<compile_context>
chip_gen: v6e
topology: v6e:2x2x1
jax: 0.10.0
libtpu: 0.0.40
codegen_flags: <defaults>
</compile_context>

<pallas_src>
import jax
import jax.numpy as jnp
from jax.experimental import pallas as pl
from jax.experimental.pallas import tpu as pltpu


def _round_up(x, m):
    return ((x + m - 1) // m) * m


# ----------------------------------------------------------------------------
# Pallas kernel 1: fused matmul + bias  (bf16 operands, f32 accumulate)
# ----------------------------------------------------------------------------
def _matmul_bias_kernel(x_ref, w_ref, b_ref, o_ref):
    acc = jnp.dot(x_ref[...], w_ref[...], preferred_element_type=jnp.float32)
    o_ref[...] = (acc + b_ref[...]).astype(o_ref.dtype)


def matmul_bias(x, w, b, *, out_dtype=jnp.float32, bm=512):
    """(M, K) @ (K, N) + b -> (M, N) in out_dtype.

    No explicit pad/slice: the M edge relies on Pallas partial-block handling
    (padding rows only affect padding rows, which are masked on writeback) and
    N is either a multiple of 128 or used as a full-extent block."""
    M, K = x.shape
    Kw, N = w.shape
    assert K == Kw

    bm_eff = min(bm, _round_up(max(M, 8), 8))
    grid = (pl.cdiv(M, bm_eff),)

    xb = x.astype(jnp.bfloat16)
    wb = w.astype(jnp.bfloat16)
    bb = b.astype(jnp.float32).reshape(1, N)

    flops = 2 * M * K * N
    bytes_accessed = ((M * K + K * N) * 2 + N * 4
                      + M * N * jnp.dtype(out_dtype).itemsize)

    return pl.pallas_call(
        _matmul_bias_kernel,
        out_shape=jax.ShapeDtypeStruct((M, N), out_dtype),
        grid_spec=pltpu.PrefetchScalarGridSpec(
            num_scalar_prefetch=0,
            grid=grid,
            in_specs=[
                pl.BlockSpec((bm_eff, K), lambda i: (i, 0)),
                pl.BlockSpec((K, N), lambda i: (0, 0)),
                pl.BlockSpec((1, N), lambda i: (0, 0)),
            ],
            out_specs=pl.BlockSpec((bm_eff, N), lambda i: (i, 0)),
        ),
        compiler_params=pltpu.CompilerParams(
            dimension_semantics=("parallel",)),
        cost_estimate=pl.CostEstimate(
            flops=flops, transcendentals=0, bytes_accessed=bytes_accessed),
    )(xb, wb, bb)


# ----------------------------------------------------------------------------
# Pallas kernel 2: bidirectional LSTM recurrence (both directions, one layer)
# ----------------------------------------------------------------------------
def _sigmoid(x):
    # Exact logistic via tanh (routes to EUP, numerically stable: no exp->inf).
    return 0.5 * (jnp.tanh(0.5 * x) + 1.0)


def _lstm_block_kernel(xp_ref, whh_ref, y_ref, h_s, c_s):
    # xp_ref : (Tb, B, 4H) bf16 gate pre-activations for this direction
    # whh_ref: (1, H, 4H)  bf16 recurrent weight (transposed) for this direction
    # y_ref  : (Tb, B, H)  bf16 hidden-state outputs (this direction's half)
    # h_s,c_s: (B, H) f32 state carried across time-blocks in VMEM scratch
    d = pl.program_id(0)          # 0 = forward, 1 = backward direction
    Tb = xp_ref.shape[0]
    Hh = h_s.shape[-1]

    @pl.when(pl.program_id(1) == 0)
    def _():
        h_s[...] = jnp.zeros_like(h_s)
        c_s[...] = jnp.zeros_like(c_s)

    whh = whh_ref[0]              # (H, 4H) bf16
    h = h_s[...]
    c = c_s[...]

    # Fully unrolled in-block time loop.  Backward direction walks the block
    # in reverse: lt = j (fwd) or Tb-1-j (bwd).
    for j in range(Tb):
        lt = j + d * (Tb - 1 - 2 * j)
        gates = xp_ref[lt].astype(jnp.float32) + jnp.dot(
            h.astype(jnp.bfloat16), whh, preferred_element_type=jnp.float32)
        # PyTorch gate order: i, f, g, o
        i_g = _sigmoid(gates[:, 0 * Hh:1 * Hh])
        f_g = _sigmoid(gates[:, 1 * Hh:2 * Hh])
        g_g = jnp.tanh(gates[:, 2 * Hh:3 * Hh])
        o_g = _sigmoid(gates[:, 3 * Hh:4 * Hh])
        c = f_g * c + i_g * g_g
        h = o_g * jnp.tanh(c)
        y_ref[lt] = h.astype(y_ref.dtype)

    h_s[...] = h
    c_s[...] = c


def _pick_time_block(T, max_tb=32):
    for cand in (32, 16, 8, 4, 2, 1):
        if cand <= max_tb and T % cand == 0:
            return cand
    return 1


def lstm_bidirectional(xp, w_hh, *, hidden):
    """xp  : (T, B, 8H) bf16 fused pre-activations [fwd 4H || bwd 4H].
    w_hh: (2, H, 4H) bf16 stacked recurrent weights [fwd, bwd].
    Returns (T, B, 2H) bf16 in the PyTorch [h_fwd || h_bwd] layout."""
    T, B, G2 = xp.shape
    Hh = hidden
    assert G2 == 8 * Hh
    Tb = _pick_time_block(T)
    nTb = T // Tb

    def xmap(d, t):
        # forward: time block t; backward: time block nTb-1-t.
        # Last block axis selects the direction's channel half.
        return (t + d * (nTb - 1 - 2 * t), 0, d)

    flops = 2 * T * (2 * B * Hh * 4 * Hh) + 2 * T * 10 * B * Hh
    transcendentals = 2 * T * B * 5 * Hh
    bytes_accessed = (T * B * 8 * Hh) * 2 + 2 * Hh * 4 * Hh * 2 + T * B * 2 * Hh * 2

    return pl.pallas_call(
        _lstm_block_kernel,
        out_shape=jax.ShapeDtypeStruct((T, B, 2 * Hh), jnp.bfloat16),
        grid_spec=pltpu.PrefetchScalarGridSpec(
            num_scalar_prefetch=0,
            grid=(2, nTb),
            in_specs=[
                pl.BlockSpec((Tb, B, 4 * Hh), xmap),
                pl.BlockSpec((1, Hh, 4 * Hh), lambda d, t: (d, 0, 0)),
            ],
            out_specs=pl.BlockSpec((Tb, B, Hh), xmap),
            scratch_shapes=[
                pltpu.VMEM((B, Hh), jnp.float32),   # h state
                pltpu.VMEM((B, Hh), jnp.float32),   # c state
            ],
        ),
        compiler_params=pltpu.CompilerParams(
            # Directions are independent -> "parallel" lets v7x put one per
            # TensorCore; the time axis carries state -> "arbitrary".
            dimension_semantics=("parallel", "arbitrary")),
        cost_estimate=pl.CostEstimate(
            flops=flops, transcendentals=transcendentals,
            bytes_accessed=bytes_accessed),
    )(xp, w_hh)


# ----------------------------------------------------------------------------
# Decoder forward
# ----------------------------------------------------------------------------
def _lstm_layer(x, layer_params, *, hidden):
    # x: (T, B, Din) -> (T, B, 2H) bf16
    T, B, Din = x.shape
    pf, pb = layer_params
    # Fused input projection for both directions: single MXU pass over x.
    w_ih_t = jnp.concatenate(
        [jnp.transpose(pf["w_ih"]), jnp.transpose(pb["w_ih"])], axis=1)  # (Din, 8H)
    bias = jnp.concatenate(
        [pf["b_ih"] + pf["b_hh"], pb["b_ih"] + pb["b_hh"]])              # (8H,)
    xp = matmul_bias(x.reshape(T * B, Din), w_ih_t, bias,
                     out_dtype=jnp.bfloat16)                             # (T*B, 8H)
    xp = xp.reshape(T, B, 8 * hidden)
    w_hh = jnp.stack(
        [jnp.transpose(pf["w_hh"]), jnp.transpose(pb["w_hh"])],
        axis=0).astype(jnp.bfloat16)                                     # (2, H, 4H)
    return lstm_bidirectional(xp, w_hh, hidden=hidden)


def decoder_forward(src, params):
    # src: (B, C, Hs, W) float32, same layout as the PyTorch module.
    b, c, hs, w = src.shape
    x = jnp.transpose(src, (3, 0, 1, 2)).reshape(w, b, c * hs)   # (T, B, D)
    hidden = params["layer0"][0]["w_hh"].shape[1]                # per-direction H

    y = _lstm_layer(x, params["layer0"], hidden=hidden)
    # TODO(synk): train-mode inter-layer dropout (p=0.1) intentionally skipped.
    y = _lstm_layer(y, params["layer1"], hidden=hidden)

    T, B, F = y.shape
    n_classes = params["w_logit"].shape[0]
    logits = matmul_bias(y.reshape(T * B, F),
                         jnp.transpose(params["w_logit"]),       # (F, n_classes)
                         jnp.zeros((n_classes,), jnp.float32),   # Linear(bias=False)
                         out_dtype=jnp.float32)
    return logits.reshape(T, B, n_classes)


# ----------------------------------------------------------------------------
# Parameters (deterministic synthetic init matching nn.LSTM / nn.Linear shapes)
# ----------------------------------------------------------------------------
def init_params(key, *, input_dim, hidden_dim=512, num_layers=2, n_classes=200):
    H = hidden_dim // 2          # per-direction hidden size (bidirectional)
    bound = 1.0 / (H ** 0.5)
    params = {}
    for layer in range(num_layers):
        in_size = input_dim if layer == 0 else hidden_dim
        dirs = []
        for _ in range(2):       # forward / backward direction
            key, k1, k2, k3, k4 = jax.random.split(key, 5)
            dirs.append({
                "w_ih": jax.random.uniform(k1, (4 * H, in_size), jnp.float32,
                                           -bound, bound),
                "w_hh": jax.random.uniform(k2, (4 * H, H), jnp.float32,
                                           -bound, bound),
                "b_ih": jax.random.uniform(k3, (4 * H,), jnp.float32,
                                           -bound, bound),
                "b_hh": jax.random.uniform(k4, (4 * H,), jnp.float32,
                                           -bound, bound),
            })
        params[f"layer{layer}"] = dirs
    key, kl = jax.random.split(key)
    params["w_logit"] = (jax.random.normal(kl, (n_classes, hidden_dim),
                                           jnp.float32) / (hidden_dim ** 0.5))
    return params


if __name__ == "__main__":
    key = jax.random.PRNGKey(0)
    kp, kx = jax.random.split(key)

    # Small input consistent with the module: (batch, channels, height, width).
    B, C, Hs, W = 2, 4, 16, 8
    input_dim = C * Hs            # 64 = c*h, as the module's forward implies
    hidden_dim = 512              # module default (256 * 2)
    n_classes = 200               # module default

    params = init_params(kp, input_dim=input_dim, hidden_dim=hidden_dim,
                         n_classes=n_classes)
    src = jax.random.uniform(kx, (B, C, Hs, W), jnp.float32)

    fwd = jax.jit(decoder_forward)
    out = fwd(src, params)
    out = jax.block_until_ready(out)

    # Output is (seq_len=W, batch, n_classes), like the PyTorch module.
    assert out.shape == (W, B, n_classes), out.shape
    assert out.dtype == jnp.float32
    assert bool(jnp.all(jnp.isfinite(out)))
    print("KERNEL_OK")
</pallas_src>

<mosaic_0001>
module attributes {stable_mosaic.version = 11 : i64} {
  func.func @_matmul_bias_kernel(%arg0: i32, %arg1: memref<16x64xbf16, #tpu.memory_space<vmem>>, %arg2: memref<64x2048xbf16, #tpu.memory_space<vmem>>, %arg3: memref<1x2048xf32, #tpu.memory_space<vmem>>, %arg4: memref<16x2048xbf16, #tpu.memory_space<vmem>>) attributes {dimension_semantics = [#tpu.dimension_semantics<parallel>], iteration_bounds = array<i64: 1>, scalar_prefetch = 0 : i64, scratch_operands = 0 : i64, tpu.core_type = #tpu.core_type<tc>, window_params = [{transform_indices = @transform_0, window_bounds = array<i64: 16, 64>}, {pipeline_mode = #tpu.pipeline_mode<synchronous>, transform_indices = @transform_1, window_bounds = array<i64: 64, 2048>}, {pipeline_mode = #tpu.pipeline_mode<synchronous>, transform_indices = @transform_2, window_bounds = array<i64: 1, 2048>}, {transform_indices = @transform_3, window_bounds = array<i64: 16, 2048>}]} {
    %c0 = arith.constant 0 : index
    %c0_0 = arith.constant 0 : index
    %0 = vector.load %arg1[%c0, %c0_0] : memref<16x64xbf16, #tpu.memory_space<vmem>>, vector<16x64xbf16>
    %c0_1 = arith.constant 0 : index
    %c0_2 = arith.constant 0 : index
    %1 = vector.load %arg2[%c0_1, %c0_2] : memref<64x2048xbf16, #tpu.memory_space<vmem>>, vector<64x2048xbf16>
    %cst = arith.constant dense<0.000000e+00> : vector<16x2048xf32>
    %2 = tpu.matmul %0, %1, %cst {dimension_numbers = #tpu.dot_dimension_numbers<[1], [0], [0], [1], [0, 0, 1, 1], [], []>} : vector<16x64xbf16>, vector<64x2048xbf16>, vector<16x2048xf32> -> vector<16x2048xf32>
    %c0_3 = arith.constant 0 : index
    %c0_4 = arith.constant 0 : index
    %3 = vector.load %arg3[%c0_3, %c0_4] : memref<1x2048xf32, #tpu.memory_space<vmem>>, vector<1x2048xf32>
    %4 = vector.broadcast %3 : vector<1x2048xf32> to vector<16x2048xf32>
    %5 = arith.addf %2, %4 : vector<16x2048xf32>
    %6 = arith.truncf %5 : vector<16x2048xf32> to vector<16x2048xbf16>
    %c0_5 = arith.constant 0 : index
    %c0_6 = arith.constant 0 : index
    %7 = vector.load %arg4[%c0_5, %c0_6] : memref<16x2048xbf16, #tpu.memory_space<vmem>>, vector<16x2048xbf16>
    tpu.vector_store %arg4[%c0_5, %c0_6], %6 {strides = array<i32>} : memref<16x2048xbf16, #tpu.memory_space<vmem>>, vector<16x2048xbf16>,
    return
  }
  func.func @transform_0(%arg0: i32) -> (i32, i32) {
    %c0_i32 = arith.constant 0 : i32
    %c0_i32_0 = arith.constant 0 : i32
    return %arg0, %c0_i32 : i32, i32
  }
  func.func @transform_1(%arg0: i32) -> (i32, i32) {
    %c0_i32 = arith.constant 0 : i32
    %c0_i32_0 = arith.constant 0 : i32
    %c0_i32_1 = arith.constant 0 : i32
    return %c0_i32, %c0_i32_0 : i32, i32
  }
  func.func @transform_2(%arg0: i32) -> (i32, i32) {
    %c0_i32 = arith.constant 0 : i32
    %c0_i32_0 = arith.constant 0 : i32
    %c0_i32_1 = arith.constant 0 : i32
    return %c0_i32, %c0_i32_0 : i32, i32
  }
  func.func @transform_3(%arg0: i32) -> (i32, i32) {
    %c0_i32 = arith.constant 0 : i32
    %c0_i32_0 = arith.constant 0 : i32
    return %arg0, %c0_i32 : i32, i32
  }
}

module attributes {stable_mosaic.version = 11 : i64} {
  func.func @_lstm_block_kernel(%arg0: i32, %arg1: i32, %arg2: memref<8x2x1024xbf16, #tpu.memory_space<vmem>>, %arg3: memref<1x256x1024xbf16, #tpu.memory_space<vmem>>, %arg4: memref<8x2x256xbf16, #tpu.memory_space<vmem>>, %arg5: memref<2x256xf32, #tpu.memory_space<vmem>>, %arg6: memref<2x256xf32, #tpu.memory_space<vmem>>) attributes {dimension_semantics = [#tpu.dimension_semantics<parallel>, #tpu.dimension_semantics<arbitrary>], iteration_bounds = array<i64: 2, 1>, scalar_prefetch = 0 : i64, scratch_operands = 2 : i64, tpu.core_type = #tpu.core_type<tc>, window_params = [{transform_indices = @transform_0, window_bounds = array<i64: 8, 2, 1024>}, {transform_indices = @transform_1, window_bounds = array<i64: 1, 256, 1024>}, {transform_indices = @transform_2, window_bounds = array<i64: 8, 2, 256>}]} {
    %c0_i32 = arith.constant 0 : i32
    %0 = arith.cmpi eq, %arg1, %c0_i32 : i32
    %1 = arith.extui %0 : i1 to i32
    %c0_i32_0 = arith.constant 0 : i32
    %2 = arith.cmpi ne, %1, %c0_i32_0 : i32
    scf.if %2 {
      %cst_127 = arith.constant 0.000000e+00 : f32
      %369 = vector.broadcast %cst_127 : f32 to vector<2x256xf32>
      %c0_128 = arith.constant 0 : index
      %c0_129 = arith.constant 0 : index
      %370 = vector.load %arg5[%c0_128, %c0_129] : memref<2x256xf32, #tpu.memory_space<vmem>>, vector<2x256xf32>
      tpu.vector_store %arg5[%c0_128, %c0_129], %369 {strides = array<i32>} : memref<2x256xf32, #tpu.memory_space<vmem>>, vector<2x256xf32>,
      %cst_130 = arith.constant 0.000000e+00 : f32
      %371 = vector.broadcast %cst_130 : f32 to vector<2x256xf32>
      %c0_131 = arith.constant 0 : index
      %c0_132 = arith.constant 0 : index
      %372 = vector.load %arg6[%c0_131, %c0_132] : memref<2x256xf32, #tpu.memory_space<vmem>>, vector<2x256xf32>
      tpu.vector_store %arg6[%c0_131, %c0_132], %371 {strides = array<i32>} : memref<2x256xf32, #tpu.memory_space<vmem>>, vector<2x256xf32>,
    } else {
    }
    %c0 = arith.constant 0 : index
    %c0_1 = arith.constant 0 : index
    %c0_2 = arith.constant 0 : index
    %3 = vector.load %arg3[%c0, %c0_1, %c0_2] : memref<1x256x1024xbf16, #tpu.memory_space<vmem>>, vector<1x256x1024xbf16>
    %4 = vector.shape_cast %3 : vector<1x256x1024xbf16> to vector<256x1024xbf16>
    %c0_3 = arith.constant 0 : index
    %c0_4 = arith.constant 0 : index
    %5 = vector.load %arg5[%c0_3, %c0_4] : memref<2x256xf32, #tpu.memory_space<vmem>>, vector<2x256xf32>
    %c0_5 = arith.constant 0 : index
    %c0_6 = arith.constant 0 : index
    %6 = vector.load %arg6[%c0_5, %c0_6] : memref<2x256xf32, #tpu.memory_space<vmem>>, vector<2x256xf32>
    %c7_i32 = arith.constant 7 : i32
    %7 = arith.muli %arg0, %c7_i32 : i32
    %c0_i32_7 = arith.constant 0 : i32
    %8 = arith.addi %c0_i32_7, %7 : i32
    %9 = arith.index_cast %8 : i32 to index
    %c0_8 = arith.constant 0 : index
    %c0_9 = arith.constant 0 : index
    %10 = vector.load %arg2[%9, %c0_8, %c0_9] : memref<8x2x1024xbf16, #tpu.memory_space<vmem>>, vector<1x2x1024xbf16>
    %11 = vector.shape_cast %10 : vector<1x2x1024xbf16> to vector<2x1024xbf16>
    %12 = arith.extf %11 : vector<2x1024xbf16> to vector<2x1024xf32>
    %13 = arith.truncf %5 : vector<2x256xf32> to vector<2x256xbf16>
    %cst = arith.constant dense<0.000000e+00> : vector<2x1024xf32>
    %14 = tpu.matmul %13, %4, %cst {dimension_numbers = #tpu.dot_dimension_numbers<[1], [0], [0], [1], [0, 0, 1, 1], [], []>} : vector<2x256xbf16>, vector<256x1024xbf16>, vector<2x1024xf32> -> vector<2x1024xf32>
    %15 = arith.addf %12, %14 : vector<2x1024xf32>
    %16 = vector.extract_strided_slice %15 {offsets = [0, 0], sizes = [2, 256], strides = [1, 1]} : vector<2x1024xf32> to vector<2x256xf32>
    %cst_10 = arith.constant 5.000000e-01 : f32
    %17 = vector.broadcast %cst_10 : f32 to vector<2x256xf32>
    %18 = arith.mulf %17, %16 : vector<2x256xf32>
    %19 = math.tanh %18 : vector<2x256xf32>
    %cst_11 = arith.constant 1.000000e+00 : f32
    %20 = vector.broadcast %cst_11 : f32 to vector<2x256xf32>
    %21 = arith.addf %19, %20 : vector<2x256xf32>
    %cst_12 = arith.constant 5.000000e-01 : f32
    %22 = vector.broadcast %cst_12 : f32 to vector<2x256xf32>
    %23 = arith.mulf %22, %21 : vector<2x256xf32>
    %24 = vector.extract_strided_slice %15 {offsets = [0, 256], sizes = [2, 256], strides = [1, 1]} : vector<2x1024xf32> to vector<2x256xf32>
    %cst_13 = arith.constant 5.000000e-01 : f32
    %25 = vector.broadcast %cst_13 : f32 to vector<2x256xf32>
    %26 = arith.mulf %25, %24 : vector<2x256xf32>
    %27 = math.tanh %26 : vector<2x256xf32>
    %cst_14 = arith.constant 1.000000e+00 : f32
    %28 = vector.broadcast %cst_14 : f32 to vector<2x256xf32>
    %29 = arith.addf %27, %28 : vector<2x256xf32>
    %cst_15 = arith.constant 5.000000e-01 : f32
    %30 = vector.broadcast %cst_15 : f32 to vector<2x256xf32>
    %31 = arith.mulf %30, %29 : vector<2x256xf32>
    %32 = vector.extract_strided_slice %15 {offsets = [0, 512], sizes = [2, 256], strides = [1, 1]} : vector<2x1024xf32> to vector<2x256xf32>
    %33 = math.tanh %32 : vector<2x256xf32>
    %34 = vector.extract_strided_slice %15 {offsets = [0, 768], sizes = [2, 256], strides = [1, 1]} : vector<2x1024xf32> to vector<2x256xf32>
    %cst_16 = arith.constant 5.000000e-01 : f32
    %35 = vector.broadcast %cst_16 : f32 to vector<2x256xf32>
    %36 = arith.mulf %35, %34 : vector<2x256xf32>
    %37 = math.tanh %36 : vector<2x256xf32>
    %cst_17 = arith.constant 1.000000e+00 : f32
    %38 = vector.broadcast %cst_17 : f32 to vector<2x256xf32>
    %39 = arith.addf %37, %38 : vector<2x256xf32>
    %cst_18 = arith.constant 5.000000e-01 : f32
    %40 = vector.broadcast %cst_18 : f32 to vector<2x256xf32>
    %41 = arith.mulf %40, %39 : vector<2x256xf32>
    %42 = arith.mulf %31, %6 : vector<2x256xf32>
    %43 = arith.mulf %23, %33 : vector<2x256xf32>
    %44 = arith.addf %42, %43 : vector<2x256xf32>
    %45 = math.tanh %44 : vector<2x256xf32>
    %46 = arith.mulf %41, %45 : vector<2x256xf32>
    %47 = arith.truncf %46 : vector<2x256xf32> to vector<2x256xbf16>
    %48 = arith.index_cast %8 : i32 to index
    %c0_19 = arith.constant 0 : index
    %c0_20 = arith.constant 0 : index
    %49 = vector.load %arg4[%48, %c0_19, %c0_20] : memref<8x2x256xbf16, #tpu.memory_space<vmem>>, vector<1x2x256xbf16>
    %50 = vector.shape_cast %49 : vector<1x2x256xbf16> to vector<2x256xbf16>
    %51 = vector.shape_cast %47 : vector<2x256xbf16> to vector<1x2x256xbf16>
    tpu.vector_store %arg4[%48, %c0_19, %c0_20], %51 {strides = array<i32>} : memref<8x2x256xbf16, #tpu.memory_space<vmem>>, vector<1x2x256xbf16>,
    %c5_i32 = arith.constant 5 : i32
    %52 = arith.muli %arg0, %c5_i32 : i32
    %c1_i32 = arith.constant 1 : i32
    %53 = arith.addi %c1_i32, %52 : i32
    %54 = arith.index_cast %53 : i32 to index
    %c0_21 = arith.constant 0 : index
    %c0_22 = arith.constant 0 : index
    %55 = vector.load %arg2[%54, %c0_21, %c0_22] : memref<8x2x1024xbf16, #tpu.memory_space<vmem>>, vector<1x2x1024xbf16>
    %56 = vector.shape_cast %55 : vector<1x2x1024xbf16> to vector<2x1024xbf16>
    %57 = arith.extf %56 : vector<2x1024xbf16> to vector<2x1024xf32>
    %58 = arith.truncf %46 : vector<2x256xf32> to vector<2x256xbf16>
    %cst_23 = arith.constant dense<0.000000e+00> : vector<2x1024xf32>
    %59 = tpu.matmul %58, %4, %cst_23 {dimension_numbers = #tpu.dot_dimension_numbers<[1], [0], [0], [1], [0, 0, 1, 1], [], []>} : vector<2x256xbf16>, vector<256x1024xbf16>, vector<2x1024xf32> -> vector<2x1024xf32>
    %60 = arith.addf %57, %59 : vector<2x1024xf32>
    %61 = vector.extract_strided_slice %60 {offsets = [0, 0], sizes = [2, 256], strides = [1, 1]} : vector<2x1024xf32> to vector<2x256xf32>
    %cst_24 = arith.constant 5.000000e-01 : f32
    %62 = vector.broadcast %cst_24 : f32 to vector<2x256xf32>
    %63 = arith.mulf %62, %61 : vector<2x256xf32>
    %64 = math.tanh %63 : vector<2x256xf32>
    %cst_25 = arith.constant 1.000000e+00 : f32
    %65 = vector.broadcast %cst_25 : f32 to vector<2x256xf32>
    %66 = arith.addf %64, %65 : vector<2x256xf32>
    %cst_26 = arith.constant 5.000000e-01 : f32
    %67 = vector.broadcast %cst_26 : f32 to vector<2x256xf32>
    %68 = arith.mulf %67, %66 : vector<2x256xf32>
    %69 = vector.extract_strided_slice %60 {offsets = [0, 256], sizes = [2, 256], strides = [1, 1]} : vector<2x1024xf32> to vector<2x256xf32>
    %cst_27 = arith.constant 5.000000e-01 : f32
    %70 = vector.broadcast %cst_27 : f32 to vector<2x256xf32>
    %71 = arith.mulf %70, %69 : vector<2x256xf32>
    %72 = math.tanh %71 : vector<2x256xf32>
    %cst_28 = arith.constant 1.000000e+00 : f32
    %73 = vector.broadcast %cst_28 : f32 to vector<2x256xf32>
    %74 = arith.addf %72, %73 : vector<2x256xf32>
    %cst_29 = arith.constant 5.000000e-01 : f32
    %75 = vector.broadcast %cst_29 : f32 to vector<2x256xf32>
    %76 = arith.mulf %75, %74 : vector<2x256xf32>
    %77 = vector.extract_strided_slice %60 {offsets = [0, 512], sizes = [2, 256], strides = [1, 1]} : vector<2x1024xf32> to vector<2x256xf32>
    %78 = math.tanh %77 : vector<2x256xf32>
    %79 = vector.extract_strided_slice %60 {offsets = [0, 768], sizes = [2, 256], strides = [1, 1]} : vector<2x1024xf32> to vector<2x256xf32>
    %cst_30 = arith.constant 5.000000e-01 : f32
    %80 = vector.broadcast %cst_30 : f32 to vector<2x256xf32>
    %81 = arith.mulf %80, %79 : vector<2x256xf32>
    %82 = math.tanh %81 : vector<2x256xf32>
    %cst_31 = arith.constant 1.000000e+00 : f32
    %83 = vector.broadcast %cst_31 : f32 to vector<2x256xf32>
    %84 = arith.addf %82, %83 : vector<2x256xf32>
    %cst_32 = arith.constant 5.000000e-01 : f32
    %85 = vector.broadcast %cst_32 : f32 to vector<2x256xf32>
    %86 = arith.mulf %85, %84 : vector<2x256xf32>
    %87 = arith.mulf %76, %44 : vector<2x256xf32>
    %88 = arith.mulf %68, %78 : vector<2x256xf32>
    %89 = arith.addf %87, %88 : vector<2x256xf32>
    %90 = math.tanh %89 : vector<2x256xf32>
    %91 = arith.mulf %86, %90 : vector<2x256xf32>
    %92 = arith.truncf %91 : vector<2x256xf32> to vector<2x256xbf16>
    %93 = arith.index_cast %53 : i32 to index
    %c0_33 = arith.constant 0 : index
    %c0_34 = arith.constant 0 : index
    %94 = vector.load %arg4[%93, %c0_33, %c0_34] : memref<8x2x256xbf16, #tpu.memory_space<vmem>>, vector<1x2x256xbf16>
    %95 = vector.shape_cast %94 : vector<1x2x256xbf16> to vector<2x256xbf16>
    %96 = vector.shape_cast %92 : vector<2x256xbf16> to vector<1x2x256xbf16>
    tpu.vector_store %arg4[%93, %c0_33, %c0_34], %96 {strides = array<i32>} : memref<8x2x256xbf16, #tpu.memory_space<vmem>>, vector<1x2x256xbf16>,
    %c3_i32 = arith.constant 3 : i32
    %97 = arith.muli %arg0, %c3_i32 : i32
    %c2_i32 = arith.constant 2 : i32
    %98 = arith.addi %c2_i32, %97 : i32
    %99 = arith.index_cast %98 : i32 to index
    %c0_35 = arith.constant 0 : index
    %c0_36 = arith.constant 0 : index
    %100 = vector.load %arg2[%99, %c0_35, %c0_36] : memref<8x2x1024xbf16, #tpu.memory_space<vmem>>, vector<1x2x1024xbf16>
    %101 = vector.shape_cast %100 : vector<1x2x1024xbf16> to vector<2x1024xbf16>
    %102 = arith.extf %101 : vector<2x1024xbf16> to vector<2x1024xf32>
    %103 = arith.truncf %91 : vector<2x256xf32> to vector<2x256xbf16>
    %cst_37 = arith.constant dense<0.000000e+00> : vector<2x1024xf32>
    %104 = tpu.matmul %103, %4, %cst_37 {dimension_numbers = #tpu.dot_dimension_numbers<[1], [0], [0], [1], [0, 0, 1, 1], [], []>} : vector<2x256xbf16>, vector<256x1024xbf16>, vector<2x1024xf32> -> vector<2x1024xf32>
    %105 = arith.addf %102, %104 : vector<2x1024xf32>
    %106 = vector.extract_strided_slice %105 {offsets = [0, 0], sizes = [2, 256], strides = [1, 1]} : vector<2x1024xf32> to vector<2x256xf32>
    %cst_38 = arith.constant 5.000000e-01 : f32
    %107 = vector.broadcast %cst_38 : f32 to vector<2x256xf32>
    %108 = arith.mulf %107, %106 : vector<2x256xf32>
    %109 = math.tanh %108 : vector<2x256xf32>
    %cst_39 = arith.constant 1.000000e+00 : f32
    %110 = vector.broadcast %cst_39 : f32 to vector<2x256xf32>
    %111 = arith.addf %109, %110 : vector<2x256xf32>
    %cst_40 = arith.constant 5.000000e-01 : f32
    %112 = vector.broadcast %cst_40 : f32 to vector<2x256xf32>
    %113 = arith.mulf %112, %111 : vector<2x256xf32>
    %114 = vector.extract_strided_slice %105 {offsets = [0, 256], sizes = [2, 256], strides = [1, 1]} : vector<2x1024xf32> to vector<2x256xf32>
    %cst_41 = arith.constant 5.000000e-01 : f32
    %115 = vector.broadcast %cst_41 : f32 to vector<2x256xf32>
    %116 = arith.mulf %115, %114 : vector<2x256xf32>
    %117 = math.tanh %116 : vector<2x256xf32>
    %cst_42 = arith.constant 1.000000e+00 : f32
    %118 = vector.broadcast %cst_42 : f32 to vector<2x256xf32>
    %119 = arith.addf %117, %118 : vector<2x256xf32>
    %cst_43 = arith.constant 5.000000e-01 : f32
    %120 = vector.broadcast %cst_43 : f32 to vector<2x256xf32>
    %121 = arith.mulf %120, %119 : vector<2x256xf32>
    %122 = vector.extract_strided_slice %105 {offsets = [0, 512], sizes = [2, 256], strides = [1, 1]} : vector<2x1024xf32> to vector<2x256xf32>
    %123 = math.tanh %122 : vector<2x256xf32>
    %124 = vector.extract_strided_slice %105 {offsets = [0, 768], sizes = [2, 256], strides = [1, 1]} : vector<2x1024xf32> to vector<2x256xf32>
    %cst_44 = arith.constant 5.000000e-01 : f32
    %125 = vector.broadcast %cst_44 : f32 to vector<2x256xf32>
    %126 = arith.mulf %125, %124 : vector<2x256xf32>
    %127 = math.tanh %126 : vector<2x256xf32>
    %cst_45 = arith.constant 1.000000e+00 : f32
    %128 = vector.broadcast %cst_45 : f32 to vector<2x256xf32>
    %129 = arith.addf %127, %128 : vector<2x256xf32>
    %cst_46 = arith.constant 5.000000e-01 : f32
    %130 = vector.broadcast %cst_46 : f32 to vector<2x256xf32>
    %131 = arith.mulf %130, %129 : vector<2x256xf32>
    %132 = arith.mulf %121, %89 : vector<2x256xf32>
    %133 = arith.mulf %113, %123 : vector<2x256xf32>
    %134 = arith.addf %132, %133 : vector<2x256xf32>
    %135 = math.tanh %134 : vector<2x256xf32>
    %136 = arith.mulf %131, %135 : vector<2x256xf32>
    %137 = arith.truncf %136 : vector<2x256xf32> to vector<2x256xbf16>
    %138 = arith.index_cast %98 : i32 to index
    %c0_47 = arith.constant 0 : index
    %c0_48 = arith.constant 0 : index
    %139 = vector.load %arg4[%138, %c0_47, %c0_48] : memref<8x2x256xbf16, #tpu.memory_space<vmem>>, vector<1x2x256xbf16>
    %140 = vector.shape_cast %139 : vector<1x2x256xbf16> to vector<2x256xbf16>
    %141 = vector.shape_cast %137 : vector<2x256xbf16> to vector<1x2x256xbf16>
    tpu.vector_store %arg4[%138, %c0_47, %c0_48], %141 {strides = array<i32>} : memref<8x2x256xbf16, #tpu.memory_space<vmem>>, vector<1x2x256xbf16>,
    %c1_i32_49 = arith.constant 1 : i32
    %142 = arith.muli %arg0, %c1_i32_49 : i32
    %c3_i32_50 = arith.constant 3 : i32
    %143 = arith.addi %c3_i32_50, %142 : i32
    %144 = arith.index_cast %143 : i32 to index
    %c0_51 = arith.constant 0 : index
    %c0_52 = arith.constant 0 : index
    %145 = vector.load %arg2[%144, %c0_51, %c0_52] : memref<8x2x1024xbf16, #tpu.memory_space<vmem>>, vector<1x2x1024xbf16>
    %146 = vector.shape_cast %145 : vector<1x2x1024xbf16> to vector<2x1024xbf16>
    %147 = arith.extf %146 : vector<2x1024xbf16> to vector<2x1024xf32>
    %148 = arith.truncf %136 : vector<2x256xf32> to vector<2x256xbf16>
    %cst_53 = arith.constant dense<0.000000e+00> : vector<2x1024xf32>
    %149 = tpu.matmul %148, %4, %cst_53 {dimension_numbers = #tpu.dot_dimension_numbers<[1], [0], [0], [1], [0, 0, 1, 1], [], []>} : vector<2x256xbf16>, vector<256x1024xbf16>, vector<2x1024xf32> -> vector<2x1024xf32>
    %150 = arith.addf %147, %149 : vector<2x1024xf32>
    %151 = vector.extract_strided_slice %150 {offsets = [0, 0], sizes = [2, 256], strides = [1, 1]} : vector<2x1024xf32> to vector<2x256xf32>
    %cst_54 = arith.constant 5.000000e-01 : f32
    %152 = vector.broadcast %cst_54 : f32 to vector<2x256xf32>
    %153 = arith.mulf %152, %151 : vector<2x256xf32>
    %154 = math.tanh %153 : vector<2x256xf32>
    %cst_55 = arith.constant 1.000000e+00 : f32
    %155 = vector.broadcast %cst_55 : f32 to vector<2x256xf32>
    %156 = arith.addf %154, %155 : vector<2x256xf32>
    %cst_56 = arith.constant 5.000000e-01 : f32
    %157 = vector.broadcast %cst_56 : f32 to vector<2x256xf32>
    %158 = arith.mulf %157, %156 : vector<2x256xf32>
    %159 = vector.extract_strided_slice %150 {offsets = [0, 256], sizes = [2, 256], strides = [1, 1]} : vector<2x1024xf32> to vector<2x256xf32>
    %cst_57 = arith.constant 5.000000e-01 : f32
    %160 = vector.broadcast %cst_57 : f32 to vector<2x256xf32>
    %161 = arith.mulf %160, %159 : vector<2x256xf32>
    %162 = math.tanh %161 : vector<2x256xf32>
    %cst_58 = arith.constant 1.000000e+00 : f32
    %163 = vector.broadcast %cst_58 : f32 to vector<2x256xf32>
    %164 = arith.addf %162, %163 : vector<2x256xf32>
    %cst_59 = arith.constant 5.000000e-01 : f32
    %165 = vector.broadcast %cst_59 : f32 to vector<2x256xf32>
    %166 = arith.mulf %165, %164 : vector<2x256xf32>
    %167 = vector.extract_strided_slice %150 {offsets = [0, 512], sizes = [2, 256], strides = [1, 1]} : vector<2x1024xf32> to vector<2x256xf32>
    %168 = math.tanh %167 : vector<2x256xf32>
    %169 = vector.extract_strided_slice %150 {offsets = [0, 768], sizes = [2, 256], strides = [1, 1]} : vector<2x1024xf32> to vector<2x256xf32>
    %cst_60 = arith.constant 5.000000e-01 : f32
    %170 = vector.broadcast %cst_60 : f32 to vector<2x256xf32>
    %171 = arith.mulf %170, %169 : vector<2x256xf32>
    %172 = math.tanh %171 : vector<2x256xf32>
    %cst_61 = arith.constant 1.000000e+00 : f32
    %173 = vector.broadcast %cst_61 : f32 to vector<2x256xf32>
    %174 = arith.addf %172, %173 : vector<2x256xf32>
    %cst_62 = arith.constant 5.000000e-01 : f32
    %175 = vector.broadcast %cst_62 : f32 to vector<2x256xf32>
    %176 = arith.mulf %175, %174 : vector<2x256xf32>
    %177 = arith.mulf %166, %134 : vector<2x256xf32>
    %178 = arith.mulf %158, %168 : vector<2x256xf32>
    %179 = arith.addf %177, %178 : vector<2x256xf32>
    %180 = math.tanh %179 : vector<2x256xf32>
    %181 = arith.mulf %176, %180 : vector<2x256xf32>
    %182 = arith.truncf %181 : vector<2x256xf32> to vector<2x256xbf16>
    %183 = arith.index_cast %143 : i32 to index
    %c0_63 = arith.constant 0 : index
    %c0_64 = arith.constant 0 : index
    %184 = vector.load %arg4[%183, %c0_63, %c0_64] : memref<8x2x256xbf16, #tpu.memory_space<vmem>>, vector<1x2x256xbf16>
    %185 = vector.shape_cast %184 : vector<1x2x256xbf16> to vector<2x256xbf16>
    %186 = vector.shape_cast %182 : vector<2x256xbf16> to vector<1x2x256xbf16>
    tpu.vector_store %arg4[%183, %c0_63, %c0_64], %186 {strides = array<i32>} : memref<8x2x256xbf16, #tpu.memory_space<vmem>>, vector<1x2x256xbf16>,
    %c-1_i32 = arith.constant -1 : i32
    %187 = arith.muli %arg0, %c-1_i32 : i32
    %c4_i32 = arith.constant 4 : i32
    %188 = arith.addi %c4_i32, %187 : i32
    %189 = arith.index_cast %188 : i32 to index
    %c0_65 = arith.constant 0 : index
    %c0_66 = arith.constant 0 : index
    %190 = vector.load %arg2[%189, %c0_65, %c0_66] : memref<8x2x1024xbf16, #tpu.memory_space<vmem>>, vector<1x2x1024xbf16>
    %191 = vector.shape_cast %190 : vector<1x2x1024xbf16> to vector<2x1024xbf16>
    %192 = arith.extf %191 : vector<2x1024xbf16> to vector<2x1024xf32>
    %193 = arith.truncf %181 : vector<2x256xf32> to vector<2x256xbf16>
    %cst_67 = arith.constant dense<0.000000e+00> : vector<2x1024xf32>
    %194 = tpu.matmul %193, %4, %cst_67 {dimension_numbers = #tpu.dot_dimension_numbers<[1], [0], [0], [1], [0, 0, 1, 1], [], []>} : vector<2x256xbf16>, vector<256x1024xbf16>, vector<2x1024xf32> -> vector<2x1024xf32>
    %195 = arith.addf %192, %194 : vector<2x1024xf32>
    %196 = vector.extract_strided_slice %195 {offsets = [0, 0], sizes = [2, 256], strides = [1, 1]} : vector<2x1024xf32> to vector<2x256xf32>
    %cst_68 = arith.constant 5.000000e-01 : f32
    %197 = vector.broadcast %cst_68 : f32 to vector<2x256xf32>
    %198 = arith.mulf %197, %196 : vector<2x256xf32>
    %199 = math.tanh %198 : vector<2x256xf32>
    %cst_69 = arith.constant 1.000000e+00 : f32
    %200 = vector.broadcast %cst_69 : f32 to vector<2x256xf32>
    %201 = arith.addf %199, %200 : vector<2x256xf32>
    %cst_70 = arith.constant 5.000000e-01 : f32
    %202 = vector.broadcast %cst_70 : f32 to vector<2x256xf32>
    %203 = arith.mulf %202, %201 : vector<2x256xf32>
    %204 = vector.extract_strided_slice %195 {offsets = [0, 256], sizes = [2, 256], strides = [1, 1]} : vector<2x1024xf32> to vector<2x256xf32>
    %cst_71 = arith.constant 5.000000e-01 : f32
    %205 = vector.broadcast %cst_71 : f32 to vector<2x256xf32>
    %206 = arith.mulf %205, %204 : vector<2x256xf32>
    %207 = math.tanh %206 : vector<2x256xf32>
    %cst_72 = arith.constant 1.000000e+00 : f32
    %208 = vector.broadcast %cst_72 : f32 to vector<2x256xf32>
    %209 = arith.addf %207, %208 : vector<2x256xf32>
    %cst_73 = arith.constant 5.000000e-01 : f32
    %210 = vector.broadcast %cst_73 : f32 to vector<2x256xf32>
    %211 = arith.mulf %210, %209 : vector<2x256xf32>
    %212 = vector.extract_strided_slice %195 {offsets = [0, 512], sizes = [2, 256], strides = [1, 1]} : vector<2x1024xf32> to vector<2x256xf32>
    %213 = math.tanh %212 : vector<2x256xf32>
    %214 = vector.extract_strided_slice %195 {offsets = [0, 768], sizes = [2, 256], strides = [1, 1]} : vector<2x1024xf32> to vector<2x256xf32>
    %cst_74 = arith.constant 5.000000e-01 : f32
    %215 = vector.broadcast %cst_74 : f32 to vector<2x256xf32>
    %216 = arith.mulf %215, %214 : vector<2x256xf32>
    %217 = math.tanh %216 : vector<2x256xf32>
    %cst_75 = arith.constant 1.000000e+00 : f32
    %218 = vector.broadcast %cst_75 : f32 to vector<2x256xf32>
    %219 = arith.addf %217, %218 : vector<2x256xf32>
    %cst_76 = arith.constant 5.000000e-01 : f32
    %220 = vector.broadcast %cst_76 : f32 to vector<2x256xf32>
    %221 = arith.mulf %220, %219 : vector<2x256xf32>
    %222 = arith.mulf %211, %179 : vector<2x256xf32>
    %223 = arith.mulf %203, %213 : vector<2x256xf32>
    %224 = arith.addf %222, %223 : vector<2x256xf32>
    %225 = math.tanh %224 : vector<2x256xf32>
    %226 = arith.mulf %221, %225 : vector<2x256xf32>
    %227 = arith.truncf %226 : vector<2x256xf32> to vector<2x256xbf16>
    %228 = arith.index_cast %188 : i32 to index
    %c0_77 = arith.constant 0 : index
    %c0_78 = arith.constant 0 : index
    %229 = vector.load %arg4[%228, %c0_77, %c0_78] : memref<8x2x256xbf16, #tpu.memory_space<vmem>>, vector<1x2x256xbf16>
    %230 = vector.shape_cast %229 : vector<1x2x256xbf16> to vector<2x256xbf16>
    %231 = vector.shape_cast %227 : vector<2x256xbf16> to vector<1x2x256xbf16>
    tpu.vector_store %arg4[%228, %c0_77, %c0_78], %231 {strides = array<i32>} : memref<8x2x256xbf16, #tpu.memory_space<vmem>>, vector<1x2x256xbf16>,
    %c-3_i32 = arith.constant -3 : i32
    %232 = arith.muli %arg0, %c-3_i32 : i32
    %c5_i32_79 = arith.constant 5 : i32
    %233 = arith.addi %c5_i32_79, %232 : i32
    %234 = arith.index_cast %233 : i32 to index
    %c0_80 = arith.constant 0 : index
    %c0_81 = arith.constant 0 : index
    %235 = vector.load %arg2[%234, %c0_80, %c0_81] : memref<8x2x1024xbf16, #tpu.memory_space<vmem>>, vector<1x2x1024xbf16>
    %236 = vector.shape_cast %235 : vector<1x2x1024xbf16> to vector<2x1024xbf16>
    %237 = arith.extf %236 : vector<2x1024xbf16> to vector<2x1024xf32>
    %238 = arith.truncf %226 : vector<2x256xf32> to vector<2x256xbf16>
    %cst_82 = arith.constant dense<0.000000e+00> : vector<2x1024xf32>
    %239 = tpu.matmul %238, %4, %cst_82 {dimension_numbers = #tpu.dot_dimension_numbers<[1], [0], [0], [1], [0, 0, 1, 1], [], []>} : vector<2x256xbf16>, vector<256x1024xbf16>, vector<2x1024xf32> -> vector<2x1024xf32>
    %240 = arith.addf %237, %239 : vector<2x1024xf32>
    %241 = vector.extract_strided_slice %240 {offsets = [0, 0], sizes = [2, 256], strides = [1, 1]} : vector<2x1024xf32> to vector<2x256xf32>
    %cst_83 = arith.constant 5.000000e-01 : f32
    %242 = vector.broadcast %cst_83 : f32 to vector<2x256xf32>
    %243 = arith.mulf %242, %241 : vector<2x256xf32>
    %244 = math.tanh %243 : vector<2x256xf32>
    %cst_84 = arith.constant 1.000000e+00 : f32
    %245 = vector.broadcast %cst_84 : f32 to vector<2x256xf32>
    %246 = arith.addf %244, %245 : vector<2x256xf32>
    %cst_85 = arith.constant 5.000000e-01 : f32
    %247 = vector.broadcast %cst_85 : f32 to vector<2x256xf32>
    %248 = arith.mulf %247, %246 : vector<2x256xf32>
    %249 = vector.extract_strided_slice %240 {offsets = [0, 256], sizes = [2, 256], strides = [1, 1]} : vector<2x1024xf32> to vector<2x256xf32>
    %cst_86 = arith.constant 5.000000e-01 : f32
    %250 = vector.broadcast %cst_86 : f32 to vector<2x256xf32>
    %251 = arith.mulf %250, %249 : vector<2x256xf32>
    %252 = math.tanh %251 : vector<2x256xf32>
    %cst_87 = arith.constant 1.000000e+00 : f32
    %253 = vector.broadcast %cst_87 : f32 to vector<2x256xf32>
    %254 = arith.addf %252, %253 : vector<2x256xf32>
    %cst_88 = arith.constant 5.000000e-01 : f32
    %255 = vector.broadcast %cst_88 : f32 to vector<2x256xf32>
    %256 = arith.mulf %255, %254 : vector<2x256xf32>
    %257 = vector.extract_strided_slice %240 {offsets = [0, 512], sizes = [2, 256], strides = [1, 1]} : vector<2x1024xf32> to vector<2x256xf32>
    %258 = math.tanh %257 : vector<2x256xf32>
    %259 = vector.extract_strided_slice %240 {offsets = [0, 768], sizes = [2, 256], strides = [1, 1]} : vector<2x1024xf32> to vector<2x256xf32>
    %cst_89 = arith.constant 5.000000e-01 : f32
    %260 = vector.broadcast %cst_89 : f32 to vector<2x256xf32>
    %261 = arith.mulf %260, %259 : vector<2x256xf32>
    %262 = math.tanh %261 : vector<2x256xf32>
    %cst_90 = arith.constant 1.000000e+00 : f32
    %263 = vector.broadcast %cst_90 : f32 to vector<2x256xf32>
    %264 = arith.addf %262, %263 : vector<2x256xf32>
    %cst_91 = arith.constant 5.000000e-01 : f32
    %265 = vector.broadcast %cst_91 : f32 to vector<2x256xf32>
    %266 = arith.mulf %265, %264 : vector<2x256xf32>
    %267 = arith.mulf %256, %224 : vector<2x256xf32>
    %268 = arith.mulf %248, %258 : vector<2x256xf32>
    %269 = arith.addf %267, %268 : vector<2x256xf32>
    %270 = math.tanh %269 : vector<2x256xf32>
    %271 = arith.mulf %266, %270 : vector<2x256xf32>
    %272 = arith.truncf %271 : vector<2x256xf32> to vector<2x256xbf16>
    %273 = arith.index_cast %233 : i32 to index
    %c0_92 = arith.constant 0 : index
    %c0_93 = arith.constant 0 : index
    %274 = vector.load %arg4[%273, %c0_92, %c0_93] : memref<8x2x256xbf16, #tpu.memory_space<vmem>>, vector<1x2x256xbf16>
    %275 = vector.shape_cast %274 : vector<1x2x256xbf16> to vector<2x256xbf16>
    %276 = vector.shape_cast %272 : vector<2x256xbf16> to vector<1x2x256xbf16>
    tpu.vector_store %arg4[%273, %c0_92, %c0_93], %276 {strides = array<i32>} : memref<8x2x256xbf16, #tpu.memory_space<vmem>>, vector<1x2x256xbf16>,
    %c-5_i32 = arith.constant -5 : i32
    %277 = arith.muli %arg0, %c-5_i32 : i32
    %c6_i32 = arith.constant 6 : i32
    %278 = arith.addi %c6_i32, %277 : i32
    %279 = arith.index_cast %278 : i32 to index
    %c0_94 = arith.constant 0 : index
    %c0_95 = arith.constant 0 : index
    %280 = vector.load %arg2[%279, %c0_94, %c0_95] : memref<8x2x1024xbf16, #tpu.memory_space<vmem>>, vector<1x2x1024xbf16>
    %281 = vector.shape_cast %280 : vector<1x2x1024xbf16> to vector<2x1024xbf16>
    %282 = arith.extf %281 : vector<2x1024xbf16> to vector<2x1024xf32>
    %283 = arith.truncf %271 : vector<2x256xf32> to vector<2x256xbf16>
    %cst_96 = arith.constant dense<0.000000e+00> : vector<2x1024xf32>
    %284 = tpu.matmul %283, %4, %cst_96 {dimension_numbers = #tpu.dot_dimension_numbers<[1], [0], [0], [1], [0, 0, 1, 1], [], []>} : vector<2x256xbf16>, vector<256x1024xbf16>, vector<2x1024xf32> -> vector<2x1024xf32>
    %285 = arith.addf %282, %284 : vector<2x1024xf32>
    %286 = vector.extract_strided_slice %285 {offsets = [0, 0], sizes = [2, 256], strides = [1, 1]} : vector<2x1024xf32> to vector<2x256xf32>
    %cst_97 = arith.constant 5.000000e-01 : f32
    %287 = vector.broadcast %cst_97 : f32 to vector<2x256xf32>
    %288 = arith.mulf %287, %286 : vector<2x256xf32>
    %289 = math.tanh %288 : vector<2x256xf32>
    %cst_98 = arith.constant 1.000000e+00 : f32
    %290 = vector.broadcast %cst_98 : f32 to vector<2x256xf32>
    %291 = arith.addf %289, %290 : vector<2x256xf32>
    %cst_99 = arith.constant 5.000000e-01 : f32
    %292 = vector.broadcast %cst_99 : f32 to vector<2x256xf32>
    %293 = arith.mulf %292, %291 : vector<2x256xf32>
    %294 = vector.extract_strided_slice %285 {offsets = [0, 256], sizes = [2, 256], strides = [1, 1]} : vector<2x1024xf32> to vector<2x256xf32>
    %cst_100 = arith.constant 5.000000e-01 : f32
    %295 = vector.broadcast %cst_100 : f32 to vector<2x256xf32>
    %296 = arith.mulf %295, %294 : vector<2x256xf32>
    %297 = math.tanh %296 : vector<2x256xf32>
    %cst_101 = arith.constant 1.000000e+00 : f32
    %298 = vector.broadcast %cst_101 : f32 to vector<2x256xf32>
    %299 = arith.addf %297, %298 : vector<2x256xf32>
    %cst_102 = arith.constant 5.000000e-01 : f32
    %300 = vector.broadcast %cst_102 : f32 to vector<2x256xf32>
    %301 = arith.mulf %300, %299 : vector<2x256xf32>
    %302 = vector.extract_strided_slice %285 {offsets = [0, 512], sizes = [2, 256], strides = [1, 1]} : vector<2x1024xf32> to vector<2x256xf32>
    %303 = math.tanh %302 : vector<2x256xf32>
    %304 = vector.extract_strided_slice %285 {offsets = [0, 768], sizes = [2, 256], strides = [1, 1]} : vector<2x1024xf32> to vector<2x256xf32>
    %cst_103 = arith.constant 5.000000e-01 : f32
    %305 = vector.broadcast %cst_103 : f32 to vector<2x256xf32>
    %306 = arith.mulf %305, %304 : vector<2x256xf32>
    %307 = math.tanh %306 : vector<2x256xf32>
    %cst_104 = arith.constant 1.000000e+00 : f32
    %308 = vector.broadcast %cst_104 : f32 to vector<2x256xf32>
    %309 = arith.addf %307, %308 : vector<2x256xf32>
    %cst_105 = arith.constant 5.000000e-01 : f32
    %310 = vector.broadcast %cst_105 : f32 to vector<2x256xf32>
    %311 = arith.mulf %310, %309 : vector<2x256xf32>
    %312 = arith.mulf %301, %269 : vector<2x256xf32>
    %313 = arith.mulf %293, %303 : vector<2x256xf32>
    %314 = arith.addf %312, %313 : vector<2x256xf32>
    %315 = math.tanh %314 : vector<2x256xf32>
    %316 = arith.mulf %311, %315 : vector<2x256xf32>
    %317 = arith.truncf %316 : vector<2x256xf32> to vector<2x256xbf16>
    %318 = arith.index_cast %278 : i32 to index
    %c0_106 = arith.constant 0 : index
    %c0_107 = arith.constant 0 : index
    %319 = vector.load %arg4[%318, %c0_106, %c0_107] : memref<8x2x256xbf16, #tpu.memory_space<vmem>>, vector<1x2x256xbf16>
    %320 = vector.shape_cast %319 : vector<1x2x256xbf16> to vector<2x256xbf16>
    %321 = vector.shape_cast %317 : vector<2x256xbf16> to vector<1x2x256xbf16>
    tpu.vector_store %arg4[%318, %c0_106, %c0_107], %321 {strides = array<i32>} : memref<8x2x256xbf16, #tpu.memory_space<vmem>>, vector<1x2x256xbf16>,
    %c-7_i32 = arith.constant -7 : i32
    %322 = arith.muli %arg0, %c-7_i32 : i32
    %c7_i32_108 = arith.constant 7 : i32
    %323 = arith.addi %c7_i32_108, %322 : i32
    %324 = arith.index_cast %323 : i32 to index
    %c0_109 = arith.constant 0 : index
    %c0_110 = arith.constant 0 : index
    %325 = vector.load %arg2[%324, %c0_109, %c0_110] : memref<8x2x1024xbf16, #tpu.memory_space<vmem>>, vector<1x2x1024xbf16>
    %326 = vector.shape_cast %325 : vector<1x2x1024xbf16> to vector<2x1024xbf16>
    %327 = arith.extf %326 : vector<2x1024xbf16> to vector<2x1024xf32>
    %328 = arith.truncf %316 : vector<2x256xf32> to vector<2x256xbf16>
    %cst_111 = arith.constant dense<0.000000e+00> : vector<2x1024xf32>
    %329 = tpu.matmul %328, %4, %cst_111 {dimension_numbers = #tpu.dot_dimension_numbers<[1], [0], [0], [1], [0, 0, 1, 1], [], []>} : vector<2x256xbf16>, vector<256x1024xbf16>, vector<2x1024xf32> -> vector<2x1024xf32>
    %330 = arith.addf %327, %329 : vector<2x1024xf32>
    %331 = vector.extract_strided_slice %330 {offsets = [0, 0], sizes = [2, 256], strides = [1, 1]} : vector<2x1024xf32> to vector<2x256xf32>
    %cst_112 = arith.constant 5.000000e-01 : f32
    %332 = vector.broadcast %cst_112 : f32 to vector<2x256xf32>
    %333 = arith.mulf %332, %331 : vector<2x256xf32>
    %334 = math.tanh %333 : vector<2x256xf32>
    %cst_113 = arith.constant 1.000000e+00 : f32
    %335 = vector.broadcast %cst_113 : f32 to vector<2x256xf32>
    %336 = arith.addf %334, %335 : vector<2x256xf32>
    %cst_114 = arith.constant 5.000000e-01 : f32
    %337 = vector.broadcast %cst_114 : f32 to vector<2x256xf32>
    %338 = arith.mulf %337, %336 : vector<2x256xf32>
    %339 = vector.extract_strided_slice %330 {offsets = [0, 256], sizes = [2, 256], strides = [1, 1]} : vector<2x1024xf32> to vector<2x256xf32>
    %cst_115 = arith.constant 5.000000e-01 : f32
    %340 = vector.broadcast %cst_115 : f32 to vector<2x256xf32>
    %341 = arith.mulf %340, %339 : vector<2x256xf32>
    %342 = math.tanh %341 : vector<2x256xf32>
    %cst_116 = arith.constant 1.000000e+00 : f32
    %343 = vector.broadcast %cst_116 : f32 to vector<2x256xf32>
    %344 = arith.addf %342, %343 : vector<2x256xf32>
    %cst_117 = arith.constant 5.000000e-01 : f32
    %345 = vector.broadcast %cst_117 : f32 to vector<2x256xf32>
    %346 = arith.mulf %345, %344 : vector<2x256xf32>
    %347 = vector.extract_strided_slice %330 {offsets = [0, 512], sizes = [2, 256], strides = [1, 1]} : vector<2x1024xf32> to vector<2x256xf32>
    %348 = math.tanh %347 : vector<2x256xf32>
    %349 = vector.extract_strided_slice %330 {offsets = [0, 768], sizes = [2, 256], strides = [1, 1]} : vector<2x1024xf32> to vector<2x256xf32>
    %cst_118 = arith.constant 5.000000e-01 : f32
    %350 = vector.broadcast %cst_118 : f32 to vector<2x256xf32>
    %351 = arith.mulf %350, %349 : vector<2x256xf32>
    %352 = math.tanh %351 : vector<2x256xf32>
    %cst_119 = arith.constant 1.000000e+00 : f32
    %353 = vector.broadcast %cst_119 : f32 to vector<2x256xf32>
    %354 = arith.addf %352, %353 : vector<2x256xf32>
    %cst_120 = arith.constant 5.000000e-01 : f32
    %355 = vector.broadcast %cst_120 : f32 to vector<2x256xf32>
    %356 = arith.mulf %355, %354 : vector<2x256xf32>
    %357 = arith.mulf %346, %314 : vector<2x256xf32>
    %358 = arith.mulf %338, %348 : vector<2x256xf32>
    %359 = arith.addf %357, %358 : vector<2x256xf32>
    %360 = math.tanh %359 : vector<2x256xf32>
    %361 = arith.mulf %356, %360 : vector<2x256xf32>
    %362 = arith.truncf %361 : vector<2x256xf32> to vector<2x256xbf16>
    %363 = arith.index_cast %323 : i32 to index
    %c0_121 = arith.constant 0 : index
    %c0_122 = arith.constant 0 : index
    %364 = vector.load %arg4[%363, %c0_121, %c0_122] : memref<8x2x256xbf16, #tpu.memory_space<vmem>>, vector<1x2x256xbf16>
    %365 = vector.shape_cast %364 : vector<1x2x256xbf16> to vector<2x256xbf16>
    %366 = vector.shape_cast %362 : vector<2x256xbf16> to vector<1x2x256xbf16>
    tpu.vector_store %arg4[%363, %c0_121, %c0_122], %366 {strides = array<i32>} : memref<8x2x256xbf16, #tpu.memory_space<vmem>>, vector<1x2x256xbf16>,
    %c0_123 = arith.constant 0 : index
    %c0_124 = arith.constant 0 : index
    %367 = vector.load %arg5[%c0_123, %c0_124] : memref<2x256xf32, #tpu.memory_space<vmem>>, vector<2x256xf32>
    tpu.vector_store %arg5[%c0_123, %c0_124], %361 {strides = array<i32>} : memref<2x256xf32, #tpu.memory_space<vmem>>, vector<2x256xf32>,
    %c0_125 = arith.constant 0 : index
    %c0_126 = arith.constant 0 : index
    %368 = vector.load %arg6[%c0_125, %c0_126] : memref<2x256xf32, #tpu.memory_space<vmem>>, vector<2x256xf32>
    tpu.vector_store %arg6[%c0_125, %c0_126], %359 {strides = array<i32>} : memref<2x256xf32, #tpu.memory_space<vmem>>, vector<2x256xf32>,
    return
  }
  func.func @transform_0(%arg0: i32, %arg1: i32) -> (i32, i32, i32) {
    %c2_i32 = arith.constant 2 : i32
    %0 = arith.muli %c2_i32, %arg1 : i32
    %c0_i32 = arith.constant 0 : i32
    %1 = arith.subi %c0_i32, %0 : i32
    %2 = arith.muli %arg0, %1 : i32
    %3 = arith.addi %arg1, %2 : i32
    %c0_i32_0 = arith.constant 0 : i32
    %c0_i32_1 = arith.constant 0 : i32
    return %3, %c0_i32_0, %arg0 : i32, i32, i32
  }
  func.func @transform_1(%arg0: i32, %arg1: i32) -> (i32, i32, i32) {
    %c0_i32 = arith.constant 0 : i32
    %c0_i32_0 = arith.constant 0 : i32
    %c0_i32_1 = arith.constant 0 : i32
    return %arg0, %c0_i32, %c0_i32_0 : i32, i32, i32
  }
  func.func @transform_2(%arg0: i32, %arg1: i32) -> (i32, i32, i32) {
    %c2_i32 = arith.constant 2 : i32
    %0 = arith.muli %c2_i32, %arg1 : i32
    %c0_i32 = arith.constant 0 : i32
    %1 = arith.subi %c0_i32, %0 : i32
    %2 = arith.muli %arg0, %1 : i32
    %3 = arith.addi %arg1, %2 : i32
    %c0_i32_0 = arith.constant 0 : i32
    %c0_i32_1 = arith.constant 0 : i32
    return %3, %c0_i32_0, %arg0 : i32, i32, i32
  }
}

module attributes {stable_mosaic.version = 11 : i64} {
  func.func @_matmul_bias_kernel(%arg0: i32, %arg1: memref<16x512xbf16, #tpu.memory_space<vmem>>, %arg2: memref<512x2048xbf16, #tpu.memory_space<vmem>>, %arg3: memref<1x2048xf32, #tpu.memory_space<vmem>>, %arg4: memref<16x2048xbf16, #tpu.memory_space<vmem>>) attributes {dimension_semantics = [#tpu.dimension_semantics<parallel>], iteration_bounds = array<i64: 1>, scalar_prefetch = 0 : i64, scratch_operands = 0 : i64, tpu.core_type = #tpu.core_type<tc>, window_params = [{transform_indices = @transform_0, window_bounds = array<i64: 16, 512>}, {pipeline_mode = #tpu.pipeline_mode<synchronous>, transform_indices = @transform_1, window_bounds = array<i64: 512, 2048>}, {pipeline_mode = #tpu.pipeline_mode<synchronous>, transform_indices = @transform_2, window_bounds = array<i64: 1, 2048>}, {transform_indices = @transform_3, window_bounds = array<i64: 16, 2048>}]} {
    %c0 = arith.constant 0 : index
    %c0_0 = arith.constant 0 : index
    %0 = vector.load %arg1[%c0, %c0_0] : memref<16x512xbf16, #tpu.memory_space<vmem>>, vector<16x512xbf16>
    %c0_1 = arith.constant 0 : index
    %c0_2 = arith.constant 0 : index
    %1 = vector.load %arg2[%c0_1, %c0_2] : memref<512x2048xbf16, #tpu.memory_space<vmem>>, vector<512x2048xbf16>
    %cst = arith.constant dense<0.000000e+00> : vector<16x2048xf32>
    %2 = tpu.matmul %0, %1, %cst {dimension_numbers = #tpu.dot_dimension_numbers<[1], [0], [0], [1], [0, 0, 1, 1], [], []>} : vector<16x512xbf16>, vector<512x2048xbf16>, vector<16x2048xf32> -> vector<16x2048xf32>
    %c0_3 = arith.constant 0 : index
    %c0_4 = arith.constant 0 : index
    %3 = vector.load %arg3[%c0_3, %c0_4] : memref<1x2048xf32, #tpu.memory_space<vmem>>, vector<1x2048xf32>
    %4 = vector.broadcast %3 : vector<1x2048xf32> to vector<16x2048xf32>
    %5 = arith.addf %2, %4 : vector<16x2048xf32>
    %6 = arith.truncf %5 : vector<16x2048xf32> to vector<16x2048xbf16>
    %c0_5 = arith.constant 0 : index
    %c0_6 = arith.constant 0 : index
    %7 = vector.load %arg4[%c0_5, %c0_6] : memref<16x2048xbf16, #tpu.memory_space<vmem>>, vector<16x2048xbf16>
    tpu.vector_store %arg4[%c0_5, %c0_6], %6 {strides = array<i32>} : memref<16x2048xbf16, #tpu.memory_space<vmem>>, vector<16x2048xbf16>,
    return
  }
  func.func @transform_0(%arg0: i32) -> (i32, i32) {
    %c0_i32 = arith.constant 0 : i32
    %c0_i32_0 = arith.constant 0 : i32
    return %arg0, %c0_i32 : i32, i32
  }
  func.func @transform_1(%arg0: i32) -> (i32, i32) {
    %c0_i32 = arith.constant 0 : i32
    %c0_i32_0 = arith.constant 0 : i32
    %c0_i32_1 = arith.constant 0 : i32
    return %c0_i32, %c0_i32_0 : i32, i32
  }
  func.func @transform_2(%arg0: i32) -> (i32, i32) {
    %c0_i32 = arith.constant 0 : i32
    %c0_i32_0 = arith.constant 0 : i32
    %c0_i32_1 = arith.constant 0 : i32
    return %c0_i32, %c0_i32_0 : i32, i32
  }
  func.func @transform_3(%arg0: i32) -> (i32, i32) {
    %c0_i32 = arith.constant 0 : i32
    %c0_i32_0 = arith.constant 0 : i32
    return %arg0, %c0_i32 : i32, i32
  }
}

module attributes {stable_mosaic.version = 11 : i64} {
  func.func @_matmul_bias_kernel(%arg0: i32, %arg1: memref<16x512xbf16, #tpu.memory_space<vmem>>, %arg2: memref<512x200xbf16, #tpu.memory_space<vmem>>, %arg3: memref<1x200xf32, #tpu.memory_space<vmem>>, %arg4: memref<16x200xf32, #tpu.memory_space<vmem>>) attributes {dimension_semantics = [#tpu.dimension_semantics<parallel>], iteration_bounds = array<i64: 1>, scalar_prefetch = 0 : i64, scratch_operands = 0 : i64, tpu.core_type = #tpu.core_type<tc>, window_params = [{transform_indices = @transform_0, window_bounds = array<i64: 16, 512>}, {pipeline_mode = #tpu.pipeline_mode<synchronous>, transform_indices = @transform_1, window_bounds = array<i64: 512, 200>}, {pipeline_mode = #tpu.pipeline_mode<synchronous>, transform_indices = @transform_2, window_bounds = array<i64: 1, 200>}, {transform_indices = @transform_3, window_bounds = array<i64: 16, 200>}]} {
    %c0 = arith.constant 0 : index
    %c0_0 = arith.constant 0 : index
    %0 = vector.load %arg1[%c0, %c0_0] : memref<16x512xbf16, #tpu.memory_space<vmem>>, vector<16x512xbf16>
    %c0_1 = arith.constant 0 : index
    %c0_2 = arith.constant 0 : index
    %1 = vector.load %arg2[%c0_1, %c0_2] : memref<512x200xbf16, #tpu.memory_space<vmem>>, vector<512x200xbf16>
    %cst = arith.constant dense<0.000000e+00> : vector<16x200xf32>
    %2 = tpu.matmul %0, %1, %cst {dimension_numbers = #tpu.dot_dimension_numbers<[1], [0], [0], [1], [0, 0, 1, 1], [], []>} : vector<16x512xbf16>, vector<512x200xbf16>, vector<16x200xf32> -> vector<16x200xf32>
    %c0_3 = arith.constant 0 : index
    %c0_4 = arith.constant 0 : index
    %3 = vector.load %arg3[%c0_3, %c0_4] : memref<1x200xf32, #tpu.memory_space<vmem>>, vector<1x200xf32>
    %4 = vector.broadcast %3 : vector<1x200xf32> to vector<16x200xf32>
    %5 = arith.addf %2, %4 : vector<16x200xf32>
    %c0_5 = arith.constant 0 : index
    %c0_6 = arith.constant 0 : index
    %6 = vector.load %arg4[%c0_5, %c0_6] : memref<16x200xf32, #tpu.memory_space<vmem>>, vector<16x200xf32>
    tpu.vector_store %arg4[%c0_5, %c0_6], %5 {strides = array<i32>} : memref<16x200xf32, #tpu.memory_space<vmem>>, vector<16x200xf32>,
    return
  }
  func.func @transform_0(%arg0: i32) -> (i32, i32) {
    %c0_i32 = arith.constant 0 : i32
    %c0_i32_0 = arith.constant 0 : i32
    return %arg0, %c0_i32 : i32, i32
  }
  func.func @transform_1(%arg0: i32) -> (i32, i32) {
    %c0_i32 = arith.constant 0 : i32
    %c0_i32_0 = arith.constant 0 : i32
    %c0_i32_1 = arith.constant 0 : i32
    return %c0_i32, %c0_i32_0 : i32, i32
  }
  func.func @transform_2(%arg0: i32) -> (i32, i32) {
    %c0_i32 = arith.constant 0 : i32
    %c0_i32_0 = arith.constant 0 : i32
    %c0_i32_1 = arith.constant 0 : i32
    return %c0_i32, %c0_i32_0 : i32, i32
  }
  func.func @transform_3(%arg0: i32) -> (i32, i32) {
    %c0_i32 = arith.constant 0 : i32
    %c0_i32_0 = arith.constant 0 : i32
    return %arg0, %c0_i32 : i32, i32
  }
}

</mosaic_0001>

<llo_original>
// kernel: decoder_forward.5
$region0: #{decoder_forward.5}
  #allocation0 [shape = 'u32[]', space=smem, size = 0x4, offset = 0x4, fixed_abs, tag = 'smem constant byte address 0x4 - core index']
  #allocation1 [shape = 'u32[144,128]{1,0:T(1,128)}', space=vmem, size = 0x12000, scoped, tag = 'internal scratch']
  %s0 = inlined_call_operand.vmem [shape: bf16[16,64], index: 0, kind: input, shape index: {}]
  %s1 = inlined_call_operand.vmem [shape: bf16[64,2048], index: 1, kind: input, shape index: {}]
  %s2 = inlined_call_operand.vmem [shape: f32[1,2048], index: 2, kind: input, shape index: {}]
  %s3 = inlined_call_operand.vmem [shape: bf16[16,2048], index: 3, kind: output, shape index: {}]
  %s4 = sld [smem:[#allocation0]]
  $region22: #{decoder_forward.5} parent=0
    _
  %s6 = ssub.s32 1, %s4
  %s7 = scalar_select 0, %s6, %s4
  // Predicated region
  $region2: #{decoder_forward.5} parent=0 // pred_check
    _
  $region3: #{decoder_forward.5} parent=0 // pred_check_branch
    %9 = sbr.rel (0) target = $region5
  $region4: #{decoder_forward.5} parent=0 // pred_region
    _
  $region5: #{decoder_forward.5} parent=0 // pred_fallthru
    _
  // Predicated region
  $region6: #{decoder_forward.5} parent=0 // pred_check
    _
  $region7: #{decoder_forward.5} parent=0 // pred_check_branch
    %11 = sbr.rel (0) target = $region9
  $region8: #{decoder_forward.5} parent=0 // pred_region
    _
  $region9: #{decoder_forward.5} parent=0 // pred_fallthru
    _
  // Predicated region
  $region10: #{decoder_forward.5} parent=0 // pred_check
    _
  $region11: #{decoder_forward.5} parent=0 // pred_check_branch
    %13 = sbr.rel (0) target = $region13
  $region12: #{decoder_forward.5} parent=0 // pred_region
    _
  $region13: #{decoder_forward.5} parent=0 // pred_fallthru
    _
  %v15 = vld [vmem:[%s0] sm:$0xf]
  %v16 = vld [vmem:[%s0 + $0x4] sm:$0xf]
  %v17 = vld [vmem:[%s1] sm:$0xff]
  %v18 = vld [vmem:[%s1 + $0x8] sm:$0xff]
  %v19 = vld [vmem:[%s1 + $0x10] sm:$0xff]
  %v20 = vld [vmem:[%s1 + $0x18] sm:$0xff]
  %v21 = vld [vmem:[%s1 + $0x20] sm:$0xff]
  %v22 = vld [vmem:[%s1 + $0x28] sm:$0xff]
  %v23 = vld [vmem:[%s1 + $0x30] sm:$0xff]
  %v24 = vld [vmem:[%s1 + $0x38] sm:$0xff]
  %v25 = vld [vmem:[%s1 + $0x40] sm:$0xff]
  %v26 = vld [vmem:[%s1 + $0x48] sm:$0xff]
  %v27 = vld [vmem:[%s1 + $0x50] sm:$0xff]
  %v28 = vld [vmem:[%s1 + $0x58] sm:$0xff]
  %v29 = vld [vmem:[%s1 + $0x60] sm:$0xff]
  %v30 = vld [vmem:[%s1 + $0x68] sm:$0xff]
  %v31 = vld [vmem:[%s1 + $0x70] sm:$0xff]
  %v32 = vld [vmem:[%s1 + $0x78] sm:$0xff]
  %v33 = vld [vmem:[%s1 + $0x80] sm:$0xff]
  %v34 = vld [vmem:[%s1 + $0x88] sm:$0xff]
  %v35 = vld [vmem:[%s1 + $0x90] sm:$0xff]
  %v36 = vld [vmem:[%s1 + $0x98] sm:$0xff]
  %v37 = vld [vmem:[%s1 + $0xa0] sm:$0xff]
  %v38 = vld [vmem:[%s1 + $0xa8] sm:$0xff]
  %v39 = vld [vmem:[%s1 + $0xb0] sm:$0xff]
  %v40 = vld [vmem:[%s1 + $0xb8] sm:$0xff]
  %v41 = vld [vmem:[%s1 + $0xc0] sm:$0xff]
  %v42 = vld [vmem:[%s1 + $0xc8] sm:$0xff]
  %v43 = vld [vmem:[%s1 + $0xd0] sm:$0xff]
  %v44 = vld [vmem:[%s1 + $0xd8] sm:$0xff]
  %v45 = vld [vmem:[%s1 + $0xe0] sm:$0xff]
  %v46 = vld [vmem:[%s1 + $0xe8] sm:$0xff]
  %v47 = vld [vmem:[%s1 + $0xf0] sm:$0xff]
  %v48 = vld [vmem:[%s1 + $0xf8] sm:$0xff]
  %v49 = vld [vmem:[%s1 + $0x100] sm:$0xff]
  %v50 = vld [vmem:[%s1 + $0x108] sm:$0xff]
  %v51 = vld [vmem:[%s1 + $0x110] sm:$0xff]
  %v52 = vld [vmem:[%s1 + $0x118] sm:$0xff]
  %v53 = vld [vmem:[%s1 + $0x120] sm:$0xff]
  %v54 = vld [vmem:[%s1 + $0x128] sm:$0xff]
  %v55 = vld [vmem:[%s1 + $0x130] sm:$0xff]
  %v56 = vld [vmem:[%s1 + $0x138] sm:$0xff]
  %v57 = vld [vmem:[%s1 + $0x140] sm:$0xff]
  %v58 = vld [vmem:[%s1 + $0x148] sm:$0xff]
  %v59 = vld [vmem:[%s1 + $0x150] sm:$0xff]
  %v60 = vld [vmem:[%s1 + $0x158] sm:$0xff]
  %v61 = vld [vmem:[%s1 + $0x160] sm:$0xff]
  %v62 = vld [vmem:[%s1 + $0x168] sm:$0xff]
  %v63 = vld [vmem:[%s1 + $0x170] sm:$0xff]
  %v64 = vld [vmem:[%s1 + $0x178] sm:$0xff]
  %v65 = vld [vmem:[%s1 + $0x180] sm:$0xff]
  %v66 = vld [vmem:[%s1 + $0x188] sm:$0xff]
  %v67 = vld [vmem:[%s1 + $0x190] sm:$0xff]
  %v68 = vld [vmem:[%s1 + $0x198] sm:$0xff]
  %v69 = vld [vmem:[%s1 + $0x1a0] sm:$0xff]
  %v70 = vld [vmem:[%s1 + $0x1a8] sm:$0xff]
  %v71 = vld [vmem:[%s1 + $0x1b0] sm:$0xff]
  %v72 = vld [vmem:[%s1 + $0x1b8] sm:$0xff]
  %v73 = vld [vmem:[%s1 + $0x1c0] sm:$0xff]
  %v74 = vld [vmem:[%s1 + $0x1c8] sm:$0xff]
  %v75 = vld [vmem:[%s1 + $0x1d0] sm:$0xff]
  %v76 = vld [vmem:[%s1 + $0x1d8] sm:$0xff]
  %v77 = vld [vmem:[%s1 + $0x1e0] sm:$0xff]
  %v78 = vld [vmem:[%s1 + $0x1e8] sm:$0xff]
  %v79 = vld [vmem:[%s1 + $0x1f0] sm:$0xff]
  %v80 = vld [vmem:[%s1 + $0x1f8] sm:$0xff]
  %v81 = vld [vmem:[%s2] sm:$0xff]
  %v82 = vld [vmem:[%s2 + $0x8] sm:$0xff]
  %v85 = vlaneseq
  %v86 = vshrl.u32 %v85, 7
  %v87 = vsub.s32 0, %v86
  %v88 = vrot.slane %v81, %v87
  %v89 = vlaneseq
  %v90 = vshrl.u32 %v89, 7
  %v91 = vsub.s32 1, %v90
  %v92 = vrot.slane %v81, %v91
  %v93 = vlaneseq
  %v94 = vshrl.u32 %v93, 7
  %v95 = vsub.s32 2, %v94
  %v96 = vrot.slane %v81, %v95
  %v97 = vlaneseq
  %v98 = vshrl.u32 %v97, 7
  %v99 = vsub.s32 3, %v98
  %v100 = vrot.slane %v81, %v99
  %v101 = vlaneseq
  %v102 = vshrl.u32 %v101, 7
  %v103 = vsub.s32 4, %v102
  %v104 = vrot.slane %v81, %v103
  %v105 = vlaneseq
  %v106 = vshrl.u32 %v105, 7
  %v107 = vsub.s32 5, %v106
  %v108 = vrot.slane %v81, %v107
  %v109 = vlaneseq
  %v110 = vshrl.u32 %v109, 7
  %v111 = vsub.s32 6, %v110
  %v112 = vrot.slane %v81, %v111
  %v113 = vlaneseq
  %v114 = vshrl.u32 %v113, 7
  %v115 = vsub.s32 7, %v114
  %v116 = vrot.slane %v81, %v115
  %v117 = vlaneseq
  %v118 = vshrl.u32 %v117, 7
  %v119 = vsub.s32 0, %v118
  %v120 = vrot.slane %v82, %v119
  %v121 = vlaneseq
  %v122 = vshrl.u32 %v121, 7
  %v123 = vsub.s32 1, %v122
  %v124 = vrot.slane %v82, %v123
  %v125 = vlaneseq
  %v126 = vshrl.u32 %v125, 7
  %v127 = vsub.s32 2, %v126
  %v128 = vrot.slane %v82, %v127
  %v129 = vlaneseq
  %v130 = vshrl.u32 %v129, 7
  %v131 = vsub.s32 3, %v130
  %v132 = vrot.slane %v82, %v131
  %v133 = vlaneseq
  %v134 = vshrl.u32 %v133, 7
  %v135 = vsub.s32 4, %v134
  %v136 = vrot.slane %v82, %v135
  %v137 = vlaneseq
  %v138 = vshrl.u32 %v137, 7
  %v139 = vsub.s32 5, %v138
  %v140 = vrot.slane %v82, %v139
  %v141 = vlaneseq
  %v142 = vshrl.u32 %v141, 7
  %v143 = vsub.s32 6, %v142
  %v144 = vrot.slane %v82, %v143
  %v145 = vlaneseq
  %v146 = vshrl.u32 %v145, 7
  %v147 = vsub.s32 7, %v146
  %v148 = vrot.slane %v82, %v147
  %v167 = vunpack.c.l.b16 %v15
  %v168 = vunpack.c.l.b16 %v16
  %v169 = vpack.c.b16 %v168, %v167
  %v234 = vunpack.c.l.b16 %v17
  %v235 = vunpack.c.h.b16 %v17
  %v236 = vunpack.c.l.b16 %v18
  %v237 = vunpack.c.h.b16 %v18
  %v238 = vunpack.c.l.b16 %v19
  %v239 = vunpack.c.h.b16 %v19
  %v240 = vunpack.c.l.b16 %v20
  %v241 = vunpack.c.h.b16 %v20
  %v242 = vunpack.c.l.b16 %v21
  %v243 = vunpack.c.h.b16 %v21
  %v244 = vunpack.c.l.b16 %v22
  %v245 = vunpack.c.h.b16 %v22
  %v246 = vunpack.c.l.b16 %v23
  %v247 = vunpack.c.h.b16 %v23
  %v248 = vunpack.c.l.b16 %v24
  %v249 = vunpack.c.h.b16 %v24
  %v250 = vunpack.c.l.b16 %v25
  %v251 = vunpack.c.h.b16 %v25
  %v252 = vunpack.c.l.b16 %v26
  %v253 = vunpack.c.h.b16 %v26
  %v254 = vunpack.c.l.b16 %v27
  %v255 = vunpack.c.h.b16 %v27
  %v256 = vunpack.c.l.b16 %v28
  %v257 = vunpack.c.h.b16 %v28
  %v258 = vunpack.c.l.b16 %v29
  %v259 = vunpack.c.h.b16 %v29
  %v260 = vunpack.c.l.b16 %v30
  %v261 = vunpack.c.h.b16 %v30
  %v262 = vunpack.c.l.b16 %v31
  %v263 = vunpack.c.h.b16 %v31
  %v264 = vunpack.c.l.b16 %v32
  %v265 = vunpack.c.h.b16 %v32
  %v266 = vunpack.c.l.b16 %v33
  %v267 = vunpack.c.h.b16 %v33
  %v268 = vunpack.c.l.b16 %v34
  %v269 = vunpack.c.h.b16 %v34
  %v270 = vunpack.c.l.b16 %v35
  %v271 = vunpack.c.h.b16 %v35
  %v272 = vunpack.c.l.b16 %v36
  %v273 = vunpack.c.h.b16 %v36
  %v274 = vunpack.c.l.b16 %v37
  %v275 = vunpack.c.h.b16 %v37
  %v276 = vunpack.c.l.b16 %v38
  %v277 = vunpack.c.h.b16 %v38
  %v278 = vunpack.c.l.b16 %v39
  %v279 = vunpack.c.h.b16 %v39
  %v280 = vunpack.c.l.b16 %v40
  %v281 = vunpack.c.h.b16 %v40
  %v282 = vunpack.c.l.b16 %v41
  %v283 = vunpack.c.h.b16 %v41
  %v284 = vunpack.c.l.b16 %v42
  %v285 = vunpack.c.h.b16 %v42
  %v286 = vunpack.c.l.b16 %v43
  %v287 = vunpack.c.h.b16 %v43
  %v288 = vunpack.c.l.b16 %v44
  %v289 = vunpack.c.h.b16 %v44
  %v290 = vunpack.c.l.b16 %v45
  %v291 = vunpack.c.h.b16 %v45
  %v292 = vunpack.c.l.b16 %v46
  %v293 = vunpack.c.h.b16 %v46
  %v294 = vunpack.c.l.b16 %v47
  %v295 = vunpack.c.h.b16 %v47
  %v296 = vunpack.c.l.b16 %v48
  %v297 = vunpack.c.h.b16 %v48
  %v298 = vunpack.c.l.b16 %v49
  %v299 = vunpack.c.h.b16 %v49
  %v300 = vunpack.c.l.b16 %v50
  %v301 = vunpack.c.h.b16 %v50
  %v302 = vunpack.c.l.b16 %v51
  %v303 = vunpack.c.h.b16 %v51
  %v304 = vunpack.c.l.b16 %v52
  %v305 = vunpack.c.h.b16 %v52
  %v306 = vunpack.c.l.b16 %v53
  %v307 = vunpack.c.h.b16 %v53
  %v308 = vunpack.c.l.b16 %v54
  %v309 = vunpack.c.h.b16 %v54
  %v310 = vunpack.c.l.b16 %v55
  %v311 = vunpack.c.h.b16 %v55
  %v312 = vunpack.c.l.b16 %v56
  %v313 = vunpack.c.h.b16 %v56
  %v314 = vunpack.c.l.b16 %v57
  %v315 = vunpack.c.h.b16 %v57
  %v316 = vunpack.c.l.b16 %v58
  %v317 = vunpack.c.h.b16 %v58
  %v318 = vunpack.c.l.b16 %v59
  %v319 = vunpack.c.h.b16 %v59
  %v320 = vunpack.c.l.b16 %v60
  %v321 = vunpack.c.h.b16 %v60
  %v322 = vunpack.c.l.b16 %v61
  %v323 = vunpack.c.h.b16 %v61
  %v324 = vunpack.c.l.b16 %v62
  %v325 = vunpack.c.h.b16 %v62
  %v326 = vunpack.c.l.b16 %v63
  %v327 = vunpack.c.h.b16 %v63
  %v328 = vunpack.c.l.b16 %v64
  %v329 = vunpack.c.h.b16 %v64
  %v330 = vunpack.c.l.b16 %v65
  %v331 = vunpack.c.h.b16 %v65
  %v332 = vunpack.c.l.b16 %v66
  %v333 = vunpack.c.h.b16 %v66
  %v334 = vunpack.c.l.b16 %v67
  %v335 = vunpack.c.h.b16 %v67
  %v336 = vunpack.c.l.b16 %v68
  %v337 = vunpack.c.h.b16 %v68
  %v338 = vunpack.c.l.b16 %v69
  %v339 = vunpack.c.h.b16 %v69
  %v340 = vunpack.c.l.b16 %v70
  %v341 = vunpack.c.h.b16 %v70
  %v342 = vunpack.c.l.b16 %v71
  %v343 = vunpack.c.h.b16 %v71
  %v344 = vunpack.c.l.b16 %v72
  %v345 = vunpack.c.h.b16 %v72
  %v346 = vunpack.c.l.b16 %v73
  %v347 = vunpack.c.h.b16 %v73
  %v348 = vunpack.c.l.b16 %v74
  %v349 = vunpack.c.h.b16 %v74
  %v350 = vunpack.c.l.b16 %v75
  %v351 = vunpack.c.h.b16 %v75
  %v352 = vunpack.c.l.b16 %v76
  %v353 = vunpack.c.h.b16 %v76
  %v354 = vunpack.c.l.b16 %v77
  %v355 = vunpack.c.h.b16 %v77
  %v356 = vunpack.c.l.b16 %v78
  %v357 = vunpack.c.h.b16 %v78
  %v358 = vunpack.c.l.b16 %v79
  %v359 = vunpack.c.h.b16 %v79
  %v360 = vunpack.c.l.b16 %v80
  %v361 = vunpack.c.h.b16 %v80
  %v362 = vpack.c.b16 %v250, %v234
  %v363 = vpack.c.b16 %v251, %v235
  %v364 = vpack.c.b16 %v252, %v236
  %v365 = vpack.c.b16 %v253, %v237
  %v366 = vpack.c.b16 %v254, %v238
  %v367 = vpack.c.b16 %v255, %v239
  %v368 = vpack.c.b16 %v256, %v240
  %v369 = vpack.c.b16 %v257, %v241
  %v370 = vpack.c.b16 %v258, %v242
  %v371 = vpack.c.b16 %v259, %v243
  %v372 = vpack.c.b16 %v260, %v244
  %v373 = vpack.c.b16 %v261, %v245
  %v374 = vpack.c.b16 %v262, %v246
  %v375 = vpack.c.b16 %v263, %v247
  %v376 = vpack.c.b16 %v264, %v248
  %v377 = vpack.c.b16 %v265, %v249
  %v378 = vpack.c.b16 %v282, %v266
  %v379 = vpack.c.b16 %v283, %v267
  %v380 = vpack.c.b16 %v284, %v268
  %v381 = vpack.c.b16 %v285, %v269
  %v382 = vpack.c.b16 %v286, %v270
  %v383 = vpack.c.b16 %v287, %v271
  %v384 = vpack.c.b16 %v288, %v272
  %v385 = vpack.c.b16 %v289, %v273
  %v386 = vpack.c.b16 %v290, %v274
  %v387 = vpack.c.b16 %v291, %v275
  %v388 = vpack.c.b16 %v292, %v276
  %v389 = vpack.c.b16 %v293, %v277
  %v390 = vpack.c.b16 %v294, %v278
  %v391 = vpack.c.b16 %v295, %v279
  %v392 = vpack.c.b16 %v296, %v280
  %v393 = vpack.c.b16 %v297, %v281
  %v394 = vpack.c.b16 %v314, %v298
  %v395 = vpack.c.b16 %v315, %v299
  %v396 = vpack.c.b16 %v316, %v300
  %v397 = vpack.c.b16 %v317, %v301
  %v398 = vpack.c.b16 %v318, %v302
  %v399 = vpack.c.b16 %v319, %v303
  %v400 = vpack.c.b16 %v320, %v304
  %v401 = vpack.c.b16 %v321, %v305
  %v402 = vpack.c.b16 %v322, %v306
  %v403 = vpack.c.b16 %v323, %v307
  %v404 = vpack.c.b16 %v324, %v308
  %v405 = vpack.c.b16 %v325, %v309
  %v406 = vpack.c.b16 %v326, %v310
  %v407 = vpack.c.b16 %v327, %v311
  %v408 = vpack.c.b16 %v328, %v312
  %v409 = vpack.c.b16 %v329, %v313
  %v410 = vpack.c.b16 %v346, %v330
  %v411 = vpack.c.b16 %v347, %v331
  %v412 = vpack.c.b16 %v348, %v332
  %v413 = vpack.c.b16 %v349, %v333
  %v414 = vpack.c.b16 %v350, %v334
  %v415 = vpack.c.b16 %v351, %v335
  %v416 = vpack.c.b16 %v352, %v336
  %v417 = vpack.c.b16 %v353, %v337
  %v418 = vpack.c.b16 %v354, %v338
  %v419 = vpack.c.b16 %v355, %v339
  %v420 = vpack.c.b16 %v356, %v340
  %v421 = vpack.c.b16 %v357, %v341
  %v422 = vpack.c.b16 %v358, %v342
  %v423 = vpack.c.b16 %v359, %v343
  %v424 = vpack.c.b16 %v360, %v344
  %v425 = vpack.c.b16 %v361, %v345
  %vm490 = vcmask 523264
  %v492 = vsel %vm490, %v169, 0
  %494 = vmatprep.subr.bf16.mxu0 0
  %495 = vmatpush1.bf16.msra.mxu0 0
  %496 = vmatprep.subr.bf16.mxu0 0
  %497 = vmatpush1.bf16.msra.mxu0 0
  %498 = vmatprep.subr.bf16.mxu0 0
  %499 = vmatpush1.bf16.msra.mxu0 0
  %500 = vmatprep.subr.bf16.mxu0 0
  %501 = vmatpush1.bf16.msra.mxu0 0
  %502 = vmatprep.subr.bf16.mxu0 %v411
  %503 = vmatpush1.bf16.msra.mxu0 %v410
  %504 = vmatprep.subr.bf16.mxu0 %v395
  %505 = vmatpush1.bf16.msra.mxu0 %v394
  %506 = vmatprep.subr.bf16.mxu0 %v379
  %507 = vmatpush1.bf16.msra.mxu0 %v378
  %508 = vmatprep.subr.bf16.mxu0 %v363
  %509 = vmatpush1.bf16.msra.mxu0 %v362
  %510 = vmatprep.subr.bf16.mxu0 0
  %511 = vmatpush2.bf16.msra.mxu0 0
  %512 = vmatprep.subr.bf16.mxu0 0
  %513 = vmatpush2.bf16.msra.mxu0 0
  %514 = vmatprep.subr.bf16.mxu0 0
  %515 = vmatpush2.bf16.msra.mxu0 0
  %516 = vmatprep.subr.bf16.mxu0 0
  %517 = vmatpush2.bf16.msra.mxu0 0
  %518 = vmatprep.subr.bf16.mxu0 0
  %519 = vmatpush2.bf16.msra.mxu0 0
  %520 = vmatprep.subr.bf16.mxu0 0
  %521 = vmatpush2.bf16.msra.mxu0 0
  %522 = vmatprep.subr.bf16.mxu0 0
  %523 = vmatpush2.bf16.msra.mxu0 0
  %524 = vmatprep.subr.bf16.mxu0 0
  %525 = vmatpush2.bf16.msra.mxu0 0
  %526 = vmatprep.mubr.bf16.mxu0 0
  %527 = vmatmul.mubr.bf16.gmra.mxu0 %v492
  %v528 = vpop.f32.mrf.mxu0
  %v529 = vadd.f32 %v88, %v528
  %v530 = vpop.f32.mrf.mxu0
  %v531 = vadd.f32 %v92, %v530
  %v532 = vpop.f32.mrf.mxu0
  %v533 = vadd.f32 %v88, %v532
  %v534 = vpop.f32.mrf.mxu0
  %v535 = vadd.f32 %v92, %v534
  %536 = vdwg.mxu0
  %537 = vmatprep.subr.bf16.mxu0 0
  %538 = vmatpush1.bf16.msra.mxu0 0
  %539 = vmatprep.subr.bf16.mxu0 0
  %540 = vmatpush1.bf16.msra.mxu0 0
  %541 = vmatprep.subr.bf16.mxu0 0
  %542 = vmatpush1.bf16.msra.mxu0 0
  %543 = vmatprep.subr.bf16.mxu0 0
  %544 = vmatpush1.bf16.msra.mxu0 0
  %545 = vmatprep.subr.bf16.mxu0 %v413
  %546 = vmatpush1.bf16.msra.mxu0 %v412
  %547 = vmatprep.subr.bf16.mxu0 %v397
  %548 = vmatpush1.bf16.msra.mxu0 %v396
  %549 = vmatprep.subr.bf16.mxu0 %v381
  %550 = vmatpush1.bf16.msra.mxu0 %v380
  %551 = vmatprep.subr.bf16.mxu0 %v365
  %552 = vmatpush1.bf16.msra.mxu0 %v364
  %553 = vmatprep.subr.bf16.mxu0 0
  %554 = vmatpush2.bf16.msra.mxu0 0
  %555 = vmatprep.subr.bf16.mxu0 0
  %556 = vmatpush2.bf16.msra.mxu0 0
  %557 = vmatprep.subr.bf16.mxu0 0
  %558 = vmatpush2.bf16.msra.mxu0 0
  %559 = vmatprep.subr.bf16.mxu0 0
  %560 = vmatpush2.bf16.msra.mxu0 0
  %561 = vmatprep.subr.bf16.mxu0 0
  %562 = vmatpush2.bf16.msra.mxu0 0
  %563 = vmatprep.subr.bf16.mxu0 0
  %564 = vmatpush2.bf16.msra.mxu0 0
  %565 = vmatprep.subr.bf16.mxu0 0
  %566 = vmatpush2.bf16.msra.mxu0 0
  %567 = vmatprep.subr.bf16.mxu0 0
  %568 = vmatpush2.bf16.msra.mxu0 0
  %569 = vmatprep.mubr.bf16.mxu0 0
  %570 = vmatmul.mubr.bf16.gmra.mxu0 %v492
  %v571 = vpop.f32.mrf.mxu0
  %v572 = vadd.f32 %v96, %v571
  %v573 = vpop.f32.mrf.mxu0
  %v574 = vadd.f32 %v100, %v573
  %v575 = vpop.f32.mrf.mxu0
  %v576 = vadd.f32 %v96, %v575
  %v577 = vpop.f32.mrf.mxu0
  %v578 = vadd.f32 %v100, %v577
  %579 = vdwg.mxu0
  %580 = vmatprep.subr.bf16.mxu0 0
  %581 = vmatpush1.bf16.msra.mxu0 0
  %582 = vmatprep.subr.bf16.mxu0 0
  %583 = vmatpush1.bf16.msra.mxu0 0
  %584 = vmatprep.subr.bf16.mxu0 0
  %585 = vmatpush1.bf16.msra.mxu0 0
  %586 = vmatprep.subr.bf16.mxu0 0
  %587 = vmatpush1.bf16.msra.mxu0 0
  %588 = vmatprep.subr.bf16.mxu0 %v415
  %589 = vmatpush1.bf16.msra.mxu0 %v414
  %590 = vmatprep.subr.bf16.mxu0 %v399
  %591 = vmatpush1.bf16.msra.mxu0 %v398
  %592 = vmatprep.subr.bf16.mxu0 %v383
  %593 = vmatpush1.bf16.msra.mxu0 %v382
  %594 = vmatprep.subr.bf16.mxu0 %v367
  %595 = vmatpush1.bf16.msra.mxu0 %v366
  %596 = vmatprep.subr.bf16.mxu0 0
  %597 = vmatpush2.bf16.msra.mxu0 0
  %598 = vmatprep.subr.bf16.mxu0 0
  %599 = vmatpush2.bf16.msra.mxu0 0
  %600 = vmatprep.subr.bf16.mxu0 0
  %601 = vmatpush2.bf16.msra.mxu0 0
  %602 = vmatprep.subr.bf16.mxu0 0
  %603 = vmatpush2.bf16.msra.mxu0 0
  %604 = vmatprep.subr.bf16.mxu0 0
  %605 = vmatpush2.bf16.msra.mxu0 0
  %606 = vmatprep.subr.bf16.mxu0 0
  %607 = vmatpush2.bf16.msra.mxu0 0
  %608 = vmatprep.subr.bf16.mxu0 0
  %609 = vmatpush2.bf16.msra.mxu0 0
  %610 = vmatprep.subr.bf16.mxu0 0
  %611 = vmatpush2.bf16.msra.mxu0 0
  %612 = vmatprep.mubr.bf16.mxu0 0
  %613 = vmatmul.mubr.bf16.gmra.mxu0 %v492
  %v614 = vpop.f32.mrf.mxu0
  %v615 = vadd.f32 %v104, %v614
  %v616 = vpop.f32.mrf.mxu0
  %v617 = vadd.f32 %v108, %v616
  %v618 = vpop.f32.mrf.mxu0
  %v619 = vadd.f32 %v104, %v618
  %v620 = vpop.f32.mrf.mxu0
  %v621 = vadd.f32 %v108, %v620
  %622 = vdwg.mxu0
  %623 = vmatprep.subr.bf16.mxu0 0
  %624 = vmatpush1.bf16.msra.mxu0 0
  %625 = vmatprep.subr.bf16.mxu0 0
  %626 = vmatpush1.bf16.msra.mxu0 0
  %627 = vmatprep.subr.bf16.mxu0 0
  %628 = vmatpush1.bf16.msra.mxu0 0
  %629 = vmatprep.subr.bf16.mxu0 0
  %630 = vmatpush1.bf16.msra.mxu0 0
  %631 = vmatprep.subr.bf16.mxu0 %v417
  %632 = vmatpush1.bf16.msra.mxu0 %v416
  %633 = vmatprep.subr.bf16.mxu0 %v401
  %634 = vmatpush1.bf16.msra.mxu0 %v400
  %635 = vmatprep.subr.bf16.mxu0 %v385
  %636 = vmatpush1.bf16.msra.mxu0 %v384
  %637 = vmatprep.subr.bf16.mxu0 %v369
  %638 = vmatpush1.bf16.msra.mxu0 %v368
  %639 = vmatprep.subr.bf16.mxu0 0
  %640 = vmatpush2.bf16.msra.mxu0 0
  %641 = vmatprep.subr.bf16.mxu0 0
  %642 = vmatpush2.bf16.msra.mxu0 0
  %643 = vmatprep.subr.bf16.mxu0 0
  %644 = vmatpush2.bf16.msra.mxu0 0
  %645 = vmatprep.subr.bf16.mxu0 0
  %646 = vmatpush2.bf16.msra.mxu0 0
  %647 = vmatprep.subr.bf16.mxu0 0
  %648 = vmatpush2.bf16.msra.mxu0 0
  %649 = vmatprep.subr.bf16.mxu0 0
  %650 = vmatpush2.bf16.msra.mxu0 0
  %651 = vmatprep.subr.bf16.mxu0 0
  %652 = vmatpush2.bf16.msra.mxu0 0
  %653 = vmatprep.subr.bf16.mxu0 0
  %654 = vmatpush2.bf16.msra.mxu0 0
  %655 = vmatprep.mubr.bf16.mxu0 0
  %656 = vmatmul.mubr.bf16.gmra.mxu0 %v492
  %v657 = vpop.f32.mrf.mxu0
  %v658 = vadd.f32 %v112, %v657
  %v659 = vpop.f32.mrf.mxu0
  %v660 = vadd.f32 %v116, %v659
  %v661 = vpop.f32.mrf.mxu0
  %v662 = vadd.f32 %v112, %v661
  %v663 = vpop.f32.mrf.mxu0
  %v664 = vadd.f32 %v116, %v663
  %665 = vdwg.mxu0
  %666 = vmatprep.subr.bf16.mxu0 0
  %667 = vmatpush1.bf16.msra.mxu0 0
  %668 = vmatprep.subr.bf16.mxu0 0
  %669 = vmatpush1.bf16.msra.mxu0 0
  %670 = vmatprep.subr.bf16.mxu0 0
  %671 = vmatpush1.bf16.msra.mxu0 0
  %672 = vmatprep.subr.bf16.mxu0 0
  %673 = vmatpush1.bf16.msra.mxu0 0
  %674 = vmatprep.subr.bf16.mxu0 %v419
  %675 = vmatpush1.bf16.msra.mxu0 %v418
  %676 = vmatprep.subr.bf16.mxu0 %v403
  %677 = vmatpush1.bf16.msra.mxu0 %v402
  %678 = vmatprep.subr.bf16.mxu0 %v387
  %679 = vmatpush1.bf16.msra.mxu0 %v386
  %680 = vmatprep.subr.bf16.mxu0 %v371
  %681 = vmatpush1.bf16.msra.mxu0 %v370
  %682 = vmatprep.subr.bf16.mxu0 0
  %683 = vmatpush2.bf16.msra.mxu0 0
  %684 = vmatprep.subr.bf16.mxu0 0
  %685 = vmatpush2.bf16.msra.mxu0 0
  %686 = vmatprep.subr.bf16.mxu0 0
  %687 = vmatpush2.bf16.msra.mxu0 0
  %688 = vmatprep.subr.bf16.mxu0 0
  %689 = vmatpush2.bf16.msra.mxu0 0
  %690 = vmatprep.subr.bf16.mxu0 0
  %691 = vmatpush2.bf16.msra.mxu0 0
  %692 = vmatprep.subr.bf16.mxu0 0
  %693 = vmatpush2.bf16.msra.mxu0 0
  %694 = vmatprep.subr.bf16.mxu0 0
  %695 = vmatpush2.bf16.msra.mxu0 0
  %696 = vmatprep.subr.bf16.mxu0 0
  %697 = vmatpush2.bf16.msra.mxu0 0
  %698 = vmatprep.mubr.bf16.mxu0 0
  %699 = vmatmul.mubr.bf16.gmra.mxu0 %v492
  %v700 = vpop.f32.mrf.mxu0
  %v701 = vadd.f32 %v120, %v700
  %v702 = vpop.f32.mrf.mxu0
  %v703 = vadd.f32 %v124, %v702
  %v704 = vpop.f32.mrf.mxu0
  %v705 = vadd.f32 %v120, %v704
  %v706 = vpop.f32.mrf.mxu0
  %v707 = vadd.f32 %v124, %v706
  %708 = vdwg.mxu0
  %709 = vmatprep.subr.bf16.mxu0 0
  %710 = vmatpush1.bf16.msra.mxu0 0
  %711 = vmatprep.subr.bf16.mxu0 0
  %712 = vmatpush1.bf16.msra.mxu0 0
  %713 = vmatprep.subr.bf16.mxu0 0
  %714 = vmatpush1.bf16.msra.mxu0 0
  %715 = vmatprep.subr.bf16.mxu0 0
  %716 = vmatpush1.bf16.msra.mxu0 0
  %717 = vmatprep.subr.bf16.mxu0 %v421
  %718 = vmatpush1.bf16.msra.mxu0 %v420
  %719 = vmatprep.subr.bf16.mxu0 %v405
  %720 = vmatpush1.bf16.msra.mxu0 %v404
  %721 = vmatprep.subr.bf16.mxu0 %v389
  %722 = vmatpush1.bf16.msra.mxu0 %v388
  %723 = vmatprep.subr.bf16.mxu0 %v373
  %724 = vmatpush1.bf16.msra.mxu0 %v372
  %725 = vmatprep.subr.bf16.mxu0 0
  %726 = vmatpush2.bf16.msra.mxu0 0
  %727 = vmatprep.subr.bf16.mxu0 0
  %728 = vmatpush2.bf16.msra.mxu0 0
  %729 = vmatprep.subr.bf16.mxu0 0
  %730 = vmatpush2.bf16.msra.mxu0 0
  %731 = vmatprep.subr.bf16.mxu0 0
  %732 = vmatpush2.bf16.msra.mxu0 0
  %733 = vmatprep.subr.bf16.mxu0 0
  %734 = vmatpush2.bf16.msra.mxu0 0
  %735 = vmatprep.subr.bf16.mxu0 0
  %736 = vmatpush2.bf16.msra.mxu0 0
  %737 = vmatprep.subr.bf16.mxu0 0
  %738 = vmatpush2.bf16.msra.mxu0 0
  %739 = vmatprep.subr.bf16.mxu0 0
  %740 = vmatpush2.bf16.msra.mxu0 0
  %741 = vmatprep.mubr.bf16.mxu0 0
  %742 = vmatmul.mubr.bf16.gmra.mxu0 %v492
  %v743 = vpop.f32.mrf.mxu0
  %v744 = vadd.f32 %v128, %v743
  %v745 = vpop.f32.mrf.mxu0
  %v746 = vadd.f32 %v132, %v745
  %v747 = vpop.f32.mrf.mxu0
  %v748 = vadd.f32 %v128, %v747
  %v749 = vpop.f32.mrf.mxu0
  %v750 = vadd.f32 %v132, %v749
  %751 = vdwg.mxu0
  %752 = vmatprep.subr.bf16.mxu0 0
  %753 = vmatpush1.bf16.msra.mxu0 0
  %754 = vmatprep.subr.bf16.mxu0 0
  %755 = vmatpush1.bf16.msra.mxu0 0
  %756 = vmatprep.subr.bf16.mxu0 0
  %757 = vmatpush1.bf16.msra.mxu0 0
  %758 = vmatprep.subr.bf16.mxu0 0
  %759 = vmatpush1.bf16.msra.mxu0 0
  %760 = vmatprep.subr.bf16.mxu0 %v423
  %761 = vmatpush1.bf16.msra.mxu0 %v422
  %762 = vmatprep.subr.bf16.mxu0 %v407
  %763 = vmatpush1.bf16.msra.mxu0 %v406
  %764 = vmatprep.subr.bf16.mxu0 %v391
  %765 = vmatpush1.bf16.msra.mxu0 %v390
  %766 = vmatprep.subr.bf16.mxu0 %v375
  %767 = vmatpush1.bf16.msra.mxu0 %v374
  %768 = vmatprep.subr.bf16.mxu0 0
  %769 = vmatpush2.bf16.msra.mxu0 0
  %770 = vmatprep.subr.bf16.mxu0 0
  %771 = vmatpush2.bf16.msra.mxu0 0
  %772 = vmatprep.subr.bf16.mxu0 0
  %773 = vmatpush2.bf16.msra.mxu0 0
  %774 = vmatprep.subr.bf16.mxu0 0
  %775 = vmatpush2.bf16.msra.mxu0 0
  %776 = vmatprep.subr.bf16.mxu0 0
  %777 = vmatpush2.bf16.msra.mxu0 0
  %778 = vmatprep.subr.bf16.mxu0 0
  %779 = vmatpush2.bf16.msra.mxu0 0
  %780 = vmatprep.subr.bf16.mxu0 0
  %781 = vmatpush2.bf16.msra.mxu0 0
  %782 = vmatprep.subr.bf16.mxu0 0
  %783 = vmatpush2.bf16.msra.mxu0 0
  %784 = vmatprep.mubr.bf16.mxu0 0
  %785 = vmatmul.mubr.bf16.gmra.mxu0 %v492
  %v786 = vpop.f32.mrf.mxu0
  %v787 = vadd.f32 %v136, %v786
  %v788 = vpop.f32.mrf.mxu0
  %v789 = vadd.f32 %v140, %v788
  %v790 = vpop.f32.mrf.mxu0
  %v791 = vadd.f32 %v136, %v790
  %v792 = vpop.f32.mrf.mxu0
  %v793 = vadd.f32 %v140, %v792
  %794 = vdwg.mxu0
  %795 = vmatprep.subr.bf16.mxu0 0
  %796 = vmatpush1.bf16.msra.mxu0 0
  %797 = vmatprep.subr.bf16.mxu0 0
  %798 = vmatpush1.bf16.msra.mxu0 0
  %799 = vmatprep.subr.bf16.mxu0 0
  %800 = vmatpush1.bf16.msra.mxu0 0
  %801 = vmatprep.subr.bf16.mxu0 0
  %802 = vmatpush1.bf16.msra.mxu0 0
  %803 = vmatprep.subr.bf16.mxu0 %v425
  %804 = vmatpush1.bf16.msra.mxu0 %v424
  %805 = vmatprep.subr.bf16.mxu0 %v409
  %806 = vmatpush1.bf16.msra.mxu0 %v408
  %807 = vmatprep.subr.bf16.mxu0 %v393
  %808 = vmatpush1.bf16.msra.mxu0 %v392
  %809 = vmatprep.subr.bf16.mxu0 %v377
  %810 = vmatpush1.bf16.msra.mxu0 %v376
  %811 = vmatprep.subr.bf16.mxu0 0
  %812 = vmatpush2.bf16.msra.mxu0 0
  %813 = vmatprep.subr.bf16.mxu0 0
  %814 = vmatpush2.bf16.msra.mxu0 0
  %815 = vmatprep.subr.bf16.mxu0 0
  %816 = vmatpush2.bf16.msra.mxu0 0
  %817 = vmatprep.subr.bf16.mxu0 0
  %818 = vmatpush2.bf16.msra.mxu0 0
  %819 = vmatprep.subr.bf16.mxu0 0
  %820 = vmatpush2.bf16.msra.mxu0 0
  %821 = vmatprep.subr.bf16.mxu0 0
  %822 = vmatpush2.bf16.msra.mxu0 0
  %823 = vmatprep.subr.bf16.mxu0 0
  %824 = vmatpush2.bf16.msra.mxu0 0
  %825 = vmatprep.subr.bf16.mxu0 0
  %826 = vmatpush2.bf16.msra.mxu0 0
  %827 = vmatprep.mubr.bf16.mxu0 0
  %828 = vmatmul.mubr.bf16.gmra.mxu0 %v492
  %v829 = vpop.f32.mrf.mxu0
  %v830 = vadd.f32 %v144, %v829
  %v831 = vpop.f32.mrf.mxu0
  %v832 = vadd.f32 %v148, %v831
  %v833 = vpop.f32.mrf.mxu0
  %v834 = vadd.f32 %v144, %v833
  %v835 = vpop.f32.mrf.mxu0
  %v836 = vadd.f32 %v148, %v835
  %837 = vdwg.mxu0
  %v838 = vpack.c.bf16 %v533, %v529
  %v839 = vpack.c.bf16 %v535, %v531
  %v840 = vpack.c.bf16 %v576, %v572
  %v841 = vpack.c.bf16 %v578, %v574
  %v842 = vpack.c.bf16 %v619, %v615
  %v843 = vpack.c.bf16 %v621, %v617
  %v844 = vpack.c.bf16 %v662, %v658
  %v845 = vpack.c.bf16 %v664, %v660
  %v846 = vpack.c.bf16 %v705, %v701
  %v847 = vpack.c.bf16 %v707, %v703
  %v848 = vpack.c.bf16 %v748, %v744
  %v849 = vpack.c.bf16 %v750, %v746
  %v850 = vpack.c.bf16 %v791, %v787
  %v851 = vpack.c.bf16 %v793, %v789
  %v852 = vpack.c.bf16 %v834, %v830
  %v853 = vpack.c.bf16 %v836, %v832
  %v870 = vunpack.c.l.b16 %v838
  %v871 = vunpack.c.l.b16 %v839
  %v872 = vunpack.c.l.b16 %v840
  %v873 = vunpack.c.l.b16 %v841
  %v874 = vunpack.c.l.b16 %v842
  %v875 = vunpack.c.l.b16 %v843
  %v876 = vunpack.c.l.b16 %v844
  %v877 = vunpack.c.l.b16 %v845
  %v878 = vunpack.c.l.b16 %v846
  %v879 = vunpack.c.l.b16 %v847
  %v880 = vunpack.c.l.b16 %v848
  %v881 = vunpack.c.l.b16 %v849
  %v882 = vunpack.c.l.b16 %v850
  %v883 = vunpack.c.l.b16 %v851
  %v884 = vunpack.c.l.b16 %v852
  %v885 = vunpack.c.l.b16 %v853
  %v886 = vunpack.c.h.b16 %v838
  %v887 = vunpack.c.h.b16 %v839
  %v888 = vunpack.c.h.b16 %v840
  %v889 = vunpack.c.h.b16 %v841
  %v890 = vunpack.c.h.b16 %v842
  %v891 = vunpack.c.h.b16 %v843
  %v892 = vunpack.c.h.b16 %v844
  %v893 = vunpack.c.h.b16 %v845
  %v894 = vunpack.c.h.b16 %v846
  %v895 = vunpack.c.h.b16 %v847
  %v896 = vunpack.c.h.b16 %v848
  %v897 = vunpack.c.h.b16 %v849
  %v898 = vunpack.c.h.b16 %v850
  %v899 = vunpack.c.h.b16 %v851
  %v900 = vunpack.c.h.b16 %v852
  %v901 = vunpack.c.h.b16 %v853
  %v902 = vpack.c.b16 %v871, %v870
  %v903 = vpack.c.b16 %v873, %v872
  %v904 = vpack.c.b16 %v875, %v874
  %v905 = vpack.c.b16 %v877, %v876
  %v906 = vpack.c.b16 %v879, %v878
  %v907 = vpack.c.b16 %v881, %v880
  %v908 = vpack.c.b16 %v883, %v882
  %v909 = vpack.c.b16 %v885, %v884
  %v910 = vpack.c.b16 %v887, %v886
  %v911 = vpack.c.b16 %v889, %v888
  %v912 = vpack.c.b16 %v891, %v890
  %v913 = vpack.c.b16 %v893, %v892
  %v914 = vpack.c.b16 %v895, %v894
  %v915 = vpack.c.b16 %v897, %v896
  %v916 = vpack.c.b16 %v899, %v898
  %v917 = vpack.c.b16 %v901, %v900
  %934 = vst [vmem:[%s3] sm:$0xff] %v902
  %935 = vst [vmem:[%s3 + $0x8] sm:$0xff] %v903
  %936 = vst [vmem:[%s3 + $0x10] sm:$0xff] %v904
  %937 = vst [vmem:[%s3 + $0x18] sm:$0xff] %v905
  %938 = vst [vmem:[%s3 + $0x20] sm:$0xff] %v906
  %939 = vst [vmem:[%s3 + $0x28] sm:$0xff] %v907
  %940 = vst [vmem:[%s3 + $0x30] sm:$0xff] %v908
  %941 = vst [vmem:[%s3 + $0x38] sm:$0xff] %v909
  %942 = vst [vmem:[%s3 + $0x40] sm:$0xff] %v910
  %943 = vst [vmem:[%s3 + $0x48] sm:$0xff] %v911
  %944 = vst [vmem:[%s3 + $0x50] sm:$0xff] %v912
  %945 = vst [vmem:[%s3 + $0x58] sm:$0xff] %v913
  %946 = vst [vmem:[%s3 + $0x60] sm:$0xff] %v914
  %947 = vst [vmem:[%s3 + $0x68] sm:$0xff] %v915
  %948 = vst [vmem:[%s3 + $0x70] sm:$0xff] %v916
  %949 = vst [vmem:[%s3 + $0x78] sm:$0xff] %v917
  // Predicated region
  $region14: #{decoder_forward.5} parent=0 // pred_check
    _
  $region15: #{decoder_forward.5} parent=0 // pred_check_branch
    %951 = sbr.rel (0) target = $region17
  $region16: #{decoder_forward.5} parent=0 // pred_region
    _
  $region17: #{decoder_forward.5} parent=0 // pred_fallthru
    _
  // Predicated region
  $region18: #{decoder_forward.5} parent=0 // pred_check
    _
  $region19: #{decoder_forward.5} parent=0 // pred_check_branch
    %953 = sbr.rel (0) target = $region21
  $region20: #{decoder_forward.5} parent=0 // pred_region
    _
  $region21: #{decoder_forward.5} parent=0 // pred_fallthru
    _

// kernel: decoder_forward.6
$region0: #{decoder_forward.6}
  #allocation0 [shape = 'u32[]', space=smem, size = 0x4, offset = 0x4, fixed_abs, tag = 'smem constant byte address 0x4 - core index']
  #allocation1 [shape = 'u32[144,128]{1,0:T(1,128)}', space=vmem, size = 0x12000, scoped, tag = 'internal scratch']
  #allocation2 [shape = 'f32[2,256]{1,0:T(2,128)}', space=vmem, size = 0x800, scoped, tag = 'scratch operand']
  #allocation3 [shape = 'f32[2,256]{1,0:T(2,128)}', space=vmem, size = 0x800, scoped, tag = 'scratch operand']
  %s0 = inlined_call_operand.vmem [shape: bf16[8,2,2048], index: 0, kind: input, shape index: {}]
  %s1 = inlined_call_operand.vmem [shape: bf16[2,256,1024], index: 1, kind: input, shape index: {}]
  %s2 = inlined_call_operand.vmem [shape: bf16[8,2,512], index: 2, kind: output, shape index: {}]
  %s3 = sld [smem:[#allocation0]]
  $region120: #{decoder_forward.6} parent=0
    _
  %s5 = ssub.s32 1, %s3
  %s6 = scalar_select 0, %s5, %s3
  $region1: #{decoder_forward.6} parent=0
    #allocation4 [shape = 'u8[65536]{0}', space=vmem, size = 0x10000, scoped, tag = 'input window, operand 0']
    #allocation5 [shape = 'u8[16384]{0}', space=vmem, size = 0x4000, scoped, tag = 'output window, operand 0']
    loop: start=0, step=1, limit=4
    $region2: #{decoder_forward.6} parent=1 // loop_pre_header
      _
    $region3: #{decoder_forward.6} parent=1 // loop_header
      %s8 = sphi 0, %s12
      %p9 = scmp.ge.s32.totalorder %s8, 4
      %s15 = sphi 0, %s27
      %s16 = sphi 0, %s23
      %s17 = sphi 0, %s15
      %s18 = sphi 0, %s16
      %s19 = sphi 0, %s17
      %s20 = sphi 0, %s18
      %s40 = sphi 0, %s42
      %s43 = sphi 0, %s40
      %s44 = sphi 0, %s43
      %s60 = sphi 0, %s44
      %s66 = sphi 0, %s68
      %s69 = sphi 0, %s66
      %s70 = sphi 0, %s69
      %s86 = sphi 0, %s70
      %s102 = sphi 0, %s104
      %s105 = sphi 0, %s102
      %s106 = sphi 0, %s105
      %s122 = sphi 0, %s106
    $region4: #{decoder_forward.6} parent=1 // loop_header_branch
      %11 = sbr.rel (%p9) target = $region8
    $region5: #{decoder_forward.6} parent=1 // loop_body
      %s13 = ssub.s32 %s8, 1
      %s14 = ssub.s32 %s8, 2
      %s21 = sadd.s32 1, %s16
      %p22 = scmp.ge.s32.totalorder %s21, 1
      %s23 = scalar_select %p22, 0, %s21
      %s24 = sadd.s32 1, %s15
      %s25 = scalar_select %p22, %s24, %s15
      %p26 = scmp.ge.s32.totalorder %s25, 2
      %s27 = scalar_select %p26, 0, %s25
      %s28 = smul.u32 %s16, 2
      %s29 = ssub.s32 0, %s28
      %s30 = smul.u32 %s15, %s29
      %s31 = sadd.s32 %s16, %s30
      %s32 = smul.u32 %s23, 2
      %s33 = ssub.s32 0, %s32
      %s34 = smul.u32 %s27, %s33
      %s35 = sadd.s32 %s23, %s34
      %s36 = ssub.s32 %s31, %s35
      %s37 = ssub.s32 %s15, %s27
      %s38 = sor.u32 %s36, %s37
      %p39 = scmp.eq.s32.totalorder %s38, 0
      %s41 = sadd.s32 %s40, 1
      %s42 = scalar_select %p39, %s40, %s41
      %p45 = pneg %p39
      %p46 = scmp.eq.s32.totalorder %s8, 1
      %p47 = por %p45, %p46
      %p48 = scmp.ne.s32.totalorder %s40, %s43
      %p49 = scmp.eq.s32.totalorder %s8, 0
      %p50 = por %p48, %p49
      %p51 = scmp.ne.s32.totalorder %s40, %s43
      %p52 = scmp.eq.s32.totalorder %s13, 1
      %p53 = por %p51, %p52
      %p54 = scmp.ne.s32.totalorder %s43, %s44
      %p55 = scmp.eq.s32.totalorder %s13, 0
      %p56 = por %p54, %p55
      %p57 = scmp.ne.s32.totalorder %s43, %s44
      %p58 = scmp.eq.s32.totalorder %s14, 1
      %p59 = por %p57, %p58
      %p61 = scmp.ne.s32.totalorder %s44, %s60
      %p62 = scmp.eq.s32.totalorder %s14, 0
      %p63 = por %p61, %p62
      %s64 = ssub.s32 %s15, %s27
      %p65 = scmp.eq.s32.totalorder %s64, 0
      %s67 = sadd.s32 %s66, 1
      %s68 = scalar_select %p65, %s66, %s67
      %p71 = pneg %p65
      %p72 = scmp.eq.s32.totalorder %s8, 1
      %p73 = por %p71, %p72
      %p74 = scmp.ne.s32.totalorder %s66, %s69
      %p75 = scmp.eq.s32.totalorder %s8, 0
      %p76 = por %p74, %p75
      %p77 = scmp.ne.s32.totalorder %s66, %s69
      %p78 = scmp.eq.s32.totalorder %s13, 1
      %p79 = por %p77, %p78
      %p80 = scmp.ne.s32.totalorder %s69, %s70
      %p81 = scmp.eq.s32.totalorder %s13, 0
      %p82 = por %p80, %p81
      %p83 = scmp.ne.s32.totalorder %s69, %s70
      %p84 = scmp.eq.s32.totalorder %s14, 1
      %p85 = por %p83, %p84
      %p87 = scmp.ne.s32.totalorder %s70, %s86
      %p88 = scmp.eq.s32.totalorder %s14, 0
      %p89 = por %p87, %p88
      %s90 = smul.u32 %s16, 2
      %s91 = ssub.s32 0, %s90
      %s92 = smul.u32 %s15, %s91
      %s93 = sadd.s32 %s16, %s92
      %s94 = smul.u32 %s23, 2
      %s95 = ssub.s32 0, %s94
      %s96 = smul.u32 %s27, %s95
      %s97 = sadd.s32 %s23, %s96
      %s98 = ssub.s32 %s93, %s97
      %s99 = ssub.s32 %s15, %s27
      %s100 = sor.u32 %s98, %s99
      %p101 = scmp.eq.s32.totalorder %s100, 0
      %s103 = sadd.s32 %s102, 1
      %s104 = scalar_select %p101, %s102, %s103
      %p107 = pneg %p101
      %p108 = scmp.eq.s32.totalorder %s8, 1
      %p109 = por %p107, %p108
      %p110 = scmp.ne.s32.totalorder %s102, %s105
      %p111 = scmp.eq.s32.totalorder %s8, 0
      %p112 = por %p110, %p111
      %p113 = scmp.ne.s32.totalorder %s102, %s105
      %p114 = scmp.eq.s32.totalorder %s13, 1
      %p115 = por %p113, %p114
      %p116 = scmp.ne.s32.totalorder %s105, %s106
      %p117 = scmp.eq.s32.totalorder %s13, 0
      %p118 = por %p116, %p117
      %p119 = scmp.ne.s32.totalorder %s105, %s106
      %p120 = scmp.eq.s32.totalorder %s14, 1
      %p121 = por %p119, %p120
      %p123 = scmp.ne.s32.totalorder %s106, %s122
      %p124 = scmp.eq.s32.totalorder %s14, 0
      %p125 = por %p123, %p124
      %p126 = scmp.le.s32.totalorder 1, %s8
      %p127 = scmp.lt.s32.totalorder %s8, 3
      %p128 = pnand %p126, %p127
      %p129 = pneg %p128
      // Predicated region
      $region9: #{decoder_forward.6} parent=5 // pred_check
        _
      $region10: #{decoder_forward.6} parent=5 // pred_check_branch
        %131 = sbr.rel (%p128) target = $region12
      $region11: #{decoder_forward.6} parent=5 // pred_region
        %s132 = ssub.s32 %s8, 1
      $region12: #{decoder_forward.6} parent=5 // pred_fallthru
        _
      %p133 = scmp.lt.s32.totalorder %s8, 2
      // Predicated region
      $region13: #{decoder_forward.6} parent=5 // pred_check
        %p134 = pneg %p133
      $region14: #{decoder_forward.6} parent=5 // pred_check_branch
        %136 = sbr.rel (%p134) target = $region16
      $region15: #{decoder_forward.6} parent=5 // pred_region
        // Predicated region
        $region17: #{decoder_forward.6} parent=15 // pred_check
          %p137 = pneg %p50
        $region18: #{decoder_forward.6} parent=15 // pred_check_branch
          %139 = sbr.rel (%p137) target = $region20
        $region19: #{decoder_forward.6} parent=15 // pred_region
          %s140 = sand.u32 %s40, 1
          %s141 = sand.u32 %s40, 1
          %s142 = smul.addr %s141, 64
          %s143 = scalar_lea.vmem [#allocation4], %s142
          %s144 = smul.u32 %s16, 2
          %s145 = ssub.s32 0, %s144
          %s146 = smul.u32 %s15, %s145
          %s147 = sadd.s32 %s16, %s146
          %s148 = smul.u32 8, %s147
          %s149 = smul.u32 8, %s15
          %s150 = smul.addr %s148, 16
          %s151 = sadd.s32 %s149, %s150
          %s152 = scalar_lea.vmem %s0, %s151
          // Predicated region
          $region21: #{decoder_forward.6} parent=19 // pred_check
            _
          $region22: #{decoder_forward.6} parent=19 // pred_check_branch
            %154 = sbr.rel (0) target = $region24
          $region23: #{decoder_forward.6} parent=19 // pred_region
            // Predicated region
            $region25: #{decoder_forward.6} parent=23 // pred_check
              _
            $region26: #{decoder_forward.6} parent=23 // pred_check_branch
              %156 = sbr.rel (0) target = $region28
            $region27: #{decoder_forward.6} parent=23 // pred_region
              // Predicated region
              $region40: #{decoder_forward.6} parent=27 // pred_check
                _
              $region41: #{decoder_forward.6} parent=27 // pred_check_branch
                %186 = sbr.rel (0) target = $region43
              $region42: #{decoder_forward.6} parent=27 // pred_region
                loop: start=0, step=1, limit=1
                $region44: #{decoder_forward.6} parent=42 // loop_pre_header
                  _
                $region45: #{decoder_forward.6} parent=42 // loop_header
                  %s188 = sphi 0, %s192
                  %p189 = scmp.ge.s32.totalorder %s188, 1
                  %s193 = sphi %s152, %s152
                  %s194 = sphi %s143, %s143
                $region46: #{decoder_forward.6} parent=42 // loop_header_branch
                  %191 = sbr.rel (%p189) target = $region50
                $region47: #{decoder_forward.6} parent=42 // loop_body
                  %v195 = vld [vmem:[%s193] sm:$0xff]
                  %196 = vst [vmem:[%s194] sm:$0xff] %v195
                  %v197 = vld [vmem:[%s193 + $0x10] sm:$0xff]
                  %198 = vst [vmem:[%s194 + $0x8] sm:$0xff] %v197
                  %v199 = vld [vmem:[%s193 + $0x20] sm:$0xff]
                  %200 = vst [vmem:[%s194 + $0x10] sm:$0xff] %v199
                  %v201 = vld [vmem:[%s193 + $0x30] sm:$0xff]
                  %202 = vst [vmem:[%s194 + $0x18] sm:$0xff] %v201
                  %v203 = vld [vmem:[%s193 + $0x40] sm:$0xff]
                  %204 = vst [vmem:[%s194 + $0x20] sm:$0xff] %v203
                  %v205 = vld [vmem:[%s193 + $0x50] sm:$0xff]
                  %206 = vst [vmem:[%s194 + $0x28] sm:$0xff] %v205
                  %v207 = vld [vmem:[%s193 + $0x60] sm:$0xff]
                  %208 = vst [vmem:[%s194 + $0x30] sm:$0xff] %v207
                  %v209 = vld [vmem:[%s193 + $0x70] sm:$0xff]
                  %210 = vst [vmem:[%s194 + $0x38] sm:$0xff] %v209
                $region48: #{decoder_forward.6} parent=42 // loop_footer
                  %s192 = sadd.s32 1, %s188
                $region49: #{decoder_forward.6} parent=42 // loop_footer_branch
                  %187 = sbr.rel target = $region45
                $region50: #{decoder_forward.6} parent=42 // loop_exit
                  _
              $region43: #{decoder_forward.6} parent=27 // pred_fallthru
                _
              // Predicated region
              $region51: #{decoder_forward.6} parent=27 // pred_check
                _
              $region52: #{decoder_forward.6} parent=27 // pred_check_branch
                %212 = sbr.rel target = $region54
              $region53: #{decoder_forward.6} parent=27 // pred_region
                _
              $region54: #{decoder_forward.6} parent=27 // pred_fallthru
                _
            $region28: #{decoder_forward.6} parent=23 // pred_fallthru
              _
            // Predicated region
            $region29: #{decoder_forward.6} parent=23 // pred_check
              _
            $region30: #{decoder_forward.6} parent=23 // pred_check_branch
              %158 = sbr.rel target = $region32
            $region31: #{decoder_forward.6} parent=23 // pred_region
              %s160 = ssub.s32 256, 1
              loop: start=0, step=1, limit=1
              $region33: #{decoder_forward.6} parent=31 // loop_pre_header
                _
              $region34: #{decoder_forward.6} parent=31 // loop_header
                %s162 = sphi 0, %s166
                %p163 = scmp.ge.s32.totalorder %s162, 1
                %s167 = sphi %s152, %s152
                %s168 = sphi %s143, %s143
              $region35: #{decoder_forward.6} parent=31 // loop_header_branch
                %165 = sbr.rel (%p163) target = $region39
              $region36: #{decoder_forward.6} parent=31 // loop_body
                %v169 = vld [vmem:[%s167] sm:%s160]
                %170 = vst [vmem:[%s168] sm:%s160] %v169
                %v171 = vld [vmem:[%s167 + $0x10] sm:%s160]
                %172 = vst [vmem:[%s168 + $0x8] sm:%s160] %v171
                %v173 = vld [vmem:[%s167 + $0x20] sm:%s160]
                %174 = vst [vmem:[%s168 + $0x10] sm:%s160] %v173
                %v175 = vld [vmem:[%s167 + $0x30] sm:%s160]
                %176 = vst [vmem:[%s168 + $0x18] sm:%s160] %v175
                %v177 = vld [vmem:[%s167 + $0x40] sm:%s160]
                %178 = vst [vmem:[%s168 + $0x20] sm:%s160] %v177
                %v179 = vld [vmem:[%s167 + $0x50] sm:%s160]
                %180 = vst [vmem:[%s168 + $0x28] sm:%s160] %v179
                %v181 = vld [vmem:[%s167 + $0x60] sm:%s160]
                %182 = vst [vmem:[%s168 + $0x30] sm:%s160] %v181
                %v183 = vld [vmem:[%s167 + $0x70] sm:%s160]
                %184 = vst [vmem:[%s168 + $0x38] sm:%s160] %v183
              $region37: #{decoder_forward.6} parent=31 // loop_footer
                %s166 = sadd.s32 1, %s162
              $region38: #{decoder_forward.6} parent=31 // loop_footer_branch
                %161 = sbr.rel target = $region34
              $region39: #{decoder_forward.6} parent=31 // loop_exit
                _
            $region32: #{decoder_forward.6} parent=23 // pred_fallthru
              _
          $region24: #{decoder_forward.6} parent=19 // pred_fallthru
            _
          %213 = vnop
        $region20: #{decoder_forward.6} parent=15 // pred_fallthru
          _
        // Predicated region
        $region55: #{decoder_forward.6} parent=15 // pred_check
          %p214 = pneg %p76
        $region56: #{decoder_forward.6} parent=15 // pred_check_branch
          %216 = sbr.rel (%p214) target = $region58
        $region57: #{decoder_forward.6} parent=15 // pred_region
          %p217 = scmp.lt.s32.totalorder %s15, 1
          %s218 = scalar_select %p217, %s15, 1
          %s219 = smul.addr %s218, 256
          %s220 = smul.addr %s219, 4
          %s221 = scalar_lea.vmem %s1, %s220
        $region58: #{decoder_forward.6} parent=15 // pred_fallthru
          _
      $region16: #{decoder_forward.6} parent=5 // pred_fallthru
        _
      %p222 = scmp.le.s32.totalorder 1, %s8
      %p223 = scmp.lt.s32.totalorder %s8, 3
      %p224 = pnand %p222, %p223
      %p225 = pneg %p224
      // Predicated region
      $region59: #{decoder_forward.6} parent=5 // pred_check
        _
      $region60: #{decoder_forward.6} parent=5 // pred_check_branch
        %227 = sbr.rel (%p224) target = $region62
      $region61: #{decoder_forward.6} parent=5 // pred_region
        %s228 = ssub.s32 %s8, 1
        %s229 = sand.u32 %s43, 1
        %s230 = sand.u32 %s43, 1
        %s231 = smul.addr %s230, 64
        %s232 = scalar_lea.vmem [#allocation4], %s231
        // Predicated region
        $region63: #{decoder_forward.6} parent=61 // pred_check
          %p233 = pneg %p56
        $region64: #{decoder_forward.6} parent=61 // pred_check_branch
          %235 = sbr.rel (%p233) target = $region66
        $region65: #{decoder_forward.6} parent=61 // pred_region
          _
        $region66: #{decoder_forward.6} parent=61 // pred_fallthru
          _
        %s236 = sand.u32 %s43, 1
        %s237 = sand.u32 %s43, 1
        %s238 = smul.addr %s237, 64
        %s239 = scalar_lea.vmem [#allocation4], %s238
        %p240 = pneg %p56
        %p241 = pneg %p53
        %p242 = scmp.lt.s32.totalorder %s17, 1
        %s243 = scalar_select %p242, %s17, 1
        %s244 = smul.addr %s243, 256
        %s245 = smul.addr %s244, 4
        %s246 = scalar_lea.vmem %s1, %s245
        %p247 = pneg %p82
        %p248 = pneg %p79
        %p249 = pneg %p118
        %p250 = pneg %p115
        %s251 = sand.u32 %s105, 1
        %s252 = sand.u32 %s105, 1
        %s253 = smul.addr %s252, 16
        %s254 = scalar_lea.vmem [#allocation5], %s253
        %s255 = smul.u32 %s18, 2
        %s256 = ssub.s32 0, %s255
        %s257 = smul.u32 %s17, %s256
        %s258 = sadd.s32 %s18, %s257
        %s259 = smul.u32 8, %s258
        %s260 = smul.u32 8, %s17
        %p261 = scmp.lt.s32.totalorder %s17, 1
        %s262 = scalar_select %p261, %s17, 1
        %s263 = smul.addr %s262, 256
        %s264 = smul.addr %s263, 4
        %s265 = scalar_lea.vmem %s1, %s264
        %s266 = smul.u32 %s18, 2
        %s267 = ssub.s32 0, %s266
        %s268 = smul.u32 %s17, %s267
        %s269 = sadd.s32 %s18, %s268
        %s270 = smul.u32 8, %s269
        %s271 = smul.u32 2, %s17
        %p272 = scmp.eq.s32.totalorder %s18, 0
        // Predicated region
        $region67: #{decoder_forward.6} parent=61 // pred_check
          %p273 = pneg %p272
        $region68: #{decoder_forward.6} parent=61 // pred_check_branch
          %275 = sbr.rel (%p273) target = $region70
        $region69: #{decoder_forward.6} parent=61 // pred_region
          %276 = vst [vmem:[#allocation2] sm:$0xf] 0.0
          %277 = vst [vmem:[#allocation3] sm:$0xf] 0.0
        $region70: #{decoder_forward.6} parent=61 // pred_fallthru
          _
        %v278 = vld [vmem:[%s265] sm:$0xff]
        %v279 = vld [vmem:[%s265 + $0x8] sm:$0xff]
        %v280 = vld [vmem:[%s265 + $0x10] sm:$0xff]
        %v281 = vld [vmem:[%s265 + $0x18] sm:$0xff]
        %v282 = vld [vmem:[%s265 + $0x20] sm:$0xff]
        %v283 = vld [vmem:[%s265 + $0x28] sm:$0xff]
        %v284 = vld [vmem:[%s265 + $0x30] sm:$0xff]
        %v285 = vld [vmem:[%s265 + $0x38] sm:$0xff]
        %v286 = vld [vmem:[%s265 + $0x40] sm:$0xff]
        %v287 = vld [vmem:[%s265 + $0x48] sm:$0xff]
        %v288 = vld [vmem:[%s265 + $0x50] sm:$0xff]
        %v289 = vld [vmem:[%s265 + $0x58] sm:$0xff]
        %v290 = vld [vmem:[%s265 + $0x60] sm:$0xff]
        %v291 = vld [vmem:[%s265 + $0x68] sm:$0xff]
        %v292 = vld [vmem:[%s265 + $0x70] sm:$0xff]
        %v293 = vld [vmem:[%s265 + $0x78] sm:$0xff]
        %v294 = vld [vmem:[%s265 + $0x80] sm:$0xff]
        %v295 = vld [vmem:[%s265 + $0x88] sm:$0xff]
        %v296 = vld [vmem:[%s265 + $0x90] sm:$0xff]
        %v297 = vld [vmem:[%s265 + $0x98] sm:$0xff]
        %v298 = vld [vmem:[%s265 + $0xa0] sm:$0xff]
        %v299 = vld [vmem:[%s265 + $0xa8] sm:$0xff]
        %v300 = vld [vmem:[%s265 + $0xb0] sm:$0xff]
        %v301 = vld [vmem:[%s265 + $0xb8] sm:$0xff]
        %v302 = vld [vmem:[%s265 + $0xc0] sm:$0xff]
        %v303 = vld [vmem:[%s265 + $0xc8] sm:$0xff]
        %v304 = vld [vmem:[%s265 + $0xd0] sm:$0xff]
        %v305 = vld [vmem:[%s265 + $0xd8] sm:$0xff]
        %v306 = vld [vmem:[%s265 + $0xe0] sm:$0xff]
        %v307 = vld [vmem:[%s265 + $0xe8] sm:$0xff]
        %v308 = vld [vmem:[%s265 + $0xf0] sm:$0xff]
        %v309 = vld [vmem:[%s265 + $0xf8] sm:$0xff]
        %v310 = vld [vmem:[%s265 + $0x100] sm:$0xff]
        %v311 = vld [vmem:[%s265 + $0x108] sm:$0xff]
        %v312 = vld [vmem:[%s265 + $0x110] sm:$0xff]
        %v313 = vld [vmem:[%s265 + $0x118] sm:$0xff]
        %v314 = vld [vmem:[%s265 + $0x120] sm:$0xff]
        %v315 = vld [vmem:[%s265 + $0x128] sm:$0xff]
        %v316 = vld [vmem:[%s265 + $0x130] sm:$0xff]
        %v317 = vld [vmem:[%s265 + $0x138] sm:$0xff]
        %v318 = vld [vmem:[%s265 + $0x140] sm:$0xff]
        %v319 = vld [vmem:[%s265 + $0x148] sm:$0xff]
        %v320 = vld [vmem:[%s265 + $0x150] sm:$0xff]
        %v321 = vld [vmem:[%s265 + $0x158] sm:$0xff]
        %v322 = vld [vmem:[%s265 + $0x160] sm:$0xff]
        %v323 = vld [vmem:[%s265 + $0x168] sm:$0xff]
        %v324 = vld [vmem:[%s265 + $0x170] sm:$0xff]
        %v325 = vld [vmem:[%s265 + $0x178] sm:$0xff]
        %v326 = vld [vmem:[%s265 + $0x180] sm:$0xff]
        %v327 = vld [vmem:[%s265 + $0x188] sm:$0xff]
        %v328 = vld [vmem:[%s265 + $0x190] sm:$0xff]
        %v329 = vld [vmem:[%s265 + $0x198] sm:$0xff]
        %v330 = vld [vmem:[%s265 + $0x1a0] sm:$0xff]
        %v331 = vld [vmem:[%s265 + $0x1a8] sm:$0xff]
        %v332 = vld [vmem:[%s265 + $0x1b0] sm:$0xff]
        %v333 = vld [vmem:[%s265 + $0x1b8] sm:$0xff]
        %v334 = vld [vmem:[%s265 + $0x1c0] sm:$0xff]
        %v335 = vld [vmem:[%s265 + $0x1c8] sm:$0xff]
        %v336 = vld [vmem:[%s265 + $0x1d0] sm:$0xff]
        %v337 = vld [vmem:[%s265 + $0x1d8] sm:$0xff]
        %v338 = vld [vmem:[%s265 + $0x1e0] sm:$0xff]
        %v339 = vld [vmem:[%s265 + $0x1e8] sm:$0xff]
        %v340 = vld [vmem:[%s265 + $0x1f0] sm:$0xff]
        %v341 = vld [vmem:[%s265 + $0x1f8] sm:$0xff]
        %v342 = vld [vmem:[%s265 + $0x200] sm:$0xff]
        %v343 = vld [vmem:[%s265 + $0x208] sm:$0xff]
        %v344 = vld [vmem:[%s265 + $0x210] sm:$0xff]
        %v345 = vld [vmem:[%s265 + $0x218] sm:$0xff]
        %v346 = vld [vmem:[%s265 + $0x220] sm:$0xff]
        %v347 = vld [vmem:[%s265 + $0x228] sm:$0xff]
        %v348 = vld [vmem:[%s265 + $0x230] sm:$0xff]
        %v349 = vld [vmem:[%s265 + $0x238] sm:$0xff]
        %v350 = vld [vmem:[%s265 + $0x240] sm:$0xff]
        %v351 = vld [vmem:[%s265 + $0x248] sm:$0xff]
        %v352 = vld [vmem:[%s265 + $0x250] sm:$0xff]
        %v353 = vld [vmem:[%s265 + $0x258] sm:$0xff]
        %v354 = vld [vmem:[%s265 + $0x260] sm:$0xff]
        %v355 = vld [vmem:[%s265 + $0x268] sm:$0xff]
        %v356 = vld [vmem:[%s265 + $0x270] sm:$0xff]
        %v357 = vld [vmem:[%s265 + $0x278] sm:$0xff]
        %v358 = vld [vmem:[%s265 + $0x280] sm:$0xff]
        %v359 = vld [vmem:[%s265 + $0x288] sm:$0xff]
        %v360 = vld [vmem:[%s265 + $0x290] sm:$0xff]
        %v361 = vld [vmem:[%s265 + $0x298] sm:$0xff]
        %v362 = vld [vmem:[%s265 + $0x2a0] sm:$0xff]
        %v363 = vld [vmem:[%s265 + $0x2a8] sm:$0xff]
        %v364 = vld [vmem:[%s265 + $0x2b0] sm:$0xff]
        %v365 = vld [vmem:[%s265 + $0x2b8] sm:$0xff]
        %v366 = vld [vmem:[%s265 + $0x2c0] sm:$0xff]
        %v367 = vld [vmem:[%s265 + $0x2c8] sm:$0xff]
        %v368 = vld [vmem:[%s265 + $0x2d0] sm:$0xff]
        %v369 = vld [vmem:[%s265 + $0x2d8] sm:$0xff]
        %v370 = vld [vmem:[%s265 + $0x2e0] sm:$0xff]
        %v371 = vld [vmem:[%s265 + $0x2e8] sm:$0xff]
        %v372 = vld [vmem:[%s265 + $0x2f0] sm:$0xff]
        %v373 = vld [vmem:[%s265 + $0x2f8] sm:$0xff]
        %v374 = vld [vmem:[%s265 + $0x300] sm:$0xff]
        %v375 = vld [vmem:[%s265 + $0x308] sm:$0xff]
        %v376 = vld [vmem:[%s265 + $0x310] sm:$0xff]
        %v377 = vld [vmem:[%s265 + $0x318] sm:$0xff]
        %v378 = vld [vmem:[%s265 + $0x320] sm:$0xff]
        %v379 = vld [vmem:[%s265 + $0x328] sm:$0xff]
        %v380 = vld [vmem:[%s265 + $0x330] sm:$0xff]
        %v381 = vld [vmem:[%s265 + $0x338] sm:$0xff]
        %v382 = vld [vmem:[%s265 + $0x340] sm:$0xff]
        %v383 = vld [vmem:[%s265 + $0x348] sm:$0xff]
        %v384 = vld [vmem:[%s265 + $0x350] sm:$0xff]
        %v385 = vld [vmem:[%s265 + $0x358] sm:$0xff]
        %v386 = vld [vmem:[%s265 + $0x360] sm:$0xff]
        %v387 = vld [vmem:[%s265 + $0x368] sm:$0xff]
        %v388 = vld [vmem:[%s265 + $0x370] sm:$0xff]
        %v389 = vld [vmem:[%s265 + $0x378] sm:$0xff]
        %v390 = vld [vmem:[%s265 + $0x380] sm:$0xff]
        %v391 = vld [vmem:[%s265 + $0x388] sm:$0xff]
        %v392 = vld [vmem:[%s265 + $0x390] sm:$0xff]
        %v393 = vld [vmem:[%s265 + $0x398] sm:$0xff]
        %v394 = vld [vmem:[%s265 + $0x3a0] sm:$0xff]
        %v395 = vld [vmem:[%s265 + $0x3a8] sm:$0xff]
        %v396 = vld [vmem:[%s265 + $0x3b0] sm:$0xff]
        %v397 = vld [vmem:[%s265 + $0x3b8] sm:$0xff]
        %v398 = vld [vmem:[%s265 + $0x3c0] sm:$0xff]
        %v399 = vld [vmem:[%s265 + $0x3c8] sm:$0xff]
        %v400 = vld [vmem:[%s265 + $0x3d0] sm:$0xff]
        %v401 = vld [vmem:[%s265 + $0x3d8] sm:$0xff]
        %v402 = vld [vmem:[%s265 + $0x3e0] sm:$0xff]
        %v403 = vld [vmem:[%s265 + $0x3e8] sm:$0xff]
        %v404 = vld [vmem:[%s265 + $0x3f0] sm:$0xff]
        %v405 = vld [vmem:[%s265 + $0x3f8] sm:$0xff]
        %v406 = vld [vmem:[#allocation2] sm:$0xf]
        %v407 = vld [vmem:[#allocation3] sm:$0xf]
        %s408 = smul.u32 %s17, 7
        %s409 = smul.u32 %s408, 8
        %s410 = scalar_lea.vmem %s232, %s409 [#allocation4]
        %v411 = vld [vmem:[%s410] sm:$0xff]
        %v412 = vunpack.c.l.bf16 %v411
        %v413 = vunpack.c.h.bf16 %v411
        %v416 = vunpack.c.l.s4 1983009808
        %v417 = vunpack.c.0.s8 %v416
        %v418 = vlaneseq
        %v419 = vshrl.u32 %v418, 7
        %v420 = vsub.s32 %v417, %v419
        %v421 = vrot.slane %v406, %v420
        %v422 = vcombine.high %v421, %v421
        %v425 = vpack.c.bf16 %v421, %v421
        %v426 = vpack.c.bf16 %v422, %v422
        %v555 = vunpack.c.l.b16 %v278
        %v556 = vunpack.c.h.b16 %v278
        %v557 = vunpack.c.l.b16 %v279
        %v558 = vunpack.c.h.b16 %v279
        %v559 = vunpack.c.l.b16 %v280
        %v560 = vunpack.c.h.b16 %v280
        %v561 = vunpack.c.l.b16 %v281
        %v562 = vunpack.c.h.b16 %v281
        %v563 = vunpack.c.l.b16 %v282
        %v564 = vunpack.c.h.b16 %v282
        %v565 = vunpack.c.l.b16 %v283
        %v566 = vunpack.c.h.b16 %v283
        %v567 = vunpack.c.l.b16 %v284
        %v568 = vunpack.c.h.b16 %v284
        %v569 = vunpack.c.l.b16 %v285
        %v570 = vunpack.c.h.b16 %v285
        %v571 = vunpack.c.l.b16 %v286
        %v572 = vunpack.c.h.b16 %v286
        %v573 = vunpack.c.l.b16 %v287
        %v574 = vunpack.c.h.b16 %v287
        %v575 = vunpack.c.l.b16 %v288
        %v576 = vunpack.c.h.b16 %v288
        %v577 = vunpack.c.l.b16 %v289
        %v578 = vunpack.c.h.b16 %v289
        %v579 = vunpack.c.l.b16 %v290
        %v580 = vunpack.c.h.b16 %v290
        %v581 = vunpack.c.l.b16 %v291
        %v582 = vunpack.c.h.b16 %v291
        %v583 = vunpack.c.l.b16 %v292
        %v584 = vunpack.c.h.b16 %v292
        %v585 = vunpack.c.l.b16 %v293
        %v586 = vunpack.c.h.b16 %v293
        %v587 = vunpack.c.l.b16 %v294
        %v588 = vunpack.c.h.b16 %v294
        %v589 = vunpack.c.l.b16 %v295
        %v590 = vunpack.c.h.b16 %v295
        %v591 = vunpack.c.l.b16 %v296
        %v592 = vunpack.c.h.b16 %v296
        %v593 = vunpack.c.l.b16 %v297
        %v594 = vunpack.c.h.b16 %v297
        %v595 = vunpack.c.l.b16 %v298
        %v596 = vunpack.c.h.b16 %v298
        %v597 = vunpack.c.l.b16 %v299
        %v598 = vunpack.c.h.b16 %v299
        %v599 = vunpack.c.l.b16 %v300
        %v600 = vunpack.c.h.b16 %v300
        %v601 = vunpack.c.l.b16 %v301
        %v602 = vunpack.c.h.b16 %v301
        %v603 = vunpack.c.l.b16 %v302
        %v604 = vunpack.c.h.b16 %v302
        %v605 = vunpack.c.l.b16 %v303
        %v606 = vunpack.c.h.b16 %v303
        %v607 = vunpack.c.l.b16 %v304
        %v608 = vunpack.c.h.b16 %v304
        %v609 = vunpack.c.l.b16 %v305
        %v610 = vunpack.c.h.b16 %v305
        %v611 = vunpack.c.l.b16 %v306
        %v612 = vunpack.c.h.b16 %v306
        %v613 = vunpack.c.l.b16 %v307
        %v614 = vunpack.c.h.b16 %v307
        %v615 = vunpack.c.l.b16 %v308
        %v616 = vunpack.c.h.b16 %v308
        %v617 = vunpack.c.l.b16 %v309
        %v618 = vunpack.c.h.b16 %v309
        %v619 = vunpack.c.l.b16 %v310
        %v620 = vunpack.c.h.b16 %v310
        %v621 = vunpack.c.l.b16 %v311
        %v622 = vunpack.c.h.b16 %v311
        %v623 = vunpack.c.l.b16 %v312
        %v624 = vunpack.c.h.b16 %v312
        %v625 = vunpack.c.l.b16 %v313
        %v626 = vunpack.c.h.b16 %v313
        %v627 = vunpack.c.l.b16 %v314
        %v628 = vunpack.c.h.b16 %v314
        %v629 = vunpack.c.l.b16 %v315
        %v630 = vunpack.c.h.b16 %v315
        %v631 = vunpack.c.l.b16 %v316
        %v632 = vunpack.c.h.b16 %v316
        %v633 = vunpack.c.l.b16 %v317
        %v634 = vunpack.c.h.b16 %v317
        %v635 = vunpack.c.l.b16 %v318
        %v636 = vunpack.c.h.b16 %v318
        %v637 = vunpack.c.l.b16 %v319
        %v638 = vunpack.c.h.b16 %v319
        %v639 = vunpack.c.l.b16 %v320
        %v640 = vunpack.c.h.b16 %v320
        %v641 = vunpack.c.l.b16 %v321
        %v642 = vunpack.c.h.b16 %v321
        %v643 = vunpack.c.l.b16 %v322
        %v644 = vunpack.c.h.b16 %v322
        %v645 = vunpack.c.l.b16 %v323
        %v646 = vunpack.c.h.b16 %v323
        %v647 = vunpack.c.l.b16 %v324
        %v648 = vunpack.c.h.b16 %v324
        %v649 = vunpack.c.l.b16 %v325
        %v650 = vunpack.c.h.b16 %v325
        %v651 = vunpack.c.l.b16 %v326
        %v652 = vunpack.c.h.b16 %v326
        %v653 = vunpack.c.l.b16 %v327
        %v654 = vunpack.c.h.b16 %v327
        %v655 = vunpack.c.l.b16 %v328
        %v656 = vunpack.c.h.b16 %v328
        %v657 = vunpack.c.l.b16 %v329
        %v658 = vunpack.c.h.b16 %v329
        %v659 = vunpack.c.l.b16 %v330
        %v660 = vunpack.c.h.b16 %v330
        %v661 = vunpack.c.l.b16 %v331
        %v662 = vunpack.c.h.b16 %v331
        %v663 = vunpack.c.l.b16 %v332
        %v664 = vunpack.c.h.b16 %v332
        %v665 = vunpack.c.l.b16 %v333
        %v666 = vunpack.c.h.b16 %v333
        %v667 = vunpack.c.l.b16 %v334
        %v668 = vunpack.c.h.b16 %v334
        %v669 = vunpack.c.l.b16 %v335
        %v670 = vunpack.c.h.b16 %v335
        %v671 = vunpack.c.l.b16 %v336
        %v672 = vunpack.c.h.b16 %v336
        %v673 = vunpack.c.l.b16 %v337
        %v674 = vunpack.c.h.b16 %v337
        %v675 = vunpack.c.l.b16 %v338
        %v676 = vunpack.c.h.b16 %v338
        %v677 = vunpack.c.l.b16 %v339
        %v678 = vunpack.c.h.b16 %v339
        %v679 = vunpack.c.l.b16 %v340
        %v680 = vunpack.c.h.b16 %v340
        %v681 = vunpack.c.l.b16 %v341
        %v682 = vunpack.c.h.b16 %v341
        %v683 = vunpack.c.l.b16 %v342
        %v684 = vunpack.c.h.b16 %v342
        %v685 = vunpack.c.l.b16 %v343
        %v686 = vunpack.c.h.b16 %v343
        %v687 = vunpack.c.l.b16 %v344
        %v688 = vunpack.c.h.b16 %v344
        %v689 = vunpack.c.l.b16 %v345
        %v690 = vunpack.c.h.b16 %v345
        %v691 = vunpack.c.l.b16 %v346
        %v692 = vunpack.c.h.b16 %v346
        %v693 = vunpack.c.l.b16 %v347
        %v694 = vunpack.c.h.b16 %v347
        %v695 = vunpack.c.l.b16 %v348
        %v696 = vunpack.c.h.b16 %v348
        %v697 = vunpack.c.l.b16 %v349
        %v698 = vunpack.c.h.b16 %v349
        %v699 = vunpack.c.l.b16 %v350
        %v700 = vunpack.c.h.b16 %v350
        %v701 = vunpack.c.l.b16 %v351
        %v702 = vunpack.c.h.b16 %v351
        %v703 = vunpack.c.l.b16 %v352
        %v704 = vunpack.c.h.b16 %v352
        %v705 = vunpack.c.l.b16 %v353
        %v706 = vunpack.c.h.b16 %v353
        %v707 = vunpack.c.l.b16 %v354
        %v708 = vunpack.c.h.b16 %v354
        %v709 = vunpack.c.l.b16 %v355
        %v710 = vunpack.c.h.b16 %v355
        %v711 = vunpack.c.l.b16 %v356
        %v712 = vunpack.c.h.b16 %v356
        %v713 = vunpack.c.l.b16 %v357
        %v714 = vunpack.c.h.b16 %v357
        %v715 = vunpack.c.l.b16 %v358
        %v716 = vunpack.c.h.b16 %v358
        %v717 = vunpack.c.l.b16 %v359
        %v718 = vunpack.c.h.b16 %v359
        %v719 = vunpack.c.l.b16 %v360
        %v720 = vunpack.c.h.b16 %v360
        %v721 = vunpack.c.l.b16 %v361
        %v722 = vunpack.c.h.b16 %v361
        %v723 = vunpack.c.l.b16 %v362
        %v724 = vunpack.c.h.b16 %v362
        %v725 = vunpack.c.l.b16 %v363
        %v726 = vunpack.c.h.b16 %v363
        %v727 = vunpack.c.l.b16 %v364
        %v728 = vunpack.c.h.b16 %v364
        %v729 = vunpack.c.l.b16 %v365
        %v730 = vunpack.c.h.b16 %v365
        %v731 = vunpack.c.l.b16 %v366
        %v732 = vunpack.c.h.b16 %v366
        %v733 = vunpack.c.l.b16 %v367
        %v734 = vunpack.c.h.b16 %v367
        %v735 = vunpack.c.l.b16 %v368
        %v736 = vunpack.c.h.b16 %v368
        %v737 = vunpack.c.l.b16 %v369
        %v738 = vunpack.c.h.b16 %v369
        %v739 = vunpack.c.l.b16 %v370
        %v740 = vunpack.c.h.b16 %v370
        %v741 = vunpack.c.l.b16 %v371
        %v742 = vunpack.c.h.b16 %v371
        %v743 = vunpack.c.l.b16 %v372
        %v744 = vunpack.c.h.b16 %v372
        %v745 = vunpack.c.l.b16 %v373
        %v746 = vunpack.c.h.b16 %v373
        %v747 = vunpack.c.l.b16 %v374
        %v748 = vunpack.c.h.b16 %v374
        %v749 = vunpack.c.l.b16 %v375
        %v750 = vunpack.c.h.b16 %v375
        %v751 = vunpack.c.l.b16 %v376
        %v752 = vunpack.c.h.b16 %v376
        %v753 = vunpack.c.l.b16 %v377
        %v754 = vunpack.c.h.b16 %v377
        %v755 = vunpack.c.l.b16 %v378
        %v756 = vunpack.c.h.b16 %v378
        %v757 = vunpack.c.l.b16 %v379
        %v758 = vunpack.c.h.b16 %v379
        %v759 = vunpack.c.l.b16 %v380
        %v760 = vunpack.c.h.b16 %v380
        %v761 = vunpack.c.l.b16 %v381
        %v762 = vunpack.c.h.b16 %v381
        %v763 = vunpack.c.l.b16 %v382
        %v764 = vunpack.c.h.b16 %v382
        %v765 = vunpack.c.l.b16 %v383
        %v766 = vunpack.c.h.b16 %v383
        %v767 = vunpack.c.l.b16 %v384
        %v768 = vunpack.c.h.b16 %v384
        %v769 = vunpack.c.l.b16 %v385
        %v770 = vunpack.c.h.b16 %v385
        %v771 = vunpack.c.l.b16 %v386
        %v772 = vunpack.c.h.b16 %v386
        %v773 = vunpack.c.l.b16 %v387
        %v774 = vunpack.c.h.b16 %v387
        %v775 = vunpack.c.l.b16 %v388
        %v776 = vunpack.c.h.b16 %v388
        %v777 = vunpack.c.l.b16 %v389
        %v778 = vunpack.c.h.b16 %v389
        %v779 = vunpack.c.l.b16 %v390
        %v780 = vunpack.c.h.b16 %v390
        %v781 = vunpack.c.l.b16 %v391
        %v782 = vunpack.c.h.b16 %v391
        %v783 = vunpack.c.l.b16 %v392
        %v784 = vunpack.c.h.b16 %v392
        %v785 = vunpack.c.l.b16 %v393
        %v786 = vunpack.c.h.b16 %v393
        %v787 = vunpack.c.l.b16 %v394
        %v788 = vunpack.c.h.b16 %v394
        %v789 = vunpack.c.l.b16 %v395
        %v790 = vunpack.c.h.b16 %v395
        %v791 = vunpack.c.l.b16 %v396
        %v792 = vunpack.c.h.b16 %v396
        %v793 = vunpack.c.l.b16 %v397
        %v794 = vunpack.c.h.b16 %v397
        %v795 = vunpack.c.l.b16 %v398
        %v796 = vunpack.c.h.b16 %v398
        %v797 = vunpack.c.l.b16 %v399
        %v798 = vunpack.c.h.b16 %v399
        %v799 = vunpack.c.l.b16 %v400
        %v800 = vunpack.c.h.b16 %v400
        %v801 = vunpack.c.l.b16 %v401
        %v802 = vunpack.c.h.b16 %v401
        %v803 = vunpack.c.l.b16 %v402
        %v804 = vunpack.c.h.b16 %v402
        %v805 = vunpack.c.l.b16 %v403
        %v806 = vunpack.c.h.b16 %v403
        %v807 = vunpack.c.l.b16 %v404
        %v808 = vunpack.c.h.b16 %v404
        %v809 = vunpack.c.l.b16 %v405
        %v810 = vunpack.c.h.b16 %v405
        %v811 = vpack.c.b16 %v563, %v555
        %v812 = vpack.c.b16 %v564, %v556
        %v813 = vpack.c.b16 %v565, %v557
        %v814 = vpack.c.b16 %v566, %v558
        %v815 = vpack.c.b16 %v567, %v559
        %v816 = vpack.c.b16 %v568, %v560
        %v817 = vpack.c.b16 %v569, %v561
        %v818 = vpack.c.b16 %v570, %v562
        %v819 = vpack.c.b16 %v579, %v571
        %v820 = vpack.c.b16 %v580, %v572
        %v821 = vpack.c.b16 %v581, %v573
        %v822 = vpack.c.b16 %v582, %v574
        %v823 = vpack.c.b16 %v583, %v575
        %v824 = vpack.c.b16 %v584, %v576
        %v825 = vpack.c.b16 %v585, %v577
        %v826 = vpack.c.b16 %v586, %v578
        %v827 = vpack.c.b16 %v595, %v587
        %v828 = vpack.c.b16 %v596, %v588
        %v829 = vpack.c.b16 %v597, %v589
        %v830 = vpack.c.b16 %v598, %v590
        %v831 = vpack.c.b16 %v599, %v591
        %v832 = vpack.c.b16 %v600, %v592
        %v833 = vpack.c.b16 %v601, %v593
        %v834 = vpack.c.b16 %v602, %v594
        %v835 = vpack.c.b16 %v611, %v603
        %v836 = vpack.c.b16 %v612, %v604
        %v837 = vpack.c.b16 %v613, %v605
        %v838 = vpack.c.b16 %v614, %v606
        %v839 = vpack.c.b16 %v615, %v607
        %v840 = vpack.c.b16 %v616, %v608
        %v841 = vpack.c.b16 %v617, %v609
        %v842 = vpack.c.b16 %v618, %v610
        %v843 = vpack.c.b16 %v627, %v619
        %v844 = vpack.c.b16 %v628, %v620
        %v845 = vpack.c.b16 %v629, %v621
        %v846 = vpack.c.b16 %v630, %v622
        %v847 = vpack.c.b16 %v631, %v623
        %v848 = vpack.c.b16 %v632, %v624
        %v849 = vpack.c.b16 %v633, %v625
        %v850 = vpack.c.b16 %v634, %v626
        %v851 = vpack.c.b16 %v643, %v635
        %v852 = vpack.c.b16 %v644, %v636
        %v853 = vpack.c.b16 %v645, %v637
        %v854 = vpack.c.b16 %v646, %v638
        %v855 = vpack.c.b16 %v647, %v639
        %v856 = vpack.c.b16 %v648, %v640
        %v857 = vpack.c.b16 %v649, %v641
        %v858 = vpack.c.b16 %v650, %v642
        %v859 = vpack.c.b16 %v659, %v651
        %v860 = vpack.c.b16 %v660, %v652
        %v861 = vpack.c.b16 %v661, %v653
        %v862 = vpack.c.b16 %v662, %v654
        %v863 = vpack.c.b16 %v663, %v655
        %v864 = vpack.c.b16 %v664, %v656
        %v865 = vpack.c.b16 %v665, %v657
        %v866 = vpack.c.b16 %v666, %v658
        %v867 = vpack.c.b16 %v675, %v667
        %v868 = vpack.c.b16 %v676, %v668
        %v869 = vpack.c.b16 %v677, %v669
        %v870 = vpack.c.b16 %v678, %v670
        %v871 = vpack.c.b16 %v679, %v671
        %v872 = vpack.c.b16 %v680, %v672
        %v873 = vpack.c.b16 %v681, %v673
        %v874 = vpack.c.b16 %v682, %v674
        %v875 = vpack.c.b16 %v691, %v683
        %v876 = vpack.c.b16 %v692, %v684
        %v877 = vpack.c.b16 %v693, %v685
        %v878 = vpack.c.b16 %v694, %v686
        %v879 = vpack.c.b16 %v695, %v687
        %v880 = vpack.c.b16 %v696, %v688
        %v881 = vpack.c.b16 %v697, %v689
        %v882 = vpack.c.b16 %v698, %v690
        %v883 = vpack.c.b16 %v707, %v699
        %v884 = vpack.c.b16 %v708, %v700
        %v885 = vpack.c.b16 %v709, %v701
        %v886 = vpack.c.b16 %v710, %v702
        %v887 = vpack.c.b16 %v711, %v703
        %v888 = vpack.c.b16 %v712, %v704
        %v889 = vpack.c.b16 %v713, %v705
        %v890 = vpack.c.b16 %v714, %v706
        %v891 = vpack.c.b16 %v723, %v715
        %v892 = vpack.c.b16 %v724, %v716
        %v893 = vpack.c.b16 %v725, %v717
        %v894 = vpack.c.b16 %v726, %v718
        %v895 = vpack.c.b16 %v727, %v719
        %v896 = vpack.c.b16 %v728, %v720
        %v897 = vpack.c.b16 %v729, %v721
        %v898 = vpack.c.b16 %v730, %v722
        %v899 = vpack.c.b16 %v739, %v731
        %v900 = vpack.c.b16 %v740, %v732
        %v901 = vpack.c.b16 %v741, %v733
        %v902 = vpack.c.b16 %v742, %v734
        %v903 = vpack.c.b16 %v743, %v735
        %v904 = vpack.c.b16 %v744, %v736
        %v905 = vpack.c.b16 %v745, %v737
        %v906 = vpack.c.b16 %v746, %v738
        %v907 = vpack.c.b16 %v755, %v747
        %v908 = vpack.c.b16 %v756, %v748
        %v909 = vpack.c.b16 %v757, %v749
        %v910 = vpack.c.b16 %v758, %v750
        %v911 = vpack.c.b16 %v759, %v751
        %v912 = vpack.c.b16 %v760, %v752
        %v913 = vpack.c.b16 %v761, %v753
        %v914 = vpack.c.b16 %v762, %v754
        %v915 = vpack.c.b16 %v771, %v763
        %v916 = vpack.c.b16 %v772, %v764
        %v917 = vpack.c.b16 %v773, %v765
        %v918 = vpack.c.b16 %v774, %v766
        %v919 = vpack.c.b16 %v775, %v767
        %v920 = vpack.c.b16 %v776, %v768
        %v921 = vpack.c.b16 %v777, %v769
        %v922 = vpack.c.b16 %v778, %v770
        %v923 = vpack.c.b16 %v787, %v779
        %v924 = vpack.c.b16 %v788, %v780
        %v925 = vpack.c.b16 %v789, %v781
        %v926 = vpack.c.b16 %v790, %v782
        %v927 = vpack.c.b16 %v791, %v783
        %v928 = vpack.c.b16 %v792, %v784
        %v929 = vpack.c.b16 %v793, %v785
        %v930 = vpack.c.b16 %v794, %v786
        %v931 = vpack.c.b16 %v803, %v795
        %v932 = vpack.c.b16 %v804, %v796
        %v933 = vpack.c.b16 %v805, %v797
        %v934 = vpack.c.b16 %v806, %v798
        %v935 = vpack.c.b16 %v807, %v799
        %v936 = vpack.c.b16 %v808, %v800
        %v937 = vpack.c.b16 %v809, %v801
        %v938 = vpack.c.b16 %v810, %v802
        %1067 = vmatprep.subr.bf16.mxu0 %v868
        %1068 = vmatpush1.bf16.msra.mxu0 %v867
        %1069 = vmatprep.subr.bf16.mxu0 %v860
        %1070 = vmatpush1.bf16.msra.mxu0 %v859
        %1071 = vmatprep.subr.bf16.mxu0 %v852
        %1072 = vmatpush1.bf16.msra.mxu0 %v851
        %1073 = vmatprep.subr.bf16.mxu0 %v844
        %1074 = vmatpush1.bf16.msra.mxu0 %v843
        %1075 = vmatprep.subr.bf16.mxu0 %v836
        %1076 = vmatpush1.bf16.msra.mxu0 %v835
        %1077 = vmatprep.subr.bf16.mxu0 %v828
        %1078 = vmatpush1.bf16.msra.mxu0 %v827
        %1079 = vmatprep.subr.bf16.mxu0 %v820
        %1080 = vmatpush1.bf16.msra.mxu0 %v819
        %1081 = vmatprep.subr.bf16.mxu0 %v812
        %1082 = vmatpush1.bf16.msra.mxu0 %v811
        %1083 = vmatprep.subr.bf16.mxu0 %v932
        %1084 = vmatpush2.bf16.msra.mxu0 %v931
        %1085 = vmatprep.subr.bf16.mxu0 %v924
        %1086 = vmatpush2.bf16.msra.mxu0 %v923
        %1087 = vmatprep.subr.bf16.mxu0 %v916
        %1088 = vmatpush2.bf16.msra.mxu0 %v915
        %1089 = vmatprep.subr.bf16.mxu0 %v908
        %1090 = vmatpush2.bf16.msra.mxu0 %v907
        %1091 = vmatprep.subr.bf16.mxu0 %v900
        %1092 = vmatpush2.bf16.msra.mxu0 %v899
        %1093 = vmatprep.subr.bf16.mxu0 %v892
        %1094 = vmatpush2.bf16.msra.mxu0 %v891
        %1095 = vmatprep.subr.bf16.mxu0 %v884
        %1096 = vmatpush2.bf16.msra.mxu0 %v883
        %1097 = vmatprep.subr.bf16.mxu0 %v876
        %1098 = vmatpush2.bf16.msra.mxu0 %v875
        %1099 = vmatprep.mubr.bf16.mxu0 %v426
        %1100 = vmatmul.mubr.bf16.gmra.mxu0 %v425
        %v1101 = vpop.f32.mrf.mxu0
        %v1102 = vadd.f32 0.0, %v1101
        %v1103 = vpop.f32.mrf.mxu0
        %v1104 = vadd.f32 0.0, %v1103
        %v1105 = vpop.f32.mrf.mxu0
        %v1106 = vpop.f32.mrf.mxu0
        %1107 = vdwg.mxu0
        %1108 = vmatprep.subr.bf16.mxu0 %v870
        %1109 = vmatpush1.bf16.msra.mxu0 %v869
        %1110 = vmatprep.subr.bf16.mxu0 %v862
        %1111 = vmatpush1.bf16.msra.mxu0 %v861
        %1112 = vmatprep.subr.bf16.mxu0 %v854
        %1113 = vmatpush1.bf16.msra.mxu0 %v853
        %1114 = vmatprep.subr.bf16.mxu0 %v846
        %1115 = vmatpush1.bf16.msra.mxu0 %v845
        %1116 = vmatprep.subr.bf16.mxu0 %v838
        %1117 = vmatpush1.bf16.msra.mxu0 %v837
        %1118 = vmatprep.subr.bf16.mxu0 %v830
        %1119 = vmatpush1.bf16.msra.mxu0 %v829
        %1120 = vmatprep.subr.bf16.mxu0 %v822
        %1121 = vmatpush1.bf16.msra.mxu0 %v821
        %1122 = vmatprep.subr.bf16.mxu0 %v814
        %1123 = vmatpush1.bf16.msra.mxu0 %v813
        %1124 = vmatprep.subr.bf16.mxu0 %v934
        %1125 = vmatpush2.bf16.msra.mxu0 %v933
        %1126 = vmatprep.subr.bf16.mxu0 %v926
        %1127 = vmatpush2.bf16.msra.mxu0 %v925
        %1128 = vmatprep.subr.bf16.mxu0 %v918
        %1129 = vmatpush2.bf16.msra.mxu0 %v917
        %1130 = vmatprep.subr.bf16.mxu0 %v910
        %1131 = vmatpush2.bf16.msra.mxu0 %v909
        %1132 = vmatprep.subr.bf16.mxu0 %v902
        %1133 = vmatpush2.bf16.msra.mxu0 %v901
        %1134 = vmatprep.subr.bf16.mxu0 %v894
        %1135 = vmatpush2.bf16.msra.mxu0 %v893
        %1136 = vmatprep.subr.bf16.mxu0 %v886
        %1137 = vmatpush2.bf16.msra.mxu0 %v885
        %1138 = vmatprep.subr.bf16.mxu0 %v878
        %1139 = vmatpush2.bf16.msra.mxu0 %v877
        %1140 = vmatprep.mubr.bf16.mxu0 %v426
        %1141 = vmatmul.mubr.bf16.gmra.mxu0 %v425
        %v1142 = vpop.f32.mrf.mxu0
        %v1143 = vadd.f32 0.0, %v1142
        %v1144 = vpop.f32.mrf.mxu0
        %v1145 = vadd.f32 0.0, %v1144
        %v1146 = vpop.f32.mrf.mxu0
        %v1147 = vpop.f32.mrf.mxu0
        %1148 = vdwg.mxu0
        %1149 = vmatprep.subr.bf16.mxu0 %v872
        %1150 = vmatpush1.bf16.msra.mxu0 %v871
        %1151 = vmatprep.subr.bf16.mxu0 %v864
        %1152 = vmatpush1.bf16.msra.mxu0 %v863
        %1153 = vmatprep.subr.bf16.mxu0 %v856
        %1154 = vmatpush1.bf16.msra.mxu0 %v855
        %1155 = vmatprep.subr.bf16.mxu0 %v848
        %1156 = vmatpush1.bf16.msra.mxu0 %v847
        %1157 = vmatprep.subr.bf16.mxu0 %v840
        %1158 = vmatpush1.bf16.msra.mxu0 %v839
        %1159 = vmatprep.subr.bf16.mxu0 %v832
        %1160 = vmatpush1.bf16.msra.mxu0 %v831
        %1161 = vmatprep.subr.bf16.mxu0 %v824
        %1162 = vmatpush1.bf16.msra.mxu0 %v823
        %1163 = vmatprep.subr.bf16.mxu0 %v816
        %1164 = vmatpush1.bf16.msra.mxu0 %v815
        %1165 = vmatprep.subr.bf16.mxu0 %v936
        %1166 = vmatpush2.bf16.msra.mxu0 %v935
        %1167 = vmatprep.subr.bf16.mxu0 %v928
        %1168 = vmatpush2.bf16.msra.mxu0 %v927
        %1169 = vmatprep.subr.bf16.mxu0 %v920
        %1170 = vmatpush2.bf16.msra.mxu0 %v919
        %1171 = vmatprep.subr.bf16.mxu0 %v912
        %1172 = vmatpush2.bf16.msra.mxu0 %v911
        %1173 = vmatprep.subr.bf16.mxu0 %v904
        %1174 = vmatpush2.bf16.msra.mxu0 %v903
        %1175 = vmatprep.subr.bf16.mxu0 %v896
        %1176 = vmatpush2.bf16.msra.mxu0 %v895
        %1177 = vmatprep.subr.bf16.mxu0 %v888
        %1178 = vmatpush2.bf16.msra.mxu0 %v887
        %1179 = vmatprep.subr.bf16.mxu0 %v880
        %1180 = vmatpush2.bf16.msra.mxu0 %v879
        %1181 = vmatprep.mubr.bf16.mxu0 %v426
        %1182 = vmatmul.mubr.bf16.gmra.mxu0 %v425
        %v1183 = vpop.f32.mrf.mxu0
        %v1184 = vadd.f32 0.0, %v1183
        %v1185 = vpop.f32.mrf.mxu0
        %v1186 = vadd.f32 0.0, %v1185
        %v1187 = vpop.f32.mrf.mxu0
        %v1188 = vpop.f32.mrf.mxu0
        %1189 = vdwg.mxu0
        %1190 = vmatprep.subr.bf16.mxu0 %v874
        %1191 = vmatpush1.bf16.msra.mxu0 %v873
        %1192 = vmatprep.subr.bf16.mxu0 %v866
        %1193 = vmatpush1.bf16.msra.mxu0 %v865
        %1194 = vmatprep.subr.bf16.mxu0 %v858
        %1195 = vmatpush1.bf16.msra.mxu0 %v857
        %1196 = vmatprep.subr.bf16.mxu0 %v850
        %1197 = vmatpush1.bf16.msra.mxu0 %v849
        %1198 = vmatprep.subr.bf16.mxu0 %v842
        %1199 = vmatpush1.bf16.msra.mxu0 %v841
        %1200 = vmatprep.subr.bf16.mxu0 %v834
        %1201 = vmatpush1.bf16.msra.mxu0 %v833
        %1202 = vmatprep.subr.bf16.mxu0 %v826
        %1203 = vmatpush1.bf16.msra.mxu0 %v825
        %1204 = vmatprep.subr.bf16.mxu0 %v818
        %1205 = vmatpush1.bf16.msra.mxu0 %v817
        %1206 = vmatprep.subr.bf16.mxu0 %v938
        %1207 = vmatpush2.bf16.msra.mxu0 %v937
        %1208 = vmatprep.subr.bf16.mxu0 %v930
        %1209 = vmatpush2.bf16.msra.mxu0 %v929
        %1210 = vmatprep.subr.bf16.mxu0 %v922
        %1211 = vmatpush2.bf16.msra.mxu0 %v921
        %1212 = vmatprep.subr.bf16.mxu0 %v914
        %1213 = vmatpush2.bf16.msra.mxu0 %v913
        %1214 = vmatprep.subr.bf16.mxu0 %v906
        %1215 = vmatpush2.bf16.msra.mxu0 %v905
        %1216 = vmatprep.subr.bf16.mxu0 %v898
        %1217 = vmatpush2.bf16.msra.mxu0 %v897
        %1218 = vmatprep.subr.bf16.mxu0 %v890
        %1219 = vmatpush2.bf16.msra.mxu0 %v889
        %1220 = vmatprep.subr.bf16.mxu0 %v882
        %1221 = vmatpush2.bf16.msra.mxu0 %v881
        %1222 = vmatprep.mubr.bf16.mxu0 %v426
        %1223 = vmatmul.mubr.bf16.gmra.mxu0 %v425
        %v1224 = vpop.f32.mrf.mxu0
        %v1225 = vadd.f32 0.0, %v1224
        %v1226 = vpop.f32.mrf.mxu0
        %v1227 = vadd.f32 0.0, %v1226
        %v1228 = vpop.f32.mrf.mxu0
        %v1229 = vpop.f32.mrf.mxu0
        %1230 = vdwg.mxu0
        %v1239 = vcombine.low %v1102, %v1104
        %v1240 = vcombine.low %v1143, %v1145
        %v1242 = vunpack.c.l.s4 1983009808
        %v1243 = vunpack.c.0.s8 %v1242
        %v1244 = vlaneseq
        %v1245 = vshrl.u32 %v1244, 7
        %v1246 = vsub.s32 %v1243, %v1245
        %v1247 = vrot.slane %v1239, %v1246
        %v1249 = vunpack.c.l.s4 1983009808
        %v1250 = vunpack.c.0.s8 %v1249
        %v1251 = vlaneseq
        %v1252 = vshrl.u32 %v1251, 7
        %v1253 = vsub.s32 %v1250, %v1252
        %v1254 = vrot.slane %v1240, %v1253
        %v1255 = vcombine.low %v1247, %v1254
        %v1256 = vcombine.low %v1184, %v1186
        %v1257 = vcombine.low %v1225, %v1227
        %v1259 = vunpack.c.l.s4 1983009808
        %v1260 = vunpack.c.0.s8 %v1259
        %v1261 = vlaneseq
        %v1262 = vshrl.u32 %v1261, 7
        %v1263 = vsub.s32 %v1260, %v1262
        %v1264 = vrot.slane %v1256, %v1263
        %v1266 = vunpack.c.l.s4 1983009808
        %v1267 = vunpack.c.0.s8 %v1266
        %v1268 = vlaneseq
        %v1269 = vshrl.u32 %v1268, 7
        %v1270 = vsub.s32 %v1267, %v1269
        %v1271 = vrot.slane %v1257, %v1270
        %v1272 = vcombine.low %v1264, %v1271
        %v1275 = vadd.f32 %v412, %v1255
        %v1276 = vadd.f32 %v413, %v1272
        %v1277 = vmul.f32 %v1275, 0.5
        %v1278 = vtanh.pop %v1277
        %v1279 = vadd.f32 %v1278, 1.0
        %v1280 = vmul.f32 %v1279, 0.5
        %v1282 = vrot.slane %v1275, 4
        %v1284 = vmul.f32 %v1282, 0.5
        %v1285 = vtanh.pop %v1284
        %v1286 = vadd.f32 %v1285, 1.0
        %v1287 = vmul.f32 %v1286, 0.5
        %v1288 = vtanh.pop %v1276
        %v1290 = vrot.slane %v1276, 4
        %v1292 = vmul.f32 %v1290, 0.5
        %v1293 = vtanh.pop %v1292
        %v1294 = vadd.f32 %v1293, 1.0
        %v1295 = vmul.f32 %v1294, 0.5
        %v1296 = vmul.f32 %v1287, %v407
        %v1297 = vmul.f32 %v1280, %v1288
        %v1298 = vadd.f32 %v1296, %v1297
        %v1299 = vtanh.pop %v1298
        %v1300 = vmul.f32 %v1295, %v1299
        %v1303 = vunpack.c.l.s4 1983009808
        %v1304 = vunpack.c.0.s8 %v1303
        %v1305 = vlaneseq
        %v1306 = vshrl.u32 %v1305, 7
        %v1307 = vsub.s32 %v1304, %v1306
        %v1308 = vrot.slane %v1300, %v1307
        %v1309 = vcombine.high %v1308, %v1308
        %v1312 = vpack.c.bf16 %v1308, %v1308
        %v1313 = vpack.c.bf16 %v1309, %v1309
        %v1316 = vcombine.low %v1312, %v1313
        %v1318 = vunpack.c.l.s4 1966171168
        %v1319 = vunpack.c.0.s8 %v1318
        %v1320 = vlaneseq
        %v1321 = vshrl.u32 %v1320, 7
        %v1322 = vsub.s32 %v1319, %v1321
        %v1323 = vrot.slane %v1316, %v1322
        %v1325 = vunpack.c.l.s4 1966171168
        %v1326 = vunpack.c.0.s8 %v1325
        %v1327 = vlaneseq
        %v1328 = vshrl.u32 %v1327, 7
        %v1329 = vsub.s32 %v1326, %v1328
        %v1330 = vrot.slane %v1323, %v1329
        %s1332 = smul.u32 %s408, 2
        %s1333 = scalar_lea.vmem %s254, %s1332 [#allocation5]
        %1334 = vst [vmem:[%s1333] sm:$0x3] %v1330
        %s1335 = smul.u32 %s17, 5
        %s1336 = sadd.s32 %s1335, 1
        %s1337 = smul.u32 %s1336, 8
        %s1338 = scalar_lea.vmem %s232, %s1337 [#allocation4]
        %v1339 = vld [vmem:[%s1338] sm:$0xff]
        %v1340 = vunpack.c.l.bf16 %v1339
        %v1341 = vunpack.c.h.bf16 %v1339
        %1342 = vmatprep.subr.bf16.mxu0 %v868
        %1343 = vmatpush1.bf16.msra.mxu0 %v867
        %1344 = vmatprep.subr.bf16.mxu0 %v860
        %1345 = vmatpush1.bf16.msra.mxu0 %v859
        %1346 = vmatprep.subr.bf16.mxu0 %v852
        %1347 = vmatpush1.bf16.msra.mxu0 %v851
        %1348 = vmatprep.subr.bf16.mxu0 %v844
        %1349 = vmatpush1.bf16.msra.mxu0 %v843
        %1350 = vmatprep.subr.bf16.mxu0 %v836
        %1351 = vmatpush1.bf16.msra.mxu0 %v835
        %1352 = vmatprep.subr.bf16.mxu0 %v828
        %1353 = vmatpush1.bf16.msra.mxu0 %v827
        %1354 = vmatprep.subr.bf16.mxu0 %v820
        %1355 = vmatpush1.bf16.msra.mxu0 %v819
        %1356 = vmatprep.subr.bf16.mxu0 %v812
        %1357 = vmatpush1.bf16.msra.mxu0 %v811
        %1358 = vmatprep.subr.bf16.mxu0 %v932
        %1359 = vmatpush2.bf16.msra.mxu0 %v931
        %1360 = vmatprep.subr.bf16.mxu0 %v924
        %1361 = vmatpush2.bf16.msra.mxu0 %v923
        %1362 = vmatprep.subr.bf16.mxu0 %v916
        %1363 = vmatpush2.bf16.msra.mxu0 %v915
        %1364 = vmatprep.subr.bf16.mxu0 %v908
        %1365 = vmatpush2.bf16.msra.mxu0 %v907
        %1366 = vmatprep.subr.bf16.mxu0 %v900
        %1367 = vmatpush2.bf16.msra.mxu0 %v899
        %1368 = vmatprep.subr.bf16.mxu0 %v892
        %1369 = vmatpush2.bf16.msra.mxu0 %v891
        %1370 = vmatprep.subr.bf16.mxu0 %v884
        %1371 = vmatpush2.bf16.msra.mxu0 %v883
        %1372 = vmatprep.subr.bf16.mxu0 %v876
        %1373 = vmatpush2.bf16.msra.mxu0 %v875
        %1374 = vmatprep.mubr.bf16.mxu0 %v1313
        %1375 = vmatmul.mubr.bf16.gmra.mxu0 %v1312
        %v1376 = vpop.f32.mrf.mxu0
        %v1377 = vadd.f32 0.0, %v1376
        %v1378 = vpop.f32.mrf.mxu0
        %v1379 = vadd.f32 0.0, %v1378
        %v1380 = vpop.f32.mrf.mxu0
        %v1381 = vpop.f32.mrf.mxu0
        %1382 = vdwg.mxu0
        %1383 = vmatprep.subr.bf16.mxu0 %v870
        %1384 = vmatpush1.bf16.msra.mxu0 %v869
        %1385 = vmatprep.subr.bf16.mxu0 %v862
        %1386 = vmatpush1.bf16.msra.mxu0 %v861
        %1387 = vmatprep.subr.bf16.mxu0 %v854
        %1388 = vmatpush1.bf16.msra.mxu0 %v853
        %1389 = vmatprep.subr.bf16.mxu0 %v846
        %1390 = vmatpush1.bf16.msra.mxu0 %v845
        %1391 = vmatprep.subr.bf16.mxu0 %v838
        %1392 = vmatpush1.bf16.msra.mxu0 %v837
        %1393 = vmatprep.subr.bf16.mxu0 %v830
        %1394 = vmatpush1.bf16.msra.mxu0 %v829
        %1395 = vmatprep.subr.bf16.mxu0 %v822
        %1396 = vmatpush1.bf16.msra.mxu0 %v821
        %1397 = vmatprep.subr.bf16.mxu0 %v814
        %1398 = vmatpush1.bf16.msra.mxu0 %v813
        %1399 = vmatprep.subr.bf16.mxu0 %v934
        %1400 = vmatpush2.bf16.msra.mxu0 %v933
        %1401 = vmatprep.subr.bf16.mxu0 %v926
        %1402 = vmatpush2.bf16.msra.mxu0 %v925
        %1403 = vmatprep.subr.bf16.mxu0 %v918
        %1404 = vmatpush2.bf16.msra.mxu0 %v917
        %1405 = vmatprep.subr.bf16.mxu0 %v910
        %1406 = vmatpush2.bf16.msra.mxu0 %v909
        %1407 = vmatprep.subr.bf16.mxu0 %v902
        %1408 = vmatpush2.bf16.msra.mxu0 %v901
        %1409 = vmatprep.subr.bf16.mxu0 %v894
        %1410 = vmatpush2.bf16.msra.mxu0 %v893
        %1411 = vmatprep.subr.bf16.mxu0 %v886
        %1412 = vmatpush2.bf16.msra.mxu0 %v885
        %1413 = vmatprep.subr.bf16.mxu0 %v878
        %1414 = vmatpush2.bf16.msra.mxu0 %v877
        %1415 = vmatprep.mubr.bf16.mxu0 %v1313
        %1416 = vmatmul.mubr.bf16.gmra.mxu0 %v1312
        %v1417 = vpop.f32.mrf.mxu0
        %v1418 = vadd.f32 0.0, %v1417
        %v1419 = vpop.f32.mrf.mxu0
        %v1420 = vadd.f32 0.0, %v1419
        %v1421 = vpop.f32.mrf.mxu0
        %v1422 = vpop.f32.mrf.mxu0
        %1423 = vdwg.mxu0
        %1424 = vmatprep.subr.bf16.mxu0 %v872
        %1425 = vmatpush1.bf16.msra.mxu0 %v871
        %1426 = vmatprep.subr.bf16.mxu0 %v864
        %1427 = vmatpush1.bf16.msra.mxu0 %v863
        %1428 = vmatprep.subr.bf16.mxu0 %v856
        %1429 = vmatpush1.bf16.msra.mxu0 %v855
        %1430 = vmatprep.subr.bf16.mxu0 %v848
        %1431 = vmatpush1.bf16.msra.mxu0 %v847
        %1432 = vmatprep.subr.bf16.mxu0 %v840
        %1433 = vmatpush1.bf16.msra.mxu0 %v839
        %1434 = vmatprep.subr.bf16.mxu0 %v832
        %1435 = vmatpush1.bf16.msra.mxu0 %v831
        %1436 = vmatprep.subr.bf16.mxu0 %v824
        %1437 = vmatpush1.bf16.msra.mxu0 %v823
        %1438 = vmatprep.subr.bf16.mxu0 %v816
        %1439 = vmatpush1.bf16.msra.mxu0 %v815
        %1440 = vmatprep.subr.bf16.mxu0 %v936
        %1441 = vmatpush2.bf16.msra.mxu0 %v935
        %1442 = vmatprep.subr.bf16.mxu0 %v928
        %1443 = vmatpush2.bf16.msra.mxu0 %v927
        %1444 = vmatprep.subr.bf16.mxu0 %v920
        %1445 = vmatpush2.bf16.msra.mxu0 %v919
        %1446 = vmatprep.subr.bf16.mxu0 %v912
        %1447 = vmatpush2.bf16.msra.mxu0 %v911
        %1448 = vmatprep.subr.bf16.mxu0 %v904
        %1449 = vmatpush2.bf16.msra.mxu0 %v903
        %1450 = vmatprep.subr.bf16.mxu0 %v896
        %1451 = vmatpush2.bf16.msra.mxu0 %v895
        %1452 = vmatprep.subr.bf16.mxu0 %v888
        %1453 = vmatpush2.bf16.msra.mxu0 %v887
        %1454 = vmatprep.subr.bf16.mxu0 %v880
        %1455 = vmatpush2.bf16.msra.mxu0 %v879
        %1456 = vmatprep.mubr.bf16.mxu0 %v1313
        %1457 = vmatmul.mubr.bf16.gmra.mxu0 %v1312
        %v1458 = vpop.f32.mrf.mxu0
        %v1459 = vadd.f32 0.0, %v1458
        %v1460 = vpop.f32.mrf.mxu0
        %v1461 = vadd.f32 0.0, %v1460
        %v1462 = vpop.f32.mrf.mxu0
        %v1463 = vpop.f32.mrf.mxu0
        %1464 = vdwg.mxu0
        %1465 = vmatprep.subr.bf16.mxu0 %v874
        %1466 = vmatpush1.bf16.msra.mxu0 %v873
        %1467 = vmatprep.subr.bf16.mxu0 %v866
        %1468 = vmatpush1.bf16.msra.mxu0 %v865
        %1469 = vmatprep.subr.bf16.mxu0 %v858
        %1470 = vmatpush1.bf16.msra.mxu0 %v857
        %1471 = vmatprep.subr.bf16.mxu0 %v850
        %1472 = vmatpush1.bf16.msra.mxu0 %v849
        %1473 = vmatprep.subr.bf16.mxu0 %v842
        %1474 = vmatpush1.bf16.msra.mxu0 %v841
        %1475 = vmatprep.subr.bf16.mxu0 %v834
        %1476 = vmatpush1.bf16.msra.mxu0 %v833
        %1477 = vmatprep.subr.bf16.mxu0 %v826
        %1478 = vmatpush1.bf16.msra.mxu0 %v825
        %1479 = vmatprep.subr.bf16.mxu0 %v818
        %1480 = vmatpush1.bf16.msra.mxu0 %v817
        %1481 = vmatprep.subr.bf16.mxu0 %v938
        %1482 = vmatpush2.bf16.msra.mxu0 %v937
        %1483 = vmatprep.subr.bf16.mxu0 %v930
        %1484 = vmatpush2.bf16.msra.mxu0 %v929
        %1485 = vmatprep.subr.bf16.mxu0 %v922
        %1486 = vmatpush2.bf16.msra.mxu0 %v921
        %1487 = vmatprep.subr.bf16.mxu0 %v914
        %1488 = vmatpush2.bf16.msra.mxu0 %v913
        %1489 = vmatprep.subr.bf16.mxu0 %v906
        %1490 = vmatpush2.bf16.msra.mxu0 %v905
        %1491 = vmatprep.subr.bf16.mxu0 %v898
        %1492 = vmatpush2.bf16.msra.mxu0 %v897
        %1493 = vmatprep.subr.bf16.mxu0 %v890
        %1494 = vmatpush2.bf16.msra.mxu0 %v889
        %1495 = vmatprep.subr.bf16.mxu0 %v882
        %1496 = vmatpush2.bf16.msra.mxu0 %v881
        %1497 = vmatprep.mubr.bf16.mxu0 %v1313
        %1498 = vmatmul.mubr.bf16.gmra.mxu0 %v1312
        %v1499 = vpop.f32.mrf.mxu0
        %v1500 = vadd.f32 0.0, %v1499
        %v1501 = vpop.f32.mrf.mxu0
        %v1502 = vadd.f32 0.0, %v1501
        %v1503 = vpop.f32.mrf.mxu0
        %v1504 = vpop.f32.mrf.mxu0
        %1505 = vdwg.mxu0
        %v1514 = vcombine.low %v1377, %v1379
        %v1515 = vcombine.low %v1418, %v1420
        %v1517 = vunpack.c.l.s4 1983009808
        %v1518 = vunpack.c.0.s8 %v1517
        %v1519 = vlaneseq
        %v1520 = vshrl.u32 %v1519, 7
        %v1521 = vsub.s32 %v1518, %v1520
        %v1522 = vrot.slane %v1514, %v1521
        %v1524 = vunpack.c.l.s4 1983009808
        %v1525 = vunpack.c.0.s8 %v1524
        %v1526 = vlaneseq
        %v1527 = vshrl.u32 %v1526, 7
        %v1528 = vsub.s32 %v1525, %v1527
        %v1529 = vrot.slane %v1515, %v1528
        %v1530 = vcombine.low %v1522, %v1529
        %v1531 = vcombine.low %v1459, %v1461
        %v1532 = vcombine.low %v1500, %v1502
        %v1534 = vunpack.c.l.s4 1983009808
        %v1535 = vunpack.c.0.s8 %v1534
        %v1536 = vlaneseq
        %v1537 = vshrl.u32 %v1536, 7
        %v1538 = vsub.s32 %v1535, %v1537
        %v1539 = vrot.slane %v1531, %v1538
        %v1541 = vunpack.c.l.s4 1983009808
        %v1542 = vunpack.c.0.s8 %v1541
        %v1543 = vlaneseq
        %v1544 = vshrl.u32 %v1543, 7
        %v1545 = vsub.s32 %v1542, %v1544
        %v1546 = vrot.slane %v1532, %v1545
        %v1547 = vcombine.low %v1539, %v1546
        %v1550 = vadd.f32 %v1340, %v1530
        %v1551 = vadd.f32 %v1341, %v1547
        %v1552 = vmul.f32 %v1550, 0.5
        %v1553 = vtanh.pop %v1552
        %v1554 = vadd.f32 %v1553, 1.0
        %v1555 = vmul.f32 %v1554, 0.5
        %v1557 = vrot.slane %v1550, 4
        %v1559 = vmul.f32 %v1557, 0.5
        %v1560 = vtanh.pop %v1559
        %v1561 = vadd.f32 %v1560, 1.0
        %v1562 = vmul.f32 %v1561, 0.5
        %v1563 = vtanh.pop %v1551
        %v1565 = vrot.slane %v1551, 4
        %v1567 = vmul.f32 %v1565, 0.5
        %v1568 = vtanh.pop %v1567
        %v1569 = vadd.f32 %v1568, 1.0
        %v1570 = vmul.f32 %v1569, 0.5
        %v1571 = vmul.f32 %v1562, %v1298
        %v1572 = vmul.f32 %v1555, %v1563
        %v1573 = vadd.f32 %v1571, %v1572
        %v1574 = vtanh.pop %v1573
        %v1575 = vmul.f32 %v1570, %v1574
        %v1578 = vunpack.c.l.s4 1983009808
        %v1579 = vunpack.c.0.s8 %v1578
        %v1580 = vlaneseq
        %v1581 = vshrl.u32 %v1580, 7
        %v1582 = vsub.s32 %v1579, %v1581
        %v1583 = vrot.slane %v1575, %v1582
        %v1584 = vcombine.high %v1583, %v1583
        %v1587 = vpack.c.bf16 %v1583, %v1583
        %v1588 = vpack.c.bf16 %v1584, %v1584
        %v1591 = vcombine.low %v1587, %v1588
        %v1593 = vunpack.c.l.s4 1966171168
        %v1594 = vunpack.c.0.s8 %v1593
        %v1595 = vlaneseq
        %v1596 = vshrl.u32 %v1595, 7
        %v1597 = vsub.s32 %v1594, %v1596
        %v1598 = vrot.slane %v1591, %v1597
        %v1600 = vunpack.c.l.s4 1966171168
        %v1601 = vunpack.c.0.s8 %v1600
        %v1602 = vlaneseq
        %v1603 = vshrl.u32 %v1602, 7
        %v1604 = vsub.s32 %v1601, %v1603
        %v1605 = vrot.slane %v1598, %v1604
        %s1607 = smul.u32 %s1336, 2
        %s1608 = scalar_lea.vmem %s254, %s1607 [#allocation5]
        %1609 = vst [vmem:[%s1608] sm:$0x3] %v1605
        %s1610 = smul.u32 %s17, 3
        %s1611 = sadd.s32 %s1610, 2
        %s1612 = smul.u32 %s1611, 8
        %s1613 = scalar_lea.vmem %s232, %s1612 [#allocation4]
        %v1614 = vld [vmem:[%s1613] sm:$0xff]
        %v1615 = vunpack.c.l.bf16 %v1614
        %v1616 = vunpack.c.h.bf16 %v1614
        %1617 = vmatprep.subr.bf16.mxu0 %v868
        %1618 = vmatpush1.bf16.msra.mxu0 %v867
        %1619 = vmatprep.subr.bf16.mxu0 %v860
        %1620 = vmatpush1.bf16.msra.mxu0 %v859
        %1621 = vmatprep.subr.bf16.mxu0 %v852
        %1622 = vmatpush1.bf16.msra.mxu0 %v851
        %1623 = vmatprep.subr.bf16.mxu0 %v844
        %1624 = vmatpush1.bf16.msra.mxu0 %v843
        %1625 = vmatprep.subr.bf16.mxu0 %v836
        %1626 = vmatpush1.bf16.msra.mxu0 %v835
        %1627 = vmatprep.subr.bf16.mxu0 %v828
        %1628 = vmatpush1.bf16.msra.mxu0 %v827
        %1629 = vmatprep.subr.bf16.mxu0 %v820
        %1630 = vmatpush1.bf16.msra.mxu0 %v819
        %1631 = vmatprep.subr.bf16.mxu0 %v812
        %1632 = vmatpush1.bf16.msra.mxu0 %v811
        %1633 = vmatprep.subr.bf16.mxu0 %v932
        %1634 = vmatpush2.bf16.msra.mxu0 %v931
        %1635 = vmatprep.subr.bf16.mxu0 %v924
        %1636 = vmatpush2.bf16.msra.mxu0 %v923
        %1637 = vmatprep.subr.bf16.mxu0 %v916
        %1638 = vmatpush2.bf16.msra.mxu0 %v915
        %1639 = vmatprep.subr.bf16.mxu0 %v908
        %1640 = vmatpush2.bf16.msra.mxu0 %v907
        %1641 = vmatprep.subr.bf16.mxu0 %v900
        %1642 = vmatpush2.bf16.msra.mxu0 %v899
        %1643 = vmatprep.subr.bf16.mxu0 %v892
        %1644 = vmatpush2.bf16.msra.mxu0 %v891
        %1645 = vmatprep.subr.bf16.mxu0 %v884
        %1646 = vmatpush2.bf16.msra.mxu0 %v883
        %1647 = vmatprep.subr.bf16.mxu0 %v876
        %1648 = vmatpush2.bf16.msra.mxu0 %v875
        %1649 = vmatprep.mubr.bf16.mxu0 %v1588
        %1650 = vmatmul.mubr.bf16.gmra.mxu0 %v1587
        %v1651 = vpop.f32.mrf.mxu0
        %v1652 = vadd.f32 0.0, %v1651
        %v1653 = vpop.f32.mrf.mxu0
        %v1654 = vadd.f32 0.0, %v1653
        %v1655 = vpop.f32.mrf.mxu0
        %v1656 = vpop.f32.mrf.mxu0
        %1657 = vdwg.mxu0
        %1658 = vmatprep.subr.bf16.mxu0 %v870
        %1659 = vmatpush1.bf16.msra.mxu0 %v869
        %1660 = vmatprep.subr.bf16.mxu0 %v862
        %1661 = vmatpush1.bf16.msra.mxu0 %v861
        %1662 = vmatprep.subr.bf16.mxu0 %v854
        %1663 = vmatpush1.bf16.msra.mxu0 %v853
        %1664 = vmatprep.subr.bf16.mxu0 %v846
        %1665 = vmatpush1.bf16.msra.mxu0 %v845
        %1666 = vmatprep.subr.bf16.mxu0 %v838
        %1667 = vmatpush1.bf16.msra.mxu0 %v837
        %1668 = vmatprep.subr.bf16.mxu0 %v830
        %1669 = vmatpush1.bf16.msra.mxu0 %v829
        %1670 = vmatprep.subr.bf16.mxu0 %v822
        %1671 = vmatpush1.bf16.msra.mxu0 %v821
        %1672 = vmatprep.subr.bf16.mxu0 %v814
        %1673 = vmatpush1.bf16.msra.mxu0 %v813
        %1674 = vmatprep.subr.bf16.mxu0 %v934
        %1675 = vmatpush2.bf16.msra.mxu0 %v933
        %1676 = vmatprep.subr.bf16.mxu0 %v926
        %1677 = vmatpush2.bf16.msra.mxu0 %v925
        %1678 = vmatprep.subr.bf16.mxu0 %v918
        %1679 = vmatpush2.bf16.msra.mxu0 %v917
        %1680 = vmatprep.subr.bf16.mxu0 %v910
        %1681 = vmatpush2.bf16.msra.mxu0 %v909
        %1682 = vmatprep.subr.bf16.mxu0 %v902
        %1683 = vmatpush2.bf16.msra.mxu0 %v901
        %1684 = vmatprep.subr.bf16.mxu0 %v894
        %1685 = vmatpush2.bf16.msra.mxu0 %v893
        %1686 = vmatprep.subr.bf16.mxu0 %v886
        %1687 = vmatpush2.bf16.msra.mxu0 %v885
        %1688 = vmatprep.subr.bf16.mxu0 %v878
        %1689 = vmatpush2.bf16.msra.mxu0 %v877
        %1690 = vmatprep.mubr.bf16.mxu0 %v1588
        %1691 = vmatmul.mubr.bf16.gmra.mxu0 %v1587
        %v1692 = vpop.f32.mrf.mxu0
        %v1693 = vadd.f32 0.0, %v1692
        %v1694 = vpop.f32.mrf.mxu0
        %v1695 = vadd.f32 0.0, %v1694
        %v1696 = vpop.f32.mrf.mxu0
        %v1697 = vpop.f32.mrf.mxu0
        %1698 = vdwg.mxu0
        %1699 = vmatprep.subr.bf16.mxu0 %v872
        %1700 = vmatpush1.bf16.msra.mxu0 %v871
        %1701 = vmatprep.subr.bf16.mxu0 %v864
        %1702 = vmatpush1.bf16.msra.mxu0 %v863
        %1703 = vmatprep.subr.bf16.mxu0 %v856
        %1704 = vmatpush1.bf16.msra.mxu0 %v855
        %1705 = vmatprep.subr.bf16.mxu0 %v848
        %1706 = vmatpush1.bf16.msra.mxu0 %v847
        %1707 = vmatprep.subr.bf16.mxu0 %v840
        %1708 = vmatpush1.bf16.msra.mxu0 %v839
        %1709 = vmatprep.subr.bf16.mxu0 %v832
        %1710 = vmatpush1.bf16.msra.mxu0 %v831
        %1711 = vmatprep.subr.bf16.mxu0 %v824
        %1712 = vmatpush1.bf16.msra.mxu0 %v823
        %1713 = vmatprep.subr.bf16.mxu0 %v816
        %1714 = vmatpush1.bf16.msra.mxu0 %v815
        %1715 = vmatprep.subr.bf16.mxu0 %v936
        %1716 = vmatpush2.bf16.msra.mxu0 %v935
        %1717 = vmatprep.subr.bf16.mxu0 %v928
        %1718 = vmatpush2.bf16.msra.mxu0 %v927
        %1719 = vmatprep.subr.bf16.mxu0 %v920
        %1720 = vmatpush2.bf16.msra.mxu0 %v919
        %1721 = vmatprep.subr.bf16.mxu0 %v912
        %1722 = vmatpush2.bf16.msra.mxu0 %v911
        %1723 = vmatprep.subr.bf16.mxu0 %v904
        %1724 = vmatpush2.bf16.msra.mxu0 %v903
        %1725 = vmatprep.subr.bf16.mxu0 %v896
        %1726 = vmatpush2.bf16.msra.mxu0 %v895
        %1727 = vmatprep.subr.bf16.mxu0 %v888
        %1728 = vmatpush2.bf16.msra.mxu0 %v887
        %1729 = vmatprep.subr.bf16.mxu0 %v880
        %1730 = vmatpush2.bf16.msra.mxu0 %v879
        %1731 = vmatprep.mubr.bf16.mxu0 %v1588
        %1732 = vmatmul.mubr.bf16.gmra.mxu0 %v1587
        %v1733 = vpop.f32.mrf.mxu0
        %v1734 = vadd.f32 0.0, %v1733
        %v1735 = vpop.f32.mrf.mxu0
        %v1736 = vadd.f32 0.0, %v1735
        %v1737 = vpop.f32.mrf.mxu0
        %v1738 = vpop.f32.mrf.mxu0
        %1739 = vdwg.mxu0
        %1740 = vmatprep.subr.bf16.mxu0 %v874
        %1741 = vmatpush1.bf16.msra.mxu0 %v873
        %1742 = vmatprep.subr.bf16.mxu0 %v866
        %1743 = vmatpush1.bf16.msra.mxu0 %v865
        %1744 = vmatprep.subr.bf16.mxu0 %v858
        %1745 = vmatpush1.bf16.msra.mxu0 %v857
        %1746 = vmatprep.subr.bf16.mxu0 %v850
        %1747 = vmatpush1.bf16.msra.mxu0 %v849
        %1748 = vmatprep.subr.bf16.mxu0 %v842
        %1749 = vmatpush1.bf16.msra.mxu0 %v841
        %1750 = vmatprep.subr.bf16.mxu0 %v834
        %1751 = vmatpush1.bf16.msra.mxu0 %v833
        %1752 = vmatprep.subr.bf16.mxu0 %v826
        %1753 = vmatpush1.bf16.msra.mxu0 %v825
        %1754 = vmatprep.subr.bf16.mxu0 %v818
        %1755 = vmatpush1.bf16.msra.mxu0 %v817
        %1756 = vmatprep.subr.bf16.mxu0 %v938
        %1757 = vmatpush2.bf16.msra.mxu0 %v937
        %1758 = vmatprep.subr.bf16.mxu0 %v930
        %1759 = vmatpush2.bf16.msra.mxu0 %v929
        %1760 = vmatprep.subr.bf16.mxu0 %v922
        %1761 = vmatpush2.bf16.msra.mxu0 %v921
        %1762 = vmatprep.subr.bf16.mxu0 %v914
        %1763 = vmatpush2.bf16.msra.mxu0 %v913
        %1764 = vmatprep.subr.bf16.mxu0 %v906
        %1765 = vmatpush2.bf16.msra.mxu0 %v905
        %1766 = vmatprep.subr.bf16.mxu0 %v898
        %1767 = vmatpush2.bf16.msra.mxu0 %v897
        %1768 = vmatprep.subr.bf16.mxu0 %v890
        %1769 = vmatpush2.bf16.msra.mxu0 %v889
        %1770 = vmatprep.subr.bf16.mxu0 %v882
        %1771 = vmatpush2.bf16.msra.mxu0 %v881
        %1772 = vmatprep.mubr.bf16.mxu0 %v1588
        %1773 = vmatmul.mubr.bf16.gmra.mxu0 %v1587
        %v1774 = vpop.f32.mrf.mxu0
        %v1775 = vadd.f32 0.0, %v1774
        %v1776 = vpop.f32.mrf.mxu0
        %v1777 = vadd.f32 0.0, %v1776
        %v1778 = vpop.f32.mrf.mxu0
        %v1779 = vpop.f32.mrf.mxu0
        %1780 = vdwg.mxu0
        %v1789 = vcombine.low %v1652, %v1654
        %v1790 = vcombine.low %v1693, %v1695
        %v1792 = vunpack.c.l.s4 1983009808
        %v1793 = vunpack.c.0.s8 %v1792
        %v1794 = vlaneseq
        %v1795 = vshrl.u32 %v1794, 7
        %v1796 = vsub.s32 %v1793, %v1795
        %v1797 = vrot.slane %v1789, %v1796
        %v1799 = vunpack.c.l.s4 1983009808
        %v1800 = vunpack.c.0.s8 %v1799
        %v1801 = vlaneseq
        %v1802 = vshrl.u32 %v1801, 7
        %v1803 = vsub.s32 %v1800, %v1802
        %v1804 = vrot.slane %v1790, %v1803
        %v1805 = vcombine.low %v1797, %v1804
        %v1806 = vcombine.low %v1734, %v1736
        %v1807 = vcombine.low %v1775, %v1777
        %v1809 = vunpack.c.l.s4 1983009808
        %v1810 = vunpack.c.0.s8 %v1809
        %v1811 = vlaneseq
        %v1812 = vshrl.u32 %v1811, 7
        %v1813 = vsub.s32 %v1810, %v1812
        %v1814 = vrot.slane %v1806, %v1813
        %v1816 = vunpack.c.l.s4 1983009808
        %v1817 = vunpack.c.0.s8 %v1816
        %v1818 = vlaneseq
        %v1819 = vshrl.u32 %v1818, 7
        %v1820 = vsub.s32 %v1817, %v1819
        %v1821 = vrot.slane %v1807, %v1820
        %v1822 = vcombine.low %v1814, %v1821
        %v1825 = vadd.f32 %v1615, %v1805
        %v1826 = vadd.f32 %v1616, %v1822
        %v1827 = vmul.f32 %v1825, 0.5
        %v1828 = vtanh.pop %v1827
        %v1829 = vadd.f32 %v1828, 1.0
        %v1830 = vmul.f32 %v1829, 0.5
        %v1832 = vrot.slane %v1825, 4
        %v1834 = vmul.f32 %v1832, 0.5
        %v1835 = vtanh.pop %v1834
        %v1836 = vadd.f32 %v1835, 1.0
        %v1837 = vmul.f32 %v1836, 0.5
        %v1838 = vtanh.pop %v1826
        %v1840 = vrot.slane %v1826, 4
        %v1842 = vmul.f32 %v1840, 0.5
        %v1843 = vtanh.pop %v1842
        %v1844 = vadd.f32 %v1843, 1.0
        %v1845 = vmul.f32 %v1844, 0.5
        %v1846 = vmul.f32 %v1837, %v1573
        %v1847 = vmul.f32 %v1830, %v1838
        %v1848 = vadd.f32 %v1846, %v1847
        %v1849 = vtanh.pop %v1848
        %v1850 = vmul.f32 %v1845, %v1849
        %v1853 = vunpack.c.l.s4 1983009808
        %v1854 = vunpack.c.0.s8 %v1853
        %v1855 = vlaneseq
        %v1856 = vshrl.u32 %v1855, 7
        %v1857 = vsub.s32 %v1854, %v1856
        %v1858 = vrot.slane %v1850, %v1857
        %v1859 = vcombine.high %v1858, %v1858
        %v1862 = vpack.c.bf16 %v1858, %v1858
        %v1863 = vpack.c.bf16 %v1859, %v1859
        %v1866 = vcombine.low %v1862, %v1863
        %v1868 = vunpack.c.l.s4 1966171168
        %v1869 = vunpack.c.0.s8 %v1868
        %v1870 = vlaneseq
        %v1871 = vshrl.u32 %v1870, 7
        %v1872 = vsub.s32 %v1869, %v1871
        %v1873 = vrot.slane %v1866, %v1872
        %v1875 = vunpack.c.l.s4 1966171168
        %v1876 = vunpack.c.0.s8 %v1875
        %v1877 = vlaneseq
        %v1878 = vshrl.u32 %v1877, 7
        %v1879 = vsub.s32 %v1876, %v1878
        %v1880 = vrot.slane %v1873, %v1879
        %s1882 = smul.u32 %s1611, 2
        %s1883 = scalar_lea.vmem %s254, %s1882 [#allocation5]
        %1884 = vst [vmem:[%s1883] sm:$0x3] %v1880
        %s1885 = sadd.s32 %s17, 3
        %s1886 = smul.u32 %s1885, 8
        %s1887 = scalar_lea.vmem %s232, %s1886 [#allocation4]
        %v1888 = vld [vmem:[%s1887] sm:$0xff]
        %v1889 = vunpack.c.l.bf16 %v1888
        %v1890 = vunpack.c.h.bf16 %v1888
        %1891 = vmatprep.subr.bf16.mxu0 %v868
        %1892 = vmatpush1.bf16.msra.mxu0 %v867
        %1893 = vmatprep.subr.bf16.mxu0 %v860
        %1894 = vmatpush1.bf16.msra.mxu0 %v859
        %1895 = vmatprep.subr.bf16.mxu0 %v852
        %1896 = vmatpush1.bf16.msra.mxu0 %v851
        %1897 = vmatprep.subr.bf16.mxu0 %v844
        %1898 = vmatpush1.bf16.msra.mxu0 %v843
        %1899 = vmatprep.subr.bf16.mxu0 %v836
        %1900 = vmatpush1.bf16.msra.mxu0 %v835
        %1901 = vmatprep.subr.bf16.mxu0 %v828
        %1902 = vmatpush1.bf16.msra.mxu0 %v827
        %1903 = vmatprep.subr.bf16.mxu0 %v820
        %1904 = vmatpush1.bf16.msra.mxu0 %v819
        %1905 = vmatprep.subr.bf16.mxu0 %v812
        %1906 = vmatpush1.bf16.msra.mxu0 %v811
        %1907 = vmatprep.subr.bf16.mxu0 %v932
        %1908 = vmatpush2.bf16.msra.mxu0 %v931
        %1909 = vmatprep.subr.bf16.mxu0 %v924
        %1910 = vmatpush2.bf16.msra.mxu0 %v923
        %1911 = vmatprep.subr.bf16.mxu0 %v916
        %1912 = vmatpush2.bf16.msra.mxu0 %v915
        %1913 = vmatprep.subr.bf16.mxu0 %v908
        %1914 = vmatpush2.bf16.msra.mxu0 %v907
        %1915 = vmatprep.subr.bf16.mxu0 %v900
        %1916 = vmatpush2.bf16.msra.mxu0 %v899
        %1917 = vmatprep.subr.bf16.mxu0 %v892
        %1918 = vmatpush2.bf16.msra.mxu0 %v891
        %1919 = vmatprep.subr.bf16.mxu0 %v884
        %1920 = vmatpush2.bf16.msra.mxu0 %v883
        %1921 = vmatprep.subr.bf16.mxu0 %v876
        %1922 = vmatpush2.bf16.msra.mxu0 %v875
        %1923 = vmatprep.mubr.bf16.mxu0 %v1863
        %1924 = vmatmul.mubr.bf16.gmra.mxu0 %v1862
        %v1925 = vpop.f32.mrf.mxu0
        %v1926 = vadd.f32 0.0, %v1925
        %v1927 = vpop.f32.mrf.mxu0
        %v1928 = vadd.f32 0.0, %v1927
        %v1929 = vpop.f32.mrf.mxu0
        %v1930 = vpop.f32.mrf.mxu0
        %1931 = vdwg.mxu0
        %1932 = vmatprep.subr.bf16.mxu0 %v870
        %1933 = vmatpush1.bf16.msra.mxu0 %v869
        %1934 = vmatprep.subr.bf16.mxu0 %v862
        %1935 = vmatpush1.bf16.msra.mxu0 %v861
        %1936 = vmatprep.subr.bf16.mxu0 %v854
        %1937 = vmatpush1.bf16.msra.mxu0 %v853
        %1938 = vmatprep.subr.bf16.mxu0 %v846
        %1939 = vmatpush1.bf16.msra.mxu0 %v845
        %1940 = vmatprep.subr.bf16.mxu0 %v838
        %1941 = vmatpush1.bf16.msra.mxu0 %v837
        %1942 = vmatprep.subr.bf16.mxu0 %v830
        %1943 = vmatpush1.bf16.msra.mxu0 %v829
        %1944 = vmatprep.subr.bf16.mxu0 %v822
        %1945 = vmatpush1.bf16.msra.mxu0 %v821
        %1946 = vmatprep.subr.bf16.mxu0 %v814
        %1947 = vmatpush1.bf16.msra.mxu0 %v813
        %1948 = vmatprep.subr.bf16.mxu0 %v934
        %1949 = vmatpush2.bf16.msra.mxu0 %v933
        %1950 = vmatprep.subr.bf16.mxu0 %v926
        %1951 = vmatpush2.bf16.msra.mxu0 %v925
        %1952 = vmatprep.subr.bf16.mxu0 %v918
        %1953 = vmatpush2.bf16.msra.mxu0 %v917
        %1954 = vmatprep.subr.bf16.mxu0 %v910
        %1955 = vmatpush2.bf16.msra.mxu0 %v909
        %1956 = vmatprep.subr.bf16.mxu0 %v902
        %1957 = vmatpush2.bf16.msra.mxu0 %v901
        %1958 = vmatprep.subr.bf16.mxu0 %v894
        %1959 = vmatpush2.bf16.msra.mxu0 %v893
        %1960 = vmatprep.subr.bf16.mxu0 %v886
        %1961 = vmatpush2.bf16.msra.mxu0 %v885
        %1962 = vmatprep.subr.bf16.mxu0 %v878
        %1963 = vmatpush2.bf16.msra.mxu0 %v877
        %1964 = vmatprep.mubr.bf16.mxu0 %v1863
        %1965 = vmatmul.mubr.bf16.gmra.mxu0 %v1862
        %v1966 = vpop.f32.mrf.mxu0
        %v1967 = vadd.f32 0.0, %v1966
        %v1968 = vpop.f32.mrf.mxu0
        %v1969 = vadd.f32 0.0, %v1968
        %v1970 = vpop.f32.mrf.mxu0
        %v1971 = vpop.f32.mrf.mxu0
        %1972 = vdwg.mxu0
        %1973 = vmatprep.subr.bf16.mxu0 %v872
        %1974 = vmatpush1.bf16.msra.mxu0 %v871
        %1975 = vmatprep.subr.bf16.mxu0 %v864
        %1976 = vmatpush1.bf16.msra.mxu0 %v863
        %1977 = vmatprep.subr.bf16.mxu0 %v856
        %1978 = vmatpush1.bf16.msra.mxu0 %v855
        %1979 = vmatprep.subr.bf16.mxu0 %v848
        %1980 = vmatpush1.bf16.msra.mxu0 %v847
        %1981 = vmatprep.subr.bf16.mxu0 %v840
        %1982 = vmatpush1.bf16.msra.mxu0 %v839
        %1983 = vmatprep.subr.bf16.mxu0 %v832
        %1984 = vmatpush1.bf16.msra.mxu0 %v831
        %1985 = vmatprep.subr.bf16.mxu0 %v824
        %1986 = vmatpush1.bf16.msra.mxu0 %v823
        %1987 = vmatprep.subr.bf16.mxu0 %v816
        %1988 = vmatpush1.bf16.msra.mxu0 %v815
        %1989 = vmatprep.subr.bf16.mxu0 %v936
        %1990 = vmatpush2.bf16.msra.mxu0 %v935
        %1991 = vmatprep.subr.bf16.mxu0 %v928
        %1992 = vmatpush2.bf16.msra.mxu0 %v927
        %1993 = vmatprep.subr.bf16.mxu0 %v920
        %1994 = vmatpush2.bf16.msra.mxu0 %v919
        %1995 = vmatprep.subr.bf16.mxu0 %v912
        %1996 = vmatpush2.bf16.msra.mxu0 %v911
        %1997 = vmatprep.subr.bf16.mxu0 %v904
        %1998 = vmatpush2.bf16.msra.mxu0 %v903
        %1999 = vmatprep.subr.bf16.mxu0 %v896
        %2000 = vmatpush2.bf16.msra.mxu0 %v895
        %2001 = vmatprep.subr.bf16.mxu0 %v888
        %2002 = vmatpush2.bf16.msra.mxu0 %v887
        %2003 = vmatprep.subr.bf16.mxu0 %v880
        %2004 = vmatpush2.bf16.msra.mxu0 %v879
        %2005 = vmatprep.mubr.bf16.mxu0 %v1863
        %2006 = vmatmul.mubr.bf16.gmra.mxu0 %v1862
        %v2007 = vpop.f32.mrf.mxu0
        %v2008 = vadd.f32 0.0, %v2007
        %v2009 = vpop.f32.mrf.mxu0
        %v2010 = vadd.f32 0.0, %v2009
        %v2011 = vpop.f32.mrf.mxu0
        %v2012 = vpop.f32.mrf.mxu0
        %2013 = vdwg.mxu0
        %2014 = vmatprep.subr.bf16.mxu0 %v874
        %2015 = vmatpush1.bf16.msra.mxu0 %v873
        %2016 = vmatprep.subr.bf16.mxu0 %v866
        %2017 = vmatpush1.bf16.msra.mxu0 %v865
        %2018 = vmatprep.subr.bf16.mxu0 %v858
        %2019 = vmatpush1.bf16.msra.mxu0 %v857
        %2020 = vmatprep.subr.bf16.mxu0 %v850
        %2021 = vmatpush1.bf16.msra.mxu0 %v849
        %2022 = vmatprep.subr.bf16.mxu0 %v842
        %2023 = vmatpush1.bf16.msra.mxu0 %v841
        %2024 = vmatprep.subr.bf16.mxu0 %v834
        %2025 = vmatpush1.bf16.msra.mxu0 %v833
        %2026 = vmatprep.subr.bf16.mxu0 %v826
        %2027 = vmatpush1.bf16.msra.mxu0 %v825
        %2028 = vmatprep.subr.bf16.mxu0 %v818
        %2029 = vmatpush1.bf16.msra.mxu0 %v817
        %2030 = vmatprep.subr.bf16.mxu0 %v938
        %2031 = vmatpush2.bf16.msra.mxu0 %v937
        %2032 = vmatprep.subr.bf16.mxu0 %v930
        %2033 = vmatpush2.bf16.msra.mxu0 %v929
        %2034 = vmatprep.subr.bf16.mxu0 %v922
        %2035 = vmatpush2.bf16.msra.mxu0 %v921
        %2036 = vmatprep.subr.bf16.mxu0 %v914
        %2037 = vmatpush2.bf16.msra.mxu0 %v913
        %2038 = vmatprep.subr.bf16.mxu0 %v906
        %2039 = vmatpush2.bf16.msra.mxu0 %v905
        %2040 = vmatprep.subr.bf16.mxu0 %v898
        %2041 = vmatpush2.bf16.msra.mxu0 %v897
        %2042 = vmatprep.subr.bf16.mxu0 %v890
        %2043 = vmatpush2.bf16.msra.mxu0 %v889
        %2044 = vmatprep.subr.bf16.mxu0 %v882
        %2045 = vmatpush2.bf16.msra.mxu0 %v881
        %2046 = vmatprep.mubr.bf16.mxu0 %v1863
        %2047 = vmatmul.mubr.bf16.gmra.mxu0 %v1862
        %v2048 = vpop.f32.mrf.mxu0
        %v2049 = vadd.f32 0.0, %v2048
        %v2050 = vpop.f32.mrf.mxu0
        %v2051 = vadd.f32 0.0, %v2050
        %v2052 = vpop.f32.mrf.mxu0
        %v2053 = vpop.f32.mrf.mxu0
        %2054 = vdwg.mxu0
        %v2063 = vcombine.low %v1926, %v1928
        %v2064 = vcombine.low %v1967, %v1969
        %v2066 = vunpack.c.l.s4 1983009808
        %v2067 = vunpack.c.0.s8 %v2066
        %v2068 = vlaneseq
        %v2069 = vshrl.u32 %v2068, 7
        %v2070 = vsub.s32 %v2067, %v2069
        %v2071 = vrot.slane %v2063, %v2070
        %v2073 = vunpack.c.l.s4 1983009808
        %v2074 = vunpack.c.0.s8 %v2073
        %v2075 = vlaneseq
        %v2076 = vshrl.u32 %v2075, 7
        %v2077 = vsub.s32 %v2074, %v2076
        %v2078 = vrot.slane %v2064, %v2077
        %v2079 = vcombine.low %v2071, %v2078
        %v2080 = vcombine.low %v2008, %v2010
        %v2081 = vcombine.low %v2049, %v2051
        %v2083 = vunpack.c.l.s4 1983009808
        %v2084 = vunpack.c.0.s8 %v2083
        %v2085 = vlaneseq
        %v2086 = vshrl.u32 %v2085, 7
        %v2087 = vsub.s32 %v2084, %v2086
        %v2088 = vrot.slane %v2080, %v2087
        %v2090 = vunpack.c.l.s4 1983009808
        %v2091 = vunpack.c.0.s8 %v2090
        %v2092 = vlaneseq
        %v2093 = vshrl.u32 %v2092, 7
        %v2094 = vsub.s32 %v2091, %v2093
        %v2095 = vrot.slane %v2081, %v2094
        %v2096 = vcombine.low %v2088, %v2095
        %v2099 = vadd.f32 %v1889, %v2079
        %v2100 = vadd.f32 %v1890, %v2096
        %v2101 = vmul.f32 %v2099, 0.5
        %v2102 = vtanh.pop %v2101
        %v2103 = vadd.f32 %v2102, 1.0
        %v2104 = vmul.f32 %v2103, 0.5
        %v2106 = vrot.slane %v2099, 4
        %v2108 = vmul.f32 %v2106, 0.5
        %v2109 = vtanh.pop %v2108
        %v2110 = vadd.f32 %v2109, 1.0
        %v2111 = vmul.f32 %v2110, 0.5
        %v2112 = vtanh.pop %v2100
        %v2114 = vrot.slane %v2100, 4
        %v2116 = vmul.f32 %v2114, 0.5
        %v2117 = vtanh.pop %v2116
        %v2118 = vadd.f32 %v2117, 1.0
        %v2119 = vmul.f32 %v2118, 0.5
        %v2120 = vmul.f32 %v2111, %v1848
        %v2121 = vmul.f32 %v2104, %v2112
        %v2122 = vadd.f32 %v2120, %v2121
        %v2123 = vtanh.pop %v2122
        %v2124 = vmul.f32 %v2119, %v2123
        %v2127 = vunpack.c.l.s4 1983009808
        %v2128 = vunpack.c.0.s8 %v2127
        %v2129 = vlaneseq
        %v2130 = vshrl.u32 %v2129, 7
        %v2131 = vsub.s32 %v2128, %v2130
        %v2132 = vrot.slane %v2124, %v2131
        %v2133 = vcombine.high %v2132, %v2132
        %v2136 = vpack.c.bf16 %v2132, %v2132
        %v2137 = vpack.c.bf16 %v2133, %v2133
        %v2140 = vcombine.low %v2136, %v2137
        %v2142 = vunpack.c.l.s4 1966171168
        %v2143 = vunpack.c.0.s8 %v2142
        %v2144 = vlaneseq
        %v2145 = vshrl.u32 %v2144, 7
        %v2146 = vsub.s32 %v2143, %v2145
        %v2147 = vrot.slane %v2140, %v2146
        %v2149 = vunpack.c.l.s4 1966171168
        %v2150 = vunpack.c.0.s8 %v2149
        %v2151 = vlaneseq
        %v2152 = vshrl.u32 %v2151, 7
        %v2153 = vsub.s32 %v2150, %v2152
        %v2154 = vrot.slane %v2147, %v2153
        %s2156 = smul.u32 %s1885, 2
        %s2157 = scalar_lea.vmem %s254, %s2156 [#allocation5]
        %2158 = vst [vmem:[%s2157] sm:$0x3] %v2154
        %s2159 = ssub.s32 4, %s17
        %s2160 = smul.u32 %s2159, 8
        %s2161 = scalar_lea.vmem %s232, %s2160 [#allocation4]
        %v2162 = vld [vmem:[%s2161] sm:$0xff]
        %v2163 = vunpack.c.l.bf16 %v2162
        %v2164 = vunpack.c.h.bf16 %v2162
        %2165 = vmatprep.subr.bf16.mxu0 %v868
        %2166 = vmatpush1.bf16.msra.mxu0 %v867
        %2167 = vmatprep.subr.bf16.mxu0 %v860
        %2168 = vmatpush1.bf16.msra.mxu0 %v859
        %2169 = vmatprep.subr.bf16.mxu0 %v852
        %2170 = vmatpush1.bf16.msra.mxu0 %v851
        %2171 = vmatprep.subr.bf16.mxu0 %v844
        %2172 = vmatpush1.bf16.msra.mxu0 %v843
        %2173 = vmatprep.subr.bf16.mxu0 %v836
        %2174 = vmatpush1.bf16.msra.mxu0 %v835
        %2175 = vmatprep.subr.bf16.mxu0 %v828
        %2176 = vmatpush1.bf16.msra.mxu0 %v827
        %2177 = vmatprep.subr.bf16.mxu0 %v820
        %2178 = vmatpush1.bf16.msra.mxu0 %v819
        %2179 = vmatprep.subr.bf16.mxu0 %v812
        %2180 = vmatpush1.bf16.msra.mxu0 %v811
        %2181 = vmatprep.subr.bf16.mxu0 %v932
        %2182 = vmatpush2.bf16.msra.mxu0 %v931
        %2183 = vmatprep.subr.bf16.mxu0 %v924
        %2184 = vmatpush2.bf16.msra.mxu0 %v923
        %2185 = vmatprep.subr.bf16.mxu0 %v916
        %2186 = vmatpush2.bf16.msra.mxu0 %v915
        %2187 = vmatprep.subr.bf16.mxu0 %v908
        %2188 = vmatpush2.bf16.msra.mxu0 %v907
        %2189 = vmatprep.subr.bf16.mxu0 %v900
        %2190 = vmatpush2.bf16.msra.mxu0 %v899
        %2191 = vmatprep.subr.bf16.mxu0 %v892
        %2192 = vmatpush2.bf16.msra.mxu0 %v891
        %2193 = vmatprep.subr.bf16.mxu0 %v884
        %2194 = vmatpush2.bf16.msra.mxu0 %v883
        %2195 = vmatprep.subr.bf16.mxu0 %v876
        %2196 = vmatpush2.bf16.msra.mxu0 %v875
        %2197 = vmatprep.mubr.bf16.mxu0 %v2137
        %2198 = vmatmul.mubr.bf16.gmra.mxu0 %v2136
        %v2199 = vpop.f32.mrf.mxu0
        %v2200 = vadd.f32 0.0, %v2199
        %v2201 = vpop.f32.mrf.mxu0
        %v2202 = vadd.f32 0.0, %v2201
        %v2203 = vpop.f32.mrf.mxu0
        %v2204 = vpop.f32.mrf.mxu0
        %2205 = vdwg.mxu0
        %2206 = vmatprep.subr.bf16.mxu0 %v870
        %2207 = vmatpush1.bf16.msra.mxu0 %v869
        %2208 = vmatprep.subr.bf16.mxu0 %v862
        %2209 = vmatpush1.bf16.msra.mxu0 %v861
        %2210 = vmatprep.subr.bf16.mxu0 %v854
        %2211 = vmatpush1.bf16.msra.mxu0 %v853
        %2212 = vmatprep.subr.bf16.mxu0 %v846
        %2213 = vmatpush1.bf16.msra.mxu0 %v845
        %2214 = vmatprep.subr.bf16.mxu0 %v838
        %2215 = vmatpush1.bf16.msra.mxu0 %v837
        %2216 = vmatprep.subr.bf16.mxu0 %v830
        %2217 = vmatpush1.bf16.msra.mxu0 %v829
        %2218 = vmatprep.subr.bf16.mxu0 %v822
        %2219 = vmatpush1.bf16.msra.mxu0 %v821
        %2220 = vmatprep.subr.bf16.mxu0 %v814
        %2221 = vmatpush1.bf16.msra.mxu0 %v813
        %2222 = vmatprep.subr.bf16.mxu0 %v934
        %2223 = vmatpush2.bf16.msra.mxu0 %v933
        %2224 = vmatprep.subr.bf16.mxu0 %v926
        %2225 = vmatpush2.bf16.msra.mxu0 %v925
        %2226 = vmatprep.subr.bf16.mxu0 %v918
        %2227 = vmatpush2.bf16.msra.mxu0 %v917
        %2228 = vmatprep.subr.bf16.mxu0 %v910
        %2229 = vmatpush2.bf16.msra.mxu0 %v909
        %2230 = vmatprep.subr.bf16.mxu0 %v902
        %2231 = vmatpush2.bf16.msra.mxu0 %v901
        %2232 = vmatprep.subr.bf16.mxu0 %v894
        %2233 = vmatpush2.bf16.msra.mxu0 %v893
        %2234 = vmatprep.subr.bf16.mxu0 %v886
        %2235 = vmatpush2.bf16.msra.mxu0 %v885
        %2236 = vmatprep.subr.bf16.mxu0 %v878
        %2237 = vmatpush2.bf16.msra.mxu0 %v877
        %2238 = vmatprep.mubr.bf16.mxu0 %v2137
        %2239 = vmatmul.mubr.bf16.gmra.mxu0 %v2136
        %v2240 = vpop.f32.mrf.mxu0
        %v2241 = vadd.f32 0.0, %v2240
        %v2242 = vpop.f32.mrf.mxu0
        %v2243 = vadd.f32 0.0, %v2242
        %v2244 = vpop.f32.mrf.mxu0
        %v2245 = vpop.f32.mrf.mxu0
        %2246 = vdwg.mxu0
        %2247 = vmatprep.subr.bf16.mxu0 %v872
        %2248 = vmatpush1.bf16.msra.mxu0 %v871
        %2249 = vmatprep.subr.bf16.mxu0 %v864
        %2250 = vmatpush1.bf16.msra.mxu0 %v863
        %2251 = vmatprep.subr.bf16.mxu0 %v856
        %2252 = vmatpush1.bf16.msra.mxu0 %v855
        %2253 = vmatprep.subr.bf16.mxu0 %v848
        %2254 = vmatpush1.bf16.msra.mxu0 %v847
        %2255 = vmatprep.subr.bf16.mxu0 %v840
        %2256 = vmatpush1.bf16.msra.mxu0 %v839
        %2257 = vmatprep.subr.bf16.mxu0 %v832
        %2258 = vmatpush1.bf16.msra.mxu0 %v831
        %2259 = vmatprep.subr.bf16.mxu0 %v824
        %2260 = vmatpush1.bf16.msra.mxu0 %v823
        %2261 = vmatprep.subr.bf16.mxu0 %v816
        %2262 = vmatpush1.bf16.msra.mxu0 %v815
        %2263 = vmatprep.subr.bf16.mxu0 %v936
        %2264 = vmatpush2.bf16.msra.mxu0 %v935
        %2265 = vmatprep.subr.bf16.mxu0 %v928
        %2266 = vmatpush2.bf16.msra.mxu0 %v927
        %2267 = vmatprep.subr.bf16.mxu0 %v920
        %2268 = vmatpush2.bf16.msra.mxu0 %v919
        %2269 = vmatprep.subr.bf16.mxu0 %v912
        %2270 = vmatpush2.bf16.msra.mxu0 %v911
        %2271 = vmatprep.subr.bf16.mxu0 %v904
        %2272 = vmatpush2.bf16.msra.mxu0 %v903
        %2273 = vmatprep.subr.bf16.mxu0 %v896
        %2274 = vmatpush2.bf16.msra.mxu0 %v895
        %2275 = vmatprep.subr.bf16.mxu0 %v888
        %2276 = vmatpush2.bf16.msra.mxu0 %v887
        %2277 = vmatprep.subr.bf16.mxu0 %v880
        %2278 = vmatpush2.bf16.msra.mxu0 %v879
        %2279 = vmatprep.mubr.bf16.mxu0 %v2137
        %2280 = vmatmul.mubr.bf16.gmra.mxu0 %v2136
        %v2281 = vpop.f32.mrf.mxu0
        %v2282 = vadd.f32 0.0, %v2281
        %v2283 = vpop.f32.mrf.mxu0
        %v2284 = vadd.f32 0.0, %v2283
        %v2285 = vpop.f32.mrf.mxu0
        %v2286 = vpop.f32.mrf.mxu0
        %2287 = vdwg.mxu0
        %2288 = vmatprep.subr.bf16.mxu0 %v874
        %2289 = vmatpush1.bf16.msra.mxu0 %v873
        %2290 = vmatprep.subr.bf16.mxu0 %v866
        %2291 = vmatpush1.bf16.msra.mxu0 %v865
        %2292 = vmatprep.subr.bf16.mxu0 %v858
        %2293 = vmatpush1.bf16.msra.mxu0 %v857
        %2294 = vmatprep.subr.bf16.mxu0 %v850
        %2295 = vmatpush1.bf16.msra.mxu0 %v849
        %2296 = vmatprep.subr.bf16.mxu0 %v842
        %2297 = vmatpush1.bf16.msra.mxu0 %v841
        %2298 = vmatprep.subr.bf16.mxu0 %v834
        %2299 = vmatpush1.bf16.msra.mxu0 %v833
        %2300 = vmatprep.subr.bf16.mxu0 %v826
        %2301 = vmatpush1.bf16.msra.mxu0 %v825
        %2302 = vmatprep.subr.bf16.mxu0 %v818
        %2303 = vmatpush1.bf16.msra.mxu0 %v817
        %2304 = vmatprep.subr.bf16.mxu0 %v938
        %2305 = vmatpush2.bf16.msra.mxu0 %v937
        %2306 = vmatprep.subr.bf16.mxu0 %v930
        %2307 = vmatpush2.bf16.msra.mxu0 %v929
        %2308 = vmatprep.subr.bf16.mxu0 %v922
        %2309 = vmatpush2.bf16.msra.mxu0 %v921
        %2310 = vmatprep.subr.bf16.mxu0 %v914
        %2311 = vmatpush2.bf16.msra.mxu0 %v913
        %2312 = vmatprep.subr.bf16.mxu0 %v906
        %2313 = vmatpush2.bf16.msra.mxu0 %v905
        %2314 = vmatprep.subr.bf16.mxu0 %v898
        %2315 = vmatpush2.bf16.msra.mxu0 %v897
        %2316 = vmatprep.subr.bf16.mxu0 %v890
        %2317 = vmatpush2.bf16.msra.mxu0 %v889
        %2318 = vmatprep.subr.bf16.mxu0 %v882
        %2319 = vmatpush2.bf16.msra.mxu0 %v881
        %2320 = vmatprep.mubr.bf16.mxu0 %v2137
        %2321 = vmatmul.mubr.bf16.gmra.mxu0 %v2136
        %v2322 = vpop.f32.mrf.mxu0
        %v2323 = vadd.f32 0.0, %v2322
        %v2324 = vpop.f32.mrf.mxu0
        %v2325 = vadd.f32 0.0, %v2324
        %v2326 = vpop.f32.mrf.mxu0
        %v2327 = vpop.f32.mrf.mxu0
        %2328 = vdwg.mxu0
        %v2337 = vcombine.low %v2200, %v2202
        %v2338 = vcombine.low %v2241, %v2243
        %v2340 = vunpack.c.l.s4 1983009808
        %v2341 = vunpack.c.0.s8 %v2340
        %v2342 = vlaneseq
        %v2343 = vshrl.u32 %v2342, 7
        %v2344 = vsub.s32 %v2341, %v2343
        %v2345 = vrot.slane %v2337, %v2344
        %v2347 = vunpack.c.l.s4 1983009808
        %v2348 = vunpack.c.0.s8 %v2347
        %v2349 = vlaneseq
        %v2350 = vshrl.u32 %v2349, 7
        %v2351 = vsub.s32 %v2348, %v2350
        %v2352 = vrot.slane %v2338, %v2351
        %v2353 = vcombine.low %v2345, %v2352
        %v2354 = vcombine.low %v2282, %v2284
        %v2355 = vcombine.low %v2323, %v2325
        %v2357 = vunpack.c.l.s4 1983009808
        %v2358 = vunpack.c.0.s8 %v2357
        %v2359 = vlaneseq
        %v2360 = vshrl.u32 %v2359, 7
        %v2361 = vsub.s32 %v2358, %v2360
        %v2362 = vrot.slane %v2354, %v2361
        %v2364 = vunpack.c.l.s4 1983009808
        %v2365 = vunpack.c.0.s8 %v2364
        %v2366 = vlaneseq
        %v2367 = vshrl.u32 %v2366, 7
        %v2368 = vsub.s32 %v2365, %v2367
        %v2369 = vrot.slane %v2355, %v2368
        %v2370 = vcombine.low %v2362, %v2369
        %v2373 = vadd.f32 %v2163, %v2353
        %v2374 = vadd.f32 %v2164, %v2370
        %v2375 = vmul.f32 %v2373, 0.5
        %v2376 = vtanh.pop %v2375
        %v2377 = vadd.f32 %v2376, 1.0
        %v2378 = vmul.f32 %v2377, 0.5
        %v2380 = vrot.slane %v2373, 4
        %v2382 = vmul.f32 %v2380, 0.5
        %v2383 = vtanh.pop %v2382
        %v2384 = vadd.f32 %v2383, 1.0
        %v2385 = vmul.f32 %v2384, 0.5
        %v2386 = vtanh.pop %v2374
        %v2388 = vrot.slane %v2374, 4
        %v2390 = vmul.f32 %v2388, 0.5
        %v2391 = vtanh.pop %v2390
        %v2392 = vadd.f32 %v2391, 1.0
        %v2393 = vmul.f32 %v2392, 0.5
        %v2394 = vmul.f32 %v2385, %v2122
        %v2395 = vmul.f32 %v2378, %v2386
        %v2396 = vadd.f32 %v2394, %v2395
        %v2397 = vtanh.pop %v2396
        %v2398 = vmul.f32 %v2393, %v2397
        %v2401 = vunpack.c.l.s4 1983009808
        %v2402 = vunpack.c.0.s8 %v2401
        %v2403 = vlaneseq
        %v2404 = vshrl.u32 %v2403, 7
        %v2405 = vsub.s32 %v2402, %v2404
        %v2406 = vrot.slane %v2398, %v2405
        %v2407 = vcombine.high %v2406, %v2406
        %v2410 = vpack.c.bf16 %v2406, %v2406
        %v2411 = vpack.c.bf16 %v2407, %v2407
        %v2414 = vcombine.low %v2410, %v2411
        %v2416 = vunpack.c.l.s4 1966171168
        %v2417 = vunpack.c.0.s8 %v2416
        %v2418 = vlaneseq
        %v2419 = vshrl.u32 %v2418, 7
        %v2420 = vsub.s32 %v2417, %v2419
        %v2421 = vrot.slane %v2414, %v2420
        %v2423 = vunpack.c.l.s4 1966171168
        %v2424 = vunpack.c.0.s8 %v2423
        %v2425 = vlaneseq
        %v2426 = vshrl.u32 %v2425, 7
        %v2427 = vsub.s32 %v2424, %v2426
        %v2428 = vrot.slane %v2421, %v2427
        %s2430 = smul.u32 %s2159, 2
        %s2431 = scalar_lea.vmem %s254, %s2430 [#allocation5]
        %2432 = vst [vmem:[%s2431] sm:$0x3] %v2428
        %s2433 = smul.u32 %s17, 4294967293
        %s2434 = sadd.s32 %s2433, 5
        %s2435 = smul.u32 %s2434, 8
        %s2436 = scalar_lea.vmem %s232, %s2435 [#allocation4]
        %v2437 = vld [vmem:[%s2436] sm:$0xff]
        %v2438 = vunpack.c.l.bf16 %v2437
        %v2439 = vunpack.c.h.bf16 %v2437
        %2440 = vmatprep.subr.bf16.mxu0 %v868
        %2441 = vmatpush1.bf16.msra.mxu0 %v867
        %2442 = vmatprep.subr.bf16.mxu0 %v860
        %2443 = vmatpush1.bf16.msra.mxu0 %v859
        %2444 = vmatprep.subr.bf16.mxu0 %v852
        %2445 = vmatpush1.bf16.msra.mxu0 %v851
        %2446 = vmatprep.subr.bf16.mxu0 %v844
        %2447 = vmatpush1.bf16.msra.mxu0 %v843
        %2448 = vmatprep.subr.bf16.mxu0 %v836
        %2449 = vmatpush1.bf16.msra.mxu0 %v835
        %2450 = vmatprep.subr.bf16.mxu0 %v828
        %2451 = vmatpush1.bf16.msra.mxu0 %v827
        %2452 = vmatprep.subr.bf16.mxu0 %v820
        %2453 = vmatpush1.bf16.msra.mxu0 %v819
        %2454 = vmatprep.subr.bf16.mxu0 %v812
        %2455 = vmatpush1.bf16.msra.mxu0 %v811
        %2456 = vmatprep.subr.bf16.mxu0 %v932
        %2457 = vmatpush2.bf16.msra.mxu0 %v931
        %2458 = vmatprep.subr.bf16.mxu0 %v924
        %2459 = vmatpush2.bf16.msra.mxu0 %v923
        %2460 = vmatprep.subr.bf16.mxu0 %v916
        %2461 = vmatpush2.bf16.msra.mxu0 %v915
        %2462 = vmatprep.subr.bf16.mxu0 %v908
        %2463 = vmatpush2.bf16.msra.mxu0 %v907
        %2464 = vmatprep.subr.bf16.mxu0 %v900
        %2465 = vmatpush2.bf16.msra.mxu0 %v899
        %2466 = vmatprep.subr.bf16.mxu0 %v892
        %2467 = vmatpush2.bf16.msra.mxu0 %v891
        %2468 = vmatprep.subr.bf16.mxu0 %v884
        %2469 = vmatpush2.bf16.msra.mxu0 %v883
        %2470 = vmatprep.subr.bf16.mxu0 %v876
        %2471 = vmatpush2.bf16.msra.mxu0 %v875
        %2472 = vmatprep.mubr.bf16.mxu0 %v2411
        %2473 = vmatmul.mubr.bf16.gmra.mxu0 %v2410
        %v2474 = vpop.f32.mrf.mxu0
        %v2475 = vadd.f32 0.0, %v2474
        %v2476 = vpop.f32.mrf.mxu0
        %v2477 = vadd.f32 0.0, %v2476
        %v2478 = vpop.f32.mrf.mxu0
        %v2479 = vpop.f32.mrf.mxu0
        %2480 = vdwg.mxu0
        %2481 = vmatprep.subr.bf16.mxu0 %v870
        %2482 = vmatpush1.bf16.msra.mxu0 %v869
        %2483 = vmatprep.subr.bf16.mxu0 %v862
        %2484 = vmatpush1.bf16.msra.mxu0 %v861
        %2485 = vmatprep.subr.bf16.mxu0 %v854
        %2486 = vmatpush1.bf16.msra.mxu0 %v853
        %2487 = vmatprep.subr.bf16.mxu0 %v846
        %2488 = vmatpush1.bf16.msra.mxu0 %v845
        %2489 = vmatprep.subr.bf16.mxu0 %v838
        %2490 = vmatpush1.bf16.msra.mxu0 %v837
        %2491 = vmatprep.subr.bf16.mxu0 %v830
        %2492 = vmatpush1.bf16.msra.mxu0 %v829
        %2493 = vmatprep.subr.bf16.mxu0 %v822
        %2494 = vmatpush1.bf16.msra.mxu0 %v821
        %2495 = vmatprep.subr.bf16.mxu0 %v814
        %2496 = vmatpush1.bf16.msra.mxu0 %v813
        %2497 = vmatprep.subr.bf16.mxu0 %v934
        %2498 = vmatpush2.bf16.msra.mxu0 %v933
        %2499 = vmatprep.subr.bf16.mxu0 %v926
        %2500 = vmatpush2.bf16.msra.mxu0 %v925
        %2501 = vmatprep.subr.bf16.mxu0 %v918
        %2502 = vmatpush2.bf16.msra.mxu0 %v917
        %2503 = vmatprep.subr.bf16.mxu0 %v910
        %2504 = vmatpush2.bf16.msra.mxu0 %v909
        %2505 = vmatprep.subr.bf16.mxu0 %v902
        %2506 = vmatpush2.bf16.msra.mxu0 %v901
        %2507 = vmatprep.subr.bf16.mxu0 %v894
        %2508 = vmatpush2.bf16.msra.mxu0 %v893
        %2509 = vmatprep.subr.bf16.mxu0 %v886
        %2510 = vmatpush2.bf16.msra.mxu0 %v885
        %2511 = vmatprep.subr.bf16.mxu0 %v878
        %2512 = vmatpush2.bf16.msra.mxu0 %v877
        %2513 = vmatprep.mubr.bf16.mxu0 %v2411
        %2514 = vmatmul.mubr.bf16.gmra.mxu0 %v2410
        %v2515 = vpop.f32.mrf.mxu0
        %v2516 = vadd.f32 0.0, %v2515
        %v2517 = vpop.f32.mrf.mxu0
        %v2518 = vadd.f32 0.0, %v2517
        %v2519 = vpop.f32.mrf.mxu0
        %v2520 = vpop.f32.mrf.mxu0
        %2521 = vdwg.mxu0
        %2522 = vmatprep.subr.bf16.mxu0 %v872
        %2523 = vmatpush1.bf16.msra.mxu0 %v871
        %2524 = vmatprep.subr.bf16.mxu0 %v864
        %2525 = vmatpush1.bf16.msra.mxu0 %v863
        %2526 = vmatprep.subr.bf16.mxu0 %v856
        %2527 = vmatpush1.bf16.msra.mxu0 %v855
        %2528 = vmatprep.subr.bf16.mxu0 %v848
        %2529 = vmatpush1.bf16.msra.mxu0 %v847
        %2530 = vmatprep.subr.bf16.mxu0 %v840
        %2531 = vmatpush1.bf16.msra.mxu0 %v839
        %2532 = vmatprep.subr.bf16.mxu0 %v832
        %2533 = vmatpush1.bf16.msra.mxu0 %v831
        %2534 = vmatprep.subr.bf16.mxu0 %v824
        %2535 = vmatpush1.bf16.msra.mxu0 %v823
        %2536 = vmatprep.subr.bf16.mxu0 %v816
        %2537 = vmatpush1.bf16.msra.mxu0 %v815
        %2538 = vmatprep.subr.bf16.mxu0 %v936
        %2539 = vmatpush2.bf16.msra.mxu0 %v935
        %2540 = vmatprep.subr.bf16.mxu0 %v928
        %2541 = vmatpush2.bf16.msra.mxu0 %v927
        %2542 = vmatprep.subr.bf16.mxu0 %v920
        %2543 = vmatpush2.bf16.msra.mxu0 %v919
        %2544 = vmatprep.subr.bf16.mxu0 %v912
        %2545 = vmatpush2.bf16.msra.mxu0 %v911
        %2546 = vmatprep.subr.bf16.mxu0 %v904
        %2547 = vmatpush2.bf16.msra.mxu0 %v903
        %2548 = vmatprep.subr.bf16.mxu0 %v896
        %2549 = vmatpush2.bf16.msra.mxu0 %v895
        %2550 = vmatprep.subr.bf16.mxu0 %v888
        %2551 = vmatpush2.bf16.msra.mxu0 %v887
        %2552 = vmatprep.subr.bf16.mxu0 %v880
        %2553 = vmatpush2.bf16.msra.mxu0 %v879
        %2554 = vmatprep.mubr.bf16.mxu0 %v2411
        %2555 = vmatmul.mubr.bf16.gmra.mxu0 %v2410
        %v2556 = vpop.f32.mrf.mxu0
        %v2557 = vadd.f32 0.0, %v2556
        %v2558 = vpop.f32.mrf.mxu0
        %v2559 = vadd.f32 0.0, %v2558
        %v2560 = vpop.f32.mrf.mxu0
        %v2561 = vpop.f32.mrf.mxu0
        %2562 = vdwg.mxu0
        %2563 = vmatprep.subr.bf16.mxu0 %v874
        %2564 = vmatpush1.bf16.msra.mxu0 %v873
        %2565 = vmatprep.subr.bf16.mxu0 %v866
        %2566 = vmatpush1.bf16.msra.mxu0 %v865
        %2567 = vmatprep.subr.bf16.mxu0 %v858
        %2568 = vmatpush1.bf16.msra.mxu0 %v857
        %2569 = vmatprep.subr.bf16.mxu0 %v850
        %2570 = vmatpush1.bf16.msra.mxu0 %v849
        %2571 = vmatprep.subr.bf16.mxu0 %v842
        %2572 = vmatpush1.bf16.msra.mxu0 %v841
        %2573 = vmatprep.subr.bf16.mxu0 %v834
        %2574 = vmatpush1.bf16.msra.mxu0 %v833
        %2575 = vmatprep.subr.bf16.mxu0 %v826
        %2576 = vmatpush1.bf16.msra.mxu0 %v825
        %2577 = vmatprep.subr.bf16.mxu0 %v818
        %2578 = vmatpush1.bf16.msra.mxu0 %v817
        %2579 = vmatprep.subr.bf16.mxu0 %v938
        %2580 = vmatpush2.bf16.msra.mxu0 %v937
        %2581 = vmatprep.subr.bf16.mxu0 %v930
        %2582 = vmatpush2.bf16.msra.mxu0 %v929
        %2583 = vmatprep.subr.bf16.mxu0 %v922
        %2584 = vmatpush2.bf16.msra.mxu0 %v921
        %2585 = vmatprep.subr.bf16.mxu0 %v914
        %2586 = vmatpush2.bf16.msra.mxu0 %v913
        %2587 = vmatprep.subr.bf16.mxu0 %v906
        %2588 = vmatpush2.bf16.msra.mxu0 %v905
        %2589 = vmatprep.subr.bf16.mxu0 %v898
        %2590 = vmatpush2.bf16.msra.mxu0 %v897
        %2591 = vmatprep.subr.bf16.mxu0 %v890
        %2592 = vmatpush2.bf16.msra.mxu0 %v889
        %2593 = vmatprep.subr.bf16.mxu0 %v882
        %2594 = vmatpush2.bf16.msra.mxu0 %v881
        %2595 = vmatprep.mubr.bf16.mxu0 %v2411
        %2596 = vmatmul.mubr.bf16.gmra.mxu0 %v2410
        %v2597 = vpop.f32.mrf.mxu0
        %v2598 = vadd.f32 0.0, %v2597
        %v2599 = vpop.f32.mrf.mxu0
        %v2600 = vadd.f32 0.0, %v2599
        %v2601 = vpop.f32.mrf.mxu0
        %v2602 = vpop.f32.mrf.mxu0
        %2603 = vdwg.mxu0
        %v2612 = vcombine.low %v2475, %v2477
        %v2613 = vcombine.low %v2516, %v2518
        %v2615 = vunpack.c.l.s4 1983009808
        %v2616 = vunpack.c.0.s8 %v2615
        %v2617 = vlaneseq
        %v2618 = vshrl.u32 %v2617, 7
        %v2619 = vsub.s32 %v2616, %v2618
        %v2620 = vrot.slane %v2612, %v2619
        %v2622 = vunpack.c.l.s4 1983009808
        %v2623 = vunpack.c.0.s8 %v2622
        %v2624 = vlaneseq
        %v2625 = vshrl.u32 %v2624, 7
        %v2626 = vsub.s32 %v2623, %v2625
        %v2627 = vrot.slane %v2613, %v2626
        %v2628 = vcombine.low %v2620, %v2627
        %v2629 = vcombine.low %v2557, %v2559
        %v2630 = vcombine.low %v2598, %v2600
        %v2632 = vunpack.c.l.s4 1983009808
        %v2633 = vunpack.c.0.s8 %v2632
        %v2634 = vlaneseq
        %v2635 = vshrl.u32 %v2634, 7
        %v2636 = vsub.s32 %v2633, %v2635
        %v2637 = vrot.slane %v2629, %v2636
        %v2639 = vunpack.c.l.s4 1983009808
        %v2640 = vunpack.c.0.s8 %v2639
        %v2641 = vlaneseq
        %v2642 = vshrl.u32 %v2641, 7
        %v2643 = vsub.s32 %v2640, %v2642
        %v2644 = vrot.slane %v2630, %v2643
        %v2645 = vcombine.low %v2637, %v2644
        %v2648 = vadd.f32 %v2438, %v2628
        %v2649 = vadd.f32 %v2439, %v2645
        %v2650 = vmul.f32 %v2648, 0.5
        %v2651 = vtanh.pop %v2650
        %v2652 = vadd.f32 %v2651, 1.0
        %v2653 = vmul.f32 %v2652, 0.5
        %v2655 = vrot.slane %v2648, 4
        %v2657 = vmul.f32 %v2655, 0.5
        %v2658 = vtanh.pop %v2657
        %v2659 = vadd.f32 %v2658, 1.0
        %v2660 = vmul.f32 %v2659, 0.5
        %v2661 = vtanh.pop %v2649
        %v2663 = vrot.slane %v2649, 4
        %v2665 = vmul.f32 %v2663, 0.5
        %v2666 = vtanh.pop %v2665
        %v2667 = vadd.f32 %v2666, 1.0
        %v2668 = vmul.f32 %v2667, 0.5
        %v2669 = vmul.f32 %v2660, %v2396
        %v2670 = vmul.f32 %v2653, %v2661
        %v2671 = vadd.f32 %v2669, %v2670
        %v2672 = vtanh.pop %v2671
        %v2673 = vmul.f32 %v2668, %v2672
        %v2676 = vunpack.c.l.s4 1983009808
        %v2677 = vunpack.c.0.s8 %v2676
        %v2678 = vlaneseq
        %v2679 = vshrl.u32 %v2678, 7
        %v2680 = vsub.s32 %v2677, %v2679
        %v2681 = vrot.slane %v2673, %v2680
        %v2682 = vcombine.high %v2681, %v2681
        %v2685 = vpack.c.bf16 %v2681, %v2681
        %v2686 = vpack.c.bf16 %v2682, %v2682
        %v2689 = vcombine.low %v2685, %v2686
        %v2691 = vunpack.c.l.s4 1966171168
        %v2692 = vunpack.c.0.s8 %v2691
        %v2693 = vlaneseq
        %v2694 = vshrl.u32 %v2693, 7
        %v2695 = vsub.s32 %v2692, %v2694
        %v2696 = vrot.slane %v2689, %v2695
        %v2698 = vunpack.c.l.s4 1966171168
        %v2699 = vunpack.c.0.s8 %v2698
        %v2700 = vlaneseq
        %v2701 = vshrl.u32 %v2700, 7
        %v2702 = vsub.s32 %v2699, %v2701
        %v2703 = vrot.slane %v2696, %v2702
        %s2705 = smul.u32 %s2434, 2
        %s2706 = scalar_lea.vmem %s254, %s2705 [#allocation5]
        %2707 = vst [vmem:[%s2706] sm:$0x3] %v2703
        %s2708 = smul.u32 %s17, 4294967291
        %s2709 = sadd.s32 %s2708, 6
        %s2710 = smul.u32 %s2709, 8
        %s2711 = scalar_lea.vmem %s232, %s2710 [#allocation4]
        %v2712 = vld [vmem:[%s2711] sm:$0xff]
        %v2713 = vunpack.c.l.bf16 %v2712
        %v2714 = vunpack.c.h.bf16 %v2712
        %2715 = vmatprep.subr.bf16.mxu0 %v868
        %2716 = vmatpush1.bf16.msra.mxu0 %v867
        %2717 = vmatprep.subr.bf16.mxu0 %v860
        %2718 = vmatpush1.bf16.msra.mxu0 %v859
        %2719 = vmatprep.subr.bf16.mxu0 %v852
        %2720 = vmatpush1.bf16.msra.mxu0 %v851
        %2721 = vmatprep.subr.bf16.mxu0 %v844
        %2722 = vmatpush1.bf16.msra.mxu0 %v843
        %2723 = vmatprep.subr.bf16.mxu0 %v836
        %2724 = vmatpush1.bf16.msra.mxu0 %v835
        %2725 = vmatprep.subr.bf16.mxu0 %v828
        %2726 = vmatpush1.bf16.msra.mxu0 %v827
        %2727 = vmatprep.subr.bf16.mxu0 %v820
        %2728 = vmatpush1.bf16.msra.mxu0 %v819
        %2729 = vmatprep.subr.bf16.mxu0 %v812
        %2730 = vmatpush1.bf16.msra.mxu0 %v811
        %2731 = vmatprep.subr.bf16.mxu0 %v932
        %2732 = vmatpush2.bf16.msra.mxu0 %v931
        %2733 = vmatprep.subr.bf16.mxu0 %v924
        %2734 = vmatpush2.bf16.msra.mxu0 %v923
        %2735 = vmatprep.subr.bf16.mxu0 %v916
        %2736 = vmatpush2.bf16.msra.mxu0 %v915
        %2737 = vmatprep.subr.bf16.mxu0 %v908
        %2738 = vmatpush2.bf16.msra.mxu0 %v907
        %2739 = vmatprep.subr.bf16.mxu0 %v900
        %2740 = vmatpush2.bf16.msra.mxu0 %v899
        %2741 = vmatprep.subr.bf16.mxu0 %v892
        %2742 = vmatpush2.bf16.msra.mxu0 %v891
        %2743 = vmatprep.subr.bf16.mxu0 %v884
        %2744 = vmatpush2.bf16.msra.mxu0 %v883
        %2745 = vmatprep.subr.bf16.mxu0 %v876
        %2746 = vmatpush2.bf16.msra.mxu0 %v875
        %2747 = vmatprep.mubr.bf16.mxu0 %v2686
        %2748 = vmatmul.mubr.bf16.gmra.mxu0 %v2685
        %v2749 = vpop.f32.mrf.mxu0
        %v2750 = vadd.f32 0.0, %v2749
        %v2751 = vpop.f32.mrf.mxu0
        %v2752 = vadd.f32 0.0, %v2751
        %v2753 = vpop.f32.mrf.mxu0
        %v2754 = vpop.f32.mrf.mxu0
        %2755 = vdwg.mxu0
        %2756 = vmatprep.subr.bf16.mxu0 %v870
        %2757 = vmatpush1.bf16.msra.mxu0 %v869
        %2758 = vmatprep.subr.bf16.mxu0 %v862
        %2759 = vmatpush1.bf16.msra.mxu0 %v861
        %2760 = vmatprep.subr.bf16.mxu0 %v854
        %2761 = vmatpush1.bf16.msra.mxu0 %v853
        %2762 = vmatprep.subr.bf16.mxu0 %v846
        %2763 = vmatpush1.bf16.msra.mxu0 %v845
        %2764 = vmatprep.subr.bf16.mxu0 %v838
        %2765 = vmatpush1.bf16.msra.mxu0 %v837
        %2766 = vmatprep.subr.bf16.mxu0 %v830
        %2767 = vmatpush1.bf16.msra.mxu0 %v829
        %2768 = vmatprep.subr.bf16.mxu0 %v822
        %2769 = vmatpush1.bf16.msra.mxu0 %v821
        %2770 = vmatprep.subr.bf16.mxu0 %v814
        %2771 = vmatpush1.bf16.msra.mxu0 %v813
        %2772 = vmatprep.subr.bf16.mxu0 %v934
        %2773 = vmatpush2.bf16.msra.mxu0 %v933
        %2774 = vmatprep.subr.bf16.mxu0 %v926
        %2775 = vmatpush2.bf16.msra.mxu0 %v925
        %2776 = vmatprep.subr.bf16.mxu0 %v918
        %2777 = vmatpush2.bf16.msra.mxu0 %v917
        %2778 = vmatprep.subr.bf16.mxu0 %v910
        %2779 = vmatpush2.bf16.msra.mxu0 %v909
        %2780 = vmatprep.subr.bf16.mxu0 %v902
        %2781 = vmatpush2.bf16.msra.mxu0 %v901
        %2782 = vmatprep.subr.bf16.mxu0 %v894
        %2783 = vmatpush2.bf16.msra.mxu0 %v893
        %2784 = vmatprep.subr.bf16.mxu0 %v886
        %2785 = vmatpush2.bf16.msra.mxu0 %v885
        %2786 = vmatprep.subr.bf16.mxu0 %v878
        %2787 = vmatpush2.bf16.msra.mxu0 %v877
        %2788 = vmatprep.mubr.bf16.mxu0 %v2686
        %2789 = vmatmul.mubr.bf16.gmra.mxu0 %v2685
        %v2790 = vpop.f32.mrf.mxu0
        %v2791 = vadd.f32 0.0, %v2790
        %v2792 = vpop.f32.mrf.mxu0
        %v2793 = vadd.f32 0.0, %v2792
        %v2794 = vpop.f32.mrf.mxu0
        %v2795 = vpop.f32.mrf.mxu0
        %2796 = vdwg.mxu0
        %2797 = vmatprep.subr.bf16.mxu0 %v872
        %2798 = vmatpush1.bf16.msra.mxu0 %v871
        %2799 = vmatprep.subr.bf16.mxu0 %v864
        %2800 = vmatpush1.bf16.msra.mxu0 %v863
        %2801 = vmatprep.subr.bf16.mxu0 %v856
        %2802 = vmatpush1.bf16.msra.mxu0 %v855
        %2803 = vmatprep.subr.bf16.mxu0 %v848
        %2804 = vmatpush1.bf16.msra.mxu0 %v847
        %2805 = vmatprep.subr.bf16.mxu0 %v840
        %2806 = vmatpush1.bf16.msra.mxu0 %v839
        %2807 = vmatprep.subr.bf16.mxu0 %v832
        %2808 = vmatpush1.bf16.msra.mxu0 %v831
        %2809 = vmatprep.subr.bf16.mxu0 %v824
        %2810 = vmatpush1.bf16.msra.mxu0 %v823
        %2811 = vmatprep.subr.bf16.mxu0 %v816
        %2812 = vmatpush1.bf16.msra.mxu0 %v815
        %2813 = vmatprep.subr.bf16.mxu0 %v936
        %2814 = vmatpush2.bf16.msra.mxu0 %v935
        %2815 = vmatprep.subr.bf16.mxu0 %v928
        %2816 = vmatpush2.bf16.msra.mxu0 %v927
        %2817 = vmatprep.subr.bf16.mxu0 %v920
        %2818 = vmatpush2.bf16.msra.mxu0 %v919
        %2819 = vmatprep.subr.bf16.mxu0 %v912
        %2820 = vmatpush2.bf16.msra.mxu0 %v911
        %2821 = vmatprep.subr.bf16.mxu0 %v904
        %2822 = vmatpush2.bf16.msra.mxu0 %v903
        %2823 = vmatprep.subr.bf16.mxu0 %v896
        %2824 = vmatpush2.bf16.msra.mxu0 %v895
        %2825 = vmatprep.subr.bf16.mxu0 %v888
        %2826 = vmatpush2.bf16.msra.mxu0 %v887
        %2827 = vmatprep.subr.bf16.mxu0 %v880
        %2828 = vmatpush2.bf16.msra.mxu0 %v879
        %2829 = vmatprep.mubr.bf16.mxu0 %v2686
        %2830 = vmatmul.mubr.bf16.gmra.mxu0 %v2685
        %v2831 = vpop.f32.mrf.mxu0
        %v2832 = vadd.f32 0.0, %v2831
        %v2833 = vpop.f32.mrf.mxu0
        %v2834 = vadd.f32 0.0, %v2833
        %v2835 = vpop.f32.mrf.mxu0
        %v2836 = vpop.f32.mrf.mxu0
        %2837 = vdwg.mxu0
        %2838 = vmatprep.subr.bf16.mxu0 %v874
        %2839 = vmatpush1.bf16.msra.mxu0 %v873
        %2840 = vmatprep.subr.bf16.mxu0 %v866
        %2841 = vmatpush1.bf16.msra.mxu0 %v865
        %2842 = vmatprep.subr.bf16.mxu0 %v858
        %2843 = vmatpush1.bf16.msra.mxu0 %v857
        %2844 = vmatprep.subr.bf16.mxu0 %v850
        %2845 = vmatpush1.bf16.msra.mxu0 %v849
        %2846 = vmatprep.subr.bf16.mxu0 %v842
        %2847 = vmatpush1.bf16.msra.mxu0 %v841
        %2848 = vmatprep.subr.bf16.mxu0 %v834
        %2849 = vmatpush1.bf16.msra.mxu0 %v833
        %2850 = vmatprep.subr.bf16.mxu0 %v826
        %2851 = vmatpush1.bf16.msra.mxu0 %v825
        %2852 = vmatprep.subr.bf16.mxu0 %v818
        %2853 = vmatpush1.bf16.msra.mxu0 %v817
        %2854 = vmatprep.subr.bf16.mxu0 %v938
        %2855 = vmatpush2.bf16.msra.mxu0 %v937
        %2856 = vmatprep.subr.bf16.mxu0 %v930
        %2857 = vmatpush2.bf16.msra.mxu0 %v929
        %2858 = vmatprep.subr.bf16.mxu0 %v922
        %2859 = vmatpush2.bf16.msra.mxu0 %v921
        %2860 = vmatprep.subr.bf16.mxu0 %v914
        %2861 = vmatpush2.bf16.msra.mxu0 %v913
        %2862 = vmatprep.subr.bf16.mxu0 %v906
        %2863 = vmatpush2.bf16.msra.mxu0 %v905
        %2864 = vmatprep.subr.bf16.mxu0 %v898
        %2865 = vmatpush2.bf16.msra.mxu0 %v897
        %2866 = vmatprep.subr.bf16.mxu0 %v890
        %2867 = vmatpush2.bf16.msra.mxu0 %v889
        %2868 = vmatprep.subr.bf16.mxu0 %v882
        %2869 = vmatpush2.bf16.msra.mxu0 %v881
        %2870 = vmatprep.mubr.bf16.mxu0 %v2686
        %2871 = vmatmul.mubr.bf16.gmra.mxu0 %v2685
        %v2872 = vpop.f32.mrf.mxu0
        %v2873 = vadd.f32 0.0, %v2872
        %v2874 = vpop.f32.mrf.mxu0
        %v2875 = vadd.f32 0.0, %v2874
        %v2876 = vpop.f32.mrf.mxu0
        %v2877 = vpop.f32.mrf.mxu0
        %2878 = vdwg.mxu0
        %v2887 = vcombine.low %v2750, %v2752
        %v2888 = vcombine.low %v2791, %v2793
        %v2890 = vunpack.c.l.s4 1983009808
        %v2891 = vunpack.c.0.s8 %v2890
        %v2892 = vlaneseq
        %v2893 = vshrl.u32 %v2892, 7
        %v2894 = vsub.s32 %v2891, %v2893
        %v2895 = vrot.slane %v2887, %v2894
        %v2897 = vunpack.c.l.s4 1983009808
        %v2898 = vunpack.c.0.s8 %v2897
        %v2899 = vlaneseq
        %v2900 = vshrl.u32 %v2899, 7
        %v2901 = vsub.s32 %v2898, %v2900
        %v2902 = vrot.slane %v2888, %v2901
        %v2903 = vcombine.low %v2895, %v2902
        %v2904 = vcombine.low %v2832, %v2834
        %v2905 = vcombine.low %v2873, %v2875
        %v2907 = vunpack.c.l.s4 1983009808
        %v2908 = vunpack.c.0.s8 %v2907
        %v2909 = vlaneseq
        %v2910 = vshrl.u32 %v2909, 7
        %v2911 = vsub.s32 %v2908, %v2910
        %v2912 = vrot.slane %v2904, %v2911
        %v2914 = vunpack.c.l.s4 1983009808
        %v2915 = vunpack.c.0.s8 %v2914
        %v2916 = vlaneseq
        %v2917 = vshrl.u32 %v2916, 7
        %v2918 = vsub.s32 %v2915, %v2917
        %v2919 = vrot.slane %v2905, %v2918
        %v2920 = vcombine.low %v2912, %v2919
        %v2923 = vadd.f32 %v2713, %v2903
        %v2924 = vadd.f32 %v2714, %v2920
        %v2925 = vmul.f32 %v2923, 0.5
        %v2926 = vtanh.pop %v2925
        %v2927 = vadd.f32 %v2926, 1.0
        %v2928 = vmul.f32 %v2927, 0.5
        %v2930 = vrot.slane %v2923, 4
        %v2932 = vmul.f32 %v2930, 0.5
        %v2933 = vtanh.pop %v2932
        %v2934 = vadd.f32 %v2933, 1.0
        %v2935 = vmul.f32 %v2934, 0.5
        %v2936 = vtanh.pop %v2924
        %v2938 = vrot.slane %v2924, 4
        %v2940 = vmul.f32 %v2938, 0.5
        %v2941 = vtanh.pop %v2940
        %v2942 = vadd.f32 %v2941, 1.0
        %v2943 = vmul.f32 %v2942, 0.5
        %v2944 = vmul.f32 %v2935, %v2671
        %v2945 = vmul.f32 %v2928, %v2936
        %v2946 = vadd.f32 %v2944, %v2945
        %v2947 = vtanh.pop %v2946
        %v2948 = vmul.f32 %v2943, %v2947
        %v2951 = vunpack.c.l.s4 1983009808
        %v2952 = vunpack.c.0.s8 %v2951
        %v2953 = vlaneseq
        %v2954 = vshrl.u32 %v2953, 7
        %v2955 = vsub.s32 %v2952, %v2954
        %v2956 = vrot.slane %v2948, %v2955
        %v2957 = vcombine.high %v2956, %v2956
        %v2960 = vpack.c.bf16 %v2956, %v2956
        %v2961 = vpack.c.bf16 %v2957, %v2957
        %v2964 = vcombine.low %v2960, %v2961
        %v2966 = vunpack.c.l.s4 1966171168
        %v2967 = vunpack.c.0.s8 %v2966
        %v2968 = vlaneseq
        %v2969 = vshrl.u32 %v2968, 7
        %v2970 = vsub.s32 %v2967, %v2969
        %v2971 = vrot.slane %v2964, %v2970
        %v2973 = vunpack.c.l.s4 1966171168
        %v2974 = vunpack.c.0.s8 %v2973
        %v2975 = vlaneseq
        %v2976 = vshrl.u32 %v2975, 7
        %v2977 = vsub.s32 %v2974, %v2976
        %v2978 = vrot.slane %v2971, %v2977
        %s2980 = smul.u32 %s2709, 2
        %s2981 = scalar_lea.vmem %s254, %s2980 [#allocation5]
        %2982 = vst [vmem:[%s2981] sm:$0x3] %v2978
        %s2983 = smul.u32 %s17, 4294967289
        %s2984 = sadd.s32 %s2983, 7
        %s2985 = smul.u32 %s2984, 8
        %s2986 = scalar_lea.vmem %s232, %s2985 [#allocation4]
        %v2987 = vld [vmem:[%s2986] sm:$0xff]
        %v2988 = vunpack.c.l.bf16 %v2987
        %v2989 = vunpack.c.h.bf16 %v2987
        %2990 = vmatprep.subr.bf16.mxu0 %v868
        %2991 = vmatpush1.bf16.msra.mxu0 %v867
        %2992 = vmatprep.subr.bf16.mxu0 %v860
        %2993 = vmatpush1.bf16.msra.mxu0 %v859
        %2994 = vmatprep.subr.bf16.mxu0 %v852
        %2995 = vmatpush1.bf16.msra.mxu0 %v851
        %2996 = vmatprep.subr.bf16.mxu0 %v844
        %2997 = vmatpush1.bf16.msra.mxu0 %v843
        %2998 = vmatprep.subr.bf16.mxu0 %v836
        %2999 = vmatpush1.bf16.msra.mxu0 %v835
        %3000 = vmatprep.subr.bf16.mxu0 %v828
        %3001 = vmatpush1.bf16.msra.mxu0 %v827
        %3002 = vmatprep.subr.bf16.mxu0 %v820
        %3003 = vmatpush1.bf16.msra.mxu0 %v819
        %3004 = vmatprep.subr.bf16.mxu0 %v812
        %3005 = vmatpush1.bf16.msra.mxu0 %v811
        %3006 = vmatprep.subr.bf16.mxu0 %v932
        %3007 = vmatpush2.bf16.msra.mxu0 %v931
        %3008 = vmatprep.subr.bf16.mxu0 %v924
        %3009 = vmatpush2.bf16.msra.mxu0 %v923
        %3010 = vmatprep.subr.bf16.mxu0 %v916
        %3011 = vmatpush2.bf16.msra.mxu0 %v915
        %3012 = vmatprep.subr.bf16.mxu0 %v908
        %3013 = vmatpush2.bf16.msra.mxu0 %v907
        %3014 = vmatprep.subr.bf16.mxu0 %v900
        %3015 = vmatpush2.bf16.msra.mxu0 %v899
        %3016 = vmatprep.subr.bf16.mxu0 %v892
        %3017 = vmatpush2.bf16.msra.mxu0 %v891
        %3018 = vmatprep.subr.bf16.mxu0 %v884
        %3019 = vmatpush2.bf16.msra.mxu0 %v883
        %3020 = vmatprep.subr.bf16.mxu0 %v876
        %3021 = vmatpush2.bf16.msra.mxu0 %v875
        %3022 = vmatprep.mubr.bf16.mxu0 %v2961
        %3023 = vmatmul.mubr.bf16.gmra.mxu0 %v2960
        %v3024 = vpop.f32.mrf.mxu0
        %v3025 = vadd.f32 0.0, %v3024
        %v3026 = vpop.f32.mrf.mxu0
        %v3027 = vadd.f32 0.0, %v3026
        %v3028 = vpop.f32.mrf.mxu0
        %v3029 = vpop.f32.mrf.mxu0
        %3030 = vdwg.mxu0
        %3031 = vmatprep.subr.bf16.mxu0 %v870
        %3032 = vmatpush1.bf16.msra.mxu0 %v869
        %3033 = vmatprep.subr.bf16.mxu0 %v862
        %3034 = vmatpush1.bf16.msra.mxu0 %v861
        %3035 = vmatprep.subr.bf16.mxu0 %v854
        %3036 = vmatpush1.bf16.msra.mxu0 %v853
        %3037 = vmatprep.subr.bf16.mxu0 %v846
        %3038 = vmatpush1.bf16.msra.mxu0 %v845
        %3039 = vmatprep.subr.bf16.mxu0 %v838
        %3040 = vmatpush1.bf16.msra.mxu0 %v837
        %3041 = vmatprep.subr.bf16.mxu0 %v830
        %3042 = vmatpush1.bf16.msra.mxu0 %v829
        %3043 = vmatprep.subr.bf16.mxu0 %v822
        %3044 = vmatpush1.bf16.msra.mxu0 %v821
        %3045 = vmatprep.subr.bf16.mxu0 %v814
        %3046 = vmatpush1.bf16.msra.mxu0 %v813
        %3047 = vmatprep.subr.bf16.mxu0 %v934
        %3048 = vmatpush2.bf16.msra.mxu0 %v933
        %3049 = vmatprep.subr.bf16.mxu0 %v926
        %3050 = vmatpush2.bf16.msra.mxu0 %v925
        %3051 = vmatprep.subr.bf16.mxu0 %v918
        %3052 = vmatpush2.bf16.msra.mxu0 %v917
        %3053 = vmatprep.subr.bf16.mxu0 %v910
        %3054 = vmatpush2.bf16.msra.mxu0 %v909
        %3055 = vmatprep.subr.bf16.mxu0 %v902
        %3056 = vmatpush2.bf16.msra.mxu0 %v901
        %3057 = vmatprep.subr.bf16.mxu0 %v894
        %3058 = vmatpush2.bf16.msra.mxu0 %v893
        %3059 = vmatprep.subr.bf16.mxu0 %v886
        %3060 = vmatpush2.bf16.msra.mxu0 %v885
        %3061 = vmatprep.subr.bf16.mxu0 %v878
        %3062 = vmatpush2.bf16.msra.mxu0 %v877
        %3063 = vmatprep.mubr.bf16.mxu0 %v2961
        %3064 = vmatmul.mubr.bf16.gmra.mxu0 %v2960
        %v3065 = vpop.f32.mrf.mxu0
        %v3066 = vadd.f32 0.0, %v3065
        %v3067 = vpop.f32.mrf.mxu0
        %v3068 = vadd.f32 0.0, %v3067
        %v3069 = vpop.f32.mrf.mxu0
        %v3070 = vpop.f32.mrf.mxu0
        %3071 = vdwg.mxu0
        %3072 = vmatprep.subr.bf16.mxu0 %v872
        %3073 = vmatpush1.bf16.msra.mxu0 %v871
        %3074 = vmatprep.subr.bf16.mxu0 %v864
        %3075 = vmatpush1.bf16.msra.mxu0 %v863
        %3076 = vmatprep.subr.bf16.mxu0 %v856
        %3077 = vmatpush1.bf16.msra.mxu0 %v855
        %3078 = vmatprep.subr.bf16.mxu0 %v848
        %3079 = vmatpush1.bf16.msra.mxu0 %v847
        %3080 = vmatprep.subr.bf16.mxu0 %v840
        %3081 = vmatpush1.bf16.msra.mxu0 %v839
        %3082 = vmatprep.subr.bf16.mxu0 %v832
        %3083 = vmatpush1.bf16.msra.mxu0 %v831
        %3084 = vmatprep.subr.bf16.mxu0 %v824
        %3085 = vmatpush1.bf16.msra.mxu0 %v823
        %3086 = vmatprep.subr.bf16.mxu0 %v816
        %3087 = vmatpush1.bf16.msra.mxu0 %v815
        %3088 = vmatprep.subr.bf16.mxu0 %v936
        %3089 = vmatpush2.bf16.msra.mxu0 %v935
        %3090 = vmatprep.subr.bf16.mxu0 %v928
        %3091 = vmatpush2.bf16.msra.mxu0 %v927
        %3092 = vmatprep.subr.bf16.mxu0 %v920
        %3093 = vmatpush2.bf16.msra.mxu0 %v919
        %3094 = vmatprep.subr.bf16.mxu0 %v912
        %3095 = vmatpush2.bf16.msra.mxu0 %v911
        %3096 = vmatprep.subr.bf16.mxu0 %v904
        %3097 = vmatpush2.bf16.msra.mxu0 %v903
        %3098 = vmatprep.subr.bf16.mxu0 %v896
        %3099 = vmatpush2.bf16.msra.mxu0 %v895
        %3100 = vmatprep.subr.bf16.mxu0 %v888
        %3101 = vmatpush2.bf16.msra.mxu0 %v887
        %3102 = vmatprep.subr.bf16.mxu0 %v880
        %3103 = vmatpush2.bf16.msra.mxu0 %v879
        %3104 = vmatprep.mubr.bf16.mxu0 %v2961
        %3105 = vmatmul.mubr.bf16.gmra.mxu0 %v2960
        %v3106 = vpop.f32.mrf.mxu0
        %v3107 = vadd.f32 0.0, %v3106
        %v3108 = vpop.f32.mrf.mxu0
        %v3109 = vadd.f32 0.0, %v3108
        %v3110 = vpop.f32.mrf.mxu0
        %v3111 = vpop.f32.mrf.mxu0
        %3112 = vdwg.mxu0
        %3113 = vmatprep.subr.bf16.mxu0 %v874
        %3114 = vmatpush1.bf16.msra.mxu0 %v873
        %3115 = vmatprep.subr.bf16.mxu0 %v866
        %3116 = vmatpush1.bf16.msra.mxu0 %v865
        %3117 = vmatprep.subr.bf16.mxu0 %v858
        %3118 = vmatpush1.bf16.msra.mxu0 %v857
        %3119 = vmatprep.subr.bf16.mxu0 %v850
        %3120 = vmatpush1.bf16.msra.mxu0 %v849
        %3121 = vmatprep.subr.bf16.mxu0 %v842
        %3122 = vmatpush1.bf16.msra.mxu0 %v841
        %3123 = vmatprep.subr.bf16.mxu0 %v834
        %3124 = vmatpush1.bf16.msra.mxu0 %v833
        %3125 = vmatprep.subr.bf16.mxu0 %v826
        %3126 = vmatpush1.bf16.msra.mxu0 %v825
        %3127 = vmatprep.subr.bf16.mxu0 %v818
        %3128 = vmatpush1.bf16.msra.mxu0 %v817
        %3129 = vmatprep.subr.bf16.mxu0 %v938
        %3130 = vmatpush2.bf16.msra.mxu0 %v937
        %3131 = vmatprep.subr.bf16.mxu0 %v930
        %3132 = vmatpush2.bf16.msra.mxu0 %v929
        %3133 = vmatprep.subr.bf16.mxu0 %v922
        %3134 = vmatpush2.bf16.msra.mxu0 %v921
        %3135 = vmatprep.subr.bf16.mxu0 %v914
        %3136 = vmatpush2.bf16.msra.mxu0 %v913
        %3137 = vmatprep.subr.bf16.mxu0 %v906
        %3138 = vmatpush2.bf16.msra.mxu0 %v905
        %3139 = vmatprep.subr.bf16.mxu0 %v898
        %3140 = vmatpush2.bf16.msra.mxu0 %v897
        %3141 = vmatprep.subr.bf16.mxu0 %v890
        %3142 = vmatpush2.bf16.msra.mxu0 %v889
        %3143 = vmatprep.subr.bf16.mxu0 %v882
        %3144 = vmatpush2.bf16.msra.mxu0 %v881
        %3145 = vmatprep.mubr.bf16.mxu0 %v2961
        %3146 = vmatmul.mubr.bf16.gmra.mxu0 %v2960
        %v3147 = vpop.f32.mrf.mxu0
        %v3148 = vadd.f32 0.0, %v3147
        %v3149 = vpop.f32.mrf.mxu0
        %v3150 = vadd.f32 0.0, %v3149
        %v3151 = vpop.f32.mrf.mxu0
        %v3152 = vpop.f32.mrf.mxu0
        %3153 = vdwg.mxu0
        %v3162 = vcombine.low %v3025, %v3027
        %v3163 = vcombine.low %v3066, %v3068
        %v3165 = vunpack.c.l.s4 1983009808
        %v3166 = vunpack.c.0.s8 %v3165
        %v3167 = vlaneseq
        %v3168 = vshrl.u32 %v3167, 7
        %v3169 = vsub.s32 %v3166, %v3168
        %v3170 = vrot.slane %v3162, %v3169
        %v3172 = vunpack.c.l.s4 1983009808
        %v3173 = vunpack.c.0.s8 %v3172
        %v3174 = vlaneseq
        %v3175 = vshrl.u32 %v3174, 7
        %v3176 = vsub.s32 %v3173, %v3175
        %v3177 = vrot.slane %v3163, %v3176
        %v3178 = vcombine.low %v3170, %v3177
        %v3179 = vcombine.low %v3107, %v3109
        %v3180 = vcombine.low %v3148, %v3150
        %v3182 = vunpack.c.l.s4 1983009808
        %v3183 = vunpack.c.0.s8 %v3182
        %v3184 = vlaneseq
        %v3185 = vshrl.u32 %v3184, 7
        %v3186 = vsub.s32 %v3183, %v3185
        %v3187 = vrot.slane %v3179, %v3186
        %v3189 = vunpack.c.l.s4 1983009808
        %v3190 = vunpack.c.0.s8 %v3189
        %v3191 = vlaneseq
        %v3192 = vshrl.u32 %v3191, 7
        %v3193 = vsub.s32 %v3190, %v3192
        %v3194 = vrot.slane %v3180, %v3193
        %v3195 = vcombine.low %v3187, %v3194
        %v3198 = vadd.f32 %v2988, %v3178
        %v3199 = vadd.f32 %v2989, %v3195
        %v3200 = vmul.f32 %v3198, 0.5
        %v3201 = vtanh.pop %v3200
        %v3202 = vadd.f32 %v3201, 1.0
        %v3203 = vmul.f32 %v3202, 0.5
        %v3205 = vrot.slane %v3198, 4
        %v3207 = vmul.f32 %v3205, 0.5
        %v3208 = vtanh.pop %v3207
        %v3209 = vadd.f32 %v3208, 1.0
        %v3210 = vmul.f32 %v3209, 0.5
        %v3211 = vtanh.pop %v3199
        %v3213 = vrot.slane %v3199, 4
        %v3215 = vmul.f32 %v3213, 0.5
        %v3216 = vtanh.pop %v3215
        %v3217 = vadd.f32 %v3216, 1.0
        %v3218 = vmul.f32 %v3217, 0.5
        %v3219 = vmul.f32 %v3210, %v2946
        %v3220 = vmul.f32 %v3203, %v3211
        %v3221 = vadd.f32 %v3219, %v3220
        %v3222 = vtanh.pop %v3221
        %v3223 = vmul.f32 %v3218, %v3222
        %v3226 = vunpack.c.l.s4 1983009808
        %v3227 = vunpack.c.0.s8 %v3226
        %v3228 = vlaneseq
        %v3229 = vshrl.u32 %v3228, 7
        %v3230 = vsub.s32 %v3227, %v3229
        %v3231 = vrot.slane %v3223, %v3230
        %v3232 = vcombine.high %v3231, %v3231
        %v3235 = vpack.c.bf16 %v3231, %v3231
        %v3236 = vpack.c.bf16 %v3232, %v3232
        %v3239 = vcombine.low %v3235, %v3236
        %v3241 = vunpack.c.l.s4 1966171168
        %v3242 = vunpack.c.0.s8 %v3241
        %v3243 = vlaneseq
        %v3244 = vshrl.u32 %v3243, 7
        %v3245 = vsub.s32 %v3242, %v3244
        %v3246 = vrot.slane %v3239, %v3245
        %v3248 = vunpack.c.l.s4 1966171168
        %v3249 = vunpack.c.0.s8 %v3248
        %v3250 = vlaneseq
        %v3251 = vshrl.u32 %v3250, 7
        %v3252 = vsub.s32 %v3249, %v3251
        %v3253 = vrot.slane %v3246, %v3252
        %s3255 = smul.u32 %s2984, 2
        %s3256 = scalar_lea.vmem %s254, %s3255 [#allocation5]
        %3257 = vst [vmem:[%s3256] sm:$0x3] %v3253
        %3258 = vst [vmem:[#allocation2] sm:$0xf] %v3223
        %3259 = vst [vmem:[#allocation3] sm:$0xf] %v3221
        %s3260 = sand.u32 %s105, 1
        %s3261 = sand.u32 %s105, 1
        %s3262 = smul.addr %s3261, 16
        %s3263 = scalar_lea.vmem [#allocation5], %s3262
        // Predicated region
        $region71: #{decoder_forward.6} parent=61 // pred_check
          %p3264 = pneg %p115
        $region72: #{decoder_forward.6} parent=61 // pred_check_branch
          %3266 = sbr.rel (%p3264) target = $region74
        $region73: #{decoder_forward.6} parent=61 // pred_region
          %s3267 = smul.u32 %s18, 2
          %s3268 = ssub.s32 0, %s3267
          %s3269 = smul.u32 %s17, %s3268
          %s3270 = sadd.s32 %s18, %s3269
          %s3271 = smul.u32 8, %s3270
          %s3272 = smul.u32 2, %s17
          %s3273 = smul.addr %s3271, 4
          %s3274 = sadd.s32 %s3272, %s3273
          %s3275 = scalar_lea.vmem %s2, %s3274
          // Predicated region
          $region75: #{decoder_forward.6} parent=73 // pred_check
            _
          $region76: #{decoder_forward.6} parent=73 // pred_check_branch
            %3277 = sbr.rel (0) target = $region78
          $region77: #{decoder_forward.6} parent=73 // pred_region
            // Predicated region
            $region79: #{decoder_forward.6} parent=77 // pred_check
              _
            $region80: #{decoder_forward.6} parent=77 // pred_check_branch
              %3279 = sbr.rel target = $region82
            $region81: #{decoder_forward.6} parent=77 // pred_region
              // Predicated region
              $region94: #{decoder_forward.6} parent=81 // pred_check
                _
              $region95: #{decoder_forward.6} parent=81 // pred_check_branch
                %3309 = sbr.rel (0) target = $region97
              $region96: #{decoder_forward.6} parent=81 // pred_region
                loop: start=0, step=1, limit=1
                $region98: #{decoder_forward.6} parent=96 // loop_pre_header
                  _
                $region99: #{decoder_forward.6} parent=96 // loop_header
                  %s3311 = sphi 0, %s3315
                  %p3312 = scmp.ge.s32.totalorder %s3311, 1
                  %s3316 = sphi %s3263, %s3263
                  %s3317 = sphi %s3275, %s3275
                $region100: #{decoder_forward.6} parent=96 // loop_header_branch
                  %3314 = sbr.rel (%p3312) target = $region104
                $region101: #{decoder_forward.6} parent=96 // loop_body
                  _
                $region102: #{decoder_forward.6} parent=96 // loop_footer
                  %s3315 = sadd.s32 1, %s3311
                $region103: #{decoder_forward.6} parent=96 // loop_footer_branch
                  %3310 = sbr.rel target = $region99
                $region104: #{decoder_forward.6} parent=96 // loop_exit
                  _
                %s3319 = ssub.s32 4, 1
                loop: start=0, step=1, limit=1
                $region105: #{decoder_forward.6} parent=96 // loop_pre_header
                  _
                $region106: #{decoder_forward.6} parent=96 // loop_header
                  %s3321 = sphi 0, %s3325
                  %p3322 = scmp.ge.s32.totalorder %s3321, 1
                  %s3326 = sphi %s3263, %s3263
                  %s3327 = sphi %s3275, %s3275
                $region107: #{decoder_forward.6} parent=96 // loop_header_branch
                  %3324 = sbr.rel (%p3322) target = $region111
                $region108: #{decoder_forward.6} parent=96 // loop_body
                  %v3328 = vld [vmem:[%s3326] sm:%s3319]
                  %3329 = vst [vmem:[%s3327] sm:%s3319] %v3328
                  %v3330 = vld [vmem:[%s3326 + $0x2] sm:%s3319]
                  %3331 = vst [vmem:[%s3327 + $0x4] sm:%s3319] %v3330
                  %v3332 = vld [vmem:[%s3326 + $0x4] sm:%s3319]
                  %3333 = vst [vmem:[%s3327 + $0x8] sm:%s3319] %v3332
                  %v3334 = vld [vmem:[%s3326 + $0x6] sm:%s3319]
                  %3335 = vst [vmem:[%s3327 + $0xc] sm:%s3319] %v3334
                  %v3336 = vld [vmem:[%s3326 + $0x8] sm:%s3319]
                  %3337 = vst [vmem:[%s3327 + $0x10] sm:%s3319] %v3336
                  %v3338 = vld [vmem:[%s3326 + $0xa] sm:%s3319]
                  %3339 = vst [vmem:[%s3327 + $0x14] sm:%s3319] %v3338
                  %v3340 = vld [vmem:[%s3326 + $0xc] sm:%s3319]
                  %3341 = vst [vmem:[%s3327 + $0x18] sm:%s3319] %v3340
                  %v3342 = vld [vmem:[%s3326 + $0xe] sm:%s3319]
                  %3343 = vst [vmem:[%s3327 + $0x1c] sm:%s3319] %v3342
                $region109: #{decoder_forward.6} parent=96 // loop_footer
                  %s3325 = sadd.s32 1, %s3321
                $region110: #{decoder_forward.6} parent=96 // loop_footer_branch
                  %3320 = sbr.rel target = $region106
                $region111: #{decoder_forward.6} parent=96 // loop_exit
                  _
              $region97: #{decoder_forward.6} parent=81 // pred_fallthru
                _
            $region82: #{decoder_forward.6} parent=77 // pred_fallthru
              _
            // Predicated region
            $region83: #{decoder_forward.6} parent=77 // pred_check
              _
            $region84: #{decoder_forward.6} parent=77 // pred_check_branch
              %3281 = sbr.rel (0) target = $region86
            $region85: #{decoder_forward.6} parent=77 // pred_region
              %s3283 = ssub.s32 4, 1
              loop: start=0, step=1, limit=1
              $region87: #{decoder_forward.6} parent=85 // loop_pre_header
                _
              $region88: #{decoder_forward.6} parent=85 // loop_header
                %s3285 = sphi 0, %s3289
                %p3286 = scmp.ge.s32.totalorder %s3285, 1
                %s3290 = sphi %s3263, %s3263
                %s3291 = sphi %s3275, %s3275
              $region89: #{decoder_forward.6} parent=85 // loop_header_branch
                %3288 = sbr.rel (%p3286) target = $region93
              $region90: #{decoder_forward.6} parent=85 // loop_body
                %v3292 = vld [vmem:[%s3290] sm:%s3283]
                %3293 = vst [vmem:[%s3291] sm:%s3283] %v3292
                %v3294 = vld [vmem:[%s3290 + $0x2] sm:%s3283]
                %3295 = vst [vmem:[%s3291 + $0x4] sm:%s3283] %v3294
                %v3296 = vld [vmem:[%s3290 + $0x4] sm:%s3283]
                %3297 = vst [vmem:[%s3291 + $0x8] sm:%s3283] %v3296
                %v3298 = vld [vmem:[%s3290 + $0x6] sm:%s3283]
                %3299 = vst [vmem:[%s3291 + $0xc] sm:%s3283] %v3298
                %v3300 = vld [vmem:[%s3290 + $0x8] sm:%s3283]
                %3301 = vst [vmem:[%s3291 + $0x10] sm:%s3283] %v3300
                %v3302 = vld [vmem:[%s3290 + $0xa] sm:%s3283]
                %3303 = vst [vmem:[%s3291 + $0x14] sm:%s3283] %v3302
                %v3304 = vld [vmem:[%s3290 + $0xc] sm:%s3283]
                %3305 = vst [vmem:[%s3291 + $0x18] sm:%s3283] %v3304
                %v3306 = vld [vmem:[%s3290 + $0xe] sm:%s3283]
                %3307 = vst [vmem:[%s3291 + $0x1c] sm:%s3283] %v3306
              $region91: #{decoder_forward.6} parent=85 // loop_footer
                %s3289 = sadd.s32 1, %s3285
              $region92: #{decoder_forward.6} parent=85 // loop_footer_branch
                %3284 = sbr.rel target = $region88
              $region93: #{decoder_forward.6} parent=85 // loop_exit
                _
            $region86: #{decoder_forward.6} parent=77 // pred_fallthru
              _
          $region78: #{decoder_forward.6} parent=73 // pred_fallthru
            _
          %3344 = vnop
        $region74: #{decoder_forward.6} parent=61 // pred_fallthru
          _
      $region62: #{decoder_forward.6} parent=5 // pred_fallthru
        _
      %p3345 = scmp.le.s32.totalorder 2, %s8
      // Predicated region
      $region112: #{decoder_forward.6} parent=5 // pred_check
        %p3346 = pneg %p3345
      $region113: #{decoder_forward.6} parent=5 // pred_check_branch
        %3348 = sbr.rel (%p3346) target = $region115
      $region114: #{decoder_forward.6} parent=5 // pred_region
        %s3349 = ssub.s32 %s8, 2
        // Predicated region
        $region116: #{decoder_forward.6} parent=114 // pred_check
          %p3350 = pneg %p121
        $region117: #{decoder_forward.6} parent=114 // pred_check_branch
          %3352 = sbr.rel (%p3350) target = $region119
        $region118: #{decoder_forward.6} parent=114 // pred_region
          %s3353 = sand.u32 %s106, 1
          %s3354 = sand.u32 %s106, 1
          %s3355 = smul.addr %s3354, 16
          %s3356 = scalar_lea.vmem [#allocation5], %s3355
        $region119: #{decoder_forward.6} parent=114 // pred_fallthru
          _
      $region115: #{decoder_forward.6} parent=5 // pred_fallthru
        _
    $region6: #{decoder_forward.6} parent=1 // loop_footer
      %s12 = sadd.s32 1, %s8
    $region7: #{decoder_forward.6} parent=1 // loop_footer_branch
      %7 = sbr.rel target = $region3
    $region8: #{decoder_forward.6} parent=1 // loop_exit
      _

// kernel: decoder_forward.7
$region0: #{decoder_forward.7}
  #allocation0 [shape = 'u32[]', space=smem, size = 0x4, offset = 0x4, fixed_abs, tag = 'smem constant byte address 0x4 - core index']
  #allocation1 [shape = 'u32[144,128]{1,0:T(1,128)}', space=vmem, size = 0x12000, scoped, tag = 'internal scratch']
  %s0 = inlined_call_operand.vmem [shape: bf16[16,512], index: 0, kind: input, shape index: {}]
  %s1 = inlined_call_operand.vmem [shape: bf16[512,2048], index: 1, kind: input, shape index: {}]
  %s2 = inlined_call_operand.vmem [shape: f32[1,2048], index: 2, kind: input, shape index: {}]
  %s3 = inlined_call_operand.vmem [shape: bf16[16,2048], index: 3, kind: output, shape index: {}]
  %s4 = sld [smem:[#allocation0]]
  $region22: #{decoder_forward.7} parent=0
    _
  %s6 = ssub.s32 1, %s4
  %s7 = scalar_select 0, %s6, %s4
  // Predicated region
  $region2: #{decoder_forward.7} parent=0 // pred_check
    _
  $region3: #{decoder_forward.7} parent=0 // pred_check_branch
    %9 = sbr.rel (0) target = $region5
  $region4: #{decoder_forward.7} parent=0 // pred_region
    _
  $region5: #{decoder_forward.7} parent=0 // pred_fallthru
    _
  // Predicated region
  $region6: #{decoder_forward.7} parent=0 // pred_check
    _
  $region7: #{decoder_forward.7} parent=0 // pred_check_branch
    %11 = sbr.rel (0) target = $region9
  $region8: #{decoder_forward.7} parent=0 // pred_region
    _
  $region9: #{decoder_forward.7} parent=0 // pred_fallthru
    _
  // Predicated region
  $region10: #{decoder_forward.7} parent=0 // pred_check
    _
  $region11: #{decoder_forward.7} parent=0 // pred_check_branch
    %13 = sbr.rel (0) target = $region13
  $region12: #{decoder_forward.7} parent=0 // pred_region
    _
  $region13: #{decoder_forward.7} parent=0 // pred_fallthru
    _
  %v14 = vld [vmem:[%s0] sm:$0xff]
  %v15 = vld [vmem:[%s0 + $0x8] sm:$0xff]
  %v16 = vld [vmem:[%s0 + $0x10] sm:$0xff]
  %v17 = vld [vmem:[%s0 + $0x18] sm:$0xff]
  %v18 = vld [vmem:[%s1] sm:$0xff]
  %v19 = vld [vmem:[%s1 + $0x8] sm:$0xff]
  %v20 = vld [vmem:[%s1 + $0x10] sm:$0xff]
  %v21 = vld [vmem:[%s1 + $0x18] sm:$0xff]
  %v22 = vld [vmem:[%s1 + $0x20] sm:$0xff]
  %v23 = vld [vmem:[%s1 + $0x28] sm:$0xff]
  %v24 = vld [vmem:[%s1 + $0x30] sm:$0xff]
  %v25 = vld [vmem:[%s1 + $0x38] sm:$0xff]
  %v26 = vld [vmem:[%s1 + $0x40] sm:$0xff]
  %v27 = vld [vmem:[%s1 + $0x48] sm:$0xff]
  %v28 = vld [vmem:[%s1 + $0x50] sm:$0xff]
  %v29 = vld [vmem:[%s1 + $0x58] sm:$0xff]
  %v30 = vld [vmem:[%s1 + $0x60] sm:$0xff]
  %v31 = vld [vmem:[%s1 + $0x68] sm:$0xff]
  %v32 = vld [vmem:[%s1 + $0x70] sm:$0xff]
  %v33 = vld [vmem:[%s1 + $0x78] sm:$0xff]
  %v34 = vld [vmem:[%s1 + $0x80] sm:$0xff]
  %v35 = vld [vmem:[%s1 + $0x88] sm:$0xff]
  %v36 = vld [vmem:[%s1 + $0x90] sm:$0xff]
  %v37 = vld [vmem:[%s1 + $0x98] sm:$0xff]
  %v38 = vld [vmem:[%s1 + $0xa0] sm:$0xff]
  %v39 = vld [vmem:[%s1 + $0xa8] sm:$0xff]
  %v40 = vld [vmem:[%s1 + $0xb0] sm:$0xff]
  %v41 = vld [vmem:[%s1 + $0xb8] sm:$0xff]
  %v42 = vld [vmem:[%s1 + $0xc0] sm:$0xff]
  %v43 = vld [vmem:[%s1 + $0xc8] sm:$0xff]
  %v44 = vld [vmem:[%s1 + $0xd0] sm:$0xff]
  %v45 = vld [vmem:[%s1 + $0xd8] sm:$0xff]
  %v46 = vld [vmem:[%s1 + $0xe0] sm:$0xff]
  %v47 = vld [vmem:[%s1 + $0xe8] sm:$0xff]
  %v48 = vld [vmem:[%s1 + $0xf0] sm:$0xff]
  %v49 = vld [vmem:[%s1 + $0xf8] sm:$0xff]
  %v50 = vld [vmem:[%s1 + $0x100] sm:$0xff]
  %v51 = vld [vmem:[%s1 + $0x108] sm:$0xff]
  %v52 = vld [vmem:[%s1 + $0x110] sm:$0xff]
  %v53 = vld [vmem:[%s1 + $0x118] sm:$0xff]
  %v54 = vld [vmem:[%s1 + $0x120] sm:$0xff]
  %v55 = vld [vmem:[%s1 + $0x128] sm:$0xff]
  %v56 = vld [vmem:[%s1 + $0x130] sm:$0xff]
  %v57 = vld [vmem:[%s1 + $0x138] sm:$0xff]
  %v58 = vld [vmem:[%s1 + $0x140] sm:$0xff]
  %v59 = vld [vmem:[%s1 + $0x148] sm:$0xff]
  %v60 = vld [vmem:[%s1 + $0x150] sm:$0xff]
  %v61 = vld [vmem:[%s1 + $0x158] sm:$0xff]
  %v62 = vld [vmem:[%s1 + $0x160] sm:$0xff]
  %v63 = vld [vmem:[%s1 + $0x168] sm:$0xff]
  %v64 = vld [vmem:[%s1 + $0x170] sm:$0xff]
  %v65 = vld [vmem:[%s1 + $0x178] sm:$0xff]
  %v66 = vld [vmem:[%s1 + $0x180] sm:$0xff]
  %v67 = vld [vmem:[%s1 + $0x188] sm:$0xff]
  %v68 = vld [vmem:[%s1 + $0x190] sm:$0xff]
  %v69 = vld [vmem:[%s1 + $0x198] sm:$0xff]
  %v70 = vld [vmem:[%s1 + $0x1a0] sm:$0xff]
  %v71 = vld [vmem:[%s1 + $0x1a8] sm:$0xff]
  %v72 = vld [vmem:[%s1 + $0x1b0] sm:$0xff]
  %v73 = vld [vmem:[%s1 + $0x1b8] sm:$0xff]
  %v74 = vld [vmem:[%s1 + $0x1c0] sm:$0xff]
  %v75 = vld [vmem:[%s1 + $0x1c8] sm:$0xff]
  %v76 = vld [vmem:[%s1 + $0x1d0] sm:$0xff]
  %v77 = vld [vmem:[%s1 + $0x1d8] sm:$0xff]
  %v78 = vld [vmem:[%s1 + $0x1e0] sm:$0xff]
  %v79 = vld [vmem:[%s1 + $0x1e8] sm:$0xff]
  %v80 = vld [vmem:[%s1 + $0x1f0] sm:$0xff]
  %v81 = vld [vmem:[%s1 + $0x1f8] sm:$0xff]
  %v82 = vld [vmem:[%s1 + $0x200] sm:$0xff]
  %v83 = vld [vmem:[%s1 + $0x208] sm:$0xff]
  %v84 = vld [vmem:[%s1 + $0x210] sm:$0xff]
  %v85 = vld [vmem:[%s1 + $0x218] sm:$0xff]
  %v86 = vld [vmem:[%s1 + $0x220] sm:$0xff]
  %v87 = vld [vmem:[%s1 + $0x228] sm:$0xff]
  %v88 = vld [vmem:[%s1 + $0x230] sm:$0xff]
  %v89 = vld [vmem:[%s1 + $0x238] sm:$0xff]
  %v90 = vld [vmem:[%s1 + $0x240] sm:$0xff]
  %v91 = vld [vmem:[%s1 + $0x248] sm:$0xff]
  %v92 = vld [vmem:[%s1 + $0x250] sm:$0xff]
  %v93 = vld [vmem:[%s1 + $0x258] sm:$0xff]
  %v94 = vld [vmem:[%s1 + $0x260] sm:$0xff]
  %v95 = vld [vmem:[%s1 + $0x268] sm:$0xff]
  %v96 = vld [vmem:[%s1 + $0x270] sm:$0xff]
  %v97 = vld [vmem:[%s1 + $0x278] sm:$0xff]
  %v98 = vld [vmem:[%s1 + $0x280] sm:$0xff]
  %v99 = vld [vmem:[%s1 + $0x288] sm:$0xff]
  %v100 = vld [vmem:[%s1 + $0x290] sm:$0xff]
  %v101 = vld [vmem:[%s1 + $0x298] sm:$0xff]
  %v102 = vld [vmem:[%s1 + $0x2a0] sm:$0xff]
  %v103 = vld [vmem:[%s1 + $0x2a8] sm:$0xff]
  %v104 = vld [vmem:[%s1 + $0x2b0] sm:$0xff]
  %v105 = vld [vmem:[%s1 + $0x2b8] sm:$0xff]
  %v106 = vld [vmem:[%s1 + $0x2c0] sm:$0xff]
  %v107 = vld [vmem:[%s1 + $0x2c8] sm:$0xff]
  %v108 = vld [vmem:[%s1 + $0x2d0] sm:$0xff]
  %v109 = vld [vmem:[%s1 + $0x2d8] sm:$0xff]
  %v110 = vld [vmem:[%s1 + $0x2e0] sm:$0xff]
  %v111 = vld [vmem:[%s1 + $0x2e8] sm:$0xff]
  %v112 = vld [vmem:[%s1 + $0x2f0] sm:$0xff]
  %v113 = vld [vmem:[%s1 + $0x2f8] sm:$0xff]
  %v114 = vld [vmem:[%s1 + $0x300] sm:$0xff]
  %v115 = vld [vmem:[%s1 + $0x308] sm:$0xff]
  %v116 = vld [vmem:[%s1 + $0x310] sm:$0xff]
  %v117 = vld [vmem:[%s1 + $0x318] sm:$0xff]
  %v118 = vld [vmem:[%s1 + $0x320] sm:$0xff]
  %v119 = vld [vmem:[%s1 + $0x328] sm:$0xff]
  %v120 = vld [vmem:[%s1 + $0x330] sm:$0xff]
  %v121 = vld [vmem:[%s1 + $0x338] sm:$0xff]
  %v122 = vld [vmem:[%s1 + $0x340] sm:$0xff]
  %v123 = vld [vmem:[%s1 + $0x348] sm:$0xff]
  %v124 = vld [vmem:[%s1 + $0x350] sm:$0xff]
  %v125 = vld [vmem:[%s1 + $0x358] sm:$0xff]
  %v126 = vld [vmem:[%s1 + $0x360] sm:$0xff]
  %v127 = vld [vmem:[%s1 + $0x368] sm:$0xff]
  %v128 = vld [vmem:[%s1 + $0x370] sm:$0xff]
  %v129 = vld [vmem:[%s1 + $0x378] sm:$0xff]
  %v130 = vld [vmem:[%s1 + $0x380] sm:$0xff]
  %v131 = vld [vmem:[%s1 + $0x388] sm:$0xff]
  %v132 = vld [vmem:[%s1 + $0x390] sm:$0xff]
  %v133 = vld [vmem:[%s1 + $0x398] sm:$0xff]
  %v134 = vld [vmem:[%s1 + $0x3a0] sm:$0xff]
  %v135 = vld [vmem:[%s1 + $0x3a8] sm:$0xff]
  %v136 = vld [vmem:[%s1 + $0x3b0] sm:$0xff]
  %v137 = vld [vmem:[%s1 + $0x3b8] sm:$0xff]
  %v138 = vld [vmem:[%s1 + $0x3c0] sm:$0xff]
  %v139 = vld [vmem:[%s1 + $0x3c8] sm:$0xff]
  %v140 = vld [vmem:[%s1 + $0x3d0] sm:$0xff]
  %v141 = vld [vmem:[%s1 + $0x3d8] sm:$0xff]
  %v142 = vld [vmem:[%s1 + $0x3e0] sm:$0xff]
  %v143 = vld [vmem:[%s1 + $0x3e8] sm:$0xff]
  %v144 = vld [vmem:[%s1 + $0x3f0] sm:$0xff]
  %v145 = vld [vmem:[%s1 + $0x3f8] sm:$0xff]
  %v146 = vld [vmem:[%s1 + $0x400] sm:$0xff]
  %v147 = vld [vmem:[%s1 + $0x408] sm:$0xff]
  %v148 = vld [vmem:[%s1 + $0x410] sm:$0xff]
  %v149 = vld [vmem:[%s1 + $0x418] sm:$0xff]
  %v150 = vld [vmem:[%s1 + $0x420] sm:$0xff]
  %v151 = vld [vmem:[%s1 + $0x428] sm:$0xff]
  %v152 = vld [vmem:[%s1 + $0x430] sm:$0xff]
  %v153 = vld [vmem:[%s1 + $0x438] sm:$0xff]
  %v154 = vld [vmem:[%s1 + $0x440] sm:$0xff]
  %v155 = vld [vmem:[%s1 + $0x448] sm:$0xff]
  %v156 = vld [vmem:[%s1 + $0x450] sm:$0xff]
  %v157 = vld [vmem:[%s1 + $0x458] sm:$0xff]
  %v158 = vld [vmem:[%s1 + $0x460] sm:$0xff]
  %v159 = vld [vmem:[%s1 + $0x468] sm:$0xff]
  %v160 = vld [vmem:[%s1 + $0x470] sm:$0xff]
  %v161 = vld [vmem:[%s1 + $0x478] sm:$0xff]
  %v162 = vld [vmem:[%s1 + $0x480] sm:$0xff]
  %v163 = vld [vmem:[%s1 + $0x488] sm:$0xff]
  %v164 = vld [vmem:[%s1 + $0x490] sm:$0xff]
  %v165 = vld [vmem:[%s1 + $0x498] sm:$0xff]
  %v166 = vld [vmem:[%s1 + $0x4a0] sm:$0xff]
  %v167 = vld [vmem:[%s1 + $0x4a8] sm:$0xff]
  %v168 = vld [vmem:[%s1 + $0x4b0] sm:$0xff]
  %v169 = vld [vmem:[%s1 + $0x4b8] sm:$0xff]
  %v170 = vld [vmem:[%s1 + $0x4c0] sm:$0xff]
  %v171 = vld [vmem:[%s1 + $0x4c8] sm:$0xff]
  %v172 = vld [vmem:[%s1 + $0x4d0] sm:$0xff]
  %v173 = vld [vmem:[%s1 + $0x4d8] sm:$0xff]
  %v174 = vld [vmem:[%s1 + $0x4e0] sm:$0xff]
  %v175 = vld [vmem:[%s1 + $0x4e8] sm:$0xff]
  %v176 = vld [vmem:[%s1 + $0x4f0] sm:$0xff]
  %v177 = vld [vmem:[%s1 + $0x4f8] sm:$0xff]
  %v178 = vld [vmem:[%s1 + $0x500] sm:$0xff]
  %v179 = vld [vmem:[%s1 + $0x508] sm:$0xff]
  %v180 = vld [vmem:[%s1 + $0x510] sm:$0xff]
  %v181 = vld [vmem:[%s1 + $0x518] sm:$0xff]
  %v182 = vld [vmem:[%s1 + $0x520] sm:$0xff]
  %v183 = vld [vmem:[%s1 + $0x528] sm:$0xff]
  %v184 = vld [vmem:[%s1 + $0x530] sm:$0xff]
  %v185 = vld [vmem:[%s1 + $0x538] sm:$0xff]
  %v186 = vld [vmem:[%s1 + $0x540] sm:$0xff]
  %v187 = vld [vmem:[%s1 + $0x548] sm:$0xff]
  %v188 = vld [vmem:[%s1 + $0x550] sm:$0xff]
  %v189 = vld [vmem:[%s1 + $0x558] sm:$0xff]
  %v190 = vld [vmem:[%s1 + $0x560] sm:$0xff]
  %v191 = vld [vmem:[%s1 + $0x568] sm:$0xff]
  %v192 = vld [vmem:[%s1 + $0x570] sm:$0xff]
  %v193 = vld [vmem:[%s1 + $0x578] sm:$0xff]
  %v194 = vld [vmem:[%s1 + $0x580] sm:$0xff]
  %v195 = vld [vmem:[%s1 + $0x588] sm:$0xff]
  %v196 = vld [vmem:[%s1 + $0x590] sm:$0xff]
  %v197 = vld [vmem:[%s1 + $0x598] sm:$0xff]
  %v198 = vld [vmem:[%s1 + $0x5a0] sm:$0xff]
  %v199 = vld [vmem:[%s1 + $0x5a8] sm:$0xff]
  %v200 = vld [vmem:[%s1 + $0x5b0] sm:$0xff]
  %v201 = vld [vmem:[%s1 + $0x5b8] sm:$0xff]
  %v202 = vld [vmem:[%s1 + $0x5c0] sm:$0xff]
  %v203 = vld [vmem:[%s1 + $0x5c8] sm:$0xff]
  %v204 = vld [vmem:[%s1 + $0x5d0] sm:$0xff]
  %v205 = vld [vmem:[%s1 + $0x5d8] sm:$0xff]
  %v206 = vld [vmem:[%s1 + $0x5e0] sm:$0xff]
  %v207 = vld [vmem:[%s1 + $0x5e8] sm:$0xff]
  %v208 = vld [vmem:[%s1 + $0x5f0] sm:$0xff]
  %v209 = vld [vmem:[%s1 + $0x5f8] sm:$0xff]
  %v210 = vld [vmem:[%s1 + $0x600] sm:$0xff]
  %v211 = vld [vmem:[%s1 + $0x608] sm:$0xff]
  %v212 = vld [vmem:[%s1 + $0x610] sm:$0xff]
  %v213 = vld [vmem:[%s1 + $0x618] sm:$0xff]
  %v214 = vld [vmem:[%s1 + $0x620] sm:$0xff]
  %v215 = vld [vmem:[%s1 + $0x628] sm:$0xff]
  %v216 = vld [vmem:[%s1 + $0x630] sm:$0xff]
  %v217 = vld [vmem:[%s1 + $0x638] sm:$0xff]
  %v218 = vld [vmem:[%s1 + $0x640] sm:$0xff]
  %v219 = vld [vmem:[%s1 + $0x648] sm:$0xff]
  %v220 = vld [vmem:[%s1 + $0x650] sm:$0xff]
  %v221 = vld [vmem:[%s1 + $0x658] sm:$0xff]
  %v222 = vld [vmem:[%s1 + $0x660] sm:$0xff]
  %v223 = vld [vmem:[%s1 + $0x668] sm:$0xff]
  %v224 = vld [vmem:[%s1 + $0x670] sm:$0xff]
  %v225 = vld [vmem:[%s1 + $0x678] sm:$0xff]
  %v226 = vld [vmem:[%s1 + $0x680] sm:$0xff]
  %v227 = vld [vmem:[%s1 + $0x688] sm:$0xff]
  %v228 = vld [vmem:[%s1 + $0x690] sm:$0xff]
  %v229 = vld [vmem:[%s1 + $0x698] sm:$0xff]
  %v230 = vld [vmem:[%s1 + $0x6a0] sm:$0xff]
  %v231 = vld [vmem:[%s1 + $0x6a8] sm:$0xff]
  %v232 = vld [vmem:[%s1 + $0x6b0] sm:$0xff]
  %v233 = vld [vmem:[%s1 + $0x6b8] sm:$0xff]
  %v234 = vld [vmem:[%s1 + $0x6c0] sm:$0xff]
  %v235 = vld [vmem:[%s1 + $0x6c8] sm:$0xff]
  %v236 = vld [vmem:[%s1 + $0x6d0] sm:$0xff]
  %v237 = vld [vmem:[%s1 + $0x6d8] sm:$0xff]
  %v238 = vld [vmem:[%s1 + $0x6e0] sm:$0xff]
  %v239 = vld [vmem:[%s1 + $0x6e8] sm:$0xff]
  %v240 = vld [vmem:[%s1 + $0x6f0] sm:$0xff]
  %v241 = vld [vmem:[%s1 + $0x6f8] sm:$0xff]
  %v242 = vld [vmem:[%s1 + $0x700] sm:$0xff]
  %v243 = vld [vmem:[%s1 + $0x708] sm:$0xff]
  %v244 = vld [vmem:[%s1 + $0x710] sm:$0xff]
  %v245 = vld [vmem:[%s1 + $0x718] sm:$0xff]
  %v246 = vld [vmem:[%s1 + $0x720] sm:$0xff]
  %v247 = vld [vmem:[%s1 + $0x728] sm:$0xff]
  %v248 = vld [vmem:[%s1 + $0x730] sm:$0xff]
  %v249 = vld [vmem:[%s1 + $0x738] sm:$0xff]
  %v250 = vld [vmem:[%s1 + $0x740] sm:$0xff]
  %v251 = vld [vmem:[%s1 + $0x748] sm:$0xff]
  %v252 = vld [vmem:[%s1 + $0x750] sm:$0xff]
  %v253 = vld [vmem:[%s1 + $0x758] sm:$0xff]
  %v254 = vld [vmem:[%s1 + $0x760] sm:$0xff]
  %v255 = vld [vmem:[%s1 + $0x768] sm:$0xff]
  %v256 = vld [vmem:[%s1 + $0x770] sm:$0xff]
  %v257 = vld [vmem:[%s1 + $0x778] sm:$0xff]
  %v258 = vld [vmem:[%s1 + $0x780] sm:$0xff]
  %v259 = vld [vmem:[%s1 + $0x788] sm:$0xff]
  %v260 = vld [vmem:[%s1 + $0x790] sm:$0xff]
  %v261 = vld [vmem:[%s1 + $0x798] sm:$0xff]
  %v262 = vld [vmem:[%s1 + $0x7a0] sm:$0xff]
  %v263 = vld [vmem:[%s1 + $0x7a8] sm:$0xff]
  %v264 = vld [vmem:[%s1 + $0x7b0] sm:$0xff]
  %v265 = vld [vmem:[%s1 + $0x7b8] sm:$0xff]
  %v266 = vld [vmem:[%s1 + $0x7c0] sm:$0xff]
  %v267 = vld [vmem:[%s1 + $0x7c8] sm:$0xff]
  %v268 = vld [vmem:[%s1 + $0x7d0] sm:$0xff]
  %v269 = vld [vmem:[%s1 + $0x7d8] sm:$0xff]
  %v270 = vld [vmem:[%s1 + $0x7e0] sm:$0xff]
  %v271 = vld [vmem:[%s1 + $0x7e8] sm:$0xff]
  %v272 = vld [vmem:[%s1 + $0x7f0] sm:$0xff]
  %v273 = vld [vmem:[%s1 + $0x7f8] sm:$0xff]
  %v274 = vld [vmem:[%s1 + $0x800] sm:$0xff]
  %v275 = vld [vmem:[%s1 + $0x808] sm:$0xff]
  %v276 = vld [vmem:[%s1 + $0x810] sm:$0xff]
  %v277 = vld [vmem:[%s1 + $0x818] sm:$0xff]
  %v278 = vld [vmem:[%s1 + $0x820] sm:$0xff]
  %v279 = vld [vmem:[%s1 + $0x828] sm:$0xff]
  %v280 = vld [vmem:[%s1 + $0x830] sm:$0xff]
  %v281 = vld [vmem:[%s1 + $0x838] sm:$0xff]
  %v282 = vld [vmem:[%s1 + $0x840] sm:$0xff]
  %v283 = vld [vmem:[%s1 + $0x848] sm:$0xff]
  %v284 = vld [vmem:[%s1 + $0x850] sm:$0xff]
  %v285 = vld [vmem:[%s1 + $0x858] sm:$0xff]
  %v286 = vld [vmem:[%s1 + $0x860] sm:$0xff]
  %v287 = vld [vmem:[%s1 + $0x868] sm:$0xff]
  %v288 = vld [vmem:[%s1 + $0x870] sm:$0xff]
  %v289 = vld [vmem:[%s1 + $0x878] sm:$0xff]
  %v290 = vld [vmem:[%s1 + $0x880] sm:$0xff]
  %v291 = vld [vmem:[%s1 + $0x888] sm:$0xff]
  %v292 = vld [vmem:[%s1 + $0x890] sm:$0xff]
  %v293 = vld [vmem:[%s1 + $0x898] sm:$0xff]
  %v294 = vld [vmem:[%s1 + $0x8a0] sm:$0xff]
  %v295 = vld [vmem:[%s1 + $0x8a8] sm:$0xff]
  %v296 = vld [vmem:[%s1 + $0x8b0] sm:$0xff]
  %v297 = vld [vmem:[%s1 + $0x8b8] sm:$0xff]
  %v298 = vld [vmem:[%s1 + $0x8c0] sm:$0xff]
  %v299 = vld [vmem:[%s1 + $0x8c8] sm:$0xff]
  %v300 = vld [vmem:[%s1 + $0x8d0] sm:$0xff]
  %v301 = vld [vmem:[%s1 + $0x8d8] sm:$0xff]
  %v302 = vld [vmem:[%s1 + $0x8e0] sm:$0xff]
  %v303 = vld [vmem:[%s1 + $0x8e8] sm:$0xff]
  %v304 = vld [vmem:[%s1 + $0x8f0] sm:$0xff]
  %v305 = vld [vmem:[%s1 + $0x8f8] sm:$0xff]
  %v306 = vld [vmem:[%s1 + $0x900] sm:$0xff]
  %v307 = vld [vmem:[%s1 + $0x908] sm:$0xff]
  %v308 = vld [vmem:[%s1 + $0x910] sm:$0xff]
  %v309 = vld [vmem:[%s1 + $0x918] sm:$0xff]
  %v310 = vld [vmem:[%s1 + $0x920] sm:$0xff]
  %v311 = vld [vmem:[%s1 + $0x928] sm:$0xff]
  %v312 = vld [vmem:[%s1 + $0x930] sm:$0xff]
  %v313 = vld [vmem:[%s1 + $0x938] sm:$0xff]
  %v314 = vld [vmem:[%s1 + $0x940] sm:$0xff]
  %v315 = vld [vmem:[%s1 + $0x948] sm:$0xff]
  %v316 = vld [vmem:[%s1 + $0x950] sm:$0xff]
  %v317 = vld [vmem:[%s1 + $0x958] sm:$0xff]
  %v318 = vld [vmem:[%s1 + $0x960] sm:$0xff]
  %v319 = vld [vmem:[%s1 + $0x968] sm:$0xff]
  %v320 = vld [vmem:[%s1 + $0x970] sm:$0xff]
  %v321 = vld [vmem:[%s1 + $0x978] sm:$0xff]
  %v322 = vld [vmem:[%s1 + $0x980] sm:$0xff]
  %v323 = vld [vmem:[%s1 + $0x988] sm:$0xff]
  %v324 = vld [vmem:[%s1 + $0x990] sm:$0xff]
  %v325 = vld [vmem:[%s1 + $0x998] sm:$0xff]
  %v326 = vld [vmem:[%s1 + $0x9a0] sm:$0xff]
  %v327 = vld [vmem:[%s1 + $0x9a8] sm:$0xff]
  %v328 = vld [vmem:[%s1 + $0x9b0] sm:$0xff]
  %v329 = vld [vmem:[%s1 + $0x9b8] sm:$0xff]
  %v330 = vld [vmem:[%s1 + $0x9c0] sm:$0xff]
  %v331 = vld [vmem:[%s1 + $0x9c8] sm:$0xff]
  %v332 = vld [vmem:[%s1 + $0x9d0] sm:$0xff]
  %v333 = vld [vmem:[%s1 + $0x9d8] sm:$0xff]
  %v334 = vld [vmem:[%s1 + $0x9e0] sm:$0xff]
  %v335 = vld [vmem:[%s1 + $0x9e8] sm:$0xff]
  %v336 = vld [vmem:[%s1 + $0x9f0] sm:$0xff]
  %v337 = vld [vmem:[%s1 + $0x9f8] sm:$0xff]
  %v338 = vld [vmem:[%s1 + $0xa00] sm:$0xff]
  %v339 = vld [vmem:[%s1 + $0xa08] sm:$0xff]
  %v340 = vld [vmem:[%s1 + $0xa10] sm:$0xff]
  %v341 = vld [vmem:[%s1 + $0xa18] sm:$0xff]
  %v342 = vld [vmem:[%s1 + $0xa20] sm:$0xff]
  %v343 = vld [vmem:[%s1 + $0xa28] sm:$0xff]
  %v344 = vld [vmem:[%s1 + $0xa30] sm:$0xff]
  %v345 = vld [vmem:[%s1 + $0xa38] sm:$0xff]
  %v346 = vld [vmem:[%s1 + $0xa40] sm:$0xff]
  %v347 = vld [vmem:[%s1 + $0xa48] sm:$0xff]
  %v348 = vld [vmem:[%s1 + $0xa50] sm:$0xff]
  %v349 = vld [vmem:[%s1 + $0xa58] sm:$0xff]
  %v350 = vld [vmem:[%s1 + $0xa60] sm:$0xff]
  %v351 = vld [vmem:[%s1 + $0xa68] sm:$0xff]
  %v352 = vld [vmem:[%s1 + $0xa70] sm:$0xff]
  %v353 = vld [vmem:[%s1 + $0xa78] sm:$0xff]
  %v354 = vld [vmem:[%s1 + $0xa80] sm:$0xff]
  %v355 = vld [vmem:[%s1 + $0xa88] sm:$0xff]
  %v356 = vld [vmem:[%s1 + $0xa90] sm:$0xff]
  %v357 = vld [vmem:[%s1 + $0xa98] sm:$0xff]
  %v358 = vld [vmem:[%s1 + $0xaa0] sm:$0xff]
  %v359 = vld [vmem:[%s1 + $0xaa8] sm:$0xff]
  %v360 = vld [vmem:[%s1 + $0xab0] sm:$0xff]
  %v361 = vld [vmem:[%s1 + $0xab8] sm:$0xff]
  %v362 = vld [vmem:[%s1 + $0xac0] sm:$0xff]
  %v363 = vld [vmem:[%s1 + $0xac8] sm:$0xff]
  %v364 = vld [vmem:[%s1 + $0xad0] sm:$0xff]
  %v365 = vld [vmem:[%s1 + $0xad8] sm:$0xff]
  %v366 = vld [vmem:[%s1 + $0xae0] sm:$0xff]
  %v367 = vld [vmem:[%s1 + $0xae8] sm:$0xff]
  %v368 = vld [vmem:[%s1 + $0xaf0] sm:$0xff]
  %v369 = vld [vmem:[%s1 + $0xaf8] sm:$0xff]
  %v370 = vld [vmem:[%s1 + $0xb00] sm:$0xff]
  %v371 = vld [vmem:[%s1 + $0xb08] sm:$0xff]
  %v372 = vld [vmem:[%s1 + $0xb10] sm:$0xff]
  %v373 = vld [vmem:[%s1 + $0xb18] sm:$0xff]
  %v374 = vld [vmem:[%s1 + $0xb20] sm:$0xff]
  %v375 = vld [vmem:[%s1 + $0xb28] sm:$0xff]
  %v376 = vld [vmem:[%s1 + $0xb30] sm:$0xff]
  %v377 = vld [vmem:[%s1 + $0xb38] sm:$0xff]
  %v378 = vld [vmem:[%s1 + $0xb40] sm:$0xff]
  %v379 = vld [vmem:[%s1 + $0xb48] sm:$0xff]
  %v380 = vld [vmem:[%s1 + $0xb50] sm:$0xff]
  %v381 = vld [vmem:[%s1 + $0xb58] sm:$0xff]
  %v382 = vld [vmem:[%s1 + $0xb60] sm:$0xff]
  %v383 = vld [vmem:[%s1 + $0xb68] sm:$0xff]
  %v384 = vld [vmem:[%s1 + $0xb70] sm:$0xff]
  %v385 = vld [vmem:[%s1 + $0xb78] sm:$0xff]
  %v386 = vld [vmem:[%s1 + $0xb80] sm:$0xff]
  %v387 = vld [vmem:[%s1 + $0xb88] sm:$0xff]
  %v388 = vld [vmem:[%s1 + $0xb90] sm:$0xff]
  %v389 = vld [vmem:[%s1 + $0xb98] sm:$0xff]
  %v390 = vld [vmem:[%s1 + $0xba0] sm:$0xff]
  %v391 = vld [vmem:[%s1 + $0xba8] sm:$0xff]
  %v392 = vld [vmem:[%s1 + $0xbb0] sm:$0xff]
  %v393 = vld [vmem:[%s1 + $0xbb8] sm:$0xff]
  %v394 = vld [vmem:[%s1 + $0xbc0] sm:$0xff]
  %v395 = vld [vmem:[%s1 + $0xbc8] sm:$0xff]
  %v396 = vld [vmem:[%s1 + $0xbd0] sm:$0xff]
  %v397 = vld [vmem:[%s1 + $0xbd8] sm:$0xff]
  %v398 = vld [vmem:[%s1 + $0xbe0] sm:$0xff]
  %v399 = vld [vmem:[%s1 + $0xbe8] sm:$0xff]
  %v400 = vld [vmem:[%s1 + $0xbf0] sm:$0xff]
  %v401 = vld [vmem:[%s1 + $0xbf8] sm:$0xff]
  %v402 = vld [vmem:[%s1 + $0xc00] sm:$0xff]
  %v403 = vld [vmem:[%s1 + $0xc08] sm:$0xff]
  %v404 = vld [vmem:[%s1 + $0xc10] sm:$0xff]
  %v405 = vld [vmem:[%s1 + $0xc18] sm:$0xff]
  %v406 = vld [vmem:[%s1 + $0xc20] sm:$0xff]
  %v407 = vld [vmem:[%s1 + $0xc28] sm:$0xff]
  %v408 = vld [vmem:[%s1 + $0xc30] sm:$0xff]
  %v409 = vld [vmem:[%s1 + $0xc38] sm:$0xff]
  %v410 = vld [vmem:[%s1 + $0xc40] sm:$0xff]
  %v411 = vld [vmem:[%s1 + $0xc48] sm:$0xff]
  %v412 = vld [vmem:[%s1 + $0xc50] sm:$0xff]
  %v413 = vld [vmem:[%s1 + $0xc58] sm:$0xff]
  %v414 = vld [vmem:[%s1 + $0xc60] sm:$0xff]
  %v415 = vld [vmem:[%s1 + $0xc68] sm:$0xff]
  %v416 = vld [vmem:[%s1 + $0xc70] sm:$0xff]
  %v417 = vld [vmem:[%s1 + $0xc78] sm:$0xff]
  %v418 = vld [vmem:[%s1 + $0xc80] sm:$0xff]
  %v419 = vld [vmem:[%s1 + $0xc88] sm:$0xff]
  %v420 = vld [vmem:[%s1 + $0xc90] sm:$0xff]
  %v421 = vld [vmem:[%s1 + $0xc98] sm:$0xff]
  %v422 = vld [vmem:[%s1 + $0xca0] sm:$0xff]
  %v423 = vld [vmem:[%s1 + $0xca8] sm:$0xff]
  %v424 = vld [vmem:[%s1 + $0xcb0] sm:$0xff]
  %v425 = vld [vmem:[%s1 + $0xcb8] sm:$0xff]
  %v426 = vld [vmem:[%s1 + $0xcc0] sm:$0xff]
  %v427 = vld [vmem:[%s1 + $0xcc8] sm:$0xff]
  %v428 = vld [vmem:[%s1 + $0xcd0] sm:$0xff]
  %v429 = vld [vmem:[%s1 + $0xcd8] sm:$0xff]
  %v430 = vld [vmem:[%s1 + $0xce0] sm:$0xff]
  %v431 = vld [vmem:[%s1 + $0xce8] sm:$0xff]
  %v432 = vld [vmem:[%s1 + $0xcf0] sm:$0xff]
  %v433 = vld [vmem:[%s1 + $0xcf8] sm:$0xff]
  %v434 = vld [vmem:[%s1 + $0xd00] sm:$0xff]
  %v435 = vld [vmem:[%s1 + $0xd08] sm:$0xff]
  %v436 = vld [vmem:[%s1 + $0xd10] sm:$0xff]
  %v437 = vld [vmem:[%s1 + $0xd18] sm:$0xff]
  %v438 = vld [vmem:[%s1 + $0xd20] sm:$0xff]
  %v439 = vld [vmem:[%s1 + $0xd28] sm:$0xff]
  %v440 = vld [vmem:[%s1 + $0xd30] sm:$0xff]
  %v441 = vld [vmem:[%s1 + $0xd38] sm:$0xff]
  %v442 = vld [vmem:[%s1 + $0xd40] sm:$0xff]
  %v443 = vld [vmem:[%s1 + $0xd48] sm:$0xff]
  %v444 = vld [vmem:[%s1 + $0xd50] sm:$0xff]
  %v445 = vld [vmem:[%s1 + $0xd58] sm:$0xff]
  %v446 = vld [vmem:[%s1 + $0xd60] sm:$0xff]
  %v447 = vld [vmem:[%s1 + $0xd68] sm:$0xff]
  %v448 = vld [vmem:[%s1 + $0xd70] sm:$0xff]
  %v449 = vld [vmem:[%s1 + $0xd78] sm:$0xff]
  %v450 = vld [vmem:[%s1 + $0xd80] sm:$0xff]
  %v451 = vld [vmem:[%s1 + $0xd88] sm:$0xff]
  %v452 = vld [vmem:[%s1 + $0xd90] sm:$0xff]
  %v453 = vld [vmem:[%s1 + $0xd98] sm:$0xff]
  %v454 = vld [vmem:[%s1 + $0xda0] sm:$0xff]
  %v455 = vld [vmem:[%s1 + $0xda8] sm:$0xff]
  %v456 = vld [vmem:[%s1 + $0xdb0] sm:$0xff]
  %v457 = vld [vmem:[%s1 + $0xdb8] sm:$0xff]
  %v458 = vld [vmem:[%s1 + $0xdc0] sm:$0xff]
  %v459 = vld [vmem:[%s1 + $0xdc8] sm:$0xff]
  %v460 = vld [vmem:[%s1 + $0xdd0] sm:$0xff]
  %v461 = vld [vmem:[%s1 + $0xdd8] sm:$0xff]
  %v462 = vld [vmem:[%s1 + $0xde0] sm:$0xff]
  %v463 = vld [vmem:[%s1 + $0xde8] sm:$0xff]
  %v464 = vld [vmem:[%s1 + $0xdf0] sm:$0xff]
  %v465 = vld [vmem:[%s1 + $0xdf8] sm:$0xff]
  %v466 = vld [vmem:[%s1 + $0xe00] sm:$0xff]
  %v467 = vld [vmem:[%s1 + $0xe08] sm:$0xff]
  %v468 = vld [vmem:[%s1 + $0xe10] sm:$0xff]
  %v469 = vld [vmem:[%s1 + $0xe18] sm:$0xff]
  %v470 = vld [vmem:[%s1 + $0xe20] sm:$0xff]
  %v471 = vld [vmem:[%s1 + $0xe28] sm:$0xff]
  %v472 = vld [vmem:[%s1 + $0xe30] sm:$0xff]
  %v473 = vld [vmem:[%s1 + $0xe38] sm:$0xff]
  %v474 = vld [vmem:[%s1 + $0xe40] sm:$0xff]
  %v475 = vld [vmem:[%s1 + $0xe48] sm:$0xff]
  %v476 = vld [vmem:[%s1 + $0xe50] sm:$0xff]
  %v477 = vld [vmem:[%s1 + $0xe58] sm:$0xff]
  %v478 = vld [vmem:[%s1 + $0xe60] sm:$0xff]
  %v479 = vld [vmem:[%s1 + $0xe68] sm:$0xff]
  %v480 = vld [vmem:[%s1 + $0xe70] sm:$0xff]
  %v481 = vld [vmem:[%s1 + $0xe78] sm:$0xff]
  %v482 = vld [vmem:[%s1 + $0xe80] sm:$0xff]
  %v483 = vld [vmem:[%s1 + $0xe88] sm:$0xff]
  %v484 = vld [vmem:[%s1 + $0xe90] sm:$0xff]
  %v485 = vld [vmem:[%s1 + $0xe98] sm:$0xff]
  %v486 = vld [vmem:[%s1 + $0xea0] sm:$0xff]
  %v487 = vld [vmem:[%s1 + $0xea8] sm:$0xff]
  %v488 = vld [vmem:[%s1 + $0xeb0] sm:$0xff]
  %v489 = vld [vmem:[%s1 + $0xeb8] sm:$0xff]
  %v490 = vld [vmem:[%s1 + $0xec0] sm:$0xff]
  %v491 = vld [vmem:[%s1 + $0xec8] sm:$0xff]
  %v492 = vld [vmem:[%s1 + $0xed0] sm:$0xff]
  %v493 = vld [vmem:[%s1 + $0xed8] sm:$0xff]
  %v494 = vld [vmem:[%s1 + $0xee0] sm:$0xff]
  %v495 = vld [vmem:[%s1 + $0xee8] sm:$0xff]
  %v496 = vld [vmem:[%s1 + $0xef0] sm:$0xff]
  %v497 = vld [vmem:[%s1 + $0xef8] sm:$0xff]
  %v498 = vld [vmem:[%s1 + $0xf00] sm:$0xff]
  %v499 = vld [vmem:[%s1 + $0xf08] sm:$0xff]
  %v500 = vld [vmem:[%s1 + $0xf10] sm:$0xff]
  %v501 = vld [vmem:[%s1 + $0xf18] sm:$0xff]
  %v502 = vld [vmem:[%s1 + $0xf20] sm:$0xff]
  %v503 = vld [vmem:[%s1 + $0xf28] sm:$0xff]
  %v504 = vld [vmem:[%s1 + $0xf30] sm:$0xff]
  %v505 = vld [vmem:[%s1 + $0xf38] sm:$0xff]
  %v506 = vld [vmem:[%s1 + $0xf40] sm:$0xff]
  %v507 = vld [vmem:[%s1 + $0xf48] sm:$0xff]
  %v508 = vld [vmem:[%s1 + $0xf50] sm:$0xff]
  %v509 = vld [vmem:[%s1 + $0xf58] sm:$0xff]
  %v510 = vld [vmem:[%s1 + $0xf60] sm:$0xff]
  %v511 = vld [vmem:[%s1 + $0xf68] sm:$0xff]
  %v512 = vld [vmem:[%s1 + $0xf70] sm:$0xff]
  %v513 = vld [vmem:[%s1 + $0xf78] sm:$0xff]
  %v514 = vld [vmem:[%s1 + $0xf80] sm:$0xff]
  %v515 = vld [vmem:[%s1 + $0xf88] sm:$0xff]
  %v516 = vld [vmem:[%s1 + $0xf90] sm:$0xff]
  %v517 = vld [vmem:[%s1 + $0xf98] sm:$0xff]
  %v518 = vld [vmem:[%s1 + $0xfa0] sm:$0xff]
  %v519 = vld [vmem:[%s1 + $0xfa8] sm:$0xff]
  %v520 = vld [vmem:[%s1 + $0xfb0] sm:$0xff]
  %v521 = vld [vmem:[%s1 + $0xfb8] sm:$0xff]
  %v522 = vld [vmem:[%s1 + $0xfc0] sm:$0xff]
  %v523 = vld [vmem:[%s1 + $0xfc8] sm:$0xff]
  %v524 = vld [vmem:[%s1 + $0xfd0] sm:$0xff]
  %v525 = vld [vmem:[%s1 + $0xfd8] sm:$0xff]
  %v526 = vld [vmem:[%s1 + $0xfe0] sm:$0xff]
  %v527 = vld [vmem:[%s1 + $0xfe8] sm:$0xff]
  %v528 = vld [vmem:[%s1 + $0xff0] sm:$0xff]
  %v529 = vld [vmem:[%s1 + $0xff8] sm:$0xff]
  %v530 = vld [vmem:[%s2] sm:$0xff]
  %v531 = vld [vmem:[%s2 + $0x8] sm:$0xff]
  %v534 = vlaneseq
  %v535 = vshrl.u32 %v534, 7
  %v536 = vsub.s32 0, %v535
  %v537 = vrot.slane %v530, %v536
  %v538 = vlaneseq
  %v539 = vshrl.u32 %v538, 7
  %v540 = vsub.s32 1, %v539
  %v541 = vrot.slane %v530, %v540
  %v542 = vlaneseq
  %v543 = vshrl.u32 %v542, 7
  %v544 = vsub.s32 2, %v543
  %v545 = vrot.slane %v530, %v544
  %v546 = vlaneseq
  %v547 = vshrl.u32 %v546, 7
  %v548 = vsub.s32 3, %v547
  %v549 = vrot.slane %v530, %v548
  %v550 = vlaneseq
  %v551 = vshrl.u32 %v550, 7
  %v552 = vsub.s32 4, %v551
  %v553 = vrot.slane %v530, %v552
  %v554 = vlaneseq
  %v555 = vshrl.u32 %v554, 7
  %v556 = vsub.s32 5, %v555
  %v557 = vrot.slane %v530, %v556
  %v558 = vlaneseq
  %v559 = vshrl.u32 %v558, 7
  %v560 = vsub.s32 6, %v559
  %v561 = vrot.slane %v530, %v560
  %v562 = vlaneseq
  %v563 = vshrl.u32 %v562, 7
  %v564 = vsub.s32 7, %v563
  %v565 = vrot.slane %v530, %v564
  %v566 = vlaneseq
  %v567 = vshrl.u32 %v566, 7
  %v568 = vsub.s32 0, %v567
  %v569 = vrot.slane %v531, %v568
  %v570 = vlaneseq
  %v571 = vshrl.u32 %v570, 7
  %v572 = vsub.s32 1, %v571
  %v573 = vrot.slane %v531, %v572
  %v574 = vlaneseq
  %v575 = vshrl.u32 %v574, 7
  %v576 = vsub.s32 2, %v575
  %v577 = vrot.slane %v531, %v576
  %v578 = vlaneseq
  %v579 = vshrl.u32 %v578, 7
  %v580 = vsub.s32 3, %v579
  %v581 = vrot.slane %v531, %v580
  %v582 = vlaneseq
  %v583 = vshrl.u32 %v582, 7
  %v584 = vsub.s32 4, %v583
  %v585 = vrot.slane %v531, %v584
  %v586 = vlaneseq
  %v587 = vshrl.u32 %v586, 7
  %v588 = vsub.s32 5, %v587
  %v589 = vrot.slane %v531, %v588
  %v590 = vlaneseq
  %v591 = vshrl.u32 %v590, 7
  %v592 = vsub.s32 6, %v591
  %v593 = vrot.slane %v531, %v592
  %v594 = vlaneseq
  %v595 = vshrl.u32 %v594, 7
  %v596 = vsub.s32 7, %v595
  %v597 = vrot.slane %v531, %v596
  %v618 = vunpack.c.l.b16 %v14
  %v619 = vunpack.c.h.b16 %v14
  %v620 = vunpack.c.l.b16 %v15
  %v621 = vunpack.c.h.b16 %v15
  %v622 = vunpack.c.l.b16 %v16
  %v623 = vunpack.c.h.b16 %v16
  %v624 = vunpack.c.l.b16 %v17
  %v625 = vunpack.c.h.b16 %v17
  %v626 = vpack.c.b16 %v622, %v618
  %v627 = vpack.c.b16 %v623, %v619
  %v628 = vpack.c.b16 %v624, %v620
  %v629 = vpack.c.b16 %v625, %v621
  %v1146 = vunpack.c.l.b16 %v18
  %v1147 = vunpack.c.h.b16 %v18
  %v1148 = vunpack.c.l.b16 %v19
  %v1149 = vunpack.c.h.b16 %v19
  %v1150 = vunpack.c.l.b16 %v20
  %v1151 = vunpack.c.h.b16 %v20
  %v1152 = vunpack.c.l.b16 %v21
  %v1153 = vunpack.c.h.b16 %v21
  %v1154 = vunpack.c.l.b16 %v22
  %v1155 = vunpack.c.h.b16 %v22
  %v1156 = vunpack.c.l.b16 %v23
  %v1157 = vunpack.c.h.b16 %v23
  %v1158 = vunpack.c.l.b16 %v24
  %v1159 = vunpack.c.h.b16 %v24
  %v1160 = vunpack.c.l.b16 %v25
  %v1161 = vunpack.c.h.b16 %v25
  %v1162 = vunpack.c.l.b16 %v26
  %v1163 = vunpack.c.h.b16 %v26
  %v1164 = vunpack.c.l.b16 %v27
  %v1165 = vunpack.c.h.b16 %v27
  %v1166 = vunpack.c.l.b16 %v28
  %v1167 = vunpack.c.h.b16 %v28
  %v1168 = vunpack.c.l.b16 %v29
  %v1169 = vunpack.c.h.b16 %v29
  %v1170 = vunpack.c.l.b16 %v30
  %v1171 = vunpack.c.h.b16 %v30
  %v1172 = vunpack.c.l.b16 %v31
  %v1173 = vunpack.c.h.b16 %v31
  %v1174 = vunpack.c.l.b16 %v32
  %v1175 = vunpack.c.h.b16 %v32
  %v1176 = vunpack.c.l.b16 %v33
  %v1177 = vunpack.c.h.b16 %v33
  %v1178 = vunpack.c.l.b16 %v34
  %v1179 = vunpack.c.h.b16 %v34
  %v1180 = vunpack.c.l.b16 %v35
  %v1181 = vunpack.c.h.b16 %v35
  %v1182 = vunpack.c.l.b16 %v36
  %v1183 = vunpack.c.h.b16 %v36
  %v1184 = vunpack.c.l.b16 %v37
  %v1185 = vunpack.c.h.b16 %v37
  %v1186 = vunpack.c.l.b16 %v38
  %v1187 = vunpack.c.h.b16 %v38
  %v1188 = vunpack.c.l.b16 %v39
  %v1189 = vunpack.c.h.b16 %v39
  %v1190 = vunpack.c.l.b16 %v40
  %v1191 = vunpack.c.h.b16 %v40
  %v1192 = vunpack.c.l.b16 %v41
  %v1193 = vunpack.c.h.b16 %v41
  %v1194 = vunpack.c.l.b16 %v42
  %v1195 = vunpack.c.h.b16 %v42
  %v1196 = vunpack.c.l.b16 %v43
  %v1197 = vunpack.c.h.b16 %v43
  %v1198 = vunpack.c.l.b16 %v44
  %v1199 = vunpack.c.h.b16 %v44
  %v1200 = vunpack.c.l.b16 %v45
  %v1201 = vunpack.c.h.b16 %v45
  %v1202 = vunpack.c.l.b16 %v46
  %v1203 = vunpack.c.h.b16 %v46
  %v1204 = vunpack.c.l.b16 %v47
  %v1205 = vunpack.c.h.b16 %v47
  %v1206 = vunpack.c.l.b16 %v48
  %v1207 = vunpack.c.h.b16 %v48
  %v1208 = vunpack.c.l.b16 %v49
  %v1209 = vunpack.c.h.b16 %v49
  %v1210 = vunpack.c.l.b16 %v50
  %v1211 = vunpack.c.h.b16 %v50
  %v1212 = vunpack.c.l.b16 %v51
  %v1213 = vunpack.c.h.b16 %v51
  %v1214 = vunpack.c.l.b16 %v52
  %v1215 = vunpack.c.h.b16 %v52
  %v1216 = vunpack.c.l.b16 %v53
  %v1217 = vunpack.c.h.b16 %v53
  %v1218 = vunpack.c.l.b16 %v54
  %v1219 = vunpack.c.h.b16 %v54
  %v1220 = vunpack.c.l.b16 %v55
  %v1221 = vunpack.c.h.b16 %v55
  %v1222 = vunpack.c.l.b16 %v56
  %v1223 = vunpack.c.h.b16 %v56
  %v1224 = vunpack.c.l.b16 %v57
  %v1225 = vunpack.c.h.b16 %v57
  %v1226 = vunpack.c.l.b16 %v58
  %v1227 = vunpack.c.h.b16 %v58
  %v1228 = vunpack.c.l.b16 %v59
  %v1229 = vunpack.c.h.b16 %v59
  %v1230 = vunpack.c.l.b16 %v60
  %v1231 = vunpack.c.h.b16 %v60
  %v1232 = vunpack.c.l.b16 %v61
  %v1233 = vunpack.c.h.b16 %v61
  %v1234 = vunpack.c.l.b16 %v62
  %v1235 = vunpack.c.h.b16 %v62
  %v1236 = vunpack.c.l.b16 %v63
  %v1237 = vunpack.c.h.b16 %v63
  %v1238 = vunpack.c.l.b16 %v64
  %v1239 = vunpack.c.h.b16 %v64
  %v1240 = vunpack.c.l.b16 %v65
  %v1241 = vunpack.c.h.b16 %v65
  %v1242 = vunpack.c.l.b16 %v66
  %v1243 = vunpack.c.h.b16 %v66
  %v1244 = vunpack.c.l.b16 %v67
  %v1245 = vunpack.c.h.b16 %v67
  %v1246 = vunpack.c.l.b16 %v68
  %v1247 = vunpack.c.h.b16 %v68
  %v1248 = vunpack.c.l.b16 %v69
  %v1249 = vunpack.c.h.b16 %v69
  %v1250 = vunpack.c.l.b16 %v70
  %v1251 = vunpack.c.h.b16 %v70
  %v1252 = vunpack.c.l.b16 %v71
  %v1253 = vunpack.c.h.b16 %v71
  %v1254 = vunpack.c.l.b16 %v72
  %v1255 = vunpack.c.h.b16 %v72
  %v1256 = vunpack.c.l.b16 %v73
  %v1257 = vunpack.c.h.b16 %v73
  %v1258 = vunpack.c.l.b16 %v74
  %v1259 = vunpack.c.h.b16 %v74
  %v1260 = vunpack.c.l.b16 %v75
  %v1261 = vunpack.c.h.b16 %v75
  %v1262 = vunpack.c.l.b16 %v76
  %v1263 = vunpack.c.h.b16 %v76
  %v1264 = vunpack.c.l.b16 %v77
  %v1265 = vunpack.c.h.b16 %v77
  %v1266 = vunpack.c.l.b16 %v78
  %v1267 = vunpack.c.h.b16 %v78
  %v1268 = vunpack.c.l.b16 %v79
  %v1269 = vunpack.c.h.b16 %v79
  %v1270 = vunpack.c.l.b16 %v80
  %v1271 = vunpack.c.h.b16 %v80
  %v1272 = vunpack.c.l.b16 %v81
  %v1273 = vunpack.c.h.b16 %v81
  %v1274 = vunpack.c.l.b16 %v82
  %v1275 = vunpack.c.h.b16 %v82
  %v1276 = vunpack.c.l.b16 %v83
  %v1277 = vunpack.c.h.b16 %v83
  %v1278 = vunpack.c.l.b16 %v84
  %v1279 = vunpack.c.h.b16 %v84
  %v1280 = vunpack.c.l.b16 %v85
  %v1281 = vunpack.c.h.b16 %v85
  %v1282 = vunpack.c.l.b16 %v86
  %v1283 = vunpack.c.h.b16 %v86
  %v1284 = vunpack.c.l.b16 %v87
  %v1285 = vunpack.c.h.b16 %v87
  %v1286 = vunpack.c.l.b16 %v88
  %v1287 = vunpack.c.h.b16 %v88
  %v1288 = vunpack.c.l.b16 %v89
  %v1289 = vunpack.c.h.b16 %v89
  %v1290 = vunpack.c.l.b16 %v90
  %v1291 = vunpack.c.h.b16 %v90
  %v1292 = vunpack.c.l.b16 %v91
  %v1293 = vunpack.c.h.b16 %v91
  %v1294 = vunpack.c.l.b16 %v92
  %v1295 = vunpack.c.h.b16 %v92
  %v1296 = vunpack.c.l.b16 %v93
  %v1297 = vunpack.c.h.b16 %v93
  %v1298 = vunpack.c.l.b16 %v94
  %v1299 = vunpack.c.h.b16 %v94
  %v1300 = vunpack.c.l.b16 %v95
  %v1301 = vunpack.c.h.b16 %v95
  %v1302 = vunpack.c.l.b16 %v96
  %v1303 = vunpack.c.h.b16 %v96
  %v1304 = vunpack.c.l.b16 %v97
  %v1305 = vunpack.c.h.b16 %v97
  %v1306 = vunpack.c.l.b16 %v98
  %v1307 = vunpack.c.h.b16 %v98
  %v1308 = vunpack.c.l.b16 %v99
  %v1309 = vunpack.c.h.b16 %v99
  %v1310 = vunpack.c.l.b16 %v100
  %v1311 = vunpack.c.h.b16 %v100
  %v1312 = vunpack.c.l.b16 %v101
  %v1313 = vunpack.c.h.b16 %v101
  %v1314 = vunpack.c.l.b16 %v102
  %v1315 = vunpack.c.h.b16 %v102
  %v1316 = vunpack.c.l.b16 %v103
  %v1317 = vunpack.c.h.b16 %v103
  %v1318 = vunpack.c.l.b16 %v104
  %v1319 = vunpack.c.h.b16 %v104
  %v1320 = vunpack.c.l.b16 %v105
  %v1321 = vunpack.c.h.b16 %v105
  %v1322 = vunpack.c.l.b16 %v106
  %v1323 = vunpack.c.h.b16 %v106
  %v1324 = vunpack.c.l.b16 %v107
  %v1325 = vunpack.c.h.b16 %v107
  %v1326 = vunpack.c.l.b16 %v108
  %v1327 = vunpack.c.h.b16 %v108
  %v1328 = vunpack.c.l.b16 %v109
  %v1329 = vunpack.c.h.b16 %v109
  %v1330 = vunpack.c.l.b16 %v110
  %v1331 = vunpack.c.h.b16 %v110
  %v1332 = vunpack.c.l.b16 %v111
  %v1333 = vunpack.c.h.b16 %v111
  %v1334 = vunpack.c.l.b16 %v112
  %v1335 = vunpack.c.h.b16 %v112
  %v1336 = vunpack.c.l.b16 %v113
  %v1337 = vunpack.c.h.b16 %v113
  %v1338 = vunpack.c.l.b16 %v114
  %v1339 = vunpack.c.h.b16 %v114
  %v1340 = vunpack.c.l.b16 %v115
  %v1341 = vunpack.c.h.b16 %v115
  %v1342 = vunpack.c.l.b16 %v116
  %v1343 = vunpack.c.h.b16 %v116
  %v1344 = vunpack.c.l.b16 %v117
  %v1345 = vunpack.c.h.b16 %v117
  %v1346 = vunpack.c.l.b16 %v118
  %v1347 = vunpack.c.h.b16 %v118
  %v1348 = vunpack.c.l.b16 %v119
  %v1349 = vunpack.c.h.b16 %v119
  %v1350 = vunpack.c.l.b16 %v120
  %v1351 = vunpack.c.h.b16 %v120
  %v1352 = vunpack.c.l.b16 %v121
  %v1353 = vunpack.c.h.b16 %v121
  %v1354 = vunpack.c.l.b16 %v122
  %v1355 = vunpack.c.h.b16 %v122
  %v1356 = vunpack.c.l.b16 %v123
  %v1357 = vunpack.c.h.b16 %v123
  %v1358 = vunpack.c.l.b16 %v124
  %v1359 = vunpack.c.h.b16 %v124
  %v1360 = vunpack.c.l.b16 %v125
  %v1361 = vunpack.c.h.b16 %v125
  %v1362 = vunpack.c.l.b16 %v126
  %v1363 = vunpack.c.h.b16 %v126
  %v1364 = vunpack.c.l.b16 %v127
  %v1365 = vunpack.c.h.b16 %v127
  %v1366 = vunpack.c.l.b16 %v128
  %v1367 = vunpack.c.h.b16 %v128
  %v1368 = vunpack.c.l.b16 %v129
  %v1369 = vunpack.c.h.b16 %v129
  %v1370 = vunpack.c.l.b16 %v130
  %v1371 = vunpack.c.h.b16 %v130
  %v1372 = vunpack.c.l.b16 %v131
  %v1373 = vunpack.c.h.b16 %v131
  %v1374 = vunpack.c.l.b16 %v132
  %v1375 = vunpack.c.h.b16 %v132
  %v1376 = vunpack.c.l.b16 %v133
  %v1377 = vunpack.c.h.b16 %v133
  %v1378 = vunpack.c.l.b16 %v134
  %v1379 = vunpack.c.h.b16 %v134
  %v1380 = vunpack.c.l.b16 %v135
  %v1381 = vunpack.c.h.b16 %v135
  %v1382 = vunpack.c.l.b16 %v136
  %v1383 = vunpack.c.h.b16 %v136
  %v1384 = vunpack.c.l.b16 %v137
  %v1385 = vunpack.c.h.b16 %v137
  %v1386 = vunpack.c.l.b16 %v138
  %v1387 = vunpack.c.h.b16 %v138
  %v1388 = vunpack.c.l.b16 %v139
  %v1389 = vunpack.c.h.b16 %v139
  %v1390 = vunpack.c.l.b16 %v140
  %v1391 = vunpack.c.h.b16 %v140
  %v1392 = vunpack.c.l.b16 %v141
  %v1393 = vunpack.c.h.b16 %v141
  %v1394 = vunpack.c.l.b16 %v142
  %v1395 = vunpack.c.h.b16 %v142
  %v1396 = vunpack.c.l.b16 %v143
  %v1397 = vunpack.c.h.b16 %v143
  %v1398 = vunpack.c.l.b16 %v144
  %v1399 = vunpack.c.h.b16 %v144
  %v1400 = vunpack.c.l.b16 %v145
  %v1401 = vunpack.c.h.b16 %v145
  %v1402 = vunpack.c.l.b16 %v146
  %v1403 = vunpack.c.h.b16 %v146
  %v1404 = vunpack.c.l.b16 %v147
  %v1405 = vunpack.c.h.b16 %v147
  %v1406 = vunpack.c.l.b16 %v148
  %v1407 = vunpack.c.h.b16 %v148
  %v1408 = vunpack.c.l.b16 %v149
  %v1409 = vunpack.c.h.b16 %v149
  %v1410 = vunpack.c.l.b16 %v150
  %v1411 = vunpack.c.h.b16 %v150
  %v1412 = vunpack.c.l.b16 %v151
  %v1413 = vunpack.c.h.b16 %v151
  %v1414 = vunpack.c.l.b16 %v152
  %v1415 = vunpack.c.h.b16 %v152
  %v1416 = vunpack.c.l.b16 %v153
  %v1417 = vunpack.c.h.b16 %v153
  %v1418 = vunpack.c.l.b16 %v154
  %v1419 = vunpack.c.h.b16 %v154
  %v1420 = vunpack.c.l.b16 %v155
  %v1421 = vunpack.c.h.b16 %v155
  %v1422 = vunpack.c.l.b16 %v156
  %v1423 = vunpack.c.h.b16 %v156
  %v1424 = vunpack.c.l.b16 %v157
  %v1425 = vunpack.c.h.b16 %v157
  %v1426 = vunpack.c.l.b16 %v158
  %v1427 = vunpack.c.h.b16 %v158
  %v1428 = vunpack.c.l.b16 %v159
  %v1429 = vunpack.c.h.b16 %v159
  %v1430 = vunpack.c.l.b16 %v160
  %v1431 = vunpack.c.h.b16 %v160
  %v1432 = vunpack.c.l.b16 %v161
  %v1433 = vunpack.c.h.b16 %v161
  %v1434 = vunpack.c.l.b16 %v162
  %v1435 = vunpack.c.h.b16 %v162
  %v1436 = vunpack.c.l.b16 %v163
  %v1437 = vunpack.c.h.b16 %v163
  %v1438 = vunpack.c.l.b16 %v164
  %v1439 = vunpack.c.h.b16 %v164
  %v1440 = vunpack.c.l.b16 %v165
  %v1441 = vunpack.c.h.b16 %v165
  %v1442 = vunpack.c.l.b16 %v166
  %v1443 = vunpack.c.h.b16 %v166
  %v1444 = vunpack.c.l.b16 %v167
  %v1445 = vunpack.c.h.b16 %v167
  %v1446 = vunpack.c.l.b16 %v168
  %v1447 = vunpack.c.h.b16 %v168
  %v1448 = vunpack.c.l.b16 %v169
  %v1449 = vunpack.c.h.b16 %v169
  %v1450 = vunpack.c.l.b16 %v170
  %v1451 = vunpack.c.h.b16 %v170
  %v1452 = vunpack.c.l.b16 %v171
  %v1453 = vunpack.c.h.b16 %v171
  %v1454 = vunpack.c.l.b16 %v172
  %v1455 = vunpack.c.h.b16 %v172
  %v1456 = vunpack.c.l.b16 %v173
  %v1457 = vunpack.c.h.b16 %v173
  %v1458 = vunpack.c.l.b16 %v174
  %v1459 = vunpack.c.h.b16 %v174
  %v1460 = vunpack.c.l.b16 %v175
  %v1461 = vunpack.c.h.b16 %v175
  %v1462 = vunpack.c.l.b16 %v176
  %v1463 = vunpack.c.h.b16 %v176
  %v1464 = vunpack.c.l.b16 %v177
  %v1465 = vunpack.c.h.b16 %v177
  %v1466 = vunpack.c.l.b16 %v178
  %v1467 = vunpack.c.h.b16 %v178
  %v1468 = vunpack.c.l.b16 %v179
  %v1469 = vunpack.c.h.b16 %v179
  %v1470 = vunpack.c.l.b16 %v180
  %v1471 = vunpack.c.h.b16 %v180
  %v1472 = vunpack.c.l.b16 %v181
  %v1473 = vunpack.c.h.b16 %v181
  %v1474 = vunpack.c.l.b16 %v182
  %v1475 = vunpack.c.h.b16 %v182
  %v1476 = vunpack.c.l.b16 %v183
  %v1477 = vunpack.c.h.b16 %v183
  %v1478 = vunpack.c.l.b16 %v184
  %v1479 = vunpack.c.h.b16 %v184
  %v1480 = vunpack.c.l.b16 %v185
  %v1481 = vunpack.c.h.b16 %v185
  %v1482 = vunpack.c.l.b16 %v186
  %v1483 = vunpack.c.h.b16 %v186
  %v1484 = vunpack.c.l.b16 %v187
  %v1485 = vunpack.c.h.b16 %v187
  %v1486 = vunpack.c.l.b16 %v188
  %v1487 = vunpack.c.h.b16 %v188
  %v1488 = vunpack.c.l.b16 %v189
  %v1489 = vunpack.c.h.b16 %v189
  %v1490 = vunpack.c.l.b16 %v190
  %v1491 = vunpack.c.h.b16 %v190
  %v1492 = vunpack.c.l.b16 %v191
  %v1493 = vunpack.c.h.b16 %v191
  %v1494 = vunpack.c.l.b16 %v192
  %v1495 = vunpack.c.h.b16 %v192
  %v1496 = vunpack.c.l.b16 %v193
  %v1497 = vunpack.c.h.b16 %v193
  %v1498 = vunpack.c.l.b16 %v194
  %v1499 = vunpack.c.h.b16 %v194
  %v1500 = vunpack.c.l.b16 %v195
  %v1501 = vunpack.c.h.b16 %v195
  %v1502 = vunpack.c.l.b16 %v196
  %v1503 = vunpack.c.h.b16 %v196
  %v1504 = vunpack.c.l.b16 %v197
  %v1505 = vunpack.c.h.b16 %v197
  %v1506 = vunpack.c.l.b16 %v198
  %v1507 = vunpack.c.h.b16 %v198
  %v1508 = vunpack.c.l.b16 %v199
  %v1509 = vunpack.c.h.b16 %v199
  %v1510 = vunpack.c.l.b16 %v200
  %v1511 = vunpack.c.h.b16 %v200
  %v1512 = vunpack.c.l.b16 %v201
  %v1513 = vunpack.c.h.b16 %v201
  %v1514 = vunpack.c.l.b16 %v202
  %v1515 = vunpack.c.h.b16 %v202
  %v1516 = vunpack.c.l.b16 %v203
  %v1517 = vunpack.c.h.b16 %v203
  %v1518 = vunpack.c.l.b16 %v204
  %v1519 = vunpack.c.h.b16 %v204
  %v1520 = vunpack.c.l.b16 %v205
  %v1521 = vunpack.c.h.b16 %v205
  %v1522 = vunpack.c.l.b16 %v206
  %v1523 = vunpack.c.h.b16 %v206
  %v1524 = vunpack.c.l.b16 %v207
  %v1525 = vunpack.c.h.b16 %v207
  %v1526 = vunpack.c.l.b16 %v208
  %v1527 = vunpack.c.h.b16 %v208
  %v1528 = vunpack.c.l.b16 %v209
  %v1529 = vunpack.c.h.b16 %v209
  %v1530 = vunpack.c.l.b16 %v210
  %v1531 = vunpack.c.h.b16 %v210
  %v1532 = vunpack.c.l.b16 %v211
  %v1533 = vunpack.c.h.b16 %v211
  %v1534 = vunpack.c.l.b16 %v212
  %v1535 = vunpack.c.h.b16 %v212
  %v1536 = vunpack.c.l.b16 %v213
  %v1537 = vunpack.c.h.b16 %v213
  %v1538 = vunpack.c.l.b16 %v214
  %v1539 = vunpack.c.h.b16 %v214
  %v1540 = vunpack.c.l.b16 %v215
  %v1541 = vunpack.c.h.b16 %v215
  %v1542 = vunpack.c.l.b16 %v216
  %v1543 = vunpack.c.h.b16 %v216
  %v1544 = vunpack.c.l.b16 %v217
  %v1545 = vunpack.c.h.b16 %v217
  %v1546 = vunpack.c.l.b16 %v218
  %v1547 = vunpack.c.h.b16 %v218
  %v1548 = vunpack.c.l.b16 %v219
  %v1549 = vunpack.c.h.b16 %v219
  %v1550 = vunpack.c.l.b16 %v220
  %v1551 = vunpack.c.h.b16 %v220
  %v1552 = vunpack.c.l.b16 %v221
  %v1553 = vunpack.c.h.b16 %v221
  %v1554 = vunpack.c.l.b16 %v222
  %v1555 = vunpack.c.h.b16 %v222
  %v1556 = vunpack.c.l.b16 %v223
  %v1557 = vunpack.c.h.b16 %v223
  %v1558 = vunpack.c.l.b16 %v224
  %v1559 = vunpack.c.h.b16 %v224
  %v1560 = vunpack.c.l.b16 %v225
  %v1561 = vunpack.c.h.b16 %v225
  %v1562 = vunpack.c.l.b16 %v226
  %v1563 = vunpack.c.h.b16 %v226
  %v1564 = vunpack.c.l.b16 %v227
  %v1565 = vunpack.c.h.b16 %v227
  %v1566 = vunpack.c.l.b16 %v228
  %v1567 = vunpack.c.h.b16 %v228
  %v1568 = vunpack.c.l.b16 %v229
  %v1569 = vunpack.c.h.b16 %v229
  %v1570 = vunpack.c.l.b16 %v230
  %v1571 = vunpack.c.h.b16 %v230
  %v1572 = vunpack.c.l.b16 %v231
  %v1573 = vunpack.c.h.b16 %v231
  %v1574 = vunpack.c.l.b16 %v232
  %v1575 = vunpack.c.h.b16 %v232
  %v1576 = vunpack.c.l.b16 %v233
  %v1577 = vunpack.c.h.b16 %v233
  %v1578 = vunpack.c.l.b16 %v234
  %v1579 = vunpack.c.h.b16 %v234
  %v1580 = vunpack.c.l.b16 %v235
  %v1581 = vunpack.c.h.b16 %v235
  %v1582 = vunpack.c.l.b16 %v236
  %v1583 = vunpack.c.h.b16 %v236
  %v1584 = vunpack.c.l.b16 %v237
  %v1585 = vunpack.c.h.b16 %v237
  %v1586 = vunpack.c.l.b16 %v238
  %v1587 = vunpack.c.h.b16 %v238
  %v1588 = vunpack.c.l.b16 %v239
  %v1589 = vunpack.c.h.b16 %v239
  %v1590 = vunpack.c.l.b16 %v240
  %v1591 = vunpack.c.h.b16 %v240
  %v1592 = vunpack.c.l.b16 %v241
  %v1593 = vunpack.c.h.b16 %v241
  %v1594 = vunpack.c.l.b16 %v242
  %v1595 = vunpack.c.h.b16 %v242
  %v1596 = vunpack.c.l.b16 %v243
  %v1597 = vunpack.c.h.b16 %v243
  %v1598 = vunpack.c.l.b16 %v244
  %v1599 = vunpack.c.h.b16 %v244
  %v1600 = vunpack.c.l.b16 %v245
  %v1601 = vunpack.c.h.b16 %v245
  %v1602 = vunpack.c.l.b16 %v246
  %v1603 = vunpack.c.h.b16 %v246
  %v1604 = vunpack.c.l.b16 %v247
  %v1605 = vunpack.c.h.b16 %v247
  %v1606 = vunpack.c.l.b16 %v248
  %v1607 = vunpack.c.h.b16 %v248
  %v1608 = vunpack.c.l.b16 %v249
  %v1609 = vunpack.c.h.b16 %v249
  %v1610 = vunpack.c.l.b16 %v250
  %v1611 = vunpack.c.h.b16 %v250
  %v1612 = vunpack.c.l.b16 %v251
  %v1613 = vunpack.c.h.b16 %v251
  %v1614 = vunpack.c.l.b16 %v252
  %v1615 = vunpack.c.h.b16 %v252
  %v1616 = vunpack.c.l.b16 %v253
  %v1617 = vunpack.c.h.b16 %v253
  %v1618 = vunpack.c.l.b16 %v254
  %v1619 = vunpack.c.h.b16 %v254
  %v1620 = vunpack.c.l.b16 %v255
  %v1621 = vunpack.c.h.b16 %v255
  %v1622 = vunpack.c.l.b16 %v256
  %v1623 = vunpack.c.h.b16 %v256
  %v1624 = vunpack.c.l.b16 %v257
  %v1625 = vunpack.c.h.b16 %v257
  %v1626 = vunpack.c.l.b16 %v258
  %v1627 = vunpack.c.h.b16 %v258
  %v1628 = vunpack.c.l.b16 %v259
  %v1629 = vunpack.c.h.b16 %v259
  %v1630 = vunpack.c.l.b16 %v260
  %v1631 = vunpack.c.h.b16 %v260
  %v1632 = vunpack.c.l.b16 %v261
  %v1633 = vunpack.c.h.b16 %v261
  %v1634 = vunpack.c.l.b16 %v262
  %v1635 = vunpack.c.h.b16 %v262
  %v1636 = vunpack.c.l.b16 %v263
  %v1637 = vunpack.c.h.b16 %v263
  %v1638 = vunpack.c.l.b16 %v264
  %v1639 = vunpack.c.h.b16 %v264
  %v1640 = vunpack.c.l.b16 %v265
  %v1641 = vunpack.c.h.b16 %v265
  %v1642 = vunpack.c.l.b16 %v266
  %v1643 = vunpack.c.h.b16 %v266
  %v1644 = vunpack.c.l.b16 %v267
  %v1645 = vunpack.c.h.b16 %v267
  %v1646 = vunpack.c.l.b16 %v268
  %v1647 = vunpack.c.h.b16 %v268
  %v1648 = vunpack.c.l.b16 %v269
  %v1649 = vunpack.c.h.b16 %v269
  %v1650 = vunpack.c.l.b16 %v270
  %v1651 = vunpack.c.h.b16 %v270
  %v1652 = vunpack.c.l.b16 %v271
  %v1653 = vunpack.c.h.b16 %v271
  %v1654 = vunpack.c.l.b16 %v272
  %v1655 = vunpack.c.h.b16 %v272
  %v1656 = vunpack.c.l.b16 %v273
  %v1657 = vunpack.c.h.b16 %v273
  %v1658 = vunpack.c.l.b16 %v274
  %v1659 = vunpack.c.h.b16 %v274
  %v1660 = vunpack.c.l.b16 %v275
  %v1661 = vunpack.c.h.b16 %v275
  %v1662 = vunpack.c.l.b16 %v276
  %v1663 = vunpack.c.h.b16 %v276
  %v1664 = vunpack.c.l.b16 %v277
  %v1665 = vunpack.c.h.b16 %v277
  %v1666 = vunpack.c.l.b16 %v278
  %v1667 = vunpack.c.h.b16 %v278
  %v1668 = vunpack.c.l.b16 %v279
  %v1669 = vunpack.c.h.b16 %v279
  %v1670 = vunpack.c.l.b16 %v280
  %v1671 = vunpack.c.h.b16 %v280
  %v1672 = vunpack.c.l.b16 %v281
  %v1673 = vunpack.c.h.b16 %v281
  %v1674 = vunpack.c.l.b16 %v282
  %v1675 = vunpack.c.h.b16 %v282
  %v1676 = vunpack.c.l.b16 %v283
  %v1677 = vunpack.c.h.b16 %v283
  %v1678 = vunpack.c.l.b16 %v284
  %v1679 = vunpack.c.h.b16 %v284
  %v1680 = vunpack.c.l.b16 %v285
  %v1681 = vunpack.c.h.b16 %v285
  %v1682 = vunpack.c.l.b16 %v286
  %v1683 = vunpack.c.h.b16 %v286
  %v1684 = vunpack.c.l.b16 %v287
  %v1685 = vunpack.c.h.b16 %v287
  %v1686 = vunpack.c.l.b16 %v288
  %v1687 = vunpack.c.h.b16 %v288
  %v1688 = vunpack.c.l.b16 %v289
  %v1689 = vunpack.c.h.b16 %v289
  %v1690 = vunpack.c.l.b16 %v290
  %v1691 = vunpack.c.h.b16 %v290
  %v1692 = vunpack.c.l.b16 %v291
  %v1693 = vunpack.c.h.b16 %v291
  %v1694 = vunpack.c.l.b16 %v292
  %v1695 = vunpack.c.h.b16 %v292
  %v1696 = vunpack.c.l.b16 %v293
  %v1697 = vunpack.c.h.b16 %v293
  %v1698 = vunpack.c.l.b16 %v294
  %v1699 = vunpack.c.h.b16 %v294
  %v1700 = vunpack.c.l.b16 %v295
  %v1701 = vunpack.c.h.b16 %v295
  %v1702 = vunpack.c.l.b16 %v296
  %v1703 = vunpack.c.h.b16 %v296
  %v1704 = vunpack.c.l.b16 %v297
  %v1705 = vunpack.c.h.b16 %v297
  %v1706 = vunpack.c.l.b16 %v298
  %v1707 = vunpack.c.h.b16 %v298
  %v1708 = vunpack.c.l.b16 %v299
  %v1709 = vunpack.c.h.b16 %v299
  %v1710 = vunpack.c.l.b16 %v300
  %v1711 = vunpack.c.h.b16 %v300
  %v1712 = vunpack.c.l.b16 %v301
  %v1713 = vunpack.c.h.b16 %v301
  %v1714 = vunpack.c.l.b16 %v302
  %v1715 = vunpack.c.h.b16 %v302
  %v1716 = vunpack.c.l.b16 %v303
  %v1717 = vunpack.c.h.b16 %v303
  %v1718 = vunpack.c.l.b16 %v304
  %v1719 = vunpack.c.h.b16 %v304
  %v1720 = vunpack.c.l.b16 %v305
  %v1721 = vunpack.c.h.b16 %v305
  %v1722 = vunpack.c.l.b16 %v306
  %v1723 = vunpack.c.h.b16 %v306
  %v1724 = vunpack.c.l.b16 %v307
  %v1725 = vunpack.c.h.b16 %v307
  %v1726 = vunpack.c.l.b16 %v308
  %v1727 = vunpack.c.h.b16 %v308
  %v1728 = vunpack.c.l.b16 %v309
  %v1729 = vunpack.c.h.b16 %v309
  %v1730 = vunpack.c.l.b16 %v310
  %v1731 = vunpack.c.h.b16 %v310
  %v1732 = vunpack.c.l.b16 %v311
  %v1733 = vunpack.c.h.b16 %v311
  %v1734 = vunpack.c.l.b16 %v312
  %v1735 = vunpack.c.h.b16 %v312
  %v1736 = vunpack.c.l.b16 %v313
  %v1737 = vunpack.c.h.b16 %v313
  %v1738 = vunpack.c.l.b16 %v314
  %v1739 = vunpack.c.h.b16 %v314
  %v1740 = vunpack.c.l.b16 %v315
  %v1741 = vunpack.c.h.b16 %v315
  %v1742 = vunpack.c.l.b16 %v316
  %v1743 = vunpack.c.h.b16 %v316
  %v1744 = vunpack.c.l.b16 %v317
  %v1745 = vunpack.c.h.b16 %v317
  %v1746 = vunpack.c.l.b16 %v318
  %v1747 = vunpack.c.h.b16 %v318
  %v1748 = vunpack.c.l.b16 %v319
  %v1749 = vunpack.c.h.b16 %v319
  %v1750 = vunpack.c.l.b16 %v320
  %v1751 = vunpack.c.h.b16 %v320
  %v1752 = vunpack.c.l.b16 %v321
  %v1753 = vunpack.c.h.b16 %v321
  %v1754 = vunpack.c.l.b16 %v322
  %v1755 = vunpack.c.h.b16 %v322
  %v1756 = vunpack.c.l.b16 %v323
  %v1757 = vunpack.c.h.b16 %v323
  %v1758 = vunpack.c.l.b16 %v324
  %v1759 = vunpack.c.h.b16 %v324
  %v1760 = vunpack.c.l.b16 %v325
  %v1761 = vunpack.c.h.b16 %v325
  %v1762 = vunpack.c.l.b16 %v326
  %v1763 = vunpack.c.h.b16 %v326
  %v1764 = vunpack.c.l.b16 %v327
  %v1765 = vunpack.c.h.b16 %v327
  %v1766 = vunpack.c.l.b16 %v328
  %v1767 = vunpack.c.h.b16 %v328
  %v1768 = vunpack.c.l.b16 %v329
  %v1769 = vunpack.c.h.b16 %v329
  %v1770 = vunpack.c.l.b16 %v330
  %v1771 = vunpack.c.h.b16 %v330
  %v1772 = vunpack.c.l.b16 %v331
  %v1773 = vunpack.c.h.b16 %v331
  %v1774 = vunpack.c.l.b16 %v332
  %v1775 = vunpack.c.h.b16 %v332
  %v1776 = vunpack.c.l.b16 %v333
  %v1777 = vunpack.c.h.b16 %v333
  %v1778 = vunpack.c.l.b16 %v334
  %v1779 = vunpack.c.h.b16 %v334
  %v1780 = vunpack.c.l.b16 %v335
  %v1781 = vunpack.c.h.b16 %v335
  %v1782 = vunpack.c.l.b16 %v336
  %v1783 = vunpack.c.h.b16 %v336
  %v1784 = vunpack.c.l.b16 %v337
  %v1785 = vunpack.c.h.b16 %v337
  %v1786 = vunpack.c.l.b16 %v338
  %v1787 = vunpack.c.h.b16 %v338
  %v1788 = vunpack.c.l.b16 %v339
  %v1789 = vunpack.c.h.b16 %v339
  %v1790 = vunpack.c.l.b16 %v340
  %v1791 = vunpack.c.h.b16 %v340
  %v1792 = vunpack.c.l.b16 %v341
  %v1793 = vunpack.c.h.b16 %v341
  %v1794 = vunpack.c.l.b16 %v342
  %v1795 = vunpack.c.h.b16 %v342
  %v1796 = vunpack.c.l.b16 %v343
  %v1797 = vunpack.c.h.b16 %v343
  %v1798 = vunpack.c.l.b16 %v344
  %v1799 = vunpack.c.h.b16 %v344
  %v1800 = vunpack.c.l.b16 %v345
  %v1801 = vunpack.c.h.b16 %v345
  %v1802 = vunpack.c.l.b16 %v346
  %v1803 = vunpack.c.h.b16 %v346
  %v1804 = vunpack.c.l.b16 %v347
  %v1805 = vunpack.c.h.b16 %v347
  %v1806 = vunpack.c.l.b16 %v348
  %v1807 = vunpack.c.h.b16 %v348
  %v1808 = vunpack.c.l.b16 %v349
  %v1809 = vunpack.c.h.b16 %v349
  %v1810 = vunpack.c.l.b16 %v350
  %v1811 = vunpack.c.h.b16 %v350
  %v1812 = vunpack.c.l.b16 %v351
  %v1813 = vunpack.c.h.b16 %v351
  %v1814 = vunpack.c.l.b16 %v352
  %v1815 = vunpack.c.h.b16 %v352
  %v1816 = vunpack.c.l.b16 %v353
  %v1817 = vunpack.c.h.b16 %v353
  %v1818 = vunpack.c.l.b16 %v354
  %v1819 = vunpack.c.h.b16 %v354
  %v1820 = vunpack.c.l.b16 %v355
  %v1821 = vunpack.c.h.b16 %v355
  %v1822 = vunpack.c.l.b16 %v356
  %v1823 = vunpack.c.h.b16 %v356
  %v1824 = vunpack.c.l.b16 %v357
  %v1825 = vunpack.c.h.b16 %v357
  %v1826 = vunpack.c.l.b16 %v358
  %v1827 = vunpack.c.h.b16 %v358
  %v1828 = vunpack.c.l.b16 %v359
  %v1829 = vunpack.c.h.b16 %v359
  %v1830 = vunpack.c.l.b16 %v360
  %v1831 = vunpack.c.h.b16 %v360
  %v1832 = vunpack.c.l.b16 %v361
  %v1833 = vunpack.c.h.b16 %v361
  %v1834 = vunpack.c.l.b16 %v362
  %v1835 = vunpack.c.h.b16 %v362
  %v1836 = vunpack.c.l.b16 %v363
  %v1837 = vunpack.c.h.b16 %v363
  %v1838 = vunpack.c.l.b16 %v364
  %v1839 = vunpack.c.h.b16 %v364
  %v1840 = vunpack.c.l.b16 %v365
  %v1841 = vunpack.c.h.b16 %v365
  %v1842 = vunpack.c.l.b16 %v366
  %v1843 = vunpack.c.h.b16 %v366
  %v1844 = vunpack.c.l.b16 %v367
  %v1845 = vunpack.c.h.b16 %v367
  %v1846 = vunpack.c.l.b16 %v368
  %v1847 = vunpack.c.h.b16 %v368
  %v1848 = vunpack.c.l.b16 %v369
  %v1849 = vunpack.c.h.b16 %v369
  %v1850 = vunpack.c.l.b16 %v370
  %v1851 = vunpack.c.h.b16 %v370
  %v1852 = vunpack.c.l.b16 %v371
  %v1853 = vunpack.c.h.b16 %v371
  %v1854 = vunpack.c.l.b16 %v372
  %v1855 = vunpack.c.h.b16 %v372
  %v1856 = vunpack.c.l.b16 %v373
  %v1857 = vunpack.c.h.b16 %v373
  %v1858 = vunpack.c.l.b16 %v374
  %v1859 = vunpack.c.h.b16 %v374
  %v1860 = vunpack.c.l.b16 %v375
  %v1861 = vunpack.c.h.b16 %v375
  %v1862 = vunpack.c.l.b16 %v376
  %v1863 = vunpack.c.h.b16 %v376
  %v1864 = vunpack.c.l.b16 %v377
  %v1865 = vunpack.c.h.b16 %v377
  %v1866 = vunpack.c.l.b16 %v378
  %v1867 = vunpack.c.h.b16 %v378
  %v1868 = vunpack.c.l.b16 %v379
  %v1869 = vunpack.c.h.b16 %v379
  %v1870 = vunpack.c.l.b16 %v380
  %v1871 = vunpack.c.h.b16 %v380
  %v1872 = vunpack.c.l.b16 %v381
  %v1873 = vunpack.c.h.b16 %v381
  %v1874 = vunpack.c.l.b16 %v382
  %v1875 = vunpack.c.h.b16 %v382
  %v1876 = vunpack.c.l.b16 %v383
  %v1877 = vunpack.c.h.b16 %v383
  %v1878 = vunpack.c.l.b16 %v384
  %v1879 = vunpack.c.h.b16 %v384
  %v1880 = vunpack.c.l.b16 %v385
  %v1881 = vunpack.c.h.b16 %v385
  %v1882 = vunpack.c.l.b16 %v386
  %v1883 = vunpack.c.h.b16 %v386
  %v1884 = vunpack.c.l.b16 %v387
  %v1885 = vunpack.c.h.b16 %v387
  %v1886 = vunpack.c.l.b16 %v388
  %v1887 = vunpack.c.h.b16 %v388
  %v1888 = vunpack.c.l.b16 %v389
  %v1889 = vunpack.c.h.b16 %v389
  %v1890 = vunpack.c.l.b16 %v390
  %v1891 = vunpack.c.h.b16 %v390
  %v1892 = vunpack.c.l.b16 %v391
  %v1893 = vunpack.c.h.b16 %v391
  %v1894 = vunpack.c.l.b16 %v392
  %v1895 = vunpack.c.h.b16 %v392
  %v1896 = vunpack.c.l.b16 %v393
  %v1897 = vunpack.c.h.b16 %v393
  %v1898 = vunpack.c.l.b16 %v394
  %v1899 = vunpack.c.h.b16 %v394
  %v1900 = vunpack.c.l.b16 %v395
  %v1901 = vunpack.c.h.b16 %v395
  %v1902 = vunpack.c.l.b16 %v396
  %v1903 = vunpack.c.h.b16 %v396
  %v1904 = vunpack.c.l.b16 %v397
  %v1905 = vunpack.c.h.b16 %v397
  %v1906 = vunpack.c.l.b16 %v398
  %v1907 = vunpack.c.h.b16 %v398
  %v1908 = vunpack.c.l.b16 %v399
  %v1909 = vunpack.c.h.b16 %v399
  %v1910 = vunpack.c.l.b16 %v400
  %v1911 = vunpack.c.h.b16 %v400
  %v1912 = vunpack.c.l.b16 %v401
  %v1913 = vunpack.c.h.b16 %v401
  %v1914 = vunpack.c.l.b16 %v402
  %v1915 = vunpack.c.h.b16 %v402
  %v1916 = vunpack.c.l.b16 %v403
  %v1917 = vunpack.c.h.b16 %v403
  %v1918 = vunpack.c.l.b16 %v404
  %v1919 = vunpack.c.h.b16 %v404
  %v1920 = vunpack.c.l.b16 %v405
  %v1921 = vunpack.c.h.b16 %v405
  %v1922 = vunpack.c.l.b16 %v406
  %v1923 = vunpack.c.h.b16 %v406
  %v1924 = vunpack.c.l.b16 %v407
  %v1925 = vunpack.c.h.b16 %v407
  %v1926 = vunpack.c.l.b16 %v408
  %v1927 = vunpack.c.h.b16 %v408
  %v1928 = vunpack.c.l.b16 %v409
  %v1929 = vunpack.c.h.b16 %v409
  %v1930 = vunpack.c.l.b16 %v410
  %v1931 = vunpack.c.h.b16 %v410
  %v1932 = vunpack.c.l.b16 %v411
  %v1933 = vunpack.c.h.b16 %v411
  %v1934 = vunpack.c.l.b16 %v412
  %v1935 = vunpack.c.h.b16 %v412
  %v1936 = vunpack.c.l.b16 %v413
  %v1937 = vunpack.c.h.b16 %v413
  %v1938 = vunpack.c.l.b16 %v414
  %v1939 = vunpack.c.h.b16 %v414
  %v1940 = vunpack.c.l.b16 %v415
  %v1941 = vunpack.c.h.b16 %v415
  %v1942 = vunpack.c.l.b16 %v416
  %v1943 = vunpack.c.h.b16 %v416
  %v1944 = vunpack.c.l.b16 %v417
  %v1945 = vunpack.c.h.b16 %v417
  %v1946 = vunpack.c.l.b16 %v418
  %v1947 = vunpack.c.h.b16 %v418
  %v1948 = vunpack.c.l.b16 %v419
  %v1949 = vunpack.c.h.b16 %v419
  %v1950 = vunpack.c.l.b16 %v420
  %v1951 = vunpack.c.h.b16 %v420
  %v1952 = vunpack.c.l.b16 %v421
  %v1953 = vunpack.c.h.b16 %v421
  %v1954 = vunpack.c.l.b16 %v422
  %v1955 = vunpack.c.h.b16 %v422
  %v1956 = vunpack.c.l.b16 %v423
  %v1957 = vunpack.c.h.b16 %v423
  %v1958 = vunpack.c.l.b16 %v424
  %v1959 = vunpack.c.h.b16 %v424
  %v1960 = vunpack.c.l.b16 %v425
  %v1961 = vunpack.c.h.b16 %v425
  %v1962 = vunpack.c.l.b16 %v426
  %v1963 = vunpack.c.h.b16 %v426
  %v1964 = vunpack.c.l.b16 %v427
  %v1965 = vunpack.c.h.b16 %v427
  %v1966 = vunpack.c.l.b16 %v428
  %v1967 = vunpack.c.h.b16 %v428
  %v1968 = vunpack.c.l.b16 %v429
  %v1969 = vunpack.c.h.b16 %v429
  %v1970 = vunpack.c.l.b16 %v430
  %v1971 = vunpack.c.h.b16 %v430
  %v1972 = vunpack.c.l.b16 %v431
  %v1973 = vunpack.c.h.b16 %v431
  %v1974 = vunpack.c.l.b16 %v432
  %v1975 = vunpack.c.h.b16 %v432
  %v1976 = vunpack.c.l.b16 %v433
  %v1977 = vunpack.c.h.b16 %v433
  %v1978 = vunpack.c.l.b16 %v434
  %v1979 = vunpack.c.h.b16 %v434
  %v1980 = vunpack.c.l.b16 %v435
  %v1981 = vunpack.c.h.b16 %v435
  %v1982 = vunpack.c.l.b16 %v436
  %v1983 = vunpack.c.h.b16 %v436
  %v1984 = vunpack.c.l.b16 %v437
  %v1985 = vunpack.c.h.b16 %v437
  %v1986 = vunpack.c.l.b16 %v438
  %v1987 = vunpack.c.h.b16 %v438
  %v1988 = vunpack.c.l.b16 %v439
  %v1989 = vunpack.c.h.b16 %v439
  %v1990 = vunpack.c.l.b16 %v440
  %v1991 = vunpack.c.h.b16 %v440
  %v1992 = vunpack.c.l.b16 %v441
  %v1993 = vunpack.c.h.b16 %v441
  %v1994 = vunpack.c.l.b16 %v442
  %v1995 = vunpack.c.h.b16 %v442
  %v1996 = vunpack.c.l.b16 %v443
  %v1997 = vunpack.c.h.b16 %v443
  %v1998 = vunpack.c.l.b16 %v444
  %v1999 = vunpack.c.h.b16 %v444
  %v2000 = vunpack.c.l.b16 %v445
  %v2001 = vunpack.c.h.b16 %v445
  %v2002 = vunpack.c.l.b16 %v446
  %v2003 = vunpack.c.h.b16 %v446
  %v2004 = vunpack.c.l.b16 %v447
  %v2005 = vunpack.c.h.b16 %v447
  %v2006 = vunpack.c.l.b16 %v448
  %v2007 = vunpack.c.h.b16 %v448
  %v2008 = vunpack.c.l.b16 %v449
  %v2009 = vunpack.c.h.b16 %v449
  %v2010 = vunpack.c.l.b16 %v450
  %v2011 = vunpack.c.h.b16 %v450
  %v2012 = vunpack.c.l.b16 %v451
  %v2013 = vunpack.c.h.b16 %v451
  %v2014 = vunpack.c.l.b16 %v452
  %v2015 = vunpack.c.h.b16 %v452
  %v2016 = vunpack.c.l.b16 %v453
  %v2017 = vunpack.c.h.b16 %v453
  %v2018 = vunpack.c.l.b16 %v454
  %v2019 = vunpack.c.h.b16 %v454
  %v2020 = vunpack.c.l.b16 %v455
  %v2021 = vunpack.c.h.b16 %v455
  %v2022 = vunpack.c.l.b16 %v456
  %v2023 = vunpack.c.h.b16 %v456
  %v2024 = vunpack.c.l.b16 %v457
  %v2025 = vunpack.c.h.b16 %v457
  %v2026 = vunpack.c.l.b16 %v458
  %v2027 = vunpack.c.h.b16 %v458
  %v2028 = vunpack.c.l.b16 %v459
  %v2029 = vunpack.c.h.b16 %v459
  %v2030 = vunpack.c.l.b16 %v460
  %v2031 = vunpack.c.h.b16 %v460
  %v2032 = vunpack.c.l.b16 %v461
  %v2033 = vunpack.c.h.b16 %v461
  %v2034 = vunpack.c.l.b16 %v462
  %v2035 = vunpack.c.h.b16 %v462
  %v2036 = vunpack.c.l.b16 %v463
  %v2037 = vunpack.c.h.b16 %v463
  %v2038 = vunpack.c.l.b16 %v464
  %v2039 = vunpack.c.h.b16 %v464
  %v2040 = vunpack.c.l.b16 %v465
  %v2041 = vunpack.c.h.b16 %v465
  %v2042 = vunpack.c.l.b16 %v466
  %v2043 = vunpack.c.h.b16 %v466
  %v2044 = vunpack.c.l.b16 %v467
  %v2045 = vunpack.c.h.b16 %v467
  %v2046 = vunpack.c.l.b16 %v468
  %v2047 = vunpack.c.h.b16 %v468
  %v2048 = vunpack.c.l.b16 %v469
  %v2049 = vunpack.c.h.b16 %v469
  %v2050 = vunpack.c.l.b16 %v470
  %v2051 = vunpack.c.h.b16 %v470
  %v2052 = vunpack.c.l.b16 %v471
  %v2053 = vunpack.c.h.b16 %v471
  %v2054 = vunpack.c.l.b16 %v472
  %v2055 = vunpack.c.h.b16 %v472
  %v2056 = vunpack.c.l.b16 %v473
  %v2057 = vunpack.c.h.b16 %v473
  %v2058 = vunpack.c.l.b16 %v474
  %v2059 = vunpack.c.h.b16 %v474
  %v2060 = vunpack.c.l.b16 %v475
  %v2061 = vunpack.c.h.b16 %v475
  %v2062 = vunpack.c.l.b16 %v476
  %v2063 = vunpack.c.h.b16 %v476
  %v2064 = vunpack.c.l.b16 %v477
  %v2065 = vunpack.c.h.b16 %v477
  %v2066 = vunpack.c.l.b16 %v478
  %v2067 = vunpack.c.h.b16 %v478
  %v2068 = vunpack.c.l.b16 %v479
  %v2069 = vunpack.c.h.b16 %v479
  %v2070 = vunpack.c.l.b16 %v480
  %v2071 = vunpack.c.h.b16 %v480
  %v2072 = vunpack.c.l.b16 %v481
  %v2073 = vunpack.c.h.b16 %v481
  %v2074 = vunpack.c.l.b16 %v482
  %v2075 = vunpack.c.h.b16 %v482
  %v2076 = vunpack.c.l.b16 %v483
  %v2077 = vunpack.c.h.b16 %v483
  %v2078 = vunpack.c.l.b16 %v484
  %v2079 = vunpack.c.h.b16 %v484
  %v2080 = vunpack.c.l.b16 %v485
  %v2081 = vunpack.c.h.b16 %v485
  %v2082 = vunpack.c.l.b16 %v486
  %v2083 = vunpack.c.h.b16 %v486
  %v2084 = vunpack.c.l.b16 %v487
  %v2085 = vunpack.c.h.b16 %v487
  %v2086 = vunpack.c.l.b16 %v488
  %v2087 = vunpack.c.h.b16 %v488
  %v2088 = vunpack.c.l.b16 %v489
  %v2089 = vunpack.c.h.b16 %v489
  %v2090 = vunpack.c.l.b16 %v490
  %v2091 = vunpack.c.h.b16 %v490
  %v2092 = vunpack.c.l.b16 %v491
  %v2093 = vunpack.c.h.b16 %v491
  %v2094 = vunpack.c.l.b16 %v492
  %v2095 = vunpack.c.h.b16 %v492
  %v2096 = vunpack.c.l.b16 %v493
  %v2097 = vunpack.c.h.b16 %v493
  %v2098 = vunpack.c.l.b16 %v494
  %v2099 = vunpack.c.h.b16 %v494
  %v2100 = vunpack.c.l.b16 %v495
  %v2101 = vunpack.c.h.b16 %v495
  %v2102 = vunpack.c.l.b16 %v496
  %v2103 = vunpack.c.h.b16 %v496
  %v2104 = vunpack.c.l.b16 %v497
  %v2105 = vunpack.c.h.b16 %v497
  %v2106 = vunpack.c.l.b16 %v498
  %v2107 = vunpack.c.h.b16 %v498
  %v2108 = vunpack.c.l.b16 %v499
  %v2109 = vunpack.c.h.b16 %v499
  %v2110 = vunpack.c.l.b16 %v500
  %v2111 = vunpack.c.h.b16 %v500
  %v2112 = vunpack.c.l.b16 %v501
  %v2113 = vunpack.c.h.b16 %v501
  %v2114 = vunpack.c.l.b16 %v502
  %v2115 = vunpack.c.h.b16 %v502
  %v2116 = vunpack.c.l.b16 %v503
  %v2117 = vunpack.c.h.b16 %v503
  %v2118 = vunpack.c.l.b16 %v504
  %v2119 = vunpack.c.h.b16 %v504
  %v2120 = vunpack.c.l.b16 %v505
  %v2121 = vunpack.c.h.b16 %v505
  %v2122 = vunpack.c.l.b16 %v506
  %v2123 = vunpack.c.h.b16 %v506
  %v2124 = vunpack.c.l.b16 %v507
  %v2125 = vunpack.c.h.b16 %v507
  %v2126 = vunpack.c.l.b16 %v508
  %v2127 = vunpack.c.h.b16 %v508
  %v2128 = vunpack.c.l.b16 %v509
  %v2129 = vunpack.c.h.b16 %v509
  %v2130 = vunpack.c.l.b16 %v510
  %v2131 = vunpack.c.h.b16 %v510
  %v2132 = vunpack.c.l.b16 %v511
  %v2133 = vunpack.c.h.b16 %v511
  %v2134 = vunpack.c.l.b16 %v512
  %v2135 = vunpack.c.h.b16 %v512
  %v2136 = vunpack.c.l.b16 %v513
  %v2137 = vunpack.c.h.b16 %v513
  %v2138 = vunpack.c.l.b16 %v514
  %v2139 = vunpack.c.h.b16 %v514
  %v2140 = vunpack.c.l.b16 %v515
  %v2141 = vunpack.c.h.b16 %v515
  %v2142 = vunpack.c.l.b16 %v516
  %v2143 = vunpack.c.h.b16 %v516
  %v2144 = vunpack.c.l.b16 %v517
  %v2145 = vunpack.c.h.b16 %v517
  %v2146 = vunpack.c.l.b16 %v518
  %v2147 = vunpack.c.h.b16 %v518
  %v2148 = vunpack.c.l.b16 %v519
  %v2149 = vunpack.c.h.b16 %v519
  %v2150 = vunpack.c.l.b16 %v520
  %v2151 = vunpack.c.h.b16 %v520
  %v2152 = vunpack.c.l.b16 %v521
  %v2153 = vunpack.c.h.b16 %v521
  %v2154 = vunpack.c.l.b16 %v522
  %v2155 = vunpack.c.h.b16 %v522
  %v2156 = vunpack.c.l.b16 %v523
  %v2157 = vunpack.c.h.b16 %v523
  %v2158 = vunpack.c.l.b16 %v524
  %v2159 = vunpack.c.h.b16 %v524
  %v2160 = vunpack.c.l.b16 %v525
  %v2161 = vunpack.c.h.b16 %v525
  %v2162 = vunpack.c.l.b16 %v526
  %v2163 = vunpack.c.h.b16 %v526
  %v2164 = vunpack.c.l.b16 %v527
  %v2165 = vunpack.c.h.b16 %v527
  %v2166 = vunpack.c.l.b16 %v528
  %v2167 = vunpack.c.h.b16 %v528
  %v2168 = vunpack.c.l.b16 %v529
  %v2169 = vunpack.c.h.b16 %v529
  %v2170 = vpack.c.b16 %v1162, %v1146
  %v2171 = vpack.c.b16 %v1163, %v1147
  %v2172 = vpack.c.b16 %v1164, %v1148
  %v2173 = vpack.c.b16 %v1165, %v1149
  %v2174 = vpack.c.b16 %v1166, %v1150
  %v2175 = vpack.c.b16 %v1167, %v1151
  %v2176 = vpack.c.b16 %v1168, %v1152
  %v2177 = vpack.c.b16 %v1169, %v1153
  %v2178 = vpack.c.b16 %v1170, %v1154
  %v2179 = vpack.c.b16 %v1171, %v1155
  %v2180 = vpack.c.b16 %v1172, %v1156
  %v2181 = vpack.c.b16 %v1173, %v1157
  %v2182 = vpack.c.b16 %v1174, %v1158
  %v2183 = vpack.c.b16 %v1175, %v1159
  %v2184 = vpack.c.b16 %v1176, %v1160
  %v2185 = vpack.c.b16 %v1177, %v1161
  %v2186 = vpack.c.b16 %v1194, %v1178
  %v2187 = vpack.c.b16 %v1195, %v1179
  %v2188 = vpack.c.b16 %v1196, %v1180
  %v2189 = vpack.c.b16 %v1197, %v1181
  %v2190 = vpack.c.b16 %v1198, %v1182
  %v2191 = vpack.c.b16 %v1199, %v1183
  %v2192 = vpack.c.b16 %v1200, %v1184
  %v2193 = vpack.c.b16 %v1201, %v1185
  %v2194 = vpack.c.b16 %v1202, %v1186
  %v2195 = vpack.c.b16 %v1203, %v1187
  %v2196 = vpack.c.b16 %v1204, %v1188
  %v2197 = vpack.c.b16 %v1205, %v1189
  %v2198 = vpack.c.b16 %v1206, %v1190
  %v2199 = vpack.c.b16 %v1207, %v1191
  %v2200 = vpack.c.b16 %v1208, %v1192
  %v2201 = vpack.c.b16 %v1209, %v1193
  %v2202 = vpack.c.b16 %v1226, %v1210
  %v2203 = vpack.c.b16 %v1227, %v1211
  %v2204 = vpack.c.b16 %v1228, %v1212
  %v2205 = vpack.c.b16 %v1229, %v1213
  %v2206 = vpack.c.b16 %v1230, %v1214
  %v2207 = vpack.c.b16 %v1231, %v1215
  %v2208 = vpack.c.b16 %v1232, %v1216
  %v2209 = vpack.c.b16 %v1233, %v1217
  %v2210 = vpack.c.b16 %v1234, %v1218
  %v2211 = vpack.c.b16 %v1235, %v1219
  %v2212 = vpack.c.b16 %v1236, %v1220
  %v2213 = vpack.c.b16 %v1237, %v1221
  %v2214 = vpack.c.b16 %v1238, %v1222
  %v2215 = vpack.c.b16 %v1239, %v1223
  %v2216 = vpack.c.b16 %v1240, %v1224
  %v2217 = vpack.c.b16 %v1241, %v1225
  %v2218 = vpack.c.b16 %v1258, %v1242
  %v2219 = vpack.c.b16 %v1259, %v1243
  %v2220 = vpack.c.b16 %v1260, %v1244
  %v2221 = vpack.c.b16 %v1261, %v1245
  %v2222 = vpack.c.b16 %v1262, %v1246
  %v2223 = vpack.c.b16 %v1263, %v1247
  %v2224 = vpack.c.b16 %v1264, %v1248
  %v2225 = vpack.c.b16 %v1265, %v1249
  %v2226 = vpack.c.b16 %v1266, %v1250
  %v2227 = vpack.c.b16 %v1267, %v1251
  %v2228 = vpack.c.b16 %v1268, %v1252
  %v2229 = vpack.c.b16 %v1269, %v1253
  %v2230 = vpack.c.b16 %v1270, %v1254
  %v2231 = vpack.c.b16 %v1271, %v1255
  %v2232 = vpack.c.b16 %v1272, %v1256
  %v2233 = vpack.c.b16 %v1273, %v1257
  %v2234 = vpack.c.b16 %v1290, %v1274
  %v2235 = vpack.c.b16 %v1291, %v1275
  %v2236 = vpack.c.b16 %v1292, %v1276
  %v2237 = vpack.c.b16 %v1293, %v1277
  %v2238 = vpack.c.b16 %v1294, %v1278
  %v2239 = vpack.c.b16 %v1295, %v1279
  %v2240 = vpack.c.b16 %v1296, %v1280
  %v2241 = vpack.c.b16 %v1297, %v1281
  %v2242 = vpack.c.b16 %v1298, %v1282
  %v2243 = vpack.c.b16 %v1299, %v1283
  %v2244 = vpack.c.b16 %v1300, %v1284
  %v2245 = vpack.c.b16 %v1301, %v1285
  %v2246 = vpack.c.b16 %v1302, %v1286
  %v2247 = vpack.c.b16 %v1303, %v1287
  %v2248 = vpack.c.b16 %v1304, %v1288
  %v2249 = vpack.c.b16 %v1305, %v1289
  %v2250 = vpack.c.b16 %v1322, %v1306
  %v2251 = vpack.c.b16 %v1323, %v1307
  %v2252 = vpack.c.b16 %v1324, %v1308
  %v2253 = vpack.c.b16 %v1325, %v1309
  %v2254 = vpack.c.b16 %v1326, %v1310
  %v2255 = vpack.c.b16 %v1327, %v1311
  %v2256 = vpack.c.b16 %v1328, %v1312
  %v2257 = vpack.c.b16 %v1329, %v1313
  %v2258 = vpack.c.b16 %v1330, %v1314
  %v2259 = vpack.c.b16 %v1331, %v1315
  %v2260 = vpack.c.b16 %v1332, %v1316
  %v2261 = vpack.c.b16 %v1333, %v1317
  %v2262 = vpack.c.b16 %v1334, %v1318
  %v2263 = vpack.c.b16 %v1335, %v1319
  %v2264 = vpack.c.b16 %v1336, %v1320
  %v2265 = vpack.c.b16 %v1337, %v1321
  %v2266 = vpack.c.b16 %v1354, %v1338
  %v2267 = vpack.c.b16 %v1355, %v1339
  %v2268 = vpack.c.b16 %v1356, %v1340
  %v2269 = vpack.c.b16 %v1357, %v1341
  %v2270 = vpack.c.b16 %v1358, %v1342
  %v2271 = vpack.c.b16 %v1359, %v1343
  %v2272 = vpack.c.b16 %v1360, %v1344
  %v2273 = vpack.c.b16 %v1361, %v1345
  %v2274 = vpack.c.b16 %v1362, %v1346
  %v2275 = vpack.c.b16 %v1363, %v1347
  %v2276 = vpack.c.b16 %v1364, %v1348
  %v2277 = vpack.c.b16 %v1365, %v1349
  %v2278 = vpack.c.b16 %v1366, %v1350
  %v2279 = vpack.c.b16 %v1367, %v1351
  %v2280 = vpack.c.b16 %v1368, %v1352
  %v2281 = vpack.c.b16 %v1369, %v1353
  %v2282 = vpack.c.b16 %v1386, %v1370
  %v2283 = vpack.c.b16 %v1387, %v1371
  %v2284 = vpack.c.b16 %v1388, %v1372
  %v2285 = vpack.c.b16 %v1389, %v1373
  %v2286 = vpack.c.b16 %v1390, %v1374
  %v2287 = vpack.c.b16 %v1391, %v1375
  %v2288 = vpack.c.b16 %v1392, %v1376
  %v2289 = vpack.c.b16 %v1393, %v1377
  %v2290 = vpack.c.b16 %v1394, %v1378
  %v2291 = vpack.c.b16 %v1395, %v1379
  %v2292 = vpack.c.b16 %v1396, %v1380
  %v2293 = vpack.c.b16 %v1397, %v1381
  %v2294 = vpack.c.b16 %v1398, %v1382
  %v2295 = vpack.c.b16 %v1399, %v1383
  %v2296 = vpack.c.b16 %v1400, %v1384
  %v2297 = vpack.c.b16 %v1401, %v1385
  %v2298 = vpack.c.b16 %v1418, %v1402
  %v2299 = vpack.c.b16 %v1419, %v1403
  %v2300 = vpack.c.b16 %v1420, %v1404
  %v2301 = vpack.c.b16 %v1421, %v1405
  %v2302 = vpack.c.b16 %v1422, %v1406
  %v2303 = vpack.c.b16 %v1423, %v1407
  %v2304 = vpack.c.b16 %v1424, %v1408
  %v2305 = vpack.c.b16 %v1425, %v1409
  %v2306 = vpack.c.b16 %v1426, %v1410
  %v2307 = vpack.c.b16 %v1427, %v1411
  %v2308 = vpack.c.b16 %v1428, %v1412
  %v2309 = vpack.c.b16 %v1429, %v1413
  %v2310 = vpack.c.b16 %v1430, %v1414
  %v2311 = vpack.c.b16 %v1431, %v1415
  %v2312 = vpack.c.b16 %v1432, %v1416
  %v2313 = vpack.c.b16 %v1433, %v1417
  %v2314 = vpack.c.b16 %v1450, %v1434
  %v2315 = vpack.c.b16 %v1451, %v1435
  %v2316 = vpack.c.b16 %v1452, %v1436
  %v2317 = vpack.c.b16 %v1453, %v1437
  %v2318 = vpack.c.b16 %v1454, %v1438
  %v2319 = vpack.c.b16 %v1455, %v1439
  %v2320 = vpack.c.b16 %v1456, %v1440
  %v2321 = vpack.c.b16 %v1457, %v1441
  %v2322 = vpack.c.b16 %v1458, %v1442
  %v2323 = vpack.c.b16 %v1459, %v1443
  %v2324 = vpack.c.b16 %v1460, %v1444
  %v2325 = vpack.c.b16 %v1461, %v1445
  %v2326 = vpack.c.b16 %v1462, %v1446
  %v2327 = vpack.c.b16 %v1463, %v1447
  %v2328 = vpack.c.b16 %v1464, %v1448
  %v2329 = vpack.c.b16 %v1465, %v1449
  %v2330 = vpack.c.b16 %v1482, %v1466
  %v2331 = vpack.c.b16 %v1483, %v1467
  %v2332 = vpack.c.b16 %v1484, %v1468
  %v2333 = vpack.c.b16 %v1485, %v1469
  %v2334 = vpack.c.b16 %v1486, %v1470
  %v2335 = vpack.c.b16 %v1487, %v1471
  %v2336 = vpack.c.b16 %v1488, %v1472
  %v2337 = vpack.c.b16 %v1489, %v1473
  %v2338 = vpack.c.b16 %v1490, %v1474
  %v2339 = vpack.c.b16 %v1491, %v1475
  %v2340 = vpack.c.b16 %v1492, %v1476
  %v2341 = vpack.c.b16 %v1493, %v1477
  %v2342 = vpack.c.b16 %v1494, %v1478
  %v2343 = vpack.c.b16 %v1495, %v1479
  %v2344 = vpack.c.b16 %v1496, %v1480
  %v2345 = vpack.c.b16 %v1497, %v1481
  %v2346 = vpack.c.b16 %v1514, %v1498
  %v2347 = vpack.c.b16 %v1515, %v1499
  %v2348 = vpack.c.b16 %v1516, %v1500
  %v2349 = vpack.c.b16 %v1517, %v1501
  %v2350 = vpack.c.b16 %v1518, %v1502
  %v2351 = vpack.c.b16 %v1519, %v1503
  %v2352 = vpack.c.b16 %v1520, %v1504
  %v2353 = vpack.c.b16 %v1521, %v1505
  %v2354 = vpack.c.b16 %v1522, %v1506
  %v2355 = vpack.c.b16 %v1523, %v1507
  %v2356 = vpack.c.b16 %v1524, %v1508
  %v2357 = vpack.c.b16 %v1525, %v1509
  %v2358 = vpack.c.b16 %v1526, %v1510
  %v2359 = vpack.c.b16 %v1527, %v1511
  %v2360 = vpack.c.b16 %v1528, %v1512
  %v2361 = vpack.c.b16 %v1529, %v1513
  %v2362 = vpack.c.b16 %v1546, %v1530
  %v2363 = vpack.c.b16 %v1547, %v1531
  %v2364 = vpack.c.b16 %v1548, %v1532
  %v2365 = vpack.c.b16 %v1549, %v1533
  %v2366 = vpack.c.b16 %v1550, %v1534
  %v2367 = vpack.c.b16 %v1551, %v1535
  %v2368 = vpack.c.b16 %v1552, %v1536
  %v2369 = vpack.c.b16 %v1553, %v1537
  %v2370 = vpack.c.b16 %v1554, %v1538
  %v2371 = vpack.c.b16 %v1555, %v1539
  %v2372 = vpack.c.b16 %v1556, %v1540
  %v2373 = vpack.c.b16 %v1557, %v1541
  %v2374 = vpack.c.b16 %v1558, %v1542
  %v2375 = vpack.c.b16 %v1559, %v1543
  %v2376 = vpack.c.b16 %v1560, %v1544
  %v2377 = vpack.c.b16 %v1561, %v1545
  %v2378 = vpack.c.b16 %v1578, %v1562
  %v2379 = vpack.c.b16 %v1579, %v1563
  %v2380 = vpack.c.b16 %v1580, %v1564
  %v2381 = vpack.c.b16 %v1581, %v1565
  %v2382 = vpack.c.b16 %v1582, %v1566
  %v2383 = vpack.c.b16 %v1583, %v1567
  %v2384 = vpack.c.b16 %v1584, %v1568
  %v2385 = vpack.c.b16 %v1585, %v1569
  %v2386 = vpack.c.b16 %v1586, %v1570
  %v2387 = vpack.c.b16 %v1587, %v1571
  %v2388 = vpack.c.b16 %v1588, %v1572
  %v2389 = vpack.c.b16 %v1589, %v1573
  %v2390 = vpack.c.b16 %v1590, %v1574
  %v2391 = vpack.c.b16 %v1591, %v1575
  %v2392 = vpack.c.b16 %v1592, %v1576
  %v2393 = vpack.c.b16 %v1593, %v1577
  %v2394 = vpack.c.b16 %v1610, %v1594
  %v2395 = vpack.c.b16 %v1611, %v1595
  %v2396 = vpack.c.b16 %v1612, %v1596
  %v2397 = vpack.c.b16 %v1613, %v1597
  %v2398 = vpack.c.b16 %v1614, %v1598
  %v2399 = vpack.c.b16 %v1615, %v1599
  %v2400 = vpack.c.b16 %v1616, %v1600
  %v2401 = vpack.c.b16 %v1617, %v1601
  %v2402 = vpack.c.b16 %v1618, %v1602
  %v2403 = vpack.c.b16 %v1619, %v1603
  %v2404 = vpack.c.b16 %v1620, %v1604
  %v2405 = vpack.c.b16 %v1621, %v1605
  %v2406 = vpack.c.b16 %v1622, %v1606
  %v2407 = vpack.c.b16 %v1623, %v1607
  %v2408 = vpack.c.b16 %v1624, %v1608
  %v2409 = vpack.c.b16 %v1625, %v1609
  %v2410 = vpack.c.b16 %v1642, %v1626
  %v2411 = vpack.c.b16 %v1643, %v1627
  %v2412 = vpack.c.b16 %v1644, %v1628
  %v2413 = vpack.c.b16 %v1645, %v1629
  %v2414 = vpack.c.b16 %v1646, %v1630
  %v2415 = vpack.c.b16 %v1647, %v1631
  %v2416 = vpack.c.b16 %v1648, %v1632
  %v2417 = vpack.c.b16 %v1649, %v1633
  %v2418 = vpack.c.b16 %v1650, %v1634
  %v2419 = vpack.c.b16 %v1651, %v1635
  %v2420 = vpack.c.b16 %v1652, %v1636
  %v2421 = vpack.c.b16 %v1653, %v1637
  %v2422 = vpack.c.b16 %v1654, %v1638
  %v2423 = vpack.c.b16 %v1655, %v1639
  %v2424 = vpack.c.b16 %v1656, %v1640
  %v2425 = vpack.c.b16 %v1657, %v1641
  %v2426 = vpack.c.b16 %v1674, %v1658
  %v2427 = vpack.c.b16 %v1675, %v1659
  %v2428 = vpack.c.b16 %v1676, %v1660
  %v2429 = vpack.c.b16 %v1677, %v1661
  %v2430 = vpack.c.b16 %v1678, %v1662
  %v2431 = vpack.c.b16 %v1679, %v1663
  %v2432 = vpack.c.b16 %v1680, %v1664
  %v2433 = vpack.c.b16 %v1681, %v1665
  %v2434 = vpack.c.b16 %v1682, %v1666
  %v2435 = vpack.c.b16 %v1683, %v1667
  %v2436 = vpack.c.b16 %v1684, %v1668
  %v2437 = vpack.c.b16 %v1685, %v1669
  %v2438 = vpack.c.b16 %v1686, %v1670
  %v2439 = vpack.c.b16 %v1687, %v1671
  %v2440 = vpack.c.b16 %v1688, %v1672
  %v2441 = vpack.c.b16 %v1689, %v1673
  %v2442 = vpack.c.b16 %v1706, %v1690
  %v2443 = vpack.c.b16 %v1707, %v1691
  %v2444 = vpack.c.b16 %v1708, %v1692
  %v2445 = vpack.c.b16 %v1709, %v1693
  %v2446 = vpack.c.b16 %v1710, %v1694
  %v2447 = vpack.c.b16 %v1711, %v1695
  %v2448 = vpack.c.b16 %v1712, %v1696
  %v2449 = vpack.c.b16 %v1713, %v1697
  %v2450 = vpack.c.b16 %v1714, %v1698
  %v2451 = vpack.c.b16 %v1715, %v1699
  %v2452 = vpack.c.b16 %v1716, %v1700
  %v2453 = vpack.c.b16 %v1717, %v1701
  %v2454 = vpack.c.b16 %v1718, %v1702
  %v2455 = vpack.c.b16 %v1719, %v1703
  %v2456 = vpack.c.b16 %v1720, %v1704
  %v2457 = vpack.c.b16 %v1721, %v1705
  %v2458 = vpack.c.b16 %v1738, %v1722
  %v2459 = vpack.c.b16 %v1739, %v1723
  %v2460 = vpack.c.b16 %v1740, %v1724
  %v2461 = vpack.c.b16 %v1741, %v1725
  %v2462 = vpack.c.b16 %v1742, %v1726
  %v2463 = vpack.c.b16 %v1743, %v1727
  %v2464 = vpack.c.b16 %v1744, %v1728
  %v2465 = vpack.c.b16 %v1745, %v1729
  %v2466 = vpack.c.b16 %v1746, %v1730
  %v2467 = vpack.c.b16 %v1747, %v1731
  %v2468 = vpack.c.b16 %v1748, %v1732
  %v2469 = vpack.c.b16 %v1749, %v1733
  %v2470 = vpack.c.b16 %v1750, %v1734
  %v2471 = vpack.c.b16 %v1751, %v1735
  %v2472 = vpack.c.b16 %v1752, %v1736
  %v2473 = vpack.c.b16 %v1753, %v1737
  %v2474 = vpack.c.b16 %v1770, %v1754
  %v2475 = vpack.c.b16 %v1771, %v1755
  %v2476 = vpack.c.b16 %v1772, %v1756
  %v2477 = vpack.c.b16 %v1773, %v1757
  %v2478 = vpack.c.b16 %v1774, %v1758
  %v2479 = vpack.c.b16 %v1775, %v1759
  %v2480 = vpack.c.b16 %v1776, %v1760
  %v2481 = vpack.c.b16 %v1777, %v1761
  %v2482 = vpack.c.b16 %v1778, %v1762
  %v2483 = vpack.c.b16 %v1779, %v1763
  %v2484 = vpack.c.b16 %v1780, %v1764
  %v2485 = vpack.c.b16 %v1781, %v1765
  %v2486 = vpack.c.b16 %v1782, %v1766
  %v2487 = vpack.c.b16 %v1783, %v1767
  %v2488 = vpack.c.b16 %v1784, %v1768
  %v2489 = vpack.c.b16 %v1785, %v1769
  %v2490 = vpack.c.b16 %v1802, %v1786
  %v2491 = vpack.c.b16 %v1803, %v1787
  %v2492 = vpack.c.b16 %v1804, %v1788
  %v2493 = vpack.c.b16 %v1805, %v1789
  %v2494 = vpack.c.b16 %v1806, %v1790
  %v2495 = vpack.c.b16 %v1807, %v1791
  %v2496 = vpack.c.b16 %v1808, %v1792
  %v2497 = vpack.c.b16 %v1809, %v1793
  %v2498 = vpack.c.b16 %v1810, %v1794
  %v2499 = vpack.c.b16 %v1811, %v1795
  %v2500 = vpack.c.b16 %v1812, %v1796
  %v2501 = vpack.c.b16 %v1813, %v1797
  %v2502 = vpack.c.b16 %v1814, %v1798
  %v2503 = vpack.c.b16 %v1815, %v1799
  %v2504 = vpack.c.b16 %v1816, %v1800
  %v2505 = vpack.c.b16 %v1817, %v1801
  %v2506 = vpack.c.b16 %v1834, %v1818
  %v2507 = vpack.c.b16 %v1835, %v1819
  %v2508 = vpack.c.b16 %v1836, %v1820
  %v2509 = vpack.c.b16 %v1837, %v1821
  %v2510 = vpack.c.b16 %v1838, %v1822
  %v2511 = vpack.c.b16 %v1839, %v1823
  %v2512 = vpack.c.b16 %v1840, %v1824
  %v2513 = vpack.c.b16 %v1841, %v1825
  %v2514 = vpack.c.b16 %v1842, %v1826
  %v2515 = vpack.c.b16 %v1843, %v1827
  %v2516 = vpack.c.b16 %v1844, %v1828
  %v2517 = vpack.c.b16 %v1845, %v1829
  %v2518 = vpack.c.b16 %v1846, %v1830
  %v2519 = vpack.c.b16 %v1847, %v1831
  %v2520 = vpack.c.b16 %v1848, %v1832
  %v2521 = vpack.c.b16 %v1849, %v1833
  %v2522 = vpack.c.b16 %v1866, %v1850
  %v2523 = vpack.c.b16 %v1867, %v1851
  %v2524 = vpack.c.b16 %v1868, %v1852
  %v2525 = vpack.c.b16 %v1869, %v1853
  %v2526 = vpack.c.b16 %v1870, %v1854
  %v2527 = vpack.c.b16 %v1871, %v1855
  %v2528 = vpack.c.b16 %v1872, %v1856
  %v2529 = vpack.c.b16 %v1873, %v1857
  %v2530 = vpack.c.b16 %v1874, %v1858
  %v2531 = vpack.c.b16 %v1875, %v1859
  %v2532 = vpack.c.b16 %v1876, %v1860
  %v2533 = vpack.c.b16 %v1877, %v1861
  %v2534 = vpack.c.b16 %v1878, %v1862
  %v2535 = vpack.c.b16 %v1879, %v1863
  %v2536 = vpack.c.b16 %v1880, %v1864
  %v2537 = vpack.c.b16 %v1881, %v1865
  %v2538 = vpack.c.b16 %v1898, %v1882
  %v2539 = vpack.c.b16 %v1899, %v1883
  %v2540 = vpack.c.b16 %v1900, %v1884
  %v2541 = vpack.c.b16 %v1901, %v1885
  %v2542 = vpack.c.b16 %v1902, %v1886
  %v2543 = vpack.c.b16 %v1903, %v1887
  %v2544 = vpack.c.b16 %v1904, %v1888
  %v2545 = vpack.c.b16 %v1905, %v1889
  %v2546 = vpack.c.b16 %v1906, %v1890
  %v2547 = vpack.c.b16 %v1907, %v1891
  %v2548 = vpack.c.b16 %v1908, %v1892
  %v2549 = vpack.c.b16 %v1909, %v1893
  %v2550 = vpack.c.b16 %v1910, %v1894
  %v2551 = vpack.c.b16 %v1911, %v1895
  %v2552 = vpack.c.b16 %v1912, %v1896
  %v2553 = vpack.c.b16 %v1913, %v1897
  %v2554 = vpack.c.b16 %v1930, %v1914
  %v2555 = vpack.c.b16 %v1931, %v1915
  %v2556 = vpack.c.b16 %v1932, %v1916
  %v2557 = vpack.c.b16 %v1933, %v1917
  %v2558 = vpack.c.b16 %v1934, %v1918
  %v2559 = vpack.c.b16 %v1935, %v1919
  %v2560 = vpack.c.b16 %v1936, %v1920
  %v2561 = vpack.c.b16 %v1937, %v1921
  %v2562 = vpack.c.b16 %v1938, %v1922
  %v2563 = vpack.c.b16 %v1939, %v1923
  %v2564 = vpack.c.b16 %v1940, %v1924
  %v2565 = vpack.c.b16 %v1941, %v1925
  %v2566 = vpack.c.b16 %v1942, %v1926
  %v2567 = vpack.c.b16 %v1943, %v1927
  %v2568 = vpack.c.b16 %v1944, %v1928
  %v2569 = vpack.c.b16 %v1945, %v1929
  %v2570 = vpack.c.b16 %v1962, %v1946
  %v2571 = vpack.c.b16 %v1963, %v1947
  %v2572 = vpack.c.b16 %v1964, %v1948
  %v2573 = vpack.c.b16 %v1965, %v1949
  %v2574 = vpack.c.b16 %v1966, %v1950
  %v2575 = vpack.c.b16 %v1967, %v1951
  %v2576 = vpack.c.b16 %v1968, %v1952
  %v2577 = vpack.c.b16 %v1969, %v1953
  %v2578 = vpack.c.b16 %v1970, %v1954
  %v2579 = vpack.c.b16 %v1971, %v1955
  %v2580 = vpack.c.b16 %v1972, %v1956
  %v2581 = vpack.c.b16 %v1973, %v1957
  %v2582 = vpack.c.b16 %v1974, %v1958
  %v2583 = vpack.c.b16 %v1975, %v1959
  %v2584 = vpack.c.b16 %v1976, %v1960
  %v2585 = vpack.c.b16 %v1977, %v1961
  %v2586 = vpack.c.b16 %v1994, %v1978
  %v2587 = vpack.c.b16 %v1995, %v1979
  %v2588 = vpack.c.b16 %v1996, %v1980
  %v2589 = vpack.c.b16 %v1997, %v1981
  %v2590 = vpack.c.b16 %v1998, %v1982
  %v2591 = vpack.c.b16 %v1999, %v1983
  %v2592 = vpack.c.b16 %v2000, %v1984
  %v2593 = vpack.c.b16 %v2001, %v1985
  %v2594 = vpack.c.b16 %v2002, %v1986
  %v2595 = vpack.c.b16 %v2003, %v1987
  %v2596 = vpack.c.b16 %v2004, %v1988
  %v2597 = vpack.c.b16 %v2005, %v1989
  %v2598 = vpack.c.b16 %v2006, %v1990
  %v2599 = vpack.c.b16 %v2007, %v1991
  %v2600 = vpack.c.b16 %v2008, %v1992
  %v2601 = vpack.c.b16 %v2009, %v1993
  %v2602 = vpack.c.b16 %v2026, %v2010
  %v2603 = vpack.c.b16 %v2027, %v2011
  %v2604 = vpack.c.b16 %v2028, %v2012
  %v2605 = vpack.c.b16 %v2029, %v2013
  %v2606 = vpack.c.b16 %v2030, %v2014
  %v2607 = vpack.c.b16 %v2031, %v2015
  %v2608 = vpack.c.b16 %v2032, %v2016
  %v2609 = vpack.c.b16 %v2033, %v2017
  %v2610 = vpack.c.b16 %v2034, %v2018
  %v2611 = vpack.c.b16 %v2035, %v2019
  %v2612 = vpack.c.b16 %v2036, %v2020
  %v2613 = vpack.c.b16 %v2037, %v2021
  %v2614 = vpack.c.b16 %v2038, %v2022
  %v2615 = vpack.c.b16 %v2039, %v2023
  %v2616 = vpack.c.b16 %v2040, %v2024
  %v2617 = vpack.c.b16 %v2041, %v2025
  %v2618 = vpack.c.b16 %v2058, %v2042
  %v2619 = vpack.c.b16 %v2059, %v2043
  %v2620 = vpack.c.b16 %v2060, %v2044
  %v2621 = vpack.c.b16 %v2061, %v2045
  %v2622 = vpack.c.b16 %v2062, %v2046
  %v2623 = vpack.c.b16 %v2063, %v2047
  %v2624 = vpack.c.b16 %v2064, %v2048
  %v2625 = vpack.c.b16 %v2065, %v2049
  %v2626 = vpack.c.b16 %v2066, %v2050
  %v2627 = vpack.c.b16 %v2067, %v2051
  %v2628 = vpack.c.b16 %v2068, %v2052
  %v2629 = vpack.c.b16 %v2069, %v2053
  %v2630 = vpack.c.b16 %v2070, %v2054
  %v2631 = vpack.c.b16 %v2071, %v2055
  %v2632 = vpack.c.b16 %v2072, %v2056
  %v2633 = vpack.c.b16 %v2073, %v2057
  %v2634 = vpack.c.b16 %v2090, %v2074
  %v2635 = vpack.c.b16 %v2091, %v2075
  %v2636 = vpack.c.b16 %v2092, %v2076
  %v2637 = vpack.c.b16 %v2093, %v2077
  %v2638 = vpack.c.b16 %v2094, %v2078
  %v2639 = vpack.c.b16 %v2095, %v2079
  %v2640 = vpack.c.b16 %v2096, %v2080
  %v2641 = vpack.c.b16 %v2097, %v2081
  %v2642 = vpack.c.b16 %v2098, %v2082
  %v2643 = vpack.c.b16 %v2099, %v2083
  %v2644 = vpack.c.b16 %v2100, %v2084
  %v2645 = vpack.c.b16 %v2101, %v2085
  %v2646 = vpack.c.b16 %v2102, %v2086
  %v2647 = vpack.c.b16 %v2103, %v2087
  %v2648 = vpack.c.b16 %v2104, %v2088
  %v2649 = vpack.c.b16 %v2105, %v2089
  %v2650 = vpack.c.b16 %v2122, %v2106
  %v2651 = vpack.c.b16 %v2123, %v2107
  %v2652 = vpack.c.b16 %v2124, %v2108
  %v2653 = vpack.c.b16 %v2125, %v2109
  %v2654 = vpack.c.b16 %v2126, %v2110
  %v2655 = vpack.c.b16 %v2127, %v2111
  %v2656 = vpack.c.b16 %v2128, %v2112
  %v2657 = vpack.c.b16 %v2129, %v2113
  %v2658 = vpack.c.b16 %v2130, %v2114
  %v2659 = vpack.c.b16 %v2131, %v2115
  %v2660 = vpack.c.b16 %v2132, %v2116
  %v2661 = vpack.c.b16 %v2133, %v2117
  %v2662 = vpack.c.b16 %v2134, %v2118
  %v2663 = vpack.c.b16 %v2135, %v2119
  %v2664 = vpack.c.b16 %v2136, %v2120
  %v2665 = vpack.c.b16 %v2137, %v2121
  %v2666 = vpack.c.b16 %v2154, %v2138
  %v2667 = vpack.c.b16 %v2155, %v2139
  %v2668 = vpack.c.b16 %v2156, %v2140
  %v2669 = vpack.c.b16 %v2157, %v2141
  %v2670 = vpack.c.b16 %v2158, %v2142
  %v2671 = vpack.c.b16 %v2159, %v2143
  %v2672 = vpack.c.b16 %v2160, %v2144
  %v2673 = vpack.c.b16 %v2161, %v2145
  %v2674 = vpack.c.b16 %v2162, %v2146
  %v2675 = vpack.c.b16 %v2163, %v2147
  %v2676 = vpack.c.b16 %v2164, %v2148
  %v2677 = vpack.c.b16 %v2165, %v2149
  %v2678 = vpack.c.b16 %v2166, %v2150
  %v2679 = vpack.c.b16 %v2167, %v2151
  %v2680 = vpack.c.b16 %v2168, %v2152
  %v2681 = vpack.c.b16 %v2169, %v2153
  %3194 = vmatprep.subr.bf16.mxu0 %v2283
  %3195 = vmatpush1.bf16.msra.mxu0 %v2282
  %3196 = vmatprep.subr.bf16.mxu0 %v2267
  %3197 = vmatpush1.bf16.msra.mxu0 %v2266
  %3198 = vmatprep.subr.bf16.mxu0 %v2251
  %3199 = vmatpush1.bf16.msra.mxu0 %v2250
  %3200 = vmatprep.subr.bf16.mxu0 %v2235
  %3201 = vmatpush1.bf16.msra.mxu0 %v2234
  %3202 = vmatprep.subr.bf16.mxu0 %v2219
  %3203 = vmatpush1.bf16.msra.mxu0 %v2218
  %3204 = vmatprep.subr.bf16.mxu0 %v2203
  %3205 = vmatpush1.bf16.msra.mxu0 %v2202
  %3206 = vmatprep.subr.bf16.mxu0 %v2187
  %3207 = vmatpush1.bf16.msra.mxu0 %v2186
  %3208 = vmatprep.subr.bf16.mxu0 %v2171
  %3209 = vmatpush1.bf16.msra.mxu0 %v2170
  %3210 = vmatprep.subr.bf16.mxu0 %v2411
  %3211 = vmatpush2.bf16.msra.mxu0 %v2410
  %3212 = vmatprep.subr.bf16.mxu0 %v2395
  %3213 = vmatpush2.bf16.msra.mxu0 %v2394
  %3214 = vmatprep.subr.bf16.mxu0 %v2379
  %3215 = vmatpush2.bf16.msra.mxu0 %v2378
  %3216 = vmatprep.subr.bf16.mxu0 %v2363
  %3217 = vmatpush2.bf16.msra.mxu0 %v2362
  %3218 = vmatprep.subr.bf16.mxu0 %v2347
  %3219 = vmatpush2.bf16.msra.mxu0 %v2346
  %3220 = vmatprep.subr.bf16.mxu0 %v2331
  %3221 = vmatpush2.bf16.msra.mxu0 %v2330
  %3222 = vmatprep.subr.bf16.mxu0 %v2315
  %3223 = vmatpush2.bf16.msra.mxu0 %v2314
  %3224 = vmatprep.subr.bf16.mxu0 %v2299
  %3225 = vmatpush2.bf16.msra.mxu0 %v2298
  %3226 = vmatprep.mubr.bf16.mxu0 %v627
  %3227 = vmatmul.mubr.bf16.gmra.mxu0 %v626
  %v3228 = vpop.f32.mrf.mxu0
  %v3229 = vadd.f32 %v537, %v3228
  %v3230 = vpop.f32.mrf.mxu0
  %v3231 = vadd.f32 %v541, %v3230
  %v3232 = vpop.f32.mrf.mxu0
  %v3233 = vadd.f32 %v537, %v3232
  %v3234 = vpop.f32.mrf.mxu0
  %v3235 = vadd.f32 %v541, %v3234
  %3236 = vdwg.mxu0
  %3237 = vmatprep.subr.bf16.mxu0 %v2539
  %3238 = vmatpush1.bf16.msra.mxu0 %v2538
  %3239 = vmatprep.subr.bf16.mxu0 %v2523
  %3240 = vmatpush1.bf16.msra.mxu0 %v2522
  %3241 = vmatprep.subr.bf16.mxu0 %v2507
  %3242 = vmatpush1.bf16.msra.mxu0 %v2506
  %3243 = vmatprep.subr.bf16.mxu0 %v2491
  %3244 = vmatpush1.bf16.msra.mxu0 %v2490
  %3245 = vmatprep.subr.bf16.mxu0 %v2475
  %3246 = vmatpush1.bf16.msra.mxu0 %v2474
  %3247 = vmatprep.subr.bf16.mxu0 %v2459
  %3248 = vmatpush1.bf16.msra.mxu0 %v2458
  %3249 = vmatprep.subr.bf16.mxu0 %v2443
  %3250 = vmatpush1.bf16.msra.mxu0 %v2442
  %3251 = vmatprep.subr.bf16.mxu0 %v2427
  %3252 = vmatpush1.bf16.msra.mxu0 %v2426
  %3253 = vmatprep.subr.bf16.mxu0 %v2667
  %3254 = vmatpush2.bf16.msra.mxu0 %v2666
  %3255 = vmatprep.subr.bf16.mxu0 %v2651
  %3256 = vmatpush2.bf16.msra.mxu0 %v2650
  %3257 = vmatprep.subr.bf16.mxu0 %v2635
  %3258 = vmatpush2.bf16.msra.mxu0 %v2634
  %3259 = vmatprep.subr.bf16.mxu0 %v2619
  %3260 = vmatpush2.bf16.msra.mxu0 %v2618
  %3261 = vmatprep.subr.bf16.mxu0 %v2603
  %3262 = vmatpush2.bf16.msra.mxu0 %v2602
  %3263 = vmatprep.subr.bf16.mxu0 %v2587
  %3264 = vmatpush2.bf16.msra.mxu0 %v2586
  %3265 = vmatprep.subr.bf16.mxu0 %v2571
  %3266 = vmatpush2.bf16.msra.mxu0 %v2570
  %3267 = vmatprep.subr.bf16.mxu0 %v2555
  %3268 = vmatpush2.bf16.msra.mxu0 %v2554
  %3269 = vmatprep.mubr.bf16.mxu0 %v629
  %3270 = vmatmul.mubr.bf16.gmra.mxu0 %v628
  %v3271 = vpop.f32.mrf.mxu0
  %v3272 = vadd.f32 %v3229, %v3271
  %v3273 = vpop.f32.mrf.mxu0
  %v3274 = vadd.f32 %v3231, %v3273
  %v3275 = vpop.f32.mrf.mxu0
  %v3276 = vadd.f32 %v3233, %v3275
  %v3277 = vpop.f32.mrf.mxu0
  %v3278 = vadd.f32 %v3235, %v3277
  %3279 = vdwg.mxu0
  %3280 = vmatprep.subr.bf16.mxu0 %v2285
  %3281 = vmatpush1.bf16.msra.mxu0 %v2284
  %3282 = vmatprep.subr.bf16.mxu0 %v2269
  %3283 = vmatpush1.bf16.msra.mxu0 %v2268
  %3284 = vmatprep.subr.bf16.mxu0 %v2253
  %3285 = vmatpush1.bf16.msra.mxu0 %v2252
  %3286 = vmatprep.subr.bf16.mxu0 %v2237
  %3287 = vmatpush1.bf16.msra.mxu0 %v2236
  %3288 = vmatprep.subr.bf16.mxu0 %v2221
  %3289 = vmatpush1.bf16.msra.mxu0 %v2220
  %3290 = vmatprep.subr.bf16.mxu0 %v2205
  %3291 = vmatpush1.bf16.msra.mxu0 %v2204
  %3292 = vmatprep.subr.bf16.mxu0 %v2189
  %3293 = vmatpush1.bf16.msra.mxu0 %v2188
  %3294 = vmatprep.subr.bf16.mxu0 %v2173
  %3295 = vmatpush1.bf16.msra.mxu0 %v2172
  %3296 = vmatprep.subr.bf16.mxu0 %v2413
  %3297 = vmatpush2.bf16.msra.mxu0 %v2412
  %3298 = vmatprep.subr.bf16.mxu0 %v2397
  %3299 = vmatpush2.bf16.msra.mxu0 %v2396
  %3300 = vmatprep.subr.bf16.mxu0 %v2381
  %3301 = vmatpush2.bf16.msra.mxu0 %v2380
  %3302 = vmatprep.subr.bf16.mxu0 %v2365
  %3303 = vmatpush2.bf16.msra.mxu0 %v2364
  %3304 = vmatprep.subr.bf16.mxu0 %v2349
  %3305 = vmatpush2.bf16.msra.mxu0 %v2348
  %3306 = vmatprep.subr.bf16.mxu0 %v2333
  %3307 = vmatpush2.bf16.msra.mxu0 %v2332
  %3308 = vmatprep.subr.bf16.mxu0 %v2317
  %3309 = vmatpush2.bf16.msra.mxu0 %v2316
  %3310 = vmatprep.subr.bf16.mxu0 %v2301
  %3311 = vmatpush2.bf16.msra.mxu0 %v2300
  %3312 = vmatprep.mubr.bf16.mxu0 %v627
  %3313 = vmatmul.mubr.bf16.gmra.mxu0 %v626
  %v3314 = vpop.f32.mrf.mxu0
  %v3315 = vadd.f32 %v545, %v3314
  %v3316 = vpop.f32.mrf.mxu0
  %v3317 = vadd.f32 %v549, %v3316
  %v3318 = vpop.f32.mrf.mxu0
  %v3319 = vadd.f32 %v545, %v3318
  %v3320 = vpop.f32.mrf.mxu0
  %v3321 = vadd.f32 %v549, %v3320
  %3322 = vdwg.mxu0
  %3323 = vmatprep.subr.bf16.mxu0 %v2541
  %3324 = vmatpush1.bf16.msra.mxu0 %v2540
  %3325 = vmatprep.subr.bf16.mxu0 %v2525
  %3326 = vmatpush1.bf16.msra.mxu0 %v2524
  %3327 = vmatprep.subr.bf16.mxu0 %v2509
  %3328 = vmatpush1.bf16.msra.mxu0 %v2508
  %3329 = vmatprep.subr.bf16.mxu0 %v2493
  %3330 = vmatpush1.bf16.msra.mxu0 %v2492
  %3331 = vmatprep.subr.bf16.mxu0 %v2477
  %3332 = vmatpush1.bf16.msra.mxu0 %v2476
  %3333 = vmatprep.subr.bf16.mxu0 %v2461
  %3334 = vmatpush1.bf16.msra.mxu0 %v2460
  %3335 = vmatprep.subr.bf16.mxu0 %v2445
  %3336 = vmatpush1.bf16.msra.mxu0 %v2444
  %3337 = vmatprep.subr.bf16.mxu0 %v2429
  %3338 = vmatpush1.bf16.msra.mxu0 %v2428
  %3339 = vmatprep.subr.bf16.mxu0 %v2669
  %3340 = vmatpush2.bf16.msra.mxu0 %v2668
  %3341 = vmatprep.subr.bf16.mxu0 %v2653
  %3342 = vmatpush2.bf16.msra.mxu0 %v2652
  %3343 = vmatprep.subr.bf16.mxu0 %v2637
  %3344 = vmatpush2.bf16.msra.mxu0 %v2636
  %3345 = vmatprep.subr.bf16.mxu0 %v2621
  %3346 = vmatpush2.bf16.msra.mxu0 %v2620
  %3347 = vmatprep.subr.bf16.mxu0 %v2605
  %3348 = vmatpush2.bf16.msra.mxu0 %v2604
  %3349 = vmatprep.subr.bf16.mxu0 %v2589
  %3350 = vmatpush2.bf16.msra.mxu0 %v2588
  %3351 = vmatprep.subr.bf16.mxu0 %v2573
  %3352 = vmatpush2.bf16.msra.mxu0 %v2572
  %3353 = vmatprep.subr.bf16.mxu0 %v2557
  %3354 = vmatpush2.bf16.msra.mxu0 %v2556
  %3355 = vmatprep.mubr.bf16.mxu0 %v629
  %3356 = vmatmul.mubr.bf16.gmra.mxu0 %v628
  %v3357 = vpop.f32.mrf.mxu0
  %v3358 = vadd.f32 %v3315, %v3357
  %v3359 = vpop.f32.mrf.mxu0
  %v3360 = vadd.f32 %v3317, %v3359
  %v3361 = vpop.f32.mrf.mxu0
  %v3362 = vadd.f32 %v3319, %v3361
  %v3363 = vpop.f32.mrf.mxu0
  %v3364 = vadd.f32 %v3321, %v3363
  %3365 = vdwg.mxu0
  %3366 = vmatprep.subr.bf16.mxu0 %v2287
  %3367 = vmatpush1.bf16.msra.mxu0 %v2286
  %3368 = vmatprep.subr.bf16.mxu0 %v2271
  %3369 = vmatpush1.bf16.msra.mxu0 %v2270
  %3370 = vmatprep.subr.bf16.mxu0 %v2255
  %3371 = vmatpush1.bf16.msra.mxu0 %v2254
  %3372 = vmatprep.subr.bf16.mxu0 %v2239
  %3373 = vmatpush1.bf16.msra.mxu0 %v2238
  %3374 = vmatprep.subr.bf16.mxu0 %v2223
  %3375 = vmatpush1.bf16.msra.mxu0 %v2222
  %3376 = vmatprep.subr.bf16.mxu0 %v2207
  %3377 = vmatpush1.bf16.msra.mxu0 %v2206
  %3378 = vmatprep.subr.bf16.mxu0 %v2191
  %3379 = vmatpush1.bf16.msra.mxu0 %v2190
  %3380 = vmatprep.subr.bf16.mxu0 %v2175
  %3381 = vmatpush1.bf16.msra.mxu0 %v2174
  %3382 = vmatprep.subr.bf16.mxu0 %v2415
  %3383 = vmatpush2.bf16.msra.mxu0 %v2414
  %3384 = vmatprep.subr.bf16.mxu0 %v2399
  %3385 = vmatpush2.bf16.msra.mxu0 %v2398
  %3386 = vmatprep.subr.bf16.mxu0 %v2383
  %3387 = vmatpush2.bf16.msra.mxu0 %v2382
  %3388 = vmatprep.subr.bf16.mxu0 %v2367
  %3389 = vmatpush2.bf16.msra.mxu0 %v2366
  %3390 = vmatprep.subr.bf16.mxu0 %v2351
  %3391 = vmatpush2.bf16.msra.mxu0 %v2350
  %3392 = vmatprep.subr.bf16.mxu0 %v2335
  %3393 = vmatpush2.bf16.msra.mxu0 %v2334
  %3394 = vmatprep.subr.bf16.mxu0 %v2319
  %3395 = vmatpush2.bf16.msra.mxu0 %v2318
  %3396 = vmatprep.subr.bf16.mxu0 %v2303
  %3397 = vmatpush2.bf16.msra.mxu0 %v2302
  %3398 = vmatprep.mubr.bf16.mxu0 %v627
  %3399 = vmatmul.mubr.bf16.gmra.mxu0 %v626
  %v3400 = vpop.f32.mrf.mxu0
  %v3401 = vadd.f32 %v553, %v3400
  %v3402 = vpop.f32.mrf.mxu0
  %v3403 = vadd.f32 %v557, %v3402
  %v3404 = vpop.f32.mrf.mxu0
  %v3405 = vadd.f32 %v553, %v3404
  %v3406 = vpop.f32.mrf.mxu0
  %v3407 = vadd.f32 %v557, %v3406
  %3408 = vdwg.mxu0
  %3409 = vmatprep.subr.bf16.mxu0 %v2543
  %3410 = vmatpush1.bf16.msra.mxu0 %v2542
  %3411 = vmatprep.subr.bf16.mxu0 %v2527
  %3412 = vmatpush1.bf16.msra.mxu0 %v2526
  %3413 = vmatprep.subr.bf16.mxu0 %v2511
  %3414 = vmatpush1.bf16.msra.mxu0 %v2510
  %3415 = vmatprep.subr.bf16.mxu0 %v2495
  %3416 = vmatpush1.bf16.msra.mxu0 %v2494
  %3417 = vmatprep.subr.bf16.mxu0 %v2479
  %3418 = vmatpush1.bf16.msra.mxu0 %v2478
  %3419 = vmatprep.subr.bf16.mxu0 %v2463
  %3420 = vmatpush1.bf16.msra.mxu0 %v2462
  %3421 = vmatprep.subr.bf16.mxu0 %v2447
  %3422 = vmatpush1.bf16.msra.mxu0 %v2446
  %3423 = vmatprep.subr.bf16.mxu0 %v2431
  %3424 = vmatpush1.bf16.msra.mxu0 %v2430
  %3425 = vmatprep.subr.bf16.mxu0 %v2671
  %3426 = vmatpush2.bf16.msra.mxu0 %v2670
  %3427 = vmatprep.subr.bf16.mxu0 %v2655
  %3428 = vmatpush2.bf16.msra.mxu0 %v2654
  %3429 = vmatprep.subr.bf16.mxu0 %v2639
  %3430 = vmatpush2.bf16.msra.mxu0 %v2638
  %3431 = vmatprep.subr.bf16.mxu0 %v2623
  %3432 = vmatpush2.bf16.msra.mxu0 %v2622
  %3433 = vmatprep.subr.bf16.mxu0 %v2607
  %3434 = vmatpush2.bf16.msra.mxu0 %v2606
  %3435 = vmatprep.subr.bf16.mxu0 %v2591
  %3436 = vmatpush2.bf16.msra.mxu0 %v2590
  %3437 = vmatprep.subr.bf16.mxu0 %v2575
  %3438 = vmatpush2.bf16.msra.mxu0 %v2574
  %3439 = vmatprep.subr.bf16.mxu0 %v2559
  %3440 = vmatpush2.bf16.msra.mxu0 %v2558
  %3441 = vmatprep.mubr.bf16.mxu0 %v629
  %3442 = vmatmul.mubr.bf16.gmra.mxu0 %v628
  %v3443 = vpop.f32.mrf.mxu0
  %v3444 = vadd.f32 %v3401, %v3443
  %v3445 = vpop.f32.mrf.mxu0
  %v3446 = vadd.f32 %v3403, %v3445
  %v3447 = vpop.f32.mrf.mxu0
  %v3448 = vadd.f32 %v3405, %v3447
  %v3449 = vpop.f32.mrf.mxu0
  %v3450 = vadd.f32 %v3407, %v3449
  %3451 = vdwg.mxu0
  %3452 = vmatprep.subr.bf16.mxu0 %v2289
  %3453 = vmatpush1.bf16.msra.mxu0 %v2288
  %3454 = vmatprep.subr.bf16.mxu0 %v2273
  %3455 = vmatpush1.bf16.msra.mxu0 %v2272
  %3456 = vmatprep.subr.bf16.mxu0 %v2257
  %3457 = vmatpush1.bf16.msra.mxu0 %v2256
  %3458 = vmatprep.subr.bf16.mxu0 %v2241
  %3459 = vmatpush1.bf16.msra.mxu0 %v2240
  %3460 = vmatprep.subr.bf16.mxu0 %v2225
  %3461 = vmatpush1.bf16.msra.mxu0 %v2224
  %3462 = vmatprep.subr.bf16.mxu0 %v2209
  %3463 = vmatpush1.bf16.msra.mxu0 %v2208
  %3464 = vmatprep.subr.bf16.mxu0 %v2193
  %3465 = vmatpush1.bf16.msra.mxu0 %v2192
  %3466 = vmatprep.subr.bf16.mxu0 %v2177
  %3467 = vmatpush1.bf16.msra.mxu0 %v2176
  %3468 = vmatprep.subr.bf16.mxu0 %v2417
  %3469 = vmatpush2.bf16.msra.mxu0 %v2416
  %3470 = vmatprep.subr.bf16.mxu0 %v2401
  %3471 = vmatpush2.bf16.msra.mxu0 %v2400
  %3472 = vmatprep.subr.bf16.mxu0 %v2385
  %3473 = vmatpush2.bf16.msra.mxu0 %v2384
  %3474 = vmatprep.subr.bf16.mxu0 %v2369
  %3475 = vmatpush2.bf16.msra.mxu0 %v2368
  %3476 = vmatprep.subr.bf16.mxu0 %v2353
  %3477 = vmatpush2.bf16.msra.mxu0 %v2352
  %3478 = vmatprep.subr.bf16.mxu0 %v2337
  %3479 = vmatpush2.bf16.msra.mxu0 %v2336
  %3480 = vmatprep.subr.bf16.mxu0 %v2321
  %3481 = vmatpush2.bf16.msra.mxu0 %v2320
  %3482 = vmatprep.subr.bf16.mxu0 %v2305
  %3483 = vmatpush2.bf16.msra.mxu0 %v2304
  %3484 = vmatprep.mubr.bf16.mxu0 %v627
  %3485 = vmatmul.mubr.bf16.gmra.mxu0 %v626
  %v3486 = vpop.f32.mrf.mxu0
  %v3487 = vadd.f32 %v561, %v3486
  %v3488 = vpop.f32.mrf.mxu0
  %v3489 = vadd.f32 %v565, %v3488
  %v3490 = vpop.f32.mrf.mxu0
  %v3491 = vadd.f32 %v561, %v3490
  %v3492 = vpop.f32.mrf.mxu0
  %v3493 = vadd.f32 %v565, %v3492
  %3494 = vdwg.mxu0
  %3495 = vmatprep.subr.bf16.mxu0 %v2545
  %3496 = vmatpush1.bf16.msra.mxu0 %v2544
  %3497 = vmatprep.subr.bf16.mxu0 %v2529
  %3498 = vmatpush1.bf16.msra.mxu0 %v2528
  %3499 = vmatprep.subr.bf16.mxu0 %v2513
  %3500 = vmatpush1.bf16.msra.mxu0 %v2512
  %3501 = vmatprep.subr.bf16.mxu0 %v2497
  %3502 = vmatpush1.bf16.msra.mxu0 %v2496
  %3503 = vmatprep.subr.bf16.mxu0 %v2481
  %3504 = vmatpush1.bf16.msra.mxu0 %v2480
  %3505 = vmatprep.subr.bf16.mxu0 %v2465
  %3506 = vmatpush1.bf16.msra.mxu0 %v2464
  %3507 = vmatprep.subr.bf16.mxu0 %v2449
  %3508 = vmatpush1.bf16.msra.mxu0 %v2448
  %3509 = vmatprep.subr.bf16.mxu0 %v2433
  %3510 = vmatpush1.bf16.msra.mxu0 %v2432
  %3511 = vmatprep.subr.bf16.mxu0 %v2673
  %3512 = vmatpush2.bf16.msra.mxu0 %v2672
  %3513 = vmatprep.subr.bf16.mxu0 %v2657
  %3514 = vmatpush2.bf16.msra.mxu0 %v2656
  %3515 = vmatprep.subr.bf16.mxu0 %v2641
  %3516 = vmatpush2.bf16.msra.mxu0 %v2640
  %3517 = vmatprep.subr.bf16.mxu0 %v2625
  %3518 = vmatpush2.bf16.msra.mxu0 %v2624
  %3519 = vmatprep.subr.bf16.mxu0 %v2609
  %3520 = vmatpush2.bf16.msra.mxu0 %v2608
  %3521 = vmatprep.subr.bf16.mxu0 %v2593
  %3522 = vmatpush2.bf16.msra.mxu0 %v2592
  %3523 = vmatprep.subr.bf16.mxu0 %v2577
  %3524 = vmatpush2.bf16.msra.mxu0 %v2576
  %3525 = vmatprep.subr.bf16.mxu0 %v2561
  %3526 = vmatpush2.bf16.msra.mxu0 %v2560
  %3527 = vmatprep.mubr.bf16.mxu0 %v629
  %3528 = vmatmul.mubr.bf16.gmra.mxu0 %v628
  %v3529 = vpop.f32.mrf.mxu0
  %v3530 = vadd.f32 %v3487, %v3529
  %v3531 = vpop.f32.mrf.mxu0
  %v3532 = vadd.f32 %v3489, %v3531
  %v3533 = vpop.f32.mrf.mxu0
  %v3534 = vadd.f32 %v3491, %v3533
  %v3535 = vpop.f32.mrf.mxu0
  %v3536 = vadd.f32 %v3493, %v3535
  %3537 = vdwg.mxu0
  %3538 = vmatprep.subr.bf16.mxu0 %v2291
  %3539 = vmatpush1.bf16.msra.mxu0 %v2290
  %3540 = vmatprep.subr.bf16.mxu0 %v2275
  %3541 = vmatpush1.bf16.msra.mxu0 %v2274
  %3542 = vmatprep.subr.bf16.mxu0 %v2259
  %3543 = vmatpush1.bf16.msra.mxu0 %v2258
  %3544 = vmatprep.subr.bf16.mxu0 %v2243
  %3545 = vmatpush1.bf16.msra.mxu0 %v2242
  %3546 = vmatprep.subr.bf16.mxu0 %v2227
  %3547 = vmatpush1.bf16.msra.mxu0 %v2226
  %3548 = vmatprep.subr.bf16.mxu0 %v2211
  %3549 = vmatpush1.bf16.msra.mxu0 %v2210
  %3550 = vmatprep.subr.bf16.mxu0 %v2195
  %3551 = vmatpush1.bf16.msra.mxu0 %v2194
  %3552 = vmatprep.subr.bf16.mxu0 %v2179
  %3553 = vmatpush1.bf16.msra.mxu0 %v2178
  %3554 = vmatprep.subr.bf16.mxu0 %v2419
  %3555 = vmatpush2.bf16.msra.mxu0 %v2418
  %3556 = vmatprep.subr.bf16.mxu0 %v2403
  %3557 = vmatpush2.bf16.msra.mxu0 %v2402
  %3558 = vmatprep.subr.bf16.mxu0 %v2387
  %3559 = vmatpush2.bf16.msra.mxu0 %v2386
  %3560 = vmatprep.subr.bf16.mxu0 %v2371
  %3561 = vmatpush2.bf16.msra.mxu0 %v2370
  %3562 = vmatprep.subr.bf16.mxu0 %v2355
  %3563 = vmatpush2.bf16.msra.mxu0 %v2354
  %3564 = vmatprep.subr.bf16.mxu0 %v2339
  %3565 = vmatpush2.bf16.msra.mxu0 %v2338
  %3566 = vmatprep.subr.bf16.mxu0 %v2323
  %3567 = vmatpush2.bf16.msra.mxu0 %v2322
  %3568 = vmatprep.subr.bf16.mxu0 %v2307
  %3569 = vmatpush2.bf16.msra.mxu0 %v2306
  %3570 = vmatprep.mubr.bf16.mxu0 %v627
  %3571 = vmatmul.mubr.bf16.gmra.mxu0 %v626
  %v3572 = vpop.f32.mrf.mxu0
  %v3573 = vadd.f32 %v569, %v3572
  %v3574 = vpop.f32.mrf.mxu0
  %v3575 = vadd.f32 %v573, %v3574
  %v3576 = vpop.f32.mrf.mxu0
  %v3577 = vadd.f32 %v569, %v3576
  %v3578 = vpop.f32.mrf.mxu0
  %v3579 = vadd.f32 %v573, %v3578
  %3580 = vdwg.mxu0
  %3581 = vmatprep.subr.bf16.mxu0 %v2547
  %3582 = vmatpush1.bf16.msra.mxu0 %v2546
  %3583 = vmatprep.subr.bf16.mxu0 %v2531
  %3584 = vmatpush1.bf16.msra.mxu0 %v2530
  %3585 = vmatprep.subr.bf16.mxu0 %v2515
  %3586 = vmatpush1.bf16.msra.mxu0 %v2514
  %3587 = vmatprep.subr.bf16.mxu0 %v2499
  %3588 = vmatpush1.bf16.msra.mxu0 %v2498
  %3589 = vmatprep.subr.bf16.mxu0 %v2483
  %3590 = vmatpush1.bf16.msra.mxu0 %v2482
  %3591 = vmatprep.subr.bf16.mxu0 %v2467
  %3592 = vmatpush1.bf16.msra.mxu0 %v2466
  %3593 = vmatprep.subr.bf16.mxu0 %v2451
  %3594 = vmatpush1.bf16.msra.mxu0 %v2450
  %3595 = vmatprep.subr.bf16.mxu0 %v2435
  %3596 = vmatpush1.bf16.msra.mxu0 %v2434
  %3597 = vmatprep.subr.bf16.mxu0 %v2675
  %3598 = vmatpush2.bf16.msra.mxu0 %v2674
  %3599 = vmatprep.subr.bf16.mxu0 %v2659
  %3600 = vmatpush2.bf16.msra.mxu0 %v2658
  %3601 = vmatprep.subr.bf16.mxu0 %v2643
  %3602 = vmatpush2.bf16.msra.mxu0 %v2642
  %3603 = vmatprep.subr.bf16.mxu0 %v2627
  %3604 = vmatpush2.bf16.msra.mxu0 %v2626
  %3605 = vmatprep.subr.bf16.mxu0 %v2611
  %3606 = vmatpush2.bf16.msra.mxu0 %v2610
  %3607 = vmatprep.subr.bf16.mxu0 %v2595
  %3608 = vmatpush2.bf16.msra.mxu0 %v2594
  %3609 = vmatprep.subr.bf16.mxu0 %v2579
  %3610 = vmatpush2.bf16.msra.mxu0 %v2578
  %3611 = vmatprep.subr.bf16.mxu0 %v2563
  %3612 = vmatpush2.bf16.msra.mxu0 %v2562
  %3613 = vmatprep.mubr.bf16.mxu0 %v629
  %3614 = vmatmul.mubr.bf16.gmra.mxu0 %v628
  %v3615 = vpop.f32.mrf.mxu0
  %v3616 = vadd.f32 %v3573, %v3615
  %v3617 = vpop.f32.mrf.mxu0
  %v3618 = vadd.f32 %v3575, %v3617
  %v3619 = vpop.f32.mrf.mxu0
  %v3620 = vadd.f32 %v3577, %v3619
  %v3621 = vpop.f32.mrf.mxu0
  %v3622 = vadd.f32 %v3579, %v3621
  %3623 = vdwg.mxu0
  %3624 = vmatprep.subr.bf16.mxu0 %v2293
  %3625 = vmatpush1.bf16.msra.mxu0 %v2292
  %3626 = vmatprep.subr.bf16.mxu0 %v2277
  %3627 = vmatpush1.bf16.msra.mxu0 %v2276
  %3628 = vmatprep.subr.bf16.mxu0 %v2261
  %3629 = vmatpush1.bf16.msra.mxu0 %v2260
  %3630 = vmatprep.subr.bf16.mxu0 %v2245
  %3631 = vmatpush1.bf16.msra.mxu0 %v2244
  %3632 = vmatprep.subr.bf16.mxu0 %v2229
  %3633 = vmatpush1.bf16.msra.mxu0 %v2228
  %3634 = vmatprep.subr.bf16.mxu0 %v2213
  %3635 = vmatpush1.bf16.msra.mxu0 %v2212
  %3636 = vmatprep.subr.bf16.mxu0 %v2197
  %3637 = vmatpush1.bf16.msra.mxu0 %v2196
  %3638 = vmatprep.subr.bf16.mxu0 %v2181
  %3639 = vmatpush1.bf16.msra.mxu0 %v2180
  %3640 = vmatprep.subr.bf16.mxu0 %v2421
  %3641 = vmatpush2.bf16.msra.mxu0 %v2420
  %3642 = vmatprep.subr.bf16.mxu0 %v2405
  %3643 = vmatpush2.bf16.msra.mxu0 %v2404
  %3644 = vmatprep.subr.bf16.mxu0 %v2389
  %3645 = vmatpush2.bf16.msra.mxu0 %v2388
  %3646 = vmatprep.subr.bf16.mxu0 %v2373
  %3647 = vmatpush2.bf16.msra.mxu0 %v2372
  %3648 = vmatprep.subr.bf16.mxu0 %v2357
  %3649 = vmatpush2.bf16.msra.mxu0 %v2356
  %3650 = vmatprep.subr.bf16.mxu0 %v2341
  %3651 = vmatpush2.bf16.msra.mxu0 %v2340
  %3652 = vmatprep.subr.bf16.mxu0 %v2325
  %3653 = vmatpush2.bf16.msra.mxu0 %v2324
  %3654 = vmatprep.subr.bf16.mxu0 %v2309
  %3655 = vmatpush2.bf16.msra.mxu0 %v2308
  %3656 = vmatprep.mubr.bf16.mxu0 %v627
  %3657 = vmatmul.mubr.bf16.gmra.mxu0 %v626
  %v3658 = vpop.f32.mrf.mxu0
  %v3659 = vadd.f32 %v577, %v3658
  %v3660 = vpop.f32.mrf.mxu0
  %v3661 = vadd.f32 %v581, %v3660
  %v3662 = vpop.f32.mrf.mxu0
  %v3663 = vadd.f32 %v577, %v3662
  %v3664 = vpop.f32.mrf.mxu0
  %v3665 = vadd.f32 %v581, %v3664
  %3666 = vdwg.mxu0
  %3667 = vmatprep.subr.bf16.mxu0 %v2549
  %3668 = vmatpush1.bf16.msra.mxu0 %v2548
  %3669 = vmatprep.subr.bf16.mxu0 %v2533
  %3670 = vmatpush1.bf16.msra.mxu0 %v2532
  %3671 = vmatprep.subr.bf16.mxu0 %v2517
  %3672 = vmatpush1.bf16.msra.mxu0 %v2516
  %3673 = vmatprep.subr.bf16.mxu0 %v2501
  %3674 = vmatpush1.bf16.msra.mxu0 %v2500
  %3675 = vmatprep.subr.bf16.mxu0 %v2485
  %3676 = vmatpush1.bf16.msra.mxu0 %v2484
  %3677 = vmatprep.subr.bf16.mxu0 %v2469
  %3678 = vmatpush1.bf16.msra.mxu0 %v2468
  %3679 = vmatprep.subr.bf16.mxu0 %v2453
  %3680 = vmatpush1.bf16.msra.mxu0 %v2452
  %3681 = vmatprep.subr.bf16.mxu0 %v2437
  %3682 = vmatpush1.bf16.msra.mxu0 %v2436
  %3683 = vmatprep.subr.bf16.mxu0 %v2677
  %3684 = vmatpush2.bf16.msra.mxu0 %v2676
  %3685 = vmatprep.subr.bf16.mxu0 %v2661
  %3686 = vmatpush2.bf16.msra.mxu0 %v2660
  %3687 = vmatprep.subr.bf16.mxu0 %v2645
  %3688 = vmatpush2.bf16.msra.mxu0 %v2644
  %3689 = vmatprep.subr.bf16.mxu0 %v2629
  %3690 = vmatpush2.bf16.msra.mxu0 %v2628
  %3691 = vmatprep.subr.bf16.mxu0 %v2613
  %3692 = vmatpush2.bf16.msra.mxu0 %v2612
  %3693 = vmatprep.subr.bf16.mxu0 %v2597
  %3694 = vmatpush2.bf16.msra.mxu0 %v2596
  %3695 = vmatprep.subr.bf16.mxu0 %v2581
  %3696 = vmatpush2.bf16.msra.mxu0 %v2580
  %3697 = vmatprep.subr.bf16.mxu0 %v2565
  %3698 = vmatpush2.bf16.msra.mxu0 %v2564
  %3699 = vmatprep.mubr.bf16.mxu0 %v629
  %3700 = vmatmul.mubr.bf16.gmra.mxu0 %v628
  %v3701 = vpop.f32.mrf.mxu0
  %v3702 = vadd.f32 %v3659, %v3701
  %v3703 = vpop.f32.mrf.mxu0
  %v3704 = vadd.f32 %v3661, %v3703
  %v3705 = vpop.f32.mrf.mxu0
  %v3706 = vadd.f32 %v3663, %v3705
  %v3707 = vpop.f32.mrf.mxu0
  %v3708 = vadd.f32 %v3665, %v3707
  %3709 = vdwg.mxu0
  %3710 = vmatprep.subr.bf16.mxu0 %v2295
  %3711 = vmatpush1.bf16.msra.mxu0 %v2294
  %3712 = vmatprep.subr.bf16.mxu0 %v2279
  %3713 = vmatpush1.bf16.msra.mxu0 %v2278
  %3714 = vmatprep.subr.bf16.mxu0 %v2263
  %3715 = vmatpush1.bf16.msra.mxu0 %v2262
  %3716 = vmatprep.subr.bf16.mxu0 %v2247
  %3717 = vmatpush1.bf16.msra.mxu0 %v2246
  %3718 = vmatprep.subr.bf16.mxu0 %v2231
  %3719 = vmatpush1.bf16.msra.mxu0 %v2230
  %3720 = vmatprep.subr.bf16.mxu0 %v2215
  %3721 = vmatpush1.bf16.msra.mxu0 %v2214
  %3722 = vmatprep.subr.bf16.mxu0 %v2199
  %3723 = vmatpush1.bf16.msra.mxu0 %v2198
  %3724 = vmatprep.subr.bf16.mxu0 %v2183
  %3725 = vmatpush1.bf16.msra.mxu0 %v2182
  %3726 = vmatprep.subr.bf16.mxu0 %v2423
  %3727 = vmatpush2.bf16.msra.mxu0 %v2422
  %3728 = vmatprep.subr.bf16.mxu0 %v2407
  %3729 = vmatpush2.bf16.msra.mxu0 %v2406
  %3730 = vmatprep.subr.bf16.mxu0 %v2391
  %3731 = vmatpush2.bf16.msra.mxu0 %v2390
  %3732 = vmatprep.subr.bf16.mxu0 %v2375
  %3733 = vmatpush2.bf16.msra.mxu0 %v2374
  %3734 = vmatprep.subr.bf16.mxu0 %v2359
  %3735 = vmatpush2.bf16.msra.mxu0 %v2358
  %3736 = vmatprep.subr.bf16.mxu0 %v2343
  %3737 = vmatpush2.bf16.msra.mxu0 %v2342
  %3738 = vmatprep.subr.bf16.mxu0 %v2327
  %3739 = vmatpush2.bf16.msra.mxu0 %v2326
  %3740 = vmatprep.subr.bf16.mxu0 %v2311
  %3741 = vmatpush2.bf16.msra.mxu0 %v2310
  %3742 = vmatprep.mubr.bf16.mxu0 %v627
  %3743 = vmatmul.mubr.bf16.gmra.mxu0 %v626
  %v3744 = vpop.f32.mrf.mxu0
  %v3745 = vadd.f32 %v585, %v3744
  %v3746 = vpop.f32.mrf.mxu0
  %v3747 = vadd.f32 %v589, %v3746
  %v3748 = vpop.f32.mrf.mxu0
  %v3749 = vadd.f32 %v585, %v3748
  %v3750 = vpop.f32.mrf.mxu0
  %v3751 = vadd.f32 %v589, %v3750
  %3752 = vdwg.mxu0
  %3753 = vmatprep.subr.bf16.mxu0 %v2551
  %3754 = vmatpush1.bf16.msra.mxu0 %v2550
  %3755 = vmatprep.subr.bf16.mxu0 %v2535
  %3756 = vmatpush1.bf16.msra.mxu0 %v2534
  %3757 = vmatprep.subr.bf16.mxu0 %v2519
  %3758 = vmatpush1.bf16.msra.mxu0 %v2518
  %3759 = vmatprep.subr.bf16.mxu0 %v2503
  %3760 = vmatpush1.bf16.msra.mxu0 %v2502
  %3761 = vmatprep.subr.bf16.mxu0 %v2487
  %3762 = vmatpush1.bf16.msra.mxu0 %v2486
  %3763 = vmatprep.subr.bf16.mxu0 %v2471
  %3764 = vmatpush1.bf16.msra.mxu0 %v2470
  %3765 = vmatprep.subr.bf16.mxu0 %v2455
  %3766 = vmatpush1.bf16.msra.mxu0 %v2454
  %3767 = vmatprep.subr.bf16.mxu0 %v2439
  %3768 = vmatpush1.bf16.msra.mxu0 %v2438
  %3769 = vmatprep.subr.bf16.mxu0 %v2679
  %3770 = vmatpush2.bf16.msra.mxu0 %v2678
  %3771 = vmatprep.subr.bf16.mxu0 %v2663
  %3772 = vmatpush2.bf16.msra.mxu0 %v2662
  %3773 = vmatprep.subr.bf16.mxu0 %v2647
  %3774 = vmatpush2.bf16.msra.mxu0 %v2646
  %3775 = vmatprep.subr.bf16.mxu0 %v2631
  %3776 = vmatpush2.bf16.msra.mxu0 %v2630
  %3777 = vmatprep.subr.bf16.mxu0 %v2615
  %3778 = vmatpush2.bf16.msra.mxu0 %v2614
  %3779 = vmatprep.subr.bf16.mxu0 %v2599
  %3780 = vmatpush2.bf16.msra.mxu0 %v2598
  %3781 = vmatprep.subr.bf16.mxu0 %v2583
  %3782 = vmatpush2.bf16.msra.mxu0 %v2582
  %3783 = vmatprep.subr.bf16.mxu0 %v2567
  %3784 = vmatpush2.bf16.msra.mxu0 %v2566
  %3785 = vmatprep.mubr.bf16.mxu0 %v629
  %3786 = vmatmul.mubr.bf16.gmra.mxu0 %v628
  %v3787 = vpop.f32.mrf.mxu0
  %v3788 = vadd.f32 %v3745, %v3787
  %v3789 = vpop.f32.mrf.mxu0
  %v3790 = vadd.f32 %v3747, %v3789
  %v3791 = vpop.f32.mrf.mxu0
  %v3792 = vadd.f32 %v3749, %v3791
  %v3793 = vpop.f32.mrf.mxu0
  %v3794 = vadd.f32 %v3751, %v3793
  %3795 = vdwg.mxu0
  %3796 = vmatprep.subr.bf16.mxu0 %v2297
  %3797 = vmatpush1.bf16.msra.mxu0 %v2296
  %3798 = vmatprep.subr.bf16.mxu0 %v2281
  %3799 = vmatpush1.bf16.msra.mxu0 %v2280
  %3800 = vmatprep.subr.bf16.mxu0 %v2265
  %3801 = vmatpush1.bf16.msra.mxu0 %v2264
  %3802 = vmatprep.subr.bf16.mxu0 %v2249
  %3803 = vmatpush1.bf16.msra.mxu0 %v2248
  %3804 = vmatprep.subr.bf16.mxu0 %v2233
  %3805 = vmatpush1.bf16.msra.mxu0 %v2232
  %3806 = vmatprep.subr.bf16.mxu0 %v2217
  %3807 = vmatpush1.bf16.msra.mxu0 %v2216
  %3808 = vmatprep.subr.bf16.mxu0 %v2201
  %3809 = vmatpush1.bf16.msra.mxu0 %v2200
  %3810 = vmatprep.subr.bf16.mxu0 %v2185
  %3811 = vmatpush1.bf16.msra.mxu0 %v2184
  %3812 = vmatprep.subr.bf16.mxu0 %v2425
  %3813 = vmatpush2.bf16.msra.mxu0 %v2424
  %3814 = vmatprep.subr.bf16.mxu0 %v2409
  %3815 = vmatpush2.bf16.msra.mxu0 %v2408
  %3816 = vmatprep.subr.bf16.mxu0 %v2393
  %3817 = vmatpush2.bf16.msra.mxu0 %v2392
  %3818 = vmatprep.subr.bf16.mxu0 %v2377
  %3819 = vmatpush2.bf16.msra.mxu0 %v2376
  %3820 = vmatprep.subr.bf16.mxu0 %v2361
  %3821 = vmatpush2.bf16.msra.mxu0 %v2360
  %3822 = vmatprep.subr.bf16.mxu0 %v2345
  %3823 = vmatpush2.bf16.msra.mxu0 %v2344
  %3824 = vmatprep.subr.bf16.mxu0 %v2329
  %3825 = vmatpush2.bf16.msra.mxu0 %v2328
  %3826 = vmatprep.subr.bf16.mxu0 %v2313
  %3827 = vmatpush2.bf16.msra.mxu0 %v2312
  %3828 = vmatprep.mubr.bf16.mxu0 %v627
  %3829 = vmatmul.mubr.bf16.gmra.mxu0 %v626
  %v3830 = vpop.f32.mrf.mxu0
  %v3831 = vadd.f32 %v593, %v3830
  %v3832 = vpop.f32.mrf.mxu0
  %v3833 = vadd.f32 %v597, %v3832
  %v3834 = vpop.f32.mrf.mxu0
  %v3835 = vadd.f32 %v593, %v3834
  %v3836 = vpop.f32.mrf.mxu0
  %v3837 = vadd.f32 %v597, %v3836
  %3838 = vdwg.mxu0
  %3839 = vmatprep.subr.bf16.mxu0 %v2553
  %3840 = vmatpush1.bf16.msra.mxu0 %v2552
  %3841 = vmatprep.subr.bf16.mxu0 %v2537
  %3842 = vmatpush1.bf16.msra.mxu0 %v2536
  %3843 = vmatprep.subr.bf16.mxu0 %v2521
  %3844 = vmatpush1.bf16.msra.mxu0 %v2520
  %3845 = vmatprep.subr.bf16.mxu0 %v2505
  %3846 = vmatpush1.bf16.msra.mxu0 %v2504
  %3847 = vmatprep.subr.bf16.mxu0 %v2489
  %3848 = vmatpush1.bf16.msra.mxu0 %v2488
  %3849 = vmatprep.subr.bf16.mxu0 %v2473
  %3850 = vmatpush1.bf16.msra.mxu0 %v2472
  %3851 = vmatprep.subr.bf16.mxu0 %v2457
  %3852 = vmatpush1.bf16.msra.mxu0 %v2456
  %3853 = vmatprep.subr.bf16.mxu0 %v2441
  %3854 = vmatpush1.bf16.msra.mxu0 %v2440
  %3855 = vmatprep.subr.bf16.mxu0 %v2681
  %3856 = vmatpush2.bf16.msra.mxu0 %v2680
  %3857 = vmatprep.subr.bf16.mxu0 %v2665
  %3858 = vmatpush2.bf16.msra.mxu0 %v2664
  %3859 = vmatprep.subr.bf16.mxu0 %v2649
  %3860 = vmatpush2.bf16.msra.mxu0 %v2648
  %3861 = vmatprep.subr.bf16.mxu0 %v2633
  %3862 = vmatpush2.bf16.msra.mxu0 %v2632
  %3863 = vmatprep.subr.bf16.mxu0 %v2617
  %3864 = vmatpush2.bf16.msra.mxu0 %v2616
  %3865 = vmatprep.subr.bf16.mxu0 %v2601
  %3866 = vmatpush2.bf16.msra.mxu0 %v2600
  %3867 = vmatprep.subr.bf16.mxu0 %v2585
  %3868 = vmatpush2.bf16.msra.mxu0 %v2584
  %3869 = vmatprep.subr.bf16.mxu0 %v2569
  %3870 = vmatpush2.bf16.msra.mxu0 %v2568
  %3871 = vmatprep.mubr.bf16.mxu0 %v629
  %3872 = vmatmul.mubr.bf16.gmra.mxu0 %v628
  %v3873 = vpop.f32.mrf.mxu0
  %v3874 = vadd.f32 %v3831, %v3873
  %v3875 = vpop.f32.mrf.mxu0
  %v3876 = vadd.f32 %v3833, %v3875
  %v3877 = vpop.f32.mrf.mxu0
  %v3878 = vadd.f32 %v3835, %v3877
  %v3879 = vpop.f32.mrf.mxu0
  %v3880 = vadd.f32 %v3837, %v3879
  %3881 = vdwg.mxu0
  %v3882 = vpack.c.bf16 %v3276, %v3272
  %v3883 = vpack.c.bf16 %v3278, %v3274
  %v3884 = vpack.c.bf16 %v3362, %v3358
  %v3885 = vpack.c.bf16 %v3364, %v3360
  %v3886 = vpack.c.bf16 %v3448, %v3444
  %v3887 = vpack.c.bf16 %v3450, %v3446
  %v3888 = vpack.c.bf16 %v3534, %v3530
  %v3889 = vpack.c.bf16 %v3536, %v3532
  %v3890 = vpack.c.bf16 %v3620, %v3616
  %v3891 = vpack.c.bf16 %v3622, %v3618
  %v3892 = vpack.c.bf16 %v3706, %v3702
  %v3893 = vpack.c.bf16 %v3708, %v3704
  %v3894 = vpack.c.bf16 %v3792, %v3788
  %v3895 = vpack.c.bf16 %v3794, %v3790
  %v3896 = vpack.c.bf16 %v3878, %v3874
  %v3897 = vpack.c.bf16 %v3880, %v3876
  %v3914 = vunpack.c.l.b16 %v3882
  %v3915 = vunpack.c.l.b16 %v3883
  %v3916 = vunpack.c.l.b16 %v3884
  %v3917 = vunpack.c.l.b16 %v3885
  %v3918 = vunpack.c.l.b16 %v3886
  %v3919 = vunpack.c.l.b16 %v3887
  %v3920 = vunpack.c.l.b16 %v3888
  %v3921 = vunpack.c.l.b16 %v3889
  %v3922 = vunpack.c.l.b16 %v3890
  %v3923 = vunpack.c.l.b16 %v3891
  %v3924 = vunpack.c.l.b16 %v3892
  %v3925 = vunpack.c.l.b16 %v3893
  %v3926 = vunpack.c.l.b16 %v3894
  %v3927 = vunpack.c.l.b16 %v3895
  %v3928 = vunpack.c.l.b16 %v3896
  %v3929 = vunpack.c.l.b16 %v3897
  %v3930 = vunpack.c.h.b16 %v3882
  %v3931 = vunpack.c.h.b16 %v3883
  %v3932 = vunpack.c.h.b16 %v3884
  %v3933 = vunpack.c.h.b16 %v3885
  %v3934 = vunpack.c.h.b16 %v3886
  %v3935 = vunpack.c.h.b16 %v3887
  %v3936 = vunpack.c.h.b16 %v3888
  %v3937 = vunpack.c.h.b16 %v3889
  %v3938 = vunpack.c.h.b16 %v3890
  %v3939 = vunpack.c.h.b16 %v3891
  %v3940 = vunpack.c.h.b16 %v3892
  %v3941 = vunpack.c.h.b16 %v3893
  %v3942 = vunpack.c.h.b16 %v3894
  %v3943 = vunpack.c.h.b16 %v3895
  %v3944 = vunpack.c.h.b16 %v3896
  %v3945 = vunpack.c.h.b16 %v3897
  %v3946 = vpack.c.b16 %v3915, %v3914
  %v3947 = vpack.c.b16 %v3917, %v3916
  %v3948 = vpack.c.b16 %v3919, %v3918
  %v3949 = vpack.c.b16 %v3921, %v3920
  %v3950 = vpack.c.b16 %v3923, %v3922
  %v3951 = vpack.c.b16 %v3925, %v3924
  %v3952 = vpack.c.b16 %v3927, %v3926
  %v3953 = vpack.c.b16 %v3929, %v3928
  %v3954 = vpack.c.b16 %v3931, %v3930
  %v3955 = vpack.c.b16 %v3933, %v3932
  %v3956 = vpack.c.b16 %v3935, %v3934
  %v3957 = vpack.c.b16 %v3937, %v3936
  %v3958 = vpack.c.b16 %v3939, %v3938
  %v3959 = vpack.c.b16 %v3941, %v3940
  %v3960 = vpack.c.b16 %v3943, %v3942
  %v3961 = vpack.c.b16 %v3945, %v3944
  %3978 = vst [vmem:[%s3] sm:$0xff] %v3946
  %3979 = vst [vmem:[%s3 + $0x8] sm:$0xff] %v3947
  %3980 = vst [vmem:[%s3 + $0x10] sm:$0xff] %v3948
  %3981 = vst [vmem:[%s3 + $0x18] sm:$0xff] %v3949
  %3982 = vst [vmem:[%s3 + $0x20] sm:$0xff] %v3950
  %3983 = vst [vmem:[%s3 + $0x28] sm:$0xff] %v3951
  %3984 = vst [vmem:[%s3 + $0x30] sm:$0xff] %v3952
  %3985 = vst [vmem:[%s3 + $0x38] sm:$0xff] %v3953
  %3986 = vst [vmem:[%s3 + $0x40] sm:$0xff] %v3954
  %3987 = vst [vmem:[%s3 + $0x48] sm:$0xff] %v3955
  %3988 = vst [vmem:[%s3 + $0x50] sm:$0xff] %v3956
  %3989 = vst [vmem:[%s3 + $0x58] sm:$0xff] %v3957
  %3990 = vst [vmem:[%s3 + $0x60] sm:$0xff] %v3958
  %3991 = vst [vmem:[%s3 + $0x68] sm:$0xff] %v3959
  %3992 = vst [vmem:[%s3 + $0x70] sm:$0xff] %v3960
  %3993 = vst [vmem:[%s3 + $0x78] sm:$0xff] %v3961
  // Predicated region
  $region14: #{decoder_forward.7} parent=0 // pred_check
    _
  $region15: #{decoder_forward.7} parent=0 // pred_check_branch
    %3995 = sbr.rel (0) target = $region17
  $region16: #{decoder_forward.7} parent=0 // pred_region
    _
  $region17: #{decoder_forward.7} parent=0 // pred_fallthru
    _
  // Predicated region
  $region18: #{decoder_forward.7} parent=0 // pred_check
    _
  $region19: #{decoder_forward.7} parent=0 // pred_check_branch
    %3997 = sbr.rel (0) target = $region21
  $region20: #{decoder_forward.7} parent=0 // pred_region
    _
  $region21: #{decoder_forward.7} parent=0 // pred_fallthru
    _

// kernel: decoder_forward.9
$region0: #{decoder_forward.9}
  #allocation0 [shape = 'u32[]', space=smem, size = 0x4, offset = 0x4, fixed_abs, tag = 'smem constant byte address 0x4 - core index']
  #allocation1 [shape = 'u32[144,128]{1,0:T(1,128)}', space=vmem, size = 0x12000, scoped, tag = 'internal scratch']
  %s0 = inlined_call_operand.vmem [shape: bf16[16,512], index: 0, kind: input, shape index: {}]
  %s1 = inlined_call_operand.vmem [shape: bf16[512,200], index: 1, kind: input, shape index: {}]
  %s2 = inlined_call_operand.vmem [shape: f32[1,200], index: 2, kind: input, shape index: {}]
  %s3 = inlined_call_operand.vmem [shape: f32[16,200], index: 3, kind: output, shape index: {}]
  %s4 = sld [smem:[#allocation0]]
  $region22: #{decoder_forward.9} parent=0
    _
  %s6 = ssub.s32 1, %s4
  %s7 = scalar_select 0, %s6, %s4
  // Predicated region
  $region2: #{decoder_forward.9} parent=0 // pred_check
    _
  $region3: #{decoder_forward.9} parent=0 // pred_check_branch
    %9 = sbr.rel (0) target = $region5
  $region4: #{decoder_forward.9} parent=0 // pred_region
    _
  $region5: #{decoder_forward.9} parent=0 // pred_fallthru
    _
  // Predicated region
  $region6: #{decoder_forward.9} parent=0 // pred_check
    _
  $region7: #{decoder_forward.9} parent=0 // pred_check_branch
    %11 = sbr.rel (0) target = $region9
  $region8: #{decoder_forward.9} parent=0 // pred_region
    _
  $region9: #{decoder_forward.9} parent=0 // pred_fallthru
    _
  // Predicated region
  $region10: #{decoder_forward.9} parent=0 // pred_check
    _
  $region11: #{decoder_forward.9} parent=0 // pred_check_branch
    %13 = sbr.rel (0) target = $region13
  $region12: #{decoder_forward.9} parent=0 // pred_region
    _
  $region13: #{decoder_forward.9} parent=0 // pred_fallthru
    _
  %v14 = vld [vmem:[%s0] sm:$0xff]
  %v15 = vld [vmem:[%s0 + $0x8] sm:$0xff]
  %v16 = vld [vmem:[%s0 + $0x10] sm:$0xff]
  %v17 = vld [vmem:[%s0 + $0x18] sm:$0xff]
  %v18 = vld [vmem:[%s1] sm:$0xff]
  %v19 = vld [vmem:[%s1 + $0x8] sm:$0xff]
  %v20 = vld [vmem:[%s1 + $0x10] sm:$0xff]
  %v21 = vld [vmem:[%s1 + $0x18] sm:$0xff]
  %v22 = vld [vmem:[%s1 + $0x20] sm:$0xff]
  %v23 = vld [vmem:[%s1 + $0x28] sm:$0xff]
  %v24 = vld [vmem:[%s1 + $0x30] sm:$0xff]
  %v25 = vld [vmem:[%s1 + $0x38] sm:$0xff]
  %v26 = vld [vmem:[%s1 + $0x40] sm:$0xff]
  %v27 = vld [vmem:[%s1 + $0x48] sm:$0xff]
  %v28 = vld [vmem:[%s1 + $0x50] sm:$0xff]
  %v29 = vld [vmem:[%s1 + $0x58] sm:$0xff]
  %v30 = vld [vmem:[%s1 + $0x60] sm:$0xff]
  %v31 = vld [vmem:[%s1 + $0x68] sm:$0xff]
  %v32 = vld [vmem:[%s1 + $0x70] sm:$0xff]
  %v33 = vld [vmem:[%s1 + $0x78] sm:$0xff]
  %v34 = vld [vmem:[%s1 + $0x80] sm:$0xff]
  %v35 = vld [vmem:[%s1 + $0x88] sm:$0xff]
  %v36 = vld [vmem:[%s1 + $0x90] sm:$0xff]
  %v37 = vld [vmem:[%s1 + $0x98] sm:$0xff]
  %v38 = vld [vmem:[%s1 + $0xa0] sm:$0xff]
  %v39 = vld [vmem:[%s1 + $0xa8] sm:$0xff]
  %v40 = vld [vmem:[%s1 + $0xb0] sm:$0xff]
  %v41 = vld [vmem:[%s1 + $0xb8] sm:$0xff]
  %v42 = vld [vmem:[%s1 + $0xc0] sm:$0xff]
  %v43 = vld [vmem:[%s1 + $0xc8] sm:$0xff]
  %v44 = vld [vmem:[%s1 + $0xd0] sm:$0xff]
  %v45 = vld [vmem:[%s1 + $0xd8] sm:$0xff]
  %v46 = vld [vmem:[%s1 + $0xe0] sm:$0xff]
  %v47 = vld [vmem:[%s1 + $0xe8] sm:$0xff]
  %v48 = vld [vmem:[%s1 + $0xf0] sm:$0xff]
  %v49 = vld [vmem:[%s1 + $0xf8] sm:$0xff]
  %v50 = vld [vmem:[%s1 + $0x100] sm:$0xff]
  %v51 = vld [vmem:[%s1 + $0x108] sm:$0xff]
  %v52 = vld [vmem:[%s1 + $0x110] sm:$0xff]
  %v53 = vld [vmem:[%s1 + $0x118] sm:$0xff]
  %v54 = vld [vmem:[%s1 + $0x120] sm:$0xff]
  %v55 = vld [vmem:[%s1 + $0x128] sm:$0xff]
  %v56 = vld [vmem:[%s1 + $0x130] sm:$0xff]
  %v57 = vld [vmem:[%s1 + $0x138] sm:$0xff]
  %v58 = vld [vmem:[%s1 + $0x140] sm:$0xff]
  %v59 = vld [vmem:[%s1 + $0x148] sm:$0xff]
  %v60 = vld [vmem:[%s1 + $0x150] sm:$0xff]
  %v61 = vld [vmem:[%s1 + $0x158] sm:$0xff]
  %v62 = vld [vmem:[%s1 + $0x160] sm:$0xff]
  %v63 = vld [vmem:[%s1 + $0x168] sm:$0xff]
  %v64 = vld [vmem:[%s1 + $0x170] sm:$0xff]
  %v65 = vld [vmem:[%s1 + $0x178] sm:$0xff]
  %v66 = vld [vmem:[%s1 + $0x180] sm:$0xff]
  %v67 = vld [vmem:[%s1 + $0x188] sm:$0xff]
  %v68 = vld [vmem:[%s1 + $0x190] sm:$0xff]
  %v69 = vld [vmem:[%s1 + $0x198] sm:$0xff]
  %v70 = vld [vmem:[%s1 + $0x1a0] sm:$0xff]
  %v71 = vld [vmem:[%s1 + $0x1a8] sm:$0xff]
  %v72 = vld [vmem:[%s1 + $0x1b0] sm:$0xff]
  %v73 = vld [vmem:[%s1 + $0x1b8] sm:$0xff]
  %v74 = vld [vmem:[%s1 + $0x1c0] sm:$0xff]
  %v75 = vld [vmem:[%s1 + $0x1c8] sm:$0xff]
  %v76 = vld [vmem:[%s1 + $0x1d0] sm:$0xff]
  %v77 = vld [vmem:[%s1 + $0x1d8] sm:$0xff]
  %v78 = vld [vmem:[%s1 + $0x1e0] sm:$0xff]
  %v79 = vld [vmem:[%s1 + $0x1e8] sm:$0xff]
  %v80 = vld [vmem:[%s1 + $0x1f0] sm:$0xff]
  %v81 = vld [vmem:[%s1 + $0x1f8] sm:$0xff]
  %v82 = vld [vmem:[%s2] sm:$0x3]
  %v84 = vlaneseq
  %v85 = vshrl.u32 %v84, 7
  %v86 = vsub.s32 0, %v85
  %v87 = vrot.slane %v82, %v86
  %v88 = vlaneseq
  %v89 = vshrl.u32 %v88, 7
  %v90 = vsub.s32 1, %v89
  %v91 = vrot.slane %v82, %v90
  %v98 = vunpack.c.l.b16 %v14
  %v99 = vunpack.c.h.b16 %v14
  %v100 = vunpack.c.l.b16 %v15
  %v101 = vunpack.c.h.b16 %v15
  %v102 = vunpack.c.l.b16 %v16
  %v103 = vunpack.c.h.b16 %v16
  %v104 = vunpack.c.l.b16 %v17
  %v105 = vunpack.c.h.b16 %v17
  %v106 = vpack.c.b16 %v102, %v98
  %v107 = vpack.c.b16 %v103, %v99
  %v108 = vpack.c.b16 %v104, %v100
  %v109 = vpack.c.b16 %v105, %v101
  %v178 = vunpack.c.l.b16 %v18
  %v179 = vunpack.c.h.b16 %v18
  %v180 = vunpack.c.l.b16 %v19
  %v181 = vunpack.c.h.b16 %v19
  %v182 = vunpack.c.l.b16 %v20
  %v183 = vunpack.c.h.b16 %v20
  %v184 = vunpack.c.l.b16 %v21
  %v185 = vunpack.c.h.b16 %v21
  %v186 = vunpack.c.l.b16 %v22
  %v187 = vunpack.c.h.b16 %v22
  %v188 = vunpack.c.l.b16 %v23
  %v189 = vunpack.c.h.b16 %v23
  %v190 = vunpack.c.l.b16 %v24
  %v191 = vunpack.c.h.b16 %v24
  %v192 = vunpack.c.l.b16 %v25
  %v193 = vunpack.c.h.b16 %v25
  %v194 = vunpack.c.l.b16 %v26
  %v195 = vunpack.c.h.b16 %v26
  %v196 = vunpack.c.l.b16 %v27
  %v197 = vunpack.c.h.b16 %v27
  %v198 = vunpack.c.l.b16 %v28
  %v199 = vunpack.c.h.b16 %v28
  %v200 = vunpack.c.l.b16 %v29
  %v201 = vunpack.c.h.b16 %v29
  %v202 = vunpack.c.l.b16 %v30
  %v203 = vunpack.c.h.b16 %v30
  %v204 = vunpack.c.l.b16 %v31
  %v205 = vunpack.c.h.b16 %v31
  %v206 = vunpack.c.l.b16 %v32
  %v207 = vunpack.c.h.b16 %v32
  %v208 = vunpack.c.l.b16 %v33
  %v209 = vunpack.c.h.b16 %v33
  %v210 = vunpack.c.l.b16 %v34
  %v211 = vunpack.c.h.b16 %v34
  %v212 = vunpack.c.l.b16 %v35
  %v213 = vunpack.c.h.b16 %v35
  %v214 = vunpack.c.l.b16 %v36
  %v215 = vunpack.c.h.b16 %v36
  %v216 = vunpack.c.l.b16 %v37
  %v217 = vunpack.c.h.b16 %v37
  %v218 = vunpack.c.l.b16 %v38
  %v219 = vunpack.c.h.b16 %v38
  %v220 = vunpack.c.l.b16 %v39
  %v221 = vunpack.c.h.b16 %v39
  %v222 = vunpack.c.l.b16 %v40
  %v223 = vunpack.c.h.b16 %v40
  %v224 = vunpack.c.l.b16 %v41
  %v225 = vunpack.c.h.b16 %v41
  %v226 = vunpack.c.l.b16 %v42
  %v227 = vunpack.c.h.b16 %v42
  %v228 = vunpack.c.l.b16 %v43
  %v229 = vunpack.c.h.b16 %v43
  %v230 = vunpack.c.l.b16 %v44
  %v231 = vunpack.c.h.b16 %v44
  %v232 = vunpack.c.l.b16 %v45
  %v233 = vunpack.c.h.b16 %v45
  %v234 = vunpack.c.l.b16 %v46
  %v235 = vunpack.c.h.b16 %v46
  %v236 = vunpack.c.l.b16 %v47
  %v237 = vunpack.c.h.b16 %v47
  %v238 = vunpack.c.l.b16 %v48
  %v239 = vunpack.c.h.b16 %v48
  %v240 = vunpack.c.l.b16 %v49
  %v241 = vunpack.c.h.b16 %v49
  %v242 = vunpack.c.l.b16 %v50
  %v243 = vunpack.c.h.b16 %v50
  %v244 = vunpack.c.l.b16 %v51
  %v245 = vunpack.c.h.b16 %v51
  %v246 = vunpack.c.l.b16 %v52
  %v247 = vunpack.c.h.b16 %v52
  %v248 = vunpack.c.l.b16 %v53
  %v249 = vunpack.c.h.b16 %v53
  %v250 = vunpack.c.l.b16 %v54
  %v251 = vunpack.c.h.b16 %v54
  %v252 = vunpack.c.l.b16 %v55
  %v253 = vunpack.c.h.b16 %v55
  %v254 = vunpack.c.l.b16 %v56
  %v255 = vunpack.c.h.b16 %v56
  %v256 = vunpack.c.l.b16 %v57
  %v257 = vunpack.c.h.b16 %v57
  %v258 = vunpack.c.l.b16 %v58
  %v259 = vunpack.c.h.b16 %v58
  %v260 = vunpack.c.l.b16 %v59
  %v261 = vunpack.c.h.b16 %v59
  %v262 = vunpack.c.l.b16 %v60
  %v263 = vunpack.c.h.b16 %v60
  %v264 = vunpack.c.l.b16 %v61
  %v265 = vunpack.c.h.b16 %v61
  %v266 = vunpack.c.l.b16 %v62
  %v267 = vunpack.c.h.b16 %v62
  %v268 = vunpack.c.l.b16 %v63
  %v269 = vunpack.c.h.b16 %v63
  %v270 = vunpack.c.l.b16 %v64
  %v271 = vunpack.c.h.b16 %v64
  %v272 = vunpack.c.l.b16 %v65
  %v273 = vunpack.c.h.b16 %v65
  %v274 = vunpack.c.l.b16 %v66
  %v275 = vunpack.c.h.b16 %v66
  %v276 = vunpack.c.l.b16 %v67
  %v277 = vunpack.c.h.b16 %v67
  %v278 = vunpack.c.l.b16 %v68
  %v279 = vunpack.c.h.b16 %v68
  %v280 = vunpack.c.l.b16 %v69
  %v281 = vunpack.c.h.b16 %v69
  %v282 = vunpack.c.l.b16 %v70
  %v283 = vunpack.c.h.b16 %v70
  %v284 = vunpack.c.l.b16 %v71
  %v285 = vunpack.c.h.b16 %v71
  %v286 = vunpack.c.l.b16 %v72
  %v287 = vunpack.c.h.b16 %v72
  %v288 = vunpack.c.l.b16 %v73
  %v289 = vunpack.c.h.b16 %v73
  %v290 = vunpack.c.l.b16 %v74
  %v291 = vunpack.c.h.b16 %v74
  %v292 = vunpack.c.l.b16 %v75
  %v293 = vunpack.c.h.b16 %v75
  %v294 = vunpack.c.l.b16 %v76
  %v295 = vunpack.c.h.b16 %v76
  %v296 = vunpack.c.l.b16 %v77
  %v297 = vunpack.c.h.b16 %v77
  %v298 = vunpack.c.l.b16 %v78
  %v299 = vunpack.c.h.b16 %v78
  %v300 = vunpack.c.l.b16 %v79
  %v301 = vunpack.c.h.b16 %v79
  %v302 = vunpack.c.l.b16 %v80
  %v303 = vunpack.c.h.b16 %v80
  %v304 = vunpack.c.l.b16 %v81
  %v305 = vunpack.c.h.b16 %v81
  %v306 = vpack.c.b16 %v180, %v178
  %v307 = vpack.c.b16 %v181, %v179
  %v308 = vpack.c.b16 %v184, %v182
  %v309 = vpack.c.b16 %v185, %v183
  %v310 = vpack.c.b16 %v188, %v186
  %v311 = vpack.c.b16 %v189, %v187
  %v312 = vpack.c.b16 %v192, %v190
  %v313 = vpack.c.b16 %v193, %v191
  %v314 = vpack.c.b16 %v196, %v194
  %v315 = vpack.c.b16 %v197, %v195
  %v316 = vpack.c.b16 %v200, %v198
  %v317 = vpack.c.b16 %v201, %v199
  %v318 = vpack.c.b16 %v204, %v202
  %v319 = vpack.c.b16 %v205, %v203
  %v320 = vpack.c.b16 %v208, %v206
  %v321 = vpack.c.b16 %v209, %v207
  %v322 = vpack.c.b16 %v212, %v210
  %v323 = vpack.c.b16 %v213, %v211
  %v324 = vpack.c.b16 %v216, %v214
  %v325 = vpack.c.b16 %v217, %v215
  %v326 = vpack.c.b16 %v220, %v218
  %v327 = vpack.c.b16 %v221, %v219
  %v328 = vpack.c.b16 %v224, %v222
  %v329 = vpack.c.b16 %v225, %v223
  %v330 = vpack.c.b16 %v228, %v226
  %v331 = vpack.c.b16 %v229, %v227
  %v332 = vpack.c.b16 %v232, %v230
  %v333 = vpack.c.b16 %v233, %v231
  %v334 = vpack.c.b16 %v236, %v234
  %v335 = vpack.c.b16 %v237, %v235
  %v336 = vpack.c.b16 %v240, %v238
  %v337 = vpack.c.b16 %v241, %v239
  %v338 = vpack.c.b16 %v244, %v242
  %v339 = vpack.c.b16 %v245, %v243
  %v340 = vpack.c.b16 %v248, %v246
  %v341 = vpack.c.b16 %v249, %v247
  %v342 = vpack.c.b16 %v252, %v250
  %v343 = vpack.c.b16 %v253, %v251
  %v344 = vpack.c.b16 %v256, %v254
  %v345 = vpack.c.b16 %v257, %v255
  %v346 = vpack.c.b16 %v260, %v258
  %v347 = vpack.c.b16 %v261, %v259
  %v348 = vpack.c.b16 %v264, %v262
  %v349 = vpack.c.b16 %v265, %v263
  %v350 = vpack.c.b16 %v268, %v266
  %v351 = vpack.c.b16 %v269, %v267
  %v352 = vpack.c.b16 %v272, %v270
  %v353 = vpack.c.b16 %v273, %v271
  %v354 = vpack.c.b16 %v276, %v274
  %v355 = vpack.c.b16 %v277, %v275
  %v356 = vpack.c.b16 %v280, %v278
  %v357 = vpack.c.b16 %v281, %v279
  %v358 = vpack.c.b16 %v284, %v282
  %v359 = vpack.c.b16 %v285, %v283
  %v360 = vpack.c.b16 %v288, %v286
  %v361 = vpack.c.b16 %v289, %v287
  %v362 = vpack.c.b16 %v292, %v290
  %v363 = vpack.c.b16 %v293, %v291
  %v364 = vpack.c.b16 %v296, %v294
  %v365 = vpack.c.b16 %v297, %v295
  %v366 = vpack.c.b16 %v300, %v298
  %v367 = vpack.c.b16 %v301, %v299
  %v368 = vpack.c.b16 %v304, %v302
  %v369 = vpack.c.b16 %v305, %v303
  %434 = vmatprep.subr.bf16.mxu0 %v321
  %435 = vmatpush1.bf16.msra.mxu0 %v320
  %436 = vmatprep.subr.bf16.mxu0 %v319
  %437 = vmatpush1.bf16.msra.mxu0 %v318
  %438 = vmatprep.subr.bf16.mxu0 %v317
  %439 = vmatpush1.bf16.msra.mxu0 %v316
  %440 = vmatprep.subr.bf16.mxu0 %v315
  %441 = vmatpush1.bf16.msra.mxu0 %v314
  %442 = vmatprep.subr.bf16.mxu0 %v313
  %443 = vmatpush1.bf16.msra.mxu0 %v312
  %444 = vmatprep.subr.bf16.mxu0 %v311
  %445 = vmatpush1.bf16.msra.mxu0 %v310
  %446 = vmatprep.subr.bf16.mxu0 %v309
  %447 = vmatpush1.bf16.msra.mxu0 %v308
  %448 = vmatprep.subr.bf16.mxu0 %v307
  %449 = vmatpush1.bf16.msra.mxu0 %v306
  %450 = vmatprep.subr.bf16.mxu0 %v337
  %451 = vmatpush2.bf16.msra.mxu0 %v336
  %452 = vmatprep.subr.bf16.mxu0 %v335
  %453 = vmatpush2.bf16.msra.mxu0 %v334
  %454 = vmatprep.subr.bf16.mxu0 %v333
  %455 = vmatpush2.bf16.msra.mxu0 %v332
  %456 = vmatprep.subr.bf16.mxu0 %v331
  %457 = vmatpush2.bf16.msra.mxu0 %v330
  %458 = vmatprep.subr.bf16.mxu0 %v329
  %459 = vmatpush2.bf16.msra.mxu0 %v328
  %460 = vmatprep.subr.bf16.mxu0 %v327
  %461 = vmatpush2.bf16.msra.mxu0 %v326
  %462 = vmatprep.subr.bf16.mxu0 %v325
  %463 = vmatpush2.bf16.msra.mxu0 %v324
  %464 = vmatprep.subr.bf16.mxu0 %v323
  %465 = vmatpush2.bf16.msra.mxu0 %v322
  %466 = vmatprep.mubr.bf16.mxu0 %v107
  %467 = vmatmul.mubr.bf16.gmra.mxu0 %v106
  %v468 = vpop.f32.mrf.mxu0
  %v469 = vadd.f32 %v87, %v468
  %v470 = vpop.f32.mrf.mxu0
  %v471 = vadd.f32 %v91, %v470
  %v472 = vpop.f32.mrf.mxu0
  %v473 = vadd.f32 %v87, %v472
  %v474 = vpop.f32.mrf.mxu0
  %v475 = vadd.f32 %v91, %v474
  %476 = vdwg.mxu0
  %477 = vmatprep.subr.bf16.mxu0 %v353
  %478 = vmatpush1.bf16.msra.mxu0 %v352
  %479 = vmatprep.subr.bf16.mxu0 %v351
  %480 = vmatpush1.bf16.msra.mxu0 %v350
  %481 = vmatprep.subr.bf16.mxu0 %v349
  %482 = vmatpush1.bf16.msra.mxu0 %v348
  %483 = vmatprep.subr.bf16.mxu0 %v347
  %484 = vmatpush1.bf16.msra.mxu0 %v346
  %485 = vmatprep.subr.bf16.mxu0 %v345
  %486 = vmatpush1.bf16.msra.mxu0 %v344
  %487 = vmatprep.subr.bf16.mxu0 %v343
  %488 = vmatpush1.bf16.msra.mxu0 %v342
  %489 = vmatprep.subr.bf16.mxu0 %v341
  %490 = vmatpush1.bf16.msra.mxu0 %v340
  %491 = vmatprep.subr.bf16.mxu0 %v339
  %492 = vmatpush1.bf16.msra.mxu0 %v338
  %493 = vmatprep.subr.bf16.mxu0 %v369
  %494 = vmatpush2.bf16.msra.mxu0 %v368
  %495 = vmatprep.subr.bf16.mxu0 %v367
  %496 = vmatpush2.bf16.msra.mxu0 %v366
  %497 = vmatprep.subr.bf16.mxu0 %v365
  %498 = vmatpush2.bf16.msra.mxu0 %v364
  %499 = vmatprep.subr.bf16.mxu0 %v363
  %500 = vmatpush2.bf16.msra.mxu0 %v362
  %501 = vmatprep.subr.bf16.mxu0 %v361
  %502 = vmatpush2.bf16.msra.mxu0 %v360
  %503 = vmatprep.subr.bf16.mxu0 %v359
  %504 = vmatpush2.bf16.msra.mxu0 %v358
  %505 = vmatprep.subr.bf16.mxu0 %v357
  %506 = vmatpush2.bf16.msra.mxu0 %v356
  %507 = vmatprep.subr.bf16.mxu0 %v355
  %508 = vmatpush2.bf16.msra.mxu0 %v354
  %509 = vmatprep.mubr.bf16.mxu0 %v109
  %510 = vmatmul.mubr.bf16.gmra.mxu0 %v108
  %v511 = vpop.f32.mrf.mxu0
  %v512 = vadd.f32 %v469, %v511
  %v513 = vpop.f32.mrf.mxu0
  %v514 = vadd.f32 %v471, %v513
  %v515 = vpop.f32.mrf.mxu0
  %v516 = vadd.f32 %v473, %v515
  %v517 = vpop.f32.mrf.mxu0
  %v518 = vadd.f32 %v475, %v517
  %519 = vdwg.mxu0
  %520 = vst [vmem:[%s3] sm:$0xff] %v512
  %vm521 = vcmask 588800
  %522 = vst.msk [vmem:[%s3 + $0x8] sm:$0xff] %vm521, %v514
  %523 = vst [vmem:[%s3 + $0x10] sm:$0xff] %v516
  %524 = vst.msk [vmem:[%s3 + $0x18] sm:$0xff] %vm521, %v518
  // Predicated region
  $region14: #{decoder_forward.9} parent=0 // pred_check
    _
  $region15: #{decoder_forward.9} parent=0 // pred_check_branch
    %526 = sbr.rel (0) target = $region17
  $region16: #{decoder_forward.9} parent=0 // pred_region
    _
  $region17: #{decoder_forward.9} parent=0 // pred_fallthru
    _
  // Predicated region
  $region18: #{decoder_forward.9} parent=0 // pred_check
    _
  $region19: #{decoder_forward.9} parent=0 // pred_check_branch
    %528 = sbr.rel (0) target = $region21
  $region20: #{decoder_forward.9} parent=0 // pred_region
    _
  $region21: #{decoder_forward.9} parent=0 // pred_fallthru
    _

</llo_original>
